<compile_context>
chip_gen: v5e
topology: v5e:2x2
jax: 0.10.0
libtpu: 0.0.40
codegen_flags: <defaults>
</compile_context>

<pallas_src>
import functools

import jax
import jax.numpy as jnp
from jax.experimental import pallas as pl
from jax.experimental.pallas import tpu as pltpu

D = 10          # n_dims
HALF = 5        # split_len1 = split_len2 = 5
HID = 10        # subnet hidden width
NBLOCKS = 8     # coupling blocks
CLAMP = 2.0     # FrEIA clamp
ATAN_K = 0.636  # FrEIA "ATAN" clamp activation constant
SCALE = CLAMP * ATAN_K

HP = 8          # padded half width (one 8-sublane group per half)
DP = 2 * HP     # padded feature width (16)
INV_HALF = 1.0 / HALF


def _atan(x):
    # Cephes-style float32 atan from ops guaranteed to lower in Mosaic.
    # Single division: select numerator/denominator, then one divide.
    sign = jnp.where(x < 0.0, -1.0, 1.0)
    ax = jnp.abs(x)
    big = ax > 2.414213562373095        # tan(3*pi/8)
    mid = ax > 0.41421356237309503      # tan(pi/8)
    num = jnp.where(big, -1.0, jnp.where(mid, ax - 1.0, ax))
    den = jnp.where(big, ax, jnp.where(mid, ax + 1.0, 1.0))
    t = num / den
    y0 = jnp.where(big, jnp.float32(jnp.pi / 2),
                   jnp.where(mid, jnp.float32(jnp.pi / 4), jnp.float32(0.0)))
    z = t * t
    poly = ((8.05374449538e-2 * z - 1.38776856032e-1) * z
            + 1.99777106478e-1) * z - 3.33329491539e-1
    return sign * (y0 + t + t * z * poly)


def _mlp_t(x, w1, b1, w2, b2, w3, b3):
    # Transposed MLP: weights are (out_pad, in_pad), activations (in_pad, TN).
    h = jnp.maximum(jnp.dot(w1, x, preferred_element_type=jnp.float32) + b1, 0.0)
    h = jnp.maximum(jnp.dot(w2, h, preferred_element_type=jnp.float32) + b2, 0.0)
    return jnp.dot(w3, h, preferred_element_type=jnp.float32) + b3


def gin_kernel(x_ref, w1_ref, b1_ref, w2_ref, b2_ref, w3_ref, b3_ref,
               p_ref, z_ref):
    """One batch tile (lane axis) of the full 8-block GIN flow.

    x_ref / z_ref : (DP, TN)  transposed, feature-padded state tile.
                    rows 0..4 = features 0..4, rows 8..12 = features 5..9,
                    rows 5..7 / 13..15 are always exactly zero.
    w*_ref        : (NBLOCKS, 2, out_pad, in_pad)  transposed, zero-padded
                    subnet weights (index 0 -> subnet1, 1 -> subnet2).
    b*_ref        : (NBLOCKS, 2, out_pad, 1)
    p_ref         : (NBLOCKS, DP, DP)  padded one-hot permutation matrices
                    acting on the feature (sublane) axis from the left.
    """
    y = x_ref[...]
    for k in range(NBLOCKS):            # static unroll over the 8 blocks
        x1 = y[:HP, :]                  # aligned 8-sublane halves: free slices
        x2 = y[HP:, :]

        # _coupling1: subnet2 applied to x2, affine on x1
        a2 = _mlp_t(x2, w1_ref[k, 1], b1_ref[k, 1], w2_ref[k, 1], b2_ref[k, 1],
                    w3_ref[k, 1], b3_ref[k, 1])
        s2 = SCALE * _atan(a2[:HP, :])                 # padded rows are 0
        s2 = s2 - jnp.sum(s2, axis=0, keepdims=True) * INV_HALF  # GIN mean (÷5)
        y1 = jnp.exp(s2) * x1 + a2[HP:, :]             # padded rows stay 0

        # _coupling2: subnet1 applied to y1, affine on x2
        a1 = _mlp_t(y1, w1_ref[k, 0], b1_ref[k, 0], w2_ref[k, 0], b2_ref[k, 0],
                    w3_ref[k, 0], b3_ref[k, 0])
        s1 = SCALE * _atan(a1[:HP, :])
        s1 = s1 - jnp.sum(s1, axis=0, keepdims=True) * INV_HALF
        y2 = jnp.exp(s1) * x2 + a1[HP:, :]

        # concat (aligned, free) + PermuteRandom as one 16x16 one-hot matmul
        y = jnp.dot(p_ref[k], jnp.concatenate([y1, y2], axis=0),
                    preferred_element_type=jnp.float32)

    z_ref[...] = y


@functools.partial(jax.jit, static_argnames=("tile_n",))
def gin_forward(x, packed, tile_n=256):
    """z, logdet = GIN(x).  x: (N, 10) float32.  logdet is identically 0."""
    w1t, b1t, w2t, b2t, w3t, b3t, ppad = packed
    N, d = x.shape
    assert d == D
    assert tile_n % 128 == 0, "tile_n must be a multiple of 128 (lane width)"
    n_pad = ((N + tile_n - 1) // tile_n) * tile_n

    # Transpose to batch-on-lanes and pad features into two aligned halves.
    xt = jnp.zeros((DP, n_pad), jnp.float32)
    xt = xt.at[:HALF, :N].set(x[:, :HALF].T)
    xt = xt.at[HP:HP + HALF, :N].set(x[:, HALF:].T)

    cost = pl.CostEstimate(
        flops=n_pad * NBLOCKS * 2 * 2 * (HALF * HID + 2 * HID * HID),
        transcendentals=n_pad * NBLOCKS * 2 * 2 * HALF,
        bytes_accessed=2 * n_pad * DP * 4,
    )

    def full(arr):
        nd = arr.ndim
        return pl.BlockSpec(arr.shape, lambda i, _nd=nd: (0,) * _nd)

    zt = pl.pallas_call(
        gin_kernel,
        out_shape=jax.ShapeDtypeStruct((DP, n_pad), jnp.float32),
        grid=(n_pad // tile_n,),
        in_specs=[pl.BlockSpec((DP, tile_n), lambda i: (0, i)),
                  full(w1t), full(b1t), full(w2t), full(b2t),
                  full(w3t), full(b3t), full(ppad)],
        out_specs=pl.BlockSpec((DP, tile_n), lambda i: (0, i)),
        compiler_params=pltpu.CompilerParams(
            dimension_semantics=("parallel",)),
        cost_estimate=cost,
    )(xt, w1t, b1t, w2t, b2t, w3t, b3t, ppad)

    z = jnp.concatenate([zt[:HALF, :N].T, zt[HP:HP + HALF, :N].T], axis=1)
    logdet = jnp.zeros((N,), jnp.float32)   # GIN flow is volume preserving
    return z, logdet


# ----------------------- parameter construction (glue) -----------------------

def init_params(key, init_identity=False):
    """Logical (unpadded) params: PyTorch Linear-style uniform init."""
    def linear(k, fan_in, fan_out, zero=False):
        if zero:
            return (jnp.zeros((fan_in, fan_out), jnp.float32),
                    jnp.zeros((fan_out,), jnp.float32))
        kw, kb = jax.random.split(k)
        bound = 1.0 / (fan_in ** 0.5)
        w = jax.random.uniform(kw, (fan_in, fan_out), jnp.float32, -bound, bound)
        b = jax.random.uniform(kb, (fan_out,), jnp.float32, -bound, bound)
        return w, b

    w1, b1, w2, b2, w3, b3, perms = [], [], [], [], [], [], []
    for blk in range(NBLOCKS):
        kb_key = jax.random.fold_in(key, blk)
        rw1, rb1, rw2, rb2, rw3, rb3 = [], [], [], [], [], []
        for s in range(2):            # subnet1, subnet2 (each HALF -> 2*HALF)
            ks = jax.random.fold_in(kb_key, s)
            k1, k2, k3 = jax.random.split(ks, 3)
            W1, B1 = linear(k1, HALF, HID)
            W2, B2 = linear(k2, HID, HID)
            W3, B3 = linear(k3, HID, 2 * HALF, zero=init_identity)
            rw1.append(W1); rb1.append(B1)
            rw2.append(W2); rb2.append(B2)
            rw3.append(W3); rb3.append(B3)
        w1.append(jnp.stack(rw1)); b1.append(jnp.stack(rb1))
        w2.append(jnp.stack(rw2)); b2.append(jnp.stack(rb2))
        w3.append(jnp.stack(rw3)); b3.append(jnp.stack(rb3))
        perms.append(jax.random.permutation(jax.random.fold_in(kb_key, 99), D))
    return (jnp.stack(w1), jnp.stack(b1), jnp.stack(w2), jnp.stack(b2),
            jnp.stack(w3), jnp.stack(b3), jnp.stack(perms))


def _pad_half_axis(a, axis):
    """Split a length-10 feature axis into two aligned 8-slot halves (zeros 5..7, 13..15)."""
    a1, a2 = jnp.split(a, [HALF], axis=axis)
    shape = list(a.shape)
    shape[axis] = HP - HALF
    z = jnp.zeros(shape, a.dtype)
    return jnp.concatenate([a1, z, a2, z], axis=axis)


def pack_params(params):
    """Transposed + zero-padded weights for the (feature, batch) kernel layout."""
    w1, b1, w2, b2, w3, b3, perms = params
    # layer 1: (5 -> 10).  Transposed (hid, in), pad to (16, 8) with zeros.
    w1t = jnp.pad(jnp.swapaxes(w1, -1, -2),
                  ((0, 0), (0, 0), (0, DP - HID), (0, HP - HALF)))
    b1t = jnp.pad(b1[..., None], ((0, 0), (0, 0), (0, DP - HID), (0, 0)))
    # layer 2: (10 -> 10) -> (16, 16)
    w2t = jnp.pad(jnp.swapaxes(w2, -1, -2),
                  ((0, 0), (0, 0), (0, DP - HID), (0, DP - HID)))
    b2t = jnp.pad(b2[..., None], ((0, 0), (0, 0), (0, DP - HID), (0, 0)))
    # layer 3: (10 -> 10).  Output axis scattered into the two aligned halves
    # (s -> rows 0..4, t -> rows 8..12), hidden axis zero-padded.
    w3t = _pad_half_axis(jnp.swapaxes(w3, -1, -2), axis=-2)
    w3t = jnp.pad(w3t, ((0, 0), (0, 0), (0, 0), (0, DP - HID)))
    b3t = _pad_half_axis(b3[..., None], axis=-2)
    # PermuteRandom as padded one-hot: row pad(j) picks old row pad(perm[j]).
    g = jnp.eye(D, dtype=jnp.float32)[perms]                    # (K, 10, 10)
    ppad = _pad_half_axis(_pad_half_axis(g, axis=-1), axis=-2)  # (K, 16, 16)
    f32 = jnp.float32
    return tuple(a.astype(f32) for a in (w1t, b1t, w2t, b2t, w3t, b3t, ppad))


def gin_forward_ref(x, params):
    """Pure-JAX reference on the logical layout (native arctan)."""
    w1, b1, w2, b2, w3, b3, perms = params
    y = x
    for k in range(NBLOCKS):
        x1, x2 = y[:, :HALF], y[:, HALF:]

        def mlp(v, s):
            h = jnp.maximum(v @ w1[k, s] + b1[k, s], 0.0)
            h = jnp.maximum(h @ w2[k, s] + b2[k, s], 0.0)
            return h @ w3[k, s] + b3[k, s]

        a2 = mlp(x2, 1)
        s2 = SCALE * jnp.arctan(a2[:, :HALF])
        s2 = s2 - s2.mean(1, keepdims=True)
        y1 = jnp.exp(s2) * x1 + a2[:, HALF:]
        a1 = mlp(y1, 0)
        s1 = SCALE * jnp.arctan(a1[:, :HALF])
        s1 = s1 - s1.mean(1, keepdims=True)
        y2 = jnp.exp(s1) * x2 + a1[:, HALF:]
        y = jnp.concatenate([y1, y2], axis=1)[:, perms[k]]
    return y, jnp.zeros((x.shape[0],), jnp.float32)


if __name__ == "__main__":
    key = jax.random.PRNGKey(0)
    kx, kp = jax.random.split(key)
    N = 512                                   # tile_n=256 -> 2 parallel tiles
    x = jax.random.normal(kx, (N, D), dtype=jnp.float32)
    params = init_params(kp, init_identity=False)
    packed = pack_params(params)

    z, logdet = gin_forward(x, packed, tile_n=256)
    jax.block_until_ready((z, logdet))

    z_ref, logdet_ref = gin_forward_ref(x, params)
    assert z.shape == (N, D)
    assert jnp.allclose(z, z_ref, atol=2e-4, rtol=2e-4), "mismatch vs reference"
    assert jnp.all(logdet == 0.0), "GIN log|det J| must be zero"
    print("KERNEL_OK")
</pallas_src>

<mosaic_0001>
module attributes {stable_mosaic.version = 11 : i64} {
  func.func @gin_kernel(%arg0: i32, %arg1: memref<16x256xf32, #tpu.memory_space<vmem>>, %arg2: memref<8x2x16x8xf32, #tpu.memory_space<vmem>>, %arg3: memref<8x2x16x1xf32, #tpu.memory_space<vmem>>, %arg4: memref<8x2x16x16xf32, #tpu.memory_space<vmem>>, %arg5: memref<8x2x16x1xf32, #tpu.memory_space<vmem>>, %arg6: memref<8x2x16x16xf32, #tpu.memory_space<vmem>>, %arg7: memref<8x2x16x1xf32, #tpu.memory_space<vmem>>, %arg8: memref<8x16x16xf32, #tpu.memory_space<vmem>>, %arg9: memref<16x256xf32, #tpu.memory_space<vmem>>) attributes {dimension_semantics = [#tpu.dimension_semantics<parallel>], iteration_bounds = array<i64: 2>, scalar_prefetch = 0 : i64, scratch_operands = 0 : i64, tpu.core_type = #tpu.core_type<tc>, window_params = [{transform_indices = @transform_0, window_bounds = array<i64: 16, 256>}, {pipeline_mode = #tpu.pipeline_mode<synchronous>, transform_indices = @transform_1, window_bounds = array<i64: 8, 2, 16, 8>}, {pipeline_mode = #tpu.pipeline_mode<synchronous>, transform_indices = @transform_2, window_bounds = array<i64: 8, 2, 16, 1>}, {pipeline_mode = #tpu.pipeline_mode<synchronous>, transform_indices = @transform_3, window_bounds = array<i64: 8, 2, 16, 16>}, {pipeline_mode = #tpu.pipeline_mode<synchronous>, transform_indices = @transform_4, window_bounds = array<i64: 8, 2, 16, 1>}, {pipeline_mode = #tpu.pipeline_mode<synchronous>, transform_indices = @transform_5, window_bounds = array<i64: 8, 2, 16, 16>}, {pipeline_mode = #tpu.pipeline_mode<synchronous>, transform_indices = @transform_6, window_bounds = array<i64: 8, 2, 16, 1>}, {pipeline_mode = #tpu.pipeline_mode<synchronous>, transform_indices = @transform_7, window_bounds = array<i64: 8, 16, 16>}, {transform_indices = @transform_8, window_bounds = array<i64: 16, 256>}]} {
    %c0 = arith.constant 0 : index
    %c0_0 = arith.constant 0 : index
    %0 = vector.load %arg1[%c0, %c0_0] : memref<16x256xf32, #tpu.memory_space<vmem>>, vector<16x256xf32>
    %1 = vector.extract_strided_slice %0 {offsets = [0, 0], sizes = [8, 256], strides = [1, 1]} : vector<16x256xf32> to vector<8x256xf32>
    %2 = vector.extract_strided_slice %0 {offsets = [8, 0], sizes = [8, 256], strides = [1, 1]} : vector<16x256xf32> to vector<8x256xf32>
    %c0_1 = arith.constant 0 : index
    %c1 = arith.constant 1 : index
    %c0_2 = arith.constant 0 : index
    %c0_3 = arith.constant 0 : index
    %3 = vector.load %arg2[%c0_1, %c1, %c0_2, %c0_3] : memref<8x2x16x8xf32, #tpu.memory_space<vmem>>, vector<1x1x16x8xf32>
    %4 = vector.shape_cast %3 : vector<1x1x16x8xf32> to vector<16x8xf32>
    %c0_4 = arith.constant 0 : index
    %c1_5 = arith.constant 1 : index
    %c0_6 = arith.constant 0 : index
    %c0_7 = arith.constant 0 : index
    %5 = vector.load %arg3[%c0_4, %c1_5, %c0_6, %c0_7] : memref<8x2x16x1xf32, #tpu.memory_space<vmem>>, vector<1x1x16x1xf32>
    %6 = vector.shape_cast %5 : vector<1x1x16x1xf32> to vector<16x1xf32>
    %c0_8 = arith.constant 0 : index
    %c1_9 = arith.constant 1 : index
    %c0_10 = arith.constant 0 : index
    %c0_11 = arith.constant 0 : index
    %7 = vector.load %arg4[%c0_8, %c1_9, %c0_10, %c0_11] : memref<8x2x16x16xf32, #tpu.memory_space<vmem>>, vector<1x1x16x16xf32>
    %8 = vector.shape_cast %7 : vector<1x1x16x16xf32> to vector<16x16xf32>
    %c0_12 = arith.constant 0 : index
    %c1_13 = arith.constant 1 : index
    %c0_14 = arith.constant 0 : index
    %c0_15 = arith.constant 0 : index
    %9 = vector.load %arg5[%c0_12, %c1_13, %c0_14, %c0_15] : memref<8x2x16x1xf32, #tpu.memory_space<vmem>>, vector<1x1x16x1xf32>
    %10 = vector.shape_cast %9 : vector<1x1x16x1xf32> to vector<16x1xf32>
    %c0_16 = arith.constant 0 : index
    %c1_17 = arith.constant 1 : index
    %c0_18 = arith.constant 0 : index
    %c0_19 = arith.constant 0 : index
    %11 = vector.load %arg6[%c0_16, %c1_17, %c0_18, %c0_19] : memref<8x2x16x16xf32, #tpu.memory_space<vmem>>, vector<1x1x16x16xf32>
    %12 = vector.shape_cast %11 : vector<1x1x16x16xf32> to vector<16x16xf32>
    %c0_20 = arith.constant 0 : index
    %c1_21 = arith.constant 1 : index
    %c0_22 = arith.constant 0 : index
    %c0_23 = arith.constant 0 : index
    %13 = vector.load %arg7[%c0_20, %c1_21, %c0_22, %c0_23] : memref<8x2x16x1xf32, #tpu.memory_space<vmem>>, vector<1x1x16x1xf32>
    %14 = vector.shape_cast %13 : vector<1x1x16x1xf32> to vector<16x1xf32>
    %cst = arith.constant dense<0.000000e+00> : vector<16x256xf32>
    %15 = tpu.matmul %4, %2, %cst {dimension_numbers = #tpu.dot_dimension_numbers<[1], [0], [0], [1], [0, 0, 1, 1], [], []>} : vector<16x8xf32>, vector<8x256xf32>, vector<16x256xf32> -> vector<16x256xf32>
    %16 = vector.broadcast %6 : vector<16x1xf32> to vector<16x256xf32>
    %17 = arith.addf %15, %16 : vector<16x256xf32>
    %cst_24 = arith.constant 0.000000e+00 : f32
    %18 = vector.broadcast %cst_24 : f32 to vector<16x256xf32>
    %19 = arith.maximumf %17, %18 : vector<16x256xf32>
    %cst_25 = arith.constant dense<0.000000e+00> : vector<16x256xf32>
    %20 = tpu.matmul %8, %19, %cst_25 {dimension_numbers = #tpu.dot_dimension_numbers<[1], [0], [0], [1], [0, 0, 1, 1], [], []>} : vector<16x16xf32>, vector<16x256xf32>, vector<16x256xf32> -> vector<16x256xf32>
    %21 = vector.broadcast %10 : vector<16x1xf32> to vector<16x256xf32>
    %22 = arith.addf %20, %21 : vector<16x256xf32>
    %cst_26 = arith.constant 0.000000e+00 : f32
    %23 = vector.broadcast %cst_26 : f32 to vector<16x256xf32>
    %24 = arith.maximumf %22, %23 : vector<16x256xf32>
    %cst_27 = arith.constant dense<0.000000e+00> : vector<16x256xf32>
    %25 = tpu.matmul %12, %24, %cst_27 {dimension_numbers = #tpu.dot_dimension_numbers<[1], [0], [0], [1], [0, 0, 1, 1], [], []>} : vector<16x16xf32>, vector<16x256xf32>, vector<16x256xf32> -> vector<16x256xf32>
    %26 = vector.broadcast %14 : vector<16x1xf32> to vector<16x256xf32>
    %27 = arith.addf %25, %26 : vector<16x256xf32>
    %28 = vector.extract_strided_slice %27 {offsets = [0, 0], sizes = [8, 256], strides = [1, 1]} : vector<16x256xf32> to vector<8x256xf32>
    %cst_28 = arith.constant 0.000000e+00 : f32
    %29 = vector.broadcast %cst_28 : f32 to vector<8x256xf32>
    %30 = arith.cmpf olt, %28, %29 : vector<8x256xf32>
    %cst_29 = arith.constant -1.000000e+00 : f32
    %cst_30 = arith.constant 1.000000e+00 : f32
    %31 = vector.broadcast %cst_29 : f32 to vector<8x256xf32>
    %32 = vector.broadcast %cst_30 : f32 to vector<8x256xf32>
    %33 = arith.select %30, %31, %32 : vector<8x256xi1>, vector<8x256xf32>
    %34 = math.absf %28 : vector<8x256xf32>
    %cst_31 = arith.constant 2.41421366 : f32
    %35 = vector.broadcast %cst_31 : f32 to vector<8x256xf32>
    %36 = arith.cmpf ogt, %34, %35 : vector<8x256xf32>
    %cst_32 = arith.constant 0.414213568 : f32
    %37 = vector.broadcast %cst_32 : f32 to vector<8x256xf32>
    %38 = arith.cmpf ogt, %34, %37 : vector<8x256xf32>
    %cst_33 = arith.constant 1.000000e+00 : f32
    %39 = vector.broadcast %cst_33 : f32 to vector<8x256xf32>
    %40 = arith.subf %34, %39 : vector<8x256xf32>
    %41 = arith.select %38, %40, %34 : vector<8x256xi1>, vector<8x256xf32>
    %cst_34 = arith.constant -1.000000e+00 : f32
    %42 = vector.broadcast %cst_34 : f32 to vector<8x256xf32>
    %43 = arith.select %36, %42, %41 : vector<8x256xi1>, vector<8x256xf32>
    %cst_35 = arith.constant 1.000000e+00 : f32
    %44 = vector.broadcast %cst_35 : f32 to vector<8x256xf32>
    %45 = arith.addf %34, %44 : vector<8x256xf32>
    %cst_36 = arith.constant 1.000000e+00 : f32
    %46 = vector.broadcast %cst_36 : f32 to vector<8x256xf32>
    %47 = arith.select %38, %45, %46 : vector<8x256xi1>, vector<8x256xf32>
    %48 = arith.select %36, %34, %47 : vector<8x256xi1>, vector<8x256xf32>
    %49 = arith.divf %43, %48 : vector<8x256xf32>
    %cst_37 = arith.constant 0.785398185 : f32
    %cst_38 = arith.constant 0.000000e+00 : f32
    %50 = vector.broadcast %cst_37 : f32 to vector<8x256xf32>
    %51 = vector.broadcast %cst_38 : f32 to vector<8x256xf32>
    %52 = arith.select %38, %50, %51 : vector<8x256xi1>, vector<8x256xf32>
    %cst_39 = arith.constant 1.57079637 : f32
    %53 = vector.broadcast %cst_39 : f32 to vector<8x256xf32>
    %54 = arith.select %36, %53, %52 : vector<8x256xi1>, vector<8x256xf32>
    %55 = arith.mulf %49, %49 : vector<8x256xf32>
    %cst_40 = arith.constant 0.0805374458 : f32
    %56 = vector.broadcast %cst_40 : f32 to vector<8x256xf32>
    %57 = arith.mulf %56, %55 : vector<8x256xf32>
    %cst_41 = arith.constant 0.138776854 : f32
    %58 = vector.broadcast %cst_41 : f32 to vector<8x256xf32>
    %59 = arith.subf %57, %58 : vector<8x256xf32>
    %60 = arith.mulf %59, %55 : vector<8x256xf32>
    %cst_42 = arith.constant 0.199777111 : f32
    %61 = vector.broadcast %cst_42 : f32 to vector<8x256xf32>
    %62 = arith.addf %60, %61 : vector<8x256xf32>
    %63 = arith.mulf %62, %55 : vector<8x256xf32>
    %cst_43 = arith.constant 0.333329499 : f32
    %64 = vector.broadcast %cst_43 : f32 to vector<8x256xf32>
    %65 = arith.subf %63, %64 : vector<8x256xf32>
    %66 = arith.addf %54, %49 : vector<8x256xf32>
    %67 = arith.mulf %49, %55 : vector<8x256xf32>
    %68 = arith.mulf %67, %65 : vector<8x256xf32>
    %69 = arith.addf %66, %68 : vector<8x256xf32>
    %70 = arith.mulf %33, %69 : vector<8x256xf32>
    %cst_44 = arith.constant 1.272000e+00 : f32
    %71 = vector.broadcast %cst_44 : f32 to vector<8x256xf32>
    %72 = arith.mulf %71, %70 : vector<8x256xf32>
    %cst_45 = arith.constant dense<0.000000e+00> : vector<256xf32>
    %73 = vector.multi_reduction <add>, %72, %cst_45 [0] : vector<8x256xf32> to vector<256xf32>
    %74 = vector.shape_cast %73 : vector<256xf32> to vector<1x256xf32>
    %cst_46 = arith.constant 2.000000e-01 : f32
    %75 = vector.broadcast %cst_46 : f32 to vector<1x256xf32>
    %76 = arith.mulf %74, %75 : vector<1x256xf32>
    %77 = vector.broadcast %76 : vector<1x256xf32> to vector<8x256xf32>
    %78 = arith.subf %72, %77 : vector<8x256xf32>
    %79 = math.exp %78 : vector<8x256xf32>
    %80 = arith.mulf %79, %1 : vector<8x256xf32>
    %81 = vector.extract_strided_slice %27 {offsets = [8, 0], sizes = [8, 256], strides = [1, 1]} : vector<16x256xf32> to vector<8x256xf32>
    %82 = arith.addf %80, %81 : vector<8x256xf32>
    %c0_47 = arith.constant 0 : index
    %c0_48 = arith.constant 0 : index
    %c0_49 = arith.constant 0 : index
    %c0_50 = arith.constant 0 : index
    %83 = vector.load %arg2[%c0_47, %c0_48, %c0_49, %c0_50] : memref<8x2x16x8xf32, #tpu.memory_space<vmem>>, vector<1x1x16x8xf32>
    %84 = vector.shape_cast %83 : vector<1x1x16x8xf32> to vector<16x8xf32>
    %c0_51 = arith.constant 0 : index
    %c0_52 = arith.constant 0 : index
    %c0_53 = arith.constant 0 : index
    %c0_54 = arith.constant 0 : index
    %85 = vector.load %arg3[%c0_51, %c0_52, %c0_53, %c0_54] : memref<8x2x16x1xf32, #tpu.memory_space<vmem>>, vector<1x1x16x1xf32>
    %86 = vector.shape_cast %85 : vector<1x1x16x1xf32> to vector<16x1xf32>
    %c0_55 = arith.constant 0 : index
    %c0_56 = arith.constant 0 : index
    %c0_57 = arith.constant 0 : index
    %c0_58 = arith.constant 0 : index
    %87 = vector.load %arg4[%c0_55, %c0_56, %c0_57, %c0_58] : memref<8x2x16x16xf32, #tpu.memory_space<vmem>>, vector<1x1x16x16xf32>
    %88 = vector.shape_cast %87 : vector<1x1x16x16xf32> to vector<16x16xf32>
    %c0_59 = arith.constant 0 : index
    %c0_60 = arith.constant 0 : index
    %c0_61 = arith.constant 0 : index
    %c0_62 = arith.constant 0 : index
    %89 = vector.load %arg5[%c0_59, %c0_60, %c0_61, %c0_62] : memref<8x2x16x1xf32, #tpu.memory_space<vmem>>, vector<1x1x16x1xf32>
    %90 = vector.shape_cast %89 : vector<1x1x16x1xf32> to vector<16x1xf32>
    %c0_63 = arith.constant 0 : index
    %c0_64 = arith.constant 0 : index
    %c0_65 = arith.constant 0 : index
    %c0_66 = arith.constant 0 : index
    %91 = vector.load %arg6[%c0_63, %c0_64, %c0_65, %c0_66] : memref<8x2x16x16xf32, #tpu.memory_space<vmem>>, vector<1x1x16x16xf32>
    %92 = vector.shape_cast %91 : vector<1x1x16x16xf32> to vector<16x16xf32>
    %c0_67 = arith.constant 0 : index
    %c0_68 = arith.constant 0 : index
    %c0_69 = arith.constant 0 : index
    %c0_70 = arith.constant 0 : index
    %93 = vector.load %arg7[%c0_67, %c0_68, %c0_69, %c0_70] : memref<8x2x16x1xf32, #tpu.memory_space<vmem>>, vector<1x1x16x1xf32>
    %94 = vector.shape_cast %93 : vector<1x1x16x1xf32> to vector<16x1xf32>
    %cst_71 = arith.constant dense<0.000000e+00> : vector<16x256xf32>
    %95 = tpu.matmul %84, %82, %cst_71 {dimension_numbers = #tpu.dot_dimension_numbers<[1], [0], [0], [1], [0, 0, 1, 1], [], []>} : vector<16x8xf32>, vector<8x256xf32>, vector<16x256xf32> -> vector<16x256xf32>
    %96 = vector.broadcast %86 : vector<16x1xf32> to vector<16x256xf32>
    %97 = arith.addf %95, %96 : vector<16x256xf32>
    %cst_72 = arith.constant 0.000000e+00 : f32
    %98 = vector.broadcast %cst_72 : f32 to vector<16x256xf32>
    %99 = arith.maximumf %97, %98 : vector<16x256xf32>
    %cst_73 = arith.constant dense<0.000000e+00> : vector<16x256xf32>
    %100 = tpu.matmul %88, %99, %cst_73 {dimension_numbers = #tpu.dot_dimension_numbers<[1], [0], [0], [1], [0, 0, 1, 1], [], []>} : vector<16x16xf32>, vector<16x256xf32>, vector<16x256xf32> -> vector<16x256xf32>
    %101 = vector.broadcast %90 : vector<16x1xf32> to vector<16x256xf32>
    %102 = arith.addf %100, %101 : vector<16x256xf32>
    %cst_74 = arith.constant 0.000000e+00 : f32
    %103 = vector.broadcast %cst_74 : f32 to vector<16x256xf32>
    %104 = arith.maximumf %102, %103 : vector<16x256xf32>
    %cst_75 = arith.constant dense<0.000000e+00> : vector<16x256xf32>
    %105 = tpu.matmul %92, %104, %cst_75 {dimension_numbers = #tpu.dot_dimension_numbers<[1], [0], [0], [1], [0, 0, 1, 1], [], []>} : vector<16x16xf32>, vector<16x256xf32>, vector<16x256xf32> -> vector<16x256xf32>
    %106 = vector.broadcast %94 : vector<16x1xf32> to vector<16x256xf32>
    %107 = arith.addf %105, %106 : vector<16x256xf32>
    %108 = vector.extract_strided_slice %107 {offsets = [0, 0], sizes = [8, 256], strides = [1, 1]} : vector<16x256xf32> to vector<8x256xf32>
    %cst_76 = arith.constant 0.000000e+00 : f32
    %109 = vector.broadcast %cst_76 : f32 to vector<8x256xf32>
    %110 = arith.cmpf olt, %108, %109 : vector<8x256xf32>
    %cst_77 = arith.constant -1.000000e+00 : f32
    %cst_78 = arith.constant 1.000000e+00 : f32
    %111 = vector.broadcast %cst_77 : f32 to vector<8x256xf32>
    %112 = vector.broadcast %cst_78 : f32 to vector<8x256xf32>
    %113 = arith.select %110, %111, %112 : vector<8x256xi1>, vector<8x256xf32>
    %114 = math.absf %108 : vector<8x256xf32>
    %cst_79 = arith.constant 2.41421366 : f32
    %115 = vector.broadcast %cst_79 : f32 to vector<8x256xf32>
    %116 = arith.cmpf ogt, %114, %115 : vector<8x256xf32>
    %cst_80 = arith.constant 0.414213568 : f32
    %117 = vector.broadcast %cst_80 : f32 to vector<8x256xf32>
    %118 = arith.cmpf ogt, %114, %117 : vector<8x256xf32>
    %cst_81 = arith.constant 1.000000e+00 : f32
    %119 = vector.broadcast %cst_81 : f32 to vector<8x256xf32>
    %120 = arith.subf %114, %119 : vector<8x256xf32>
    %121 = arith.select %118, %120, %114 : vector<8x256xi1>, vector<8x256xf32>
    %cst_82 = arith.constant -1.000000e+00 : f32
    %122 = vector.broadcast %cst_82 : f32 to vector<8x256xf32>
    %123 = arith.select %116, %122, %121 : vector<8x256xi1>, vector<8x256xf32>
    %cst_83 = arith.constant 1.000000e+00 : f32
    %124 = vector.broadcast %cst_83 : f32 to vector<8x256xf32>
    %125 = arith.addf %114, %124 : vector<8x256xf32>
    %cst_84 = arith.constant 1.000000e+00 : f32
    %126 = vector.broadcast %cst_84 : f32 to vector<8x256xf32>
    %127 = arith.select %118, %125, %126 : vector<8x256xi1>, vector<8x256xf32>
    %128 = arith.select %116, %114, %127 : vector<8x256xi1>, vector<8x256xf32>
    %129 = arith.divf %123, %128 : vector<8x256xf32>
    %cst_85 = arith.constant 0.785398185 : f32
    %cst_86 = arith.constant 0.000000e+00 : f32
    %130 = vector.broadcast %cst_85 : f32 to vector<8x256xf32>
    %131 = vector.broadcast %cst_86 : f32 to vector<8x256xf32>
    %132 = arith.select %118, %130, %131 : vector<8x256xi1>, vector<8x256xf32>
    %cst_87 = arith.constant 1.57079637 : f32
    %133 = vector.broadcast %cst_87 : f32 to vector<8x256xf32>
    %134 = arith.select %116, %133, %132 : vector<8x256xi1>, vector<8x256xf32>
    %135 = arith.mulf %129, %129 : vector<8x256xf32>
    %cst_88 = arith.constant 0.0805374458 : f32
    %136 = vector.broadcast %cst_88 : f32 to vector<8x256xf32>
    %137 = arith.mulf %136, %135 : vector<8x256xf32>
    %cst_89 = arith.constant 0.138776854 : f32
    %138 = vector.broadcast %cst_89 : f32 to vector<8x256xf32>
    %139 = arith.subf %137, %138 : vector<8x256xf32>
    %140 = arith.mulf %139, %135 : vector<8x256xf32>
    %cst_90 = arith.constant 0.199777111 : f32
    %141 = vector.broadcast %cst_90 : f32 to vector<8x256xf32>
    %142 = arith.addf %140, %141 : vector<8x256xf32>
    %143 = arith.mulf %142, %135 : vector<8x256xf32>
    %cst_91 = arith.constant 0.333329499 : f32
    %144 = vector.broadcast %cst_91 : f32 to vector<8x256xf32>
    %145 = arith.subf %143, %144 : vector<8x256xf32>
    %146 = arith.addf %134, %129 : vector<8x256xf32>
    %147 = arith.mulf %129, %135 : vector<8x256xf32>
    %148 = arith.mulf %147, %145 : vector<8x256xf32>
    %149 = arith.addf %146, %148 : vector<8x256xf32>
    %150 = arith.mulf %113, %149 : vector<8x256xf32>
    %cst_92 = arith.constant 1.272000e+00 : f32
    %151 = vector.broadcast %cst_92 : f32 to vector<8x256xf32>
    %152 = arith.mulf %151, %150 : vector<8x256xf32>
    %cst_93 = arith.constant dense<0.000000e+00> : vector<256xf32>
    %153 = vector.multi_reduction <add>, %152, %cst_93 [0] : vector<8x256xf32> to vector<256xf32>
    %154 = vector.shape_cast %153 : vector<256xf32> to vector<1x256xf32>
    %cst_94 = arith.constant 2.000000e-01 : f32
    %155 = vector.broadcast %cst_94 : f32 to vector<1x256xf32>
    %156 = arith.mulf %154, %155 : vector<1x256xf32>
    %157 = vector.broadcast %156 : vector<1x256xf32> to vector<8x256xf32>
    %158 = arith.subf %152, %157 : vector<8x256xf32>
    %159 = math.exp %158 : vector<8x256xf32>
    %160 = arith.mulf %159, %2 : vector<8x256xf32>
    %161 = vector.extract_strided_slice %107 {offsets = [8, 0], sizes = [8, 256], strides = [1, 1]} : vector<16x256xf32> to vector<8x256xf32>
    %162 = arith.addf %160, %161 : vector<8x256xf32>
    %c0_95 = arith.constant 0 : index
    %c0_96 = arith.constant 0 : index
    %c0_97 = arith.constant 0 : index
    %163 = vector.load %arg8[%c0_95, %c0_96, %c0_97] : memref<8x16x16xf32, #tpu.memory_space<vmem>>, vector<1x16x16xf32>
    %164 = vector.shape_cast %163 : vector<1x16x16xf32> to vector<16x16xf32>
    %165 = tpu.concatenate %82, %162 in 0 : vector<8x256xf32>, vector<8x256xf32> -> vector<16x256xf32>
    %cst_98 = arith.constant dense<0.000000e+00> : vector<16x256xf32>
    %166 = tpu.matmul %164, %165, %cst_98 {dimension_numbers = #tpu.dot_dimension_numbers<[1], [0], [0], [1], [0, 0, 1, 1], [], []>} : vector<16x16xf32>, vector<16x256xf32>, vector<16x256xf32> -> vector<16x256xf32>
    %167 = vector.extract_strided_slice %166 {offsets = [0, 0], sizes = [8, 256], strides = [1, 1]} : vector<16x256xf32> to vector<8x256xf32>
    %168 = vector.extract_strided_slice %166 {offsets = [8, 0], sizes = [8, 256], strides = [1, 1]} : vector<16x256xf32> to vector<8x256xf32>
    %c1_99 = arith.constant 1 : index
    %c1_100 = arith.constant 1 : index
    %c0_101 = arith.constant 0 : index
    %c0_102 = arith.constant 0 : index
    %169 = vector.load %arg2[%c1_99, %c1_100, %c0_101, %c0_102] : memref<8x2x16x8xf32, #tpu.memory_space<vmem>>, vector<1x1x16x8xf32>
    %170 = vector.shape_cast %169 : vector<1x1x16x8xf32> to vector<16x8xf32>
    %c1_103 = arith.constant 1 : index
    %c1_104 = arith.constant 1 : index
    %c0_105 = arith.constant 0 : index
    %c0_106 = arith.constant 0 : index
    %171 = vector.load %arg3[%c1_103, %c1_104, %c0_105, %c0_106] : memref<8x2x16x1xf32, #tpu.memory_space<vmem>>, vector<1x1x16x1xf32>
    %172 = vector.shape_cast %171 : vector<1x1x16x1xf32> to vector<16x1xf32>
    %c1_107 = arith.constant 1 : index
    %c1_108 = arith.constant 1 : index
    %c0_109 = arith.constant 0 : index
    %c0_110 = arith.constant 0 : index
    %173 = vector.load %arg4[%c1_107, %c1_108, %c0_109, %c0_110] : memref<8x2x16x16xf32, #tpu.memory_space<vmem>>, vector<1x1x16x16xf32>
    %174 = vector.shape_cast %173 : vector<1x1x16x16xf32> to vector<16x16xf32>
    %c1_111 = arith.constant 1 : index
    %c1_112 = arith.constant 1 : index
    %c0_113 = arith.constant 0 : index
    %c0_114 = arith.constant 0 : index
    %175 = vector.load %arg5[%c1_111, %c1_112, %c0_113, %c0_114] : memref<8x2x16x1xf32, #tpu.memory_space<vmem>>, vector<1x1x16x1xf32>
    %176 = vector.shape_cast %175 : vector<1x1x16x1xf32> to vector<16x1xf32>
    %c1_115 = arith.constant 1 : index
    %c1_116 = arith.constant 1 : index
    %c0_117 = arith.constant 0 : index
    %c0_118 = arith.constant 0 : index
    %177 = vector.load %arg6[%c1_115, %c1_116, %c0_117, %c0_118] : memref<8x2x16x16xf32, #tpu.memory_space<vmem>>, vector<1x1x16x16xf32>
    %178 = vector.shape_cast %177 : vector<1x1x16x16xf32> to vector<16x16xf32>
    %c1_119 = arith.constant 1 : index
    %c1_120 = arith.constant 1 : index
    %c0_121 = arith.constant 0 : index
    %c0_122 = arith.constant 0 : index
    %179 = vector.load %arg7[%c1_119, %c1_120, %c0_121, %c0_122] : memref<8x2x16x1xf32, #tpu.memory_space<vmem>>, vector<1x1x16x1xf32>
    %180 = vector.shape_cast %179 : vector<1x1x16x1xf32> to vector<16x1xf32>
    %cst_123 = arith.constant dense<0.000000e+00> : vector<16x256xf32>
    %181 = tpu.matmul %170, %168, %cst_123 {dimension_numbers = #tpu.dot_dimension_numbers<[1], [0], [0], [1], [0, 0, 1, 1], [], []>} : vector<16x8xf32>, vector<8x256xf32>, vector<16x256xf32> -> vector<16x256xf32>
    %182 = vector.broadcast %172 : vector<16x1xf32> to vector<16x256xf32>
    %183 = arith.addf %181, %182 : vector<16x256xf32>
    %cst_124 = arith.constant 0.000000e+00 : f32
    %184 = vector.broadcast %cst_124 : f32 to vector<16x256xf32>
    %185 = arith.maximumf %183, %184 : vector<16x256xf32>
    %cst_125 = arith.constant dense<0.000000e+00> : vector<16x256xf32>
    %186 = tpu.matmul %174, %185, %cst_125 {dimension_numbers = #tpu.dot_dimension_numbers<[1], [0], [0], [1], [0, 0, 1, 1], [], []>} : vector<16x16xf32>, vector<16x256xf32>, vector<16x256xf32> -> vector<16x256xf32>
    %187 = vector.broadcast %176 : vector<16x1xf32> to vector<16x256xf32>
    %188 = arith.addf %186, %187 : vector<16x256xf32>
    %cst_126 = arith.constant 0.000000e+00 : f32
    %189 = vector.broadcast %cst_126 : f32 to vector<16x256xf32>
    %190 = arith.maximumf %188, %189 : vector<16x256xf32>
    %cst_127 = arith.constant dense<0.000000e+00> : vector<16x256xf32>
    %191 = tpu.matmul %178, %190, %cst_127 {dimension_numbers = #tpu.dot_dimension_numbers<[1], [0], [0], [1], [0, 0, 1, 1], [], []>} : vector<16x16xf32>, vector<16x256xf32>, vector<16x256xf32> -> vector<16x256xf32>
    %192 = vector.broadcast %180 : vector<16x1xf32> to vector<16x256xf32>
    %193 = arith.addf %191, %192 : vector<16x256xf32>
    %194 = vector.extract_strided_slice %193 {offsets = [0, 0], sizes = [8, 256], strides = [1, 1]} : vector<16x256xf32> to vector<8x256xf32>
    %cst_128 = arith.constant 0.000000e+00 : f32
    %195 = vector.broadcast %cst_128 : f32 to vector<8x256xf32>
    %196 = arith.cmpf olt, %194, %195 : vector<8x256xf32>
    %cst_129 = arith.constant -1.000000e+00 : f32
    %cst_130 = arith.constant 1.000000e+00 : f32
    %197 = vector.broadcast %cst_129 : f32 to vector<8x256xf32>
    %198 = vector.broadcast %cst_130 : f32 to vector<8x256xf32>
    %199 = arith.select %196, %197, %198 : vector<8x256xi1>, vector<8x256xf32>
    %200 = math.absf %194 : vector<8x256xf32>
    %cst_131 = arith.constant 2.41421366 : f32
    %201 = vector.broadcast %cst_131 : f32 to vector<8x256xf32>
    %202 = arith.cmpf ogt, %200, %201 : vector<8x256xf32>
    %cst_132 = arith.constant 0.414213568 : f32
    %203 = vector.broadcast %cst_132 : f32 to vector<8x256xf32>
    %204 = arith.cmpf ogt, %200, %203 : vector<8x256xf32>
    %cst_133 = arith.constant 1.000000e+00 : f32
    %205 = vector.broadcast %cst_133 : f32 to vector<8x256xf32>
    %206 = arith.subf %200, %205 : vector<8x256xf32>
    %207 = arith.select %204, %206, %200 : vector<8x256xi1>, vector<8x256xf32>
    %cst_134 = arith.constant -1.000000e+00 : f32
    %208 = vector.broadcast %cst_134 : f32 to vector<8x256xf32>
    %209 = arith.select %202, %208, %207 : vector<8x256xi1>, vector<8x256xf32>
    %cst_135 = arith.constant 1.000000e+00 : f32
    %210 = vector.broadcast %cst_135 : f32 to vector<8x256xf32>
    %211 = arith.addf %200, %210 : vector<8x256xf32>
    %cst_136 = arith.constant 1.000000e+00 : f32
    %212 = vector.broadcast %cst_136 : f32 to vector<8x256xf32>
    %213 = arith.select %204, %211, %212 : vector<8x256xi1>, vector<8x256xf32>
    %214 = arith.select %202, %200, %213 : vector<8x256xi1>, vector<8x256xf32>
    %215 = arith.divf %209, %214 : vector<8x256xf32>
    %cst_137 = arith.constant 0.785398185 : f32
    %cst_138 = arith.constant 0.000000e+00 : f32
    %216 = vector.broadcast %cst_137 : f32 to vector<8x256xf32>
    %217 = vector.broadcast %cst_138 : f32 to vector<8x256xf32>
    %218 = arith.select %204, %216, %217 : vector<8x256xi1>, vector<8x256xf32>
    %cst_139 = arith.constant 1.57079637 : f32
    %219 = vector.broadcast %cst_139 : f32 to vector<8x256xf32>
    %220 = arith.select %202, %219, %218 : vector<8x256xi1>, vector<8x256xf32>
    %221 = arith.mulf %215, %215 : vector<8x256xf32>
    %cst_140 = arith.constant 0.0805374458 : f32
    %222 = vector.broadcast %cst_140 : f32 to vector<8x256xf32>
    %223 = arith.mulf %222, %221 : vector<8x256xf32>
    %cst_141 = arith.constant 0.138776854 : f32
    %224 = vector.broadcast %cst_141 : f32 to vector<8x256xf32>
    %225 = arith.subf %223, %224 : vector<8x256xf32>
    %226 = arith.mulf %225, %221 : vector<8x256xf32>
    %cst_142 = arith.constant 0.199777111 : f32
    %227 = vector.broadcast %cst_142 : f32 to vector<8x256xf32>
    %228 = arith.addf %226, %227 : vector<8x256xf32>
    %229 = arith.mulf %228, %221 : vector<8x256xf32>
    %cst_143 = arith.constant 0.333329499 : f32
    %230 = vector.broadcast %cst_143 : f32 to vector<8x256xf32>
    %231 = arith.subf %229, %230 : vector<8x256xf32>
    %232 = arith.addf %220, %215 : vector<8x256xf32>
    %233 = arith.mulf %215, %221 : vector<8x256xf32>
    %234 = arith.mulf %233, %231 : vector<8x256xf32>
    %235 = arith.addf %232, %234 : vector<8x256xf32>
    %236 = arith.mulf %199, %235 : vector<8x256xf32>
    %cst_144 = arith.constant 1.272000e+00 : f32
    %237 = vector.broadcast %cst_144 : f32 to vector<8x256xf32>
    %238 = arith.mulf %237, %236 : vector<8x256xf32>
    %cst_145 = arith.constant dense<0.000000e+00> : vector<256xf32>
    %239 = vector.multi_reduction <add>, %238, %cst_145 [0] : vector<8x256xf32> to vector<256xf32>
    %240 = vector.shape_cast %239 : vector<256xf32> to vector<1x256xf32>
    %cst_146 = arith.constant 2.000000e-01 : f32
    %241 = vector.broadcast %cst_146 : f32 to vector<1x256xf32>
    %242 = arith.mulf %240, %241 : vector<1x256xf32>
    %243 = vector.broadcast %242 : vector<1x256xf32> to vector<8x256xf32>
    %244 = arith.subf %238, %243 : vector<8x256xf32>
    %245 = math.exp %244 : vector<8x256xf32>
    %246 = arith.mulf %245, %167 : vector<8x256xf32>
    %247 = vector.extract_strided_slice %193 {offsets = [8, 0], sizes = [8, 256], strides = [1, 1]} : vector<16x256xf32> to vector<8x256xf32>
    %248 = arith.addf %246, %247 : vector<8x256xf32>
    %c1_147 = arith.constant 1 : index
    %c0_148 = arith.constant 0 : index
    %c0_149 = arith.constant 0 : index
    %c0_150 = arith.constant 0 : index
    %249 = vector.load %arg2[%c1_147, %c0_148, %c0_149, %c0_150] : memref<8x2x16x8xf32, #tpu.memory_space<vmem>>, vector<1x1x16x8xf32>
    %250 = vector.shape_cast %249 : vector<1x1x16x8xf32> to vector<16x8xf32>
    %c1_151 = arith.constant 1 : index
    %c0_152 = arith.constant 0 : index
    %c0_153 = arith.constant 0 : index
    %c0_154 = arith.constant 0 : index
    %251 = vector.load %arg3[%c1_151, %c0_152, %c0_153, %c0_154] : memref<8x2x16x1xf32, #tpu.memory_space<vmem>>, vector<1x1x16x1xf32>
    %252 = vector.shape_cast %251 : vector<1x1x16x1xf32> to vector<16x1xf32>
    %c1_155 = arith.constant 1 : index
    %c0_156 = arith.constant 0 : index
    %c0_157 = arith.constant 0 : index
    %c0_158 = arith.constant 0 : index
    %253 = vector.load %arg4[%c1_155, %c0_156, %c0_157, %c0_158] : memref<8x2x16x16xf32, #tpu.memory_space<vmem>>, vector<1x1x16x16xf32>
    %254 = vector.shape_cast %253 : vector<1x1x16x16xf32> to vector<16x16xf32>
    %c1_159 = arith.constant 1 : index
    %c0_160 = arith.constant 0 : index
    %c0_161 = arith.constant 0 : index
    %c0_162 = arith.constant 0 : index
    %255 = vector.load %arg5[%c1_159, %c0_160, %c0_161, %c0_162] : memref<8x2x16x1xf32, #tpu.memory_space<vmem>>, vector<1x1x16x1xf32>
    %256 = vector.shape_cast %255 : vector<1x1x16x1xf32> to vector<16x1xf32>
    %c1_163 = arith.constant 1 : index
    %c0_164 = arith.constant 0 : index
    %c0_165 = arith.constant 0 : index
    %c0_166 = arith.constant 0 : index
    %257 = vector.load %arg6[%c1_163, %c0_164, %c0_165, %c0_166] : memref<8x2x16x16xf32, #tpu.memory_space<vmem>>, vector<1x1x16x16xf32>
    %258 = vector.shape_cast %257 : vector<1x1x16x16xf32> to vector<16x16xf32>
    %c1_167 = arith.constant 1 : index
    %c0_168 = arith.constant 0 : index
    %c0_169 = arith.constant 0 : index
    %c0_170 = arith.constant 0 : index
    %259 = vector.load %arg7[%c1_167, %c0_168, %c0_169, %c0_170] : memref<8x2x16x1xf32, #tpu.memory_space<vmem>>, vector<1x1x16x1xf32>
    %260 = vector.shape_cast %259 : vector<1x1x16x1xf32> to vector<16x1xf32>
    %cst_171 = arith.constant dense<0.000000e+00> : vector<16x256xf32>
    %261 = tpu.matmul %250, %248, %cst_171 {dimension_numbers = #tpu.dot_dimension_numbers<[1], [0], [0], [1], [0, 0, 1, 1], [], []>} : vector<16x8xf32>, vector<8x256xf32>, vector<16x256xf32> -> vector<16x256xf32>
    %262 = vector.broadcast %252 : vector<16x1xf32> to vector<16x256xf32>
    %263 = arith.addf %261, %262 : vector<16x256xf32>
    %cst_172 = arith.constant 0.000000e+00 : f32
    %264 = vector.broadcast %cst_172 : f32 to vector<16x256xf32>
    %265 = arith.maximumf %263, %264 : vector<16x256xf32>
    %cst_173 = arith.constant dense<0.000000e+00> : vector<16x256xf32>
    %266 = tpu.matmul %254, %265, %cst_173 {dimension_numbers = #tpu.dot_dimension_numbers<[1], [0], [0], [1], [0, 0, 1, 1], [], []>} : vector<16x16xf32>, vector<16x256xf32>, vector<16x256xf32> -> vector<16x256xf32>
    %267 = vector.broadcast %256 : vector<16x1xf32> to vector<16x256xf32>
    %268 = arith.addf %266, %267 : vector<16x256xf32>
    %cst_174 = arith.constant 0.000000e+00 : f32
    %269 = vector.broadcast %cst_174 : f32 to vector<16x256xf32>
    %270 = arith.maximumf %268, %269 : vector<16x256xf32>
    %cst_175 = arith.constant dense<0.000000e+00> : vector<16x256xf32>
    %271 = tpu.matmul %258, %270, %cst_175 {dimension_numbers = #tpu.dot_dimension_numbers<[1], [0], [0], [1], [0, 0, 1, 1], [], []>} : vector<16x16xf32>, vector<16x256xf32>, vector<16x256xf32> -> vector<16x256xf32>
    %272 = vector.broadcast %260 : vector<16x1xf32> to vector<16x256xf32>
    %273 = arith.addf %271, %272 : vector<16x256xf32>
    %274 = vector.extract_strided_slice %273 {offsets = [0, 0], sizes = [8, 256], strides = [1, 1]} : vector<16x256xf32> to vector<8x256xf32>
    %cst_176 = arith.constant 0.000000e+00 : f32
    %275 = vector.broadcast %cst_176 : f32 to vector<8x256xf32>
    %276 = arith.cmpf olt, %274, %275 : vector<8x256xf32>
    %cst_177 = arith.constant -1.000000e+00 : f32
    %cst_178 = arith.constant 1.000000e+00 : f32
    %277 = vector.broadcast %cst_177 : f32 to vector<8x256xf32>
    %278 = vector.broadcast %cst_178 : f32 to vector<8x256xf32>
    %279 = arith.select %276, %277, %278 : vector<8x256xi1>, vector<8x256xf32>
    %280 = math.absf %274 : vector<8x256xf32>
    %cst_179 = arith.constant 2.41421366 : f32
    %281 = vector.broadcast %cst_179 : f32 to vector<8x256xf32>
    %282 = arith.cmpf ogt, %280, %281 : vector<8x256xf32>
    %cst_180 = arith.constant 0.414213568 : f32
    %283 = vector.broadcast %cst_180 : f32 to vector<8x256xf32>
    %284 = arith.cmpf ogt, %280, %283 : vector<8x256xf32>
    %cst_181 = arith.constant 1.000000e+00 : f32
    %285 = vector.broadcast %cst_181 : f32 to vector<8x256xf32>
    %286 = arith.subf %280, %285 : vector<8x256xf32>
    %287 = arith.select %284, %286, %280 : vector<8x256xi1>, vector<8x256xf32>
    %cst_182 = arith.constant -1.000000e+00 : f32
    %288 = vector.broadcast %cst_182 : f32 to vector<8x256xf32>
    %289 = arith.select %282, %288, %287 : vector<8x256xi1>, vector<8x256xf32>
    %cst_183 = arith.constant 1.000000e+00 : f32
    %290 = vector.broadcast %cst_183 : f32 to vector<8x256xf32>
    %291 = arith.addf %280, %290 : vector<8x256xf32>
    %cst_184 = arith.constant 1.000000e+00 : f32
    %292 = vector.broadcast %cst_184 : f32 to vector<8x256xf32>
    %293 = arith.select %284, %291, %292 : vector<8x256xi1>, vector<8x256xf32>
    %294 = arith.select %282, %280, %293 : vector<8x256xi1>, vector<8x256xf32>
    %295 = arith.divf %289, %294 : vector<8x256xf32>
    %cst_185 = arith.constant 0.785398185 : f32
    %cst_186 = arith.constant 0.000000e+00 : f32
    %296 = vector.broadcast %cst_185 : f32 to vector<8x256xf32>
    %297 = vector.broadcast %cst_186 : f32 to vector<8x256xf32>
    %298 = arith.select %284, %296, %297 : vector<8x256xi1>, vector<8x256xf32>
    %cst_187 = arith.constant 1.57079637 : f32
    %299 = vector.broadcast %cst_187 : f32 to vector<8x256xf32>
    %300 = arith.select %282, %299, %298 : vector<8x256xi1>, vector<8x256xf32>
    %301 = arith.mulf %295, %295 : vector<8x256xf32>
    %cst_188 = arith.constant 0.0805374458 : f32
    %302 = vector.broadcast %cst_188 : f32 to vector<8x256xf32>
    %303 = arith.mulf %302, %301 : vector<8x256xf32>
    %cst_189 = arith.constant 0.138776854 : f32
    %304 = vector.broadcast %cst_189 : f32 to vector<8x256xf32>
    %305 = arith.subf %303, %304 : vector<8x256xf32>
    %306 = arith.mulf %305, %301 : vector<8x256xf32>
    %cst_190 = arith.constant 0.199777111 : f32
    %307 = vector.broadcast %cst_190 : f32 to vector<8x256xf32>
    %308 = arith.addf %306, %307 : vector<8x256xf32>
    %309 = arith.mulf %308, %301 : vector<8x256xf32>
    %cst_191 = arith.constant 0.333329499 : f32
    %310 = vector.broadcast %cst_191 : f32 to vector<8x256xf32>
    %311 = arith.subf %309, %310 : vector<8x256xf32>
    %312 = arith.addf %300, %295 : vector<8x256xf32>
    %313 = arith.mulf %295, %301 : vector<8x256xf32>
    %314 = arith.mulf %313, %311 : vector<8x256xf32>
    %315 = arith.addf %312, %314 : vector<8x256xf32>
    %316 = arith.mulf %279, %315 : vector<8x256xf32>
    %cst_192 = arith.constant 1.272000e+00 : f32
    %317 = vector.broadcast %cst_192 : f32 to vector<8x256xf32>
    %318 = arith.mulf %317, %316 : vector<8x256xf32>
    %cst_193 = arith.constant dense<0.000000e+00> : vector<256xf32>
    %319 = vector.multi_reduction <add>, %318, %cst_193 [0] : vector<8x256xf32> to vector<256xf32>
    %320 = vector.shape_cast %319 : vector<256xf32> to vector<1x256xf32>
    %cst_194 = arith.constant 2.000000e-01 : f32
    %321 = vector.broadcast %cst_194 : f32 to vector<1x256xf32>
    %322 = arith.mulf %320, %321 : vector<1x256xf32>
    %323 = vector.broadcast %322 : vector<1x256xf32> to vector<8x256xf32>
    %324 = arith.subf %318, %323 : vector<8x256xf32>
    %325 = math.exp %324 : vector<8x256xf32>
    %326 = arith.mulf %325, %168 : vector<8x256xf32>
    %327 = vector.extract_strided_slice %273 {offsets = [8, 0], sizes = [8, 256], strides = [1, 1]} : vector<16x256xf32> to vector<8x256xf32>
    %328 = arith.addf %326, %327 : vector<8x256xf32>
    %c1_195 = arith.constant 1 : index
    %c0_196 = arith.constant 0 : index
    %c0_197 = arith.constant 0 : index
    %329 = vector.load %arg8[%c1_195, %c0_196, %c0_197] : memref<8x16x16xf32, #tpu.memory_space<vmem>>, vector<1x16x16xf32>
    %330 = vector.shape_cast %329 : vector<1x16x16xf32> to vector<16x16xf32>
    %331 = tpu.concatenate %248, %328 in 0 : vector<8x256xf32>, vector<8x256xf32> -> vector<16x256xf32>
    %cst_198 = arith.constant dense<0.000000e+00> : vector<16x256xf32>
    %332 = tpu.matmul %330, %331, %cst_198 {dimension_numbers = #tpu.dot_dimension_numbers<[1], [0], [0], [1], [0, 0, 1, 1], [], []>} : vector<16x16xf32>, vector<16x256xf32>, vector<16x256xf32> -> vector<16x256xf32>
    %333 = vector.extract_strided_slice %332 {offsets = [0, 0], sizes = [8, 256], strides = [1, 1]} : vector<16x256xf32> to vector<8x256xf32>
    %334 = vector.extract_strided_slice %332 {offsets = [8, 0], sizes = [8, 256], strides = [1, 1]} : vector<16x256xf32> to vector<8x256xf32>
    %c2 = arith.constant 2 : index
    %c1_199 = arith.constant 1 : index
    %c0_200 = arith.constant 0 : index
    %c0_201 = arith.constant 0 : index
    %335 = vector.load %arg2[%c2, %c1_199, %c0_200, %c0_201] : memref<8x2x16x8xf32, #tpu.memory_space<vmem>>, vector<1x1x16x8xf32>
    %336 = vector.shape_cast %335 : vector<1x1x16x8xf32> to vector<16x8xf32>
    %c2_202 = arith.constant 2 : index
    %c1_203 = arith.constant 1 : index
    %c0_204 = arith.constant 0 : index
    %c0_205 = arith.constant 0 : index
    %337 = vector.load %arg3[%c2_202, %c1_203, %c0_204, %c0_205] : memref<8x2x16x1xf32, #tpu.memory_space<vmem>>, vector<1x1x16x1xf32>
    %338 = vector.shape_cast %337 : vector<1x1x16x1xf32> to vector<16x1xf32>
    %c2_206 = arith.constant 2 : index
    %c1_207 = arith.constant 1 : index
    %c0_208 = arith.constant 0 : index
    %c0_209 = arith.constant 0 : index
    %339 = vector.load %arg4[%c2_206, %c1_207, %c0_208, %c0_209] : memref<8x2x16x16xf32, #tpu.memory_space<vmem>>, vector<1x1x16x16xf32>
    %340 = vector.shape_cast %339 : vector<1x1x16x16xf32> to vector<16x16xf32>
    %c2_210 = arith.constant 2 : index
    %c1_211 = arith.constant 1 : index
    %c0_212 = arith.constant 0 : index
    %c0_213 = arith.constant 0 : index
    %341 = vector.load %arg5[%c2_210, %c1_211, %c0_212, %c0_213] : memref<8x2x16x1xf32, #tpu.memory_space<vmem>>, vector<1x1x16x1xf32>
    %342 = vector.shape_cast %341 : vector<1x1x16x1xf32> to vector<16x1xf32>
    %c2_214 = arith.constant 2 : index
    %c1_215 = arith.constant 1 : index
    %c0_216 = arith.constant 0 : index
    %c0_217 = arith.constant 0 : index
    %343 = vector.load %arg6[%c2_214, %c1_215, %c0_216, %c0_217] : memref<8x2x16x16xf32, #tpu.memory_space<vmem>>, vector<1x1x16x16xf32>
    %344 = vector.shape_cast %343 : vector<1x1x16x16xf32> to vector<16x16xf32>
    %c2_218 = arith.constant 2 : index
    %c1_219 = arith.constant 1 : index
    %c0_220 = arith.constant 0 : index
    %c0_221 = arith.constant 0 : index
    %345 = vector.load %arg7[%c2_218, %c1_219, %c0_220, %c0_221] : memref<8x2x16x1xf32, #tpu.memory_space<vmem>>, vector<1x1x16x1xf32>
    %346 = vector.shape_cast %345 : vector<1x1x16x1xf32> to vector<16x1xf32>
    %cst_222 = arith.constant dense<0.000000e+00> : vector<16x256xf32>
    %347 = tpu.matmul %336, %334, %cst_222 {dimension_numbers = #tpu.dot_dimension_numbers<[1], [0], [0], [1], [0, 0, 1, 1], [], []>} : vector<16x8xf32>, vector<8x256xf32>, vector<16x256xf32> -> vector<16x256xf32>
    %348 = vector.broadcast %338 : vector<16x1xf32> to vector<16x256xf32>
    %349 = arith.addf %347, %348 : vector<16x256xf32>
    %cst_223 = arith.constant 0.000000e+00 : f32
    %350 = vector.broadcast %cst_223 : f32 to vector<16x256xf32>
    %351 = arith.maximumf %349, %350 : vector<16x256xf32>
    %cst_224 = arith.constant dense<0.000000e+00> : vector<16x256xf32>
    %352 = tpu.matmul %340, %351, %cst_224 {dimension_numbers = #tpu.dot_dimension_numbers<[1], [0], [0], [1], [0, 0, 1, 1], [], []>} : vector<16x16xf32>, vector<16x256xf32>, vector<16x256xf32> -> vector<16x256xf32>
    %353 = vector.broadcast %342 : vector<16x1xf32> to vector<16x256xf32>
    %354 = arith.addf %352, %353 : vector<16x256xf32>
    %cst_225 = arith.constant 0.000000e+00 : f32
    %355 = vector.broadcast %cst_225 : f32 to vector<16x256xf32>
    %356 = arith.maximumf %354, %355 : vector<16x256xf32>
    %cst_226 = arith.constant dense<0.000000e+00> : vector<16x256xf32>
    %357 = tpu.matmul %344, %356, %cst_226 {dimension_numbers = #tpu.dot_dimension_numbers<[1], [0], [0], [1], [0, 0, 1, 1], [], []>} : vector<16x16xf32>, vector<16x256xf32>, vector<16x256xf32> -> vector<16x256xf32>
    %358 = vector.broadcast %346 : vector<16x1xf32> to vector<16x256xf32>
    %359 = arith.addf %357, %358 : vector<16x256xf32>
    %360 = vector.extract_strided_slice %359 {offsets = [0, 0], sizes = [8, 256], strides = [1, 1]} : vector<16x256xf32> to vector<8x256xf32>
    %cst_227 = arith.constant 0.000000e+00 : f32
    %361 = vector.broadcast %cst_227 : f32 to vector<8x256xf32>
    %362 = arith.cmpf olt, %360, %361 : vector<8x256xf32>
    %cst_228 = arith.constant -1.000000e+00 : f32
    %cst_229 = arith.constant 1.000000e+00 : f32
    %363 = vector.broadcast %cst_228 : f32 to vector<8x256xf32>
    %364 = vector.broadcast %cst_229 : f32 to vector<8x256xf32>
    %365 = arith.select %362, %363, %364 : vector<8x256xi1>, vector<8x256xf32>
    %366 = math.absf %360 : vector<8x256xf32>
    %cst_230 = arith.constant 2.41421366 : f32
    %367 = vector.broadcast %cst_230 : f32 to vector<8x256xf32>
    %368 = arith.cmpf ogt, %366, %367 : vector<8x256xf32>
    %cst_231 = arith.constant 0.414213568 : f32
    %369 = vector.broadcast %cst_231 : f32 to vector<8x256xf32>
    %370 = arith.cmpf ogt, %366, %369 : vector<8x256xf32>
    %cst_232 = arith.constant 1.000000e+00 : f32
    %371 = vector.broadcast %cst_232 : f32 to vector<8x256xf32>
    %372 = arith.subf %366, %371 : vector<8x256xf32>
    %373 = arith.select %370, %372, %366 : vector<8x256xi1>, vector<8x256xf32>
    %cst_233 = arith.constant -1.000000e+00 : f32
    %374 = vector.broadcast %cst_233 : f32 to vector<8x256xf32>
    %375 = arith.select %368, %374, %373 : vector<8x256xi1>, vector<8x256xf32>
    %cst_234 = arith.constant 1.000000e+00 : f32
    %376 = vector.broadcast %cst_234 : f32 to vector<8x256xf32>
    %377 = arith.addf %366, %376 : vector<8x256xf32>
    %cst_235 = arith.constant 1.000000e+00 : f32
    %378 = vector.broadcast %cst_235 : f32 to vector<8x256xf32>
    %379 = arith.select %370, %377, %378 : vector<8x256xi1>, vector<8x256xf32>
    %380 = arith.select %368, %366, %379 : vector<8x256xi1>, vector<8x256xf32>
    %381 = arith.divf %375, %380 : vector<8x256xf32>
    %cst_236 = arith.constant 0.785398185 : f32
    %cst_237 = arith.constant 0.000000e+00 : f32
    %382 = vector.broadcast %cst_236 : f32 to vector<8x256xf32>
    %383 = vector.broadcast %cst_237 : f32 to vector<8x256xf32>
    %384 = arith.select %370, %382, %383 : vector<8x256xi1>, vector<8x256xf32>
    %cst_238 = arith.constant 1.57079637 : f32
    %385 = vector.broadcast %cst_238 : f32 to vector<8x256xf32>
    %386 = arith.select %368, %385, %384 : vector<8x256xi1>, vector<8x256xf32>
    %387 = arith.mulf %381, %381 : vector<8x256xf32>
    %cst_239 = arith.constant 0.0805374458 : f32
    %388 = vector.broadcast %cst_239 : f32 to vector<8x256xf32>
    %389 = arith.mulf %388, %387 : vector<8x256xf32>
    %cst_240 = arith.constant 0.138776854 : f32
    %390 = vector.broadcast %cst_240 : f32 to vector<8x256xf32>
    %391 = arith.subf %389, %390 : vector<8x256xf32>
    %392 = arith.mulf %391, %387 : vector<8x256xf32>
    %cst_241 = arith.constant 0.199777111 : f32
    %393 = vector.broadcast %cst_241 : f32 to vector<8x256xf32>
    %394 = arith.addf %392, %393 : vector<8x256xf32>
    %395 = arith.mulf %394, %387 : vector<8x256xf32>
    %cst_242 = arith.constant 0.333329499 : f32
    %396 = vector.broadcast %cst_242 : f32 to vector<8x256xf32>
    %397 = arith.subf %395, %396 : vector<8x256xf32>
    %398 = arith.addf %386, %381 : vector<8x256xf32>
    %399 = arith.mulf %381, %387 : vector<8x256xf32>
    %400 = arith.mulf %399, %397 : vector<8x256xf32>
    %401 = arith.addf %398, %400 : vector<8x256xf32>
    %402 = arith.mulf %365, %401 : vector<8x256xf32>
    %cst_243 = arith.constant 1.272000e+00 : f32
    %403 = vector.broadcast %cst_243 : f32 to vector<8x256xf32>
    %404 = arith.mulf %403, %402 : vector<8x256xf32>
    %cst_244 = arith.constant dense<0.000000e+00> : vector<256xf32>
    %405 = vector.multi_reduction <add>, %404, %cst_244 [0] : vector<8x256xf32> to vector<256xf32>
    %406 = vector.shape_cast %405 : vector<256xf32> to vector<1x256xf32>
    %cst_245 = arith.constant 2.000000e-01 : f32
    %407 = vector.broadcast %cst_245 : f32 to vector<1x256xf32>
    %408 = arith.mulf %406, %407 : vector<1x256xf32>
    %409 = vector.broadcast %408 : vector<1x256xf32> to vector<8x256xf32>
    %410 = arith.subf %404, %409 : vector<8x256xf32>
    %411 = math.exp %410 : vector<8x256xf32>
    %412 = arith.mulf %411, %333 : vector<8x256xf32>
    %413 = vector.extract_strided_slice %359 {offsets = [8, 0], sizes = [8, 256], strides = [1, 1]} : vector<16x256xf32> to vector<8x256xf32>
    %414 = arith.addf %412, %413 : vector<8x256xf32>
    %c2_246 = arith.constant 2 : index
    %c0_247 = arith.constant 0 : index
    %c0_248 = arith.constant 0 : index
    %c0_249 = arith.constant 0 : index
    %415 = vector.load %arg2[%c2_246, %c0_247, %c0_248, %c0_249] : memref<8x2x16x8xf32, #tpu.memory_space<vmem>>, vector<1x1x16x8xf32>
    %416 = vector.shape_cast %415 : vector<1x1x16x8xf32> to vector<16x8xf32>
    %c2_250 = arith.constant 2 : index
    %c0_251 = arith.constant 0 : index
    %c0_252 = arith.constant 0 : index
    %c0_253 = arith.constant 0 : index
    %417 = vector.load %arg3[%c2_250, %c0_251, %c0_252, %c0_253] : memref<8x2x16x1xf32, #tpu.memory_space<vmem>>, vector<1x1x16x1xf32>
    %418 = vector.shape_cast %417 : vector<1x1x16x1xf32> to vector<16x1xf32>
    %c2_254 = arith.constant 2 : index
    %c0_255 = arith.constant 0 : index
    %c0_256 = arith.constant 0 : index
    %c0_257 = arith.constant 0 : index
    %419 = vector.load %arg4[%c2_254, %c0_255, %c0_256, %c0_257] : memref<8x2x16x16xf32, #tpu.memory_space<vmem>>, vector<1x1x16x16xf32>
    %420 = vector.shape_cast %419 : vector<1x1x16x16xf32> to vector<16x16xf32>
    %c2_258 = arith.constant 2 : index
    %c0_259 = arith.constant 0 : index
    %c0_260 = arith.constant 0 : index
    %c0_261 = arith.constant 0 : index
    %421 = vector.load %arg5[%c2_258, %c0_259, %c0_260, %c0_261] : memref<8x2x16x1xf32, #tpu.memory_space<vmem>>, vector<1x1x16x1xf32>
    %422 = vector.shape_cast %421 : vector<1x1x16x1xf32> to vector<16x1xf32>
    %c2_262 = arith.constant 2 : index
    %c0_263 = arith.constant 0 : index
    %c0_264 = arith.constant 0 : index
    %c0_265 = arith.constant 0 : index
    %423 = vector.load %arg6[%c2_262, %c0_263, %c0_264, %c0_265] : memref<8x2x16x16xf32, #tpu.memory_space<vmem>>, vector<1x1x16x16xf32>
    %424 = vector.shape_cast %423 : vector<1x1x16x16xf32> to vector<16x16xf32>
    %c2_266 = arith.constant 2 : index
    %c0_267 = arith.constant 0 : index
    %c0_268 = arith.constant 0 : index
    %c0_269 = arith.constant 0 : index
    %425 = vector.load %arg7[%c2_266, %c0_267, %c0_268, %c0_269] : memref<8x2x16x1xf32, #tpu.memory_space<vmem>>, vector<1x1x16x1xf32>
    %426 = vector.shape_cast %425 : vector<1x1x16x1xf32> to vector<16x1xf32>
    %cst_270 = arith.constant dense<0.000000e+00> : vector<16x256xf32>
    %427 = tpu.matmul %416, %414, %cst_270 {dimension_numbers = #tpu.dot_dimension_numbers<[1], [0], [0], [1], [0, 0, 1, 1], [], []>} : vector<16x8xf32>, vector<8x256xf32>, vector<16x256xf32> -> vector<16x256xf32>
    %428 = vector.broadcast %418 : vector<16x1xf32> to vector<16x256xf32>
    %429 = arith.addf %427, %428 : vector<16x256xf32>
    %cst_271 = arith.constant 0.000000e+00 : f32
    %430 = vector.broadcast %cst_271 : f32 to vector<16x256xf32>
    %431 = arith.maximumf %429, %430 : vector<16x256xf32>
    %cst_272 = arith.constant dense<0.000000e+00> : vector<16x256xf32>
    %432 = tpu.matmul %420, %431, %cst_272 {dimension_numbers = #tpu.dot_dimension_numbers<[1], [0], [0], [1], [0, 0, 1, 1], [], []>} : vector<16x16xf32>, vector<16x256xf32>, vector<16x256xf32> -> vector<16x256xf32>
    %433 = vector.broadcast %422 : vector<16x1xf32> to vector<16x256xf32>
    %434 = arith.addf %432, %433 : vector<16x256xf32>
    %cst_273 = arith.constant 0.000000e+00 : f32
    %435 = vector.broadcast %cst_273 : f32 to vector<16x256xf32>
    %436 = arith.maximumf %434, %435 : vector<16x256xf32>
    %cst_274 = arith.constant dense<0.000000e+00> : vector<16x256xf32>
    %437 = tpu.matmul %424, %436, %cst_274 {dimension_numbers = #tpu.dot_dimension_numbers<[1], [0], [0], [1], [0, 0, 1, 1], [], []>} : vector<16x16xf32>, vector<16x256xf32>, vector<16x256xf32> -> vector<16x256xf32>
    %438 = vector.broadcast %426 : vector<16x1xf32> to vector<16x256xf32>
    %439 = arith.addf %437, %438 : vector<16x256xf32>
    %440 = vector.extract_strided_slice %439 {offsets = [0, 0], sizes = [8, 256], strides = [1, 1]} : vector<16x256xf32> to vector<8x256xf32>
    %cst_275 = arith.constant 0.000000e+00 : f32
    %441 = vector.broadcast %cst_275 : f32 to vector<8x256xf32>
    %442 = arith.cmpf olt, %440, %441 : vector<8x256xf32>
    %cst_276 = arith.constant -1.000000e+00 : f32
    %cst_277 = arith.constant 1.000000e+00 : f32
    %443 = vector.broadcast %cst_276 : f32 to vector<8x256xf32>
    %444 = vector.broadcast %cst_277 : f32 to vector<8x256xf32>
    %445 = arith.select %442, %443, %444 : vector<8x256xi1>, vector<8x256xf32>
    %446 = math.absf %440 : vector<8x256xf32>
    %cst_278 = arith.constant 2.41421366 : f32
    %447 = vector.broadcast %cst_278 : f32 to vector<8x256xf32>
    %448 = arith.cmpf ogt, %446, %447 : vector<8x256xf32>
    %cst_279 = arith.constant 0.414213568 : f32
    %449 = vector.broadcast %cst_279 : f32 to vector<8x256xf32>
    %450 = arith.cmpf ogt, %446, %449 : vector<8x256xf32>
    %cst_280 = arith.constant 1.000000e+00 : f32
    %451 = vector.broadcast %cst_280 : f32 to vector<8x256xf32>
    %452 = arith.subf %446, %451 : vector<8x256xf32>
    %453 = arith.select %450, %452, %446 : vector<8x256xi1>, vector<8x256xf32>
    %cst_281 = arith.constant -1.000000e+00 : f32
    %454 = vector.broadcast %cst_281 : f32 to vector<8x256xf32>
    %455 = arith.select %448, %454, %453 : vector<8x256xi1>, vector<8x256xf32>
    %cst_282 = arith.constant 1.000000e+00 : f32
    %456 = vector.broadcast %cst_282 : f32 to vector<8x256xf32>
    %457 = arith.addf %446, %456 : vector<8x256xf32>
    %cst_283 = arith.constant 1.000000e+00 : f32
    %458 = vector.broadcast %cst_283 : f32 to vector<8x256xf32>
    %459 = arith.select %450, %457, %458 : vector<8x256xi1>, vector<8x256xf32>
    %460 = arith.select %448, %446, %459 : vector<8x256xi1>, vector<8x256xf32>
    %461 = arith.divf %455, %460 : vector<8x256xf32>
    %cst_284 = arith.constant 0.785398185 : f32
    %cst_285 = arith.constant 0.000000e+00 : f32
    %462 = vector.broadcast %cst_284 : f32 to vector<8x256xf32>
    %463 = vector.broadcast %cst_285 : f32 to vector<8x256xf32>
    %464 = arith.select %450, %462, %463 : vector<8x256xi1>, vector<8x256xf32>
    %cst_286 = arith.constant 1.57079637 : f32
    %465 = vector.broadcast %cst_286 : f32 to vector<8x256xf32>
    %466 = arith.select %448, %465, %464 : vector<8x256xi1>, vector<8x256xf32>
    %467 = arith.mulf %461, %461 : vector<8x256xf32>
    %cst_287 = arith.constant 0.0805374458 : f32
    %468 = vector.broadcast %cst_287 : f32 to vector<8x256xf32>
    %469 = arith.mulf %468, %467 : vector<8x256xf32>
    %cst_288 = arith.constant 0.138776854 : f32
    %470 = vector.broadcast %cst_288 : f32 to vector<8x256xf32>
    %471 = arith.subf %469, %470 : vector<8x256xf32>
    %472 = arith.mulf %471, %467 : vector<8x256xf32>
    %cst_289 = arith.constant 0.199777111 : f32
    %473 = vector.broadcast %cst_289 : f32 to vector<8x256xf32>
    %474 = arith.addf %472, %473 : vector<8x256xf32>
    %475 = arith.mulf %474, %467 : vector<8x256xf32>
    %cst_290 = arith.constant 0.333329499 : f32
    %476 = vector.broadcast %cst_290 : f32 to vector<8x256xf32>
    %477 = arith.subf %475, %476 : vector<8x256xf32>
    %478 = arith.addf %466, %461 : vector<8x256xf32>
    %479 = arith.mulf %461, %467 : vector<8x256xf32>
    %480 = arith.mulf %479, %477 : vector<8x256xf32>
    %481 = arith.addf %478, %480 : vector<8x256xf32>
    %482 = arith.mulf %445, %481 : vector<8x256xf32>
    %cst_291 = arith.constant 1.272000e+00 : f32
    %483 = vector.broadcast %cst_291 : f32 to vector<8x256xf32>
    %484 = arith.mulf %483, %482 : vector<8x256xf32>
    %cst_292 = arith.constant dense<0.000000e+00> : vector<256xf32>
    %485 = vector.multi_reduction <add>, %484, %cst_292 [0] : vector<8x256xf32> to vector<256xf32>
    %486 = vector.shape_cast %485 : vector<256xf32> to vector<1x256xf32>
    %cst_293 = arith.constant 2.000000e-01 : f32
    %487 = vector.broadcast %cst_293 : f32 to vector<1x256xf32>
    %488 = arith.mulf %486, %487 : vector<1x256xf32>
    %489 = vector.broadcast %488 : vector<1x256xf32> to vector<8x256xf32>
    %490 = arith.subf %484, %489 : vector<8x256xf32>
    %491 = math.exp %490 : vector<8x256xf32>
    %492 = arith.mulf %491, %334 : vector<8x256xf32>
    %493 = vector.extract_strided_slice %439 {offsets = [8, 0], sizes = [8, 256], strides = [1, 1]} : vector<16x256xf32> to vector<8x256xf32>
    %494 = arith.addf %492, %493 : vector<8x256xf32>
    %c2_294 = arith.constant 2 : index
    %c0_295 = arith.constant 0 : index
    %c0_296 = arith.constant 0 : index
    %495 = vector.load %arg8[%c2_294, %c0_295, %c0_296] : memref<8x16x16xf32, #tpu.memory_space<vmem>>, vector<1x16x16xf32>
    %496 = vector.shape_cast %495 : vector<1x16x16xf32> to vector<16x16xf32>
    %497 = tpu.concatenate %414, %494 in 0 : vector<8x256xf32>, vector<8x256xf32> -> vector<16x256xf32>
    %cst_297 = arith.constant dense<0.000000e+00> : vector<16x256xf32>
    %498 = tpu.matmul %496, %497, %cst_297 {dimension_numbers = #tpu.dot_dimension_numbers<[1], [0], [0], [1], [0, 0, 1, 1], [], []>} : vector<16x16xf32>, vector<16x256xf32>, vector<16x256xf32> -> vector<16x256xf32>
    %499 = vector.extract_strided_slice %498 {offsets = [0, 0], sizes = [8, 256], strides = [1, 1]} : vector<16x256xf32> to vector<8x256xf32>
    %500 = vector.extract_strided_slice %498 {offsets = [8, 0], sizes = [8, 256], strides = [1, 1]} : vector<16x256xf32> to vector<8x256xf32>
    %c3 = arith.constant 3 : index
    %c1_298 = arith.constant 1 : index
    %c0_299 = arith.constant 0 : index
    %c0_300 = arith.constant 0 : index
    %501 = vector.load %arg2[%c3, %c1_298, %c0_299, %c0_300] : memref<8x2x16x8xf32, #tpu.memory_space<vmem>>, vector<1x1x16x8xf32>
    %502 = vector.shape_cast %501 : vector<1x1x16x8xf32> to vector<16x8xf32>
    %c3_301 = arith.constant 3 : index
    %c1_302 = arith.constant 1 : index
    %c0_303 = arith.constant 0 : index
    %c0_304 = arith.constant 0 : index
    %503 = vector.load %arg3[%c3_301, %c1_302, %c0_303, %c0_304] : memref<8x2x16x1xf32, #tpu.memory_space<vmem>>, vector<1x1x16x1xf32>
    %504 = vector.shape_cast %503 : vector<1x1x16x1xf32> to vector<16x1xf32>
    %c3_305 = arith.constant 3 : index
    %c1_306 = arith.constant 1 : index
    %c0_307 = arith.constant 0 : index
    %c0_308 = arith.constant 0 : index
    %505 = vector.load %arg4[%c3_305, %c1_306, %c0_307, %c0_308] : memref<8x2x16x16xf32, #tpu.memory_space<vmem>>, vector<1x1x16x16xf32>
    %506 = vector.shape_cast %505 : vector<1x1x16x16xf32> to vector<16x16xf32>
    %c3_309 = arith.constant 3 : index
    %c1_310 = arith.constant 1 : index
    %c0_311 = arith.constant 0 : index
    %c0_312 = arith.constant 0 : index
    %507 = vector.load %arg5[%c3_309, %c1_310, %c0_311, %c0_312] : memref<8x2x16x1xf32, #tpu.memory_space<vmem>>, vector<1x1x16x1xf32>
    %508 = vector.shape_cast %507 : vector<1x1x16x1xf32> to vector<16x1xf32>
    %c3_313 = arith.constant 3 : index
    %c1_314 = arith.constant 1 : index
    %c0_315 = arith.constant 0 : index
    %c0_316 = arith.constant 0 : index
    %509 = vector.load %arg6[%c3_313, %c1_314, %c0_315, %c0_316] : memref<8x2x16x16xf32, #tpu.memory_space<vmem>>, vector<1x1x16x16xf32>
    %510 = vector.shape_cast %509 : vector<1x1x16x16xf32> to vector<16x16xf32>
    %c3_317 = arith.constant 3 : index
    %c1_318 = arith.constant 1 : index
    %c0_319 = arith.constant 0 : index
    %c0_320 = arith.constant 0 : index
    %511 = vector.load %arg7[%c3_317, %c1_318, %c0_319, %c0_320] : memref<8x2x16x1xf32, #tpu.memory_space<vmem>>, vector<1x1x16x1xf32>
    %512 = vector.shape_cast %511 : vector<1x1x16x1xf32> to vector<16x1xf32>
    %cst_321 = arith.constant dense<0.000000e+00> : vector<16x256xf32>
    %513 = tpu.matmul %502, %500, %cst_321 {dimension_numbers = #tpu.dot_dimension_numbers<[1], [0], [0], [1], [0, 0, 1, 1], [], []>} : vector<16x8xf32>, vector<8x256xf32>, vector<16x256xf32> -> vector<16x256xf32>
    %514 = vector.broadcast %504 : vector<16x1xf32> to vector<16x256xf32>
    %515 = arith.addf %513, %514 : vector<16x256xf32>
    %cst_322 = arith.constant 0.000000e+00 : f32
    %516 = vector.broadcast %cst_322 : f32 to vector<16x256xf32>
    %517 = arith.maximumf %515, %516 : vector<16x256xf32>
    %cst_323 = arith.constant dense<0.000000e+00> : vector<16x256xf32>
    %518 = tpu.matmul %506, %517, %cst_323 {dimension_numbers = #tpu.dot_dimension_numbers<[1], [0], [0], [1], [0, 0, 1, 1], [], []>} : vector<16x16xf32>, vector<16x256xf32>, vector<16x256xf32> -> vector<16x256xf32>
    %519 = vector.broadcast %508 : vector<16x1xf32> to vector<16x256xf32>
    %520 = arith.addf %518, %519 : vector<16x256xf32>
    %cst_324 = arith.constant 0.000000e+00 : f32
    %521 = vector.broadcast %cst_324 : f32 to vector<16x256xf32>
    %522 = arith.maximumf %520, %521 : vector<16x256xf32>
    %cst_325 = arith.constant dense<0.000000e+00> : vector<16x256xf32>
    %523 = tpu.matmul %510, %522, %cst_325 {dimension_numbers = #tpu.dot_dimension_numbers<[1], [0], [0], [1], [0, 0, 1, 1], [], []>} : vector<16x16xf32>, vector<16x256xf32>, vector<16x256xf32> -> vector<16x256xf32>
    %524 = vector.broadcast %512 : vector<16x1xf32> to vector<16x256xf32>
    %525 = arith.addf %523, %524 : vector<16x256xf32>
    %526 = vector.extract_strided_slice %525 {offsets = [0, 0], sizes = [8, 256], strides = [1, 1]} : vector<16x256xf32> to vector<8x256xf32>
    %cst_326 = arith.constant 0.000000e+00 : f32
    %527 = vector.broadcast %cst_326 : f32 to vector<8x256xf32>
    %528 = arith.cmpf olt, %526, %527 : vector<8x256xf32>
    %cst_327 = arith.constant -1.000000e+00 : f32
    %cst_328 = arith.constant 1.000000e+00 : f32
    %529 = vector.broadcast %cst_327 : f32 to vector<8x256xf32>
    %530 = vector.broadcast %cst_328 : f32 to vector<8x256xf32>
    %531 = arith.select %528, %529, %530 : vector<8x256xi1>, vector<8x256xf32>
    %532 = math.absf %526 : vector<8x256xf32>
    %cst_329 = arith.constant 2.41421366 : f32
    %533 = vector.broadcast %cst_329 : f32 to vector<8x256xf32>
    %534 = arith.cmpf ogt, %532, %533 : vector<8x256xf32>
    %cst_330 = arith.constant 0.414213568 : f32
    %535 = vector.broadcast %cst_330 : f32 to vector<8x256xf32>
    %536 = arith.cmpf ogt, %532, %535 : vector<8x256xf32>
    %cst_331 = arith.constant 1.000000e+00 : f32
    %537 = vector.broadcast %cst_331 : f32 to vector<8x256xf32>
    %538 = arith.subf %532, %537 : vector<8x256xf32>
    %539 = arith.select %536, %538, %532 : vector<8x256xi1>, vector<8x256xf32>
    %cst_332 = arith.constant -1.000000e+00 : f32
    %540 = vector.broadcast %cst_332 : f32 to vector<8x256xf32>
    %541 = arith.select %534, %540, %539 : vector<8x256xi1>, vector<8x256xf32>
    %cst_333 = arith.constant 1.000000e+00 : f32
    %542 = vector.broadcast %cst_333 : f32 to vector<8x256xf32>
    %543 = arith.addf %532, %542 : vector<8x256xf32>
    %cst_334 = arith.constant 1.000000e+00 : f32
    %544 = vector.broadcast %cst_334 : f32 to vector<8x256xf32>
    %545 = arith.select %536, %543, %544 : vector<8x256xi1>, vector<8x256xf32>
    %546 = arith.select %534, %532, %545 : vector<8x256xi1>, vector<8x256xf32>
    %547 = arith.divf %541, %546 : vector<8x256xf32>
    %cst_335 = arith.constant 0.785398185 : f32
    %cst_336 = arith.constant 0.000000e+00 : f32
    %548 = vector.broadcast %cst_335 : f32 to vector<8x256xf32>
    %549 = vector.broadcast %cst_336 : f32 to vector<8x256xf32>
    %550 = arith.select %536, %548, %549 : vector<8x256xi1>, vector<8x256xf32>
    %cst_337 = arith.constant 1.57079637 : f32
    %551 = vector.broadcast %cst_337 : f32 to vector<8x256xf32>
    %552 = arith.select %534, %551, %550 : vector<8x256xi1>, vector<8x256xf32>
    %553 = arith.mulf %547, %547 : vector<8x256xf32>
    %cst_338 = arith.constant 0.0805374458 : f32
    %554 = vector.broadcast %cst_338 : f32 to vector<8x256xf32>
    %555 = arith.mulf %554, %553 : vector<8x256xf32>
    %cst_339 = arith.constant 0.138776854 : f32
    %556 = vector.broadcast %cst_339 : f32 to vector<8x256xf32>
    %557 = arith.subf %555, %556 : vector<8x256xf32>
    %558 = arith.mulf %557, %553 : vector<8x256xf32>
    %cst_340 = arith.constant 0.199777111 : f32
    %559 = vector.broadcast %cst_340 : f32 to vector<8x256xf32>
    %560 = arith.addf %558, %559 : vector<8x256xf32>
    %561 = arith.mulf %560, %553 : vector<8x256xf32>
    %cst_341 = arith.constant 0.333329499 : f32
    %562 = vector.broadcast %cst_341 : f32 to vector<8x256xf32>
    %563 = arith.subf %561, %562 : vector<8x256xf32>
    %564 = arith.addf %552, %547 : vector<8x256xf32>
    %565 = arith.mulf %547, %553 : vector<8x256xf32>
    %566 = arith.mulf %565, %563 : vector<8x256xf32>
    %567 = arith.addf %564, %566 : vector<8x256xf32>
    %568 = arith.mulf %531, %567 : vector<8x256xf32>
    %cst_342 = arith.constant 1.272000e+00 : f32
    %569 = vector.broadcast %cst_342 : f32 to vector<8x256xf32>
    %570 = arith.mulf %569, %568 : vector<8x256xf32>
    %cst_343 = arith.constant dense<0.000000e+00> : vector<256xf32>
    %571 = vector.multi_reduction <add>, %570, %cst_343 [0] : vector<8x256xf32> to vector<256xf32>
    %572 = vector.shape_cast %571 : vector<256xf32> to vector<1x256xf32>
    %cst_344 = arith.constant 2.000000e-01 : f32
    %573 = vector.broadcast %cst_344 : f32 to vector<1x256xf32>
    %574 = arith.mulf %572, %573 : vector<1x256xf32>
    %575 = vector.broadcast %574 : vector<1x256xf32> to vector<8x256xf32>
    %576 = arith.subf %570, %575 : vector<8x256xf32>
    %577 = math.exp %576 : vector<8x256xf32>
    %578 = arith.mulf %577, %499 : vector<8x256xf32>
    %579 = vector.extract_strided_slice %525 {offsets = [8, 0], sizes = [8, 256], strides = [1, 1]} : vector<16x256xf32> to vector<8x256xf32>
    %580 = arith.addf %578, %579 : vector<8x256xf32>
    %c3_345 = arith.constant 3 : index
    %c0_346 = arith.constant 0 : index
    %c0_347 = arith.constant 0 : index
    %c0_348 = arith.constant 0 : index
    %581 = vector.load %arg2[%c3_345, %c0_346, %c0_347, %c0_348] : memref<8x2x16x8xf32, #tpu.memory_space<vmem>>, vector<1x1x16x8xf32>
    %582 = vector.shape_cast %581 : vector<1x1x16x8xf32> to vector<16x8xf32>
    %c3_349 = arith.constant 3 : index
    %c0_350 = arith.constant 0 : index
    %c0_351 = arith.constant 0 : index
    %c0_352 = arith.constant 0 : index
    %583 = vector.load %arg3[%c3_349, %c0_350, %c0_351, %c0_352] : memref<8x2x16x1xf32, #tpu.memory_space<vmem>>, vector<1x1x16x1xf32>
    %584 = vector.shape_cast %583 : vector<1x1x16x1xf32> to vector<16x1xf32>
    %c3_353 = arith.constant 3 : index
    %c0_354 = arith.constant 0 : index
    %c0_355 = arith.constant 0 : index
    %c0_356 = arith.constant 0 : index
    %585 = vector.load %arg4[%c3_353, %c0_354, %c0_355, %c0_356] : memref<8x2x16x16xf32, #tpu.memory_space<vmem>>, vector<1x1x16x16xf32>
    %586 = vector.shape_cast %585 : vector<1x1x16x16xf32> to vector<16x16xf32>
    %c3_357 = arith.constant 3 : index
    %c0_358 = arith.constant 0 : index
    %c0_359 = arith.constant 0 : index
    %c0_360 = arith.constant 0 : index
    %587 = vector.load %arg5[%c3_357, %c0_358, %c0_359, %c0_360] : memref<8x2x16x1xf32, #tpu.memory_space<vmem>>, vector<1x1x16x1xf32>
    %588 = vector.shape_cast %587 : vector<1x1x16x1xf32> to vector<16x1xf32>
    %c3_361 = arith.constant 3 : index
    %c0_362 = arith.constant 0 : index
    %c0_363 = arith.constant 0 : index
    %c0_364 = arith.constant 0 : index
    %589 = vector.load %arg6[%c3_361, %c0_362, %c0_363, %c0_364] : memref<8x2x16x16xf32, #tpu.memory_space<vmem>>, vector<1x1x16x16xf32>
    %590 = vector.shape_cast %589 : vector<1x1x16x16xf32> to vector<16x16xf32>
    %c3_365 = arith.constant 3 : index
    %c0_366 = arith.constant 0 : index
    %c0_367 = arith.constant 0 : index
    %c0_368 = arith.constant 0 : index
    %591 = vector.load %arg7[%c3_365, %c0_366, %c0_367, %c0_368] : memref<8x2x16x1xf32, #tpu.memory_space<vmem>>, vector<1x1x16x1xf32>
    %592 = vector.shape_cast %591 : vector<1x1x16x1xf32> to vector<16x1xf32>
    %cst_369 = arith.constant dense<0.000000e+00> : vector<16x256xf32>
    %593 = tpu.matmul %582, %580, %cst_369 {dimension_numbers = #tpu.dot_dimension_numbers<[1], [0], [0], [1], [0, 0, 1, 1], [], []>} : vector<16x8xf32>, vector<8x256xf32>, vector<16x256xf32> -> vector<16x256xf32>
    %594 = vector.broadcast %584 : vector<16x1xf32> to vector<16x256xf32>
    %595 = arith.addf %593, %594 : vector<16x256xf32>
    %cst_370 = arith.constant 0.000000e+00 : f32
    %596 = vector.broadcast %cst_370 : f32 to vector<16x256xf32>
    %597 = arith.maximumf %595, %596 : vector<16x256xf32>
    %cst_371 = arith.constant dense<0.000000e+00> : vector<16x256xf32>
    %598 = tpu.matmul %586, %597, %cst_371 {dimension_numbers = #tpu.dot_dimension_numbers<[1], [0], [0], [1], [0, 0, 1, 1], [], []>} : vector<16x16xf32>, vector<16x256xf32>, vector<16x256xf32> -> vector<16x256xf32>
    %599 = vector.broadcast %588 : vector<16x1xf32> to vector<16x256xf32>
    %600 = arith.addf %598, %599 : vector<16x256xf32>
    %cst_372 = arith.constant 0.000000e+00 : f32
    %601 = vector.broadcast %cst_372 : f32 to vector<16x256xf32>
    %602 = arith.maximumf %600, %601 : vector<16x256xf32>
    %cst_373 = arith.constant dense<0.000000e+00> : vector<16x256xf32>
    %603 = tpu.matmul %590, %602, %cst_373 {dimension_numbers = #tpu.dot_dimension_numbers<[1], [0], [0], [1], [0, 0, 1, 1], [], []>} : vector<16x16xf32>, vector<16x256xf32>, vector<16x256xf32> -> vector<16x256xf32>
    %604 = vector.broadcast %592 : vector<16x1xf32> to vector<16x256xf32>
    %605 = arith.addf %603, %604 : vector<16x256xf32>
    %606 = vector.extract_strided_slice %605 {offsets = [0, 0], sizes = [8, 256], strides = [1, 1]} : vector<16x256xf32> to vector<8x256xf32>
    %cst_374 = arith.constant 0.000000e+00 : f32
    %607 = vector.broadcast %cst_374 : f32 to vector<8x256xf32>
    %608 = arith.cmpf olt, %606, %607 : vector<8x256xf32>
    %cst_375 = arith.constant -1.000000e+00 : f32
    %cst_376 = arith.constant 1.000000e+00 : f32
    %609 = vector.broadcast %cst_375 : f32 to vector<8x256xf32>
    %610 = vector.broadcast %cst_376 : f32 to vector<8x256xf32>
    %611 = arith.select %608, %609, %610 : vector<8x256xi1>, vector<8x256xf32>
    %612 = math.absf %606 : vector<8x256xf32>
    %cst_377 = arith.constant 2.41421366 : f32
    %613 = vector.broadcast %cst_377 : f32 to vector<8x256xf32>
    %614 = arith.cmpf ogt, %612, %613 : vector<8x256xf32>
    %cst_378 = arith.constant 0.414213568 : f32
    %615 = vector.broadcast %cst_378 : f32 to vector<8x256xf32>
    %616 = arith.cmpf ogt, %612, %615 : vector<8x256xf32>
    %cst_379 = arith.constant 1.000000e+00 : f32
    %617 = vector.broadcast %cst_379 : f32 to vector<8x256xf32>
    %618 = arith.subf %612, %617 : vector<8x256xf32>
    %619 = arith.select %616, %618, %612 : vector<8x256xi1>, vector<8x256xf32>
    %cst_380 = arith.constant -1.000000e+00 : f32
    %620 = vector.broadcast %cst_380 : f32 to vector<8x256xf32>
    %621 = arith.select %614, %620, %619 : vector<8x256xi1>, vector<8x256xf32>
    %cst_381 = arith.constant 1.000000e+00 : f32
    %622 = vector.broadcast %cst_381 : f32 to vector<8x256xf32>
    %623 = arith.addf %612, %622 : vector<8x256xf32>
    %cst_382 = arith.constant 1.000000e+00 : f32
    %624 = vector.broadcast %cst_382 : f32 to vector<8x256xf32>
    %625 = arith.select %616, %623, %624 : vector<8x256xi1>, vector<8x256xf32>
    %626 = arith.select %614, %612, %625 : vector<8x256xi1>, vector<8x256xf32>
    %627 = arith.divf %621, %626 : vector<8x256xf32>
    %cst_383 = arith.constant 0.785398185 : f32
    %cst_384 = arith.constant 0.000000e+00 : f32
    %628 = vector.broadcast %cst_383 : f32 to vector<8x256xf32>
    %629 = vector.broadcast %cst_384 : f32 to vector<8x256xf32>
    %630 = arith.select %616, %628, %629 : vector<8x256xi1>, vector<8x256xf32>
    %cst_385 = arith.constant 1.57079637 : f32
    %631 = vector.broadcast %cst_385 : f32 to vector<8x256xf32>
    %632 = arith.select %614, %631, %630 : vector<8x256xi1>, vector<8x256xf32>
    %633 = arith.mulf %627, %627 : vector<8x256xf32>
    %cst_386 = arith.constant 0.0805374458 : f32
    %634 = vector.broadcast %cst_386 : f32 to vector<8x256xf32>
    %635 = arith.mulf %634, %633 : vector<8x256xf32>
    %cst_387 = arith.constant 0.138776854 : f32
    %636 = vector.broadcast %cst_387 : f32 to vector<8x256xf32>
    %637 = arith.subf %635, %636 : vector<8x256xf32>
    %638 = arith.mulf %637, %633 : vector<8x256xf32>
    %cst_388 = arith.constant 0.199777111 : f32
    %639 = vector.broadcast %cst_388 : f32 to vector<8x256xf32>
    %640 = arith.addf %638, %639 : vector<8x256xf32>
    %641 = arith.mulf %640, %633 : vector<8x256xf32>
    %cst_389 = arith.constant 0.333329499 : f32
    %642 = vector.broadcast %cst_389 : f32 to vector<8x256xf32>
    %643 = arith.subf %641, %642 : vector<8x256xf32>
    %644 = arith.addf %632, %627 : vector<8x256xf32>
    %645 = arith.mulf %627, %633 : vector<8x256xf32>
    %646 = arith.mulf %645, %643 : vector<8x256xf32>
    %647 = arith.addf %644, %646 : vector<8x256xf32>
    %648 = arith.mulf %611, %647 : vector<8x256xf32>
    %cst_390 = arith.constant 1.272000e+00 : f32
    %649 = vector.broadcast %cst_390 : f32 to vector<8x256xf32>
    %650 = arith.mulf %649, %648 : vector<8x256xf32>
    %cst_391 = arith.constant dense<0.000000e+00> : vector<256xf32>
    %651 = vector.multi_reduction <add>, %650, %cst_391 [0] : vector<8x256xf32> to vector<256xf32>
    %652 = vector.shape_cast %651 : vector<256xf32> to vector<1x256xf32>
    %cst_392 = arith.constant 2.000000e-01 : f32
    %653 = vector.broadcast %cst_392 : f32 to vector<1x256xf32>
    %654 = arith.mulf %652, %653 : vector<1x256xf32>
    %655 = vector.broadcast %654 : vector<1x256xf32> to vector<8x256xf32>
    %656 = arith.subf %650, %655 : vector<8x256xf32>
    %657 = math.exp %656 : vector<8x256xf32>
    %658 = arith.mulf %657, %500 : vector<8x256xf32>
    %659 = vector.extract_strided_slice %605 {offsets = [8, 0], sizes = [8, 256], strides = [1, 1]} : vector<16x256xf32> to vector<8x256xf32>
    %660 = arith.addf %658, %659 : vector<8x256xf32>
    %c3_393 = arith.constant 3 : index
    %c0_394 = arith.constant 0 : index
    %c0_395 = arith.constant 0 : index
    %661 = vector.load %arg8[%c3_393, %c0_394, %c0_395] : memref<8x16x16xf32, #tpu.memory_space<vmem>>, vector<1x16x16xf32>
    %662 = vector.shape_cast %661 : vector<1x16x16xf32> to vector<16x16xf32>
    %663 = tpu.concatenate %580, %660 in 0 : vector<8x256xf32>, vector<8x256xf32> -> vector<16x256xf32>
    %cst_396 = arith.constant dense<0.000000e+00> : vector<16x256xf32>
    %664 = tpu.matmul %662, %663, %cst_396 {dimension_numbers = #tpu.dot_dimension_numbers<[1], [0], [0], [1], [0, 0, 1, 1], [], []>} : vector<16x16xf32>, vector<16x256xf32>, vector<16x256xf32> -> vector<16x256xf32>
    %665 = vector.extract_strided_slice %664 {offsets = [0, 0], sizes = [8, 256], strides = [1, 1]} : vector<16x256xf32> to vector<8x256xf32>
    %666 = vector.extract_strided_slice %664 {offsets = [8, 0], sizes = [8, 256], strides = [1, 1]} : vector<16x256xf32> to vector<8x256xf32>
    %c4 = arith.constant 4 : index
    %c1_397 = arith.constant 1 : index
    %c0_398 = arith.constant 0 : index
    %c0_399 = arith.constant 0 : index
    %667 = vector.load %arg2[%c4, %c1_397, %c0_398, %c0_399] : memref<8x2x16x8xf32, #tpu.memory_space<vmem>>, vector<1x1x16x8xf32>
    %668 = vector.shape_cast %667 : vector<1x1x16x8xf32> to vector<16x8xf32>
    %c4_400 = arith.constant 4 : index
    %c1_401 = arith.constant 1 : index
    %c0_402 = arith.constant 0 : index
    %c0_403 = arith.constant 0 : index
    %669 = vector.load %arg3[%c4_400, %c1_401, %c0_402, %c0_403] : memref<8x2x16x1xf32, #tpu.memory_space<vmem>>, vector<1x1x16x1xf32>
    %670 = vector.shape_cast %669 : vector<1x1x16x1xf32> to vector<16x1xf32>
    %c4_404 = arith.constant 4 : index
    %c1_405 = arith.constant 1 : index
    %c0_406 = arith.constant 0 : index
    %c0_407 = arith.constant 0 : index
    %671 = vector.load %arg4[%c4_404, %c1_405, %c0_406, %c0_407] : memref<8x2x16x16xf32, #tpu.memory_space<vmem>>, vector<1x1x16x16xf32>
    %672 = vector.shape_cast %671 : vector<1x1x16x16xf32> to vector<16x16xf32>
    %c4_408 = arith.constant 4 : index
    %c1_409 = arith.constant 1 : index
    %c0_410 = arith.constant 0 : index
    %c0_411 = arith.constant 0 : index
    %673 = vector.load %arg5[%c4_408, %c1_409, %c0_410, %c0_411] : memref<8x2x16x1xf32, #tpu.memory_space<vmem>>, vector<1x1x16x1xf32>
    %674 = vector.shape_cast %673 : vector<1x1x16x1xf32> to vector<16x1xf32>
    %c4_412 = arith.constant 4 : index
    %c1_413 = arith.constant 1 : index
    %c0_414 = arith.constant 0 : index
    %c0_415 = arith.constant 0 : index
    %675 = vector.load %arg6[%c4_412, %c1_413, %c0_414, %c0_415] : memref<8x2x16x16xf32, #tpu.memory_space<vmem>>, vector<1x1x16x16xf32>
    %676 = vector.shape_cast %675 : vector<1x1x16x16xf32> to vector<16x16xf32>
    %c4_416 = arith.constant 4 : index
    %c1_417 = arith.constant 1 : index
    %c0_418 = arith.constant 0 : index
    %c0_419 = arith.constant 0 : index
    %677 = vector.load %arg7[%c4_416, %c1_417, %c0_418, %c0_419] : memref<8x2x16x1xf32, #tpu.memory_space<vmem>>, vector<1x1x16x1xf32>
    %678 = vector.shape_cast %677 : vector<1x1x16x1xf32> to vector<16x1xf32>
    %cst_420 = arith.constant dense<0.000000e+00> : vector<16x256xf32>
    %679 = tpu.matmul %668, %666, %cst_420 {dimension_numbers = #tpu.dot_dimension_numbers<[1], [0], [0], [1], [0, 0, 1, 1], [], []>} : vector<16x8xf32>, vector<8x256xf32>, vector<16x256xf32> -> vector<16x256xf32>
    %680 = vector.broadcast %670 : vector<16x1xf32> to vector<16x256xf32>
    %681 = arith.addf %679, %680 : vector<16x256xf32>
    %cst_421 = arith.constant 0.000000e+00 : f32
    %682 = vector.broadcast %cst_421 : f32 to vector<16x256xf32>
    %683 = arith.maximumf %681, %682 : vector<16x256xf32>
    %cst_422 = arith.constant dense<0.000000e+00> : vector<16x256xf32>
    %684 = tpu.matmul %672, %683, %cst_422 {dimension_numbers = #tpu.dot_dimension_numbers<[1], [0], [0], [1], [0, 0, 1, 1], [], []>} : vector<16x16xf32>, vector<16x256xf32>, vector<16x256xf32> -> vector<16x256xf32>
    %685 = vector.broadcast %674 : vector<16x1xf32> to vector<16x256xf32>
    %686 = arith.addf %684, %685 : vector<16x256xf32>
    %cst_423 = arith.constant 0.000000e+00 : f32
    %687 = vector.broadcast %cst_423 : f32 to vector<16x256xf32>
    %688 = arith.maximumf %686, %687 : vector<16x256xf32>
    %cst_424 = arith.constant dense<0.000000e+00> : vector<16x256xf32>
    %689 = tpu.matmul %676, %688, %cst_424 {dimension_numbers = #tpu.dot_dimension_numbers<[1], [0], [0], [1], [0, 0, 1, 1], [], []>} : vector<16x16xf32>, vector<16x256xf32>, vector<16x256xf32> -> vector<16x256xf32>
    %690 = vector.broadcast %678 : vector<16x1xf32> to vector<16x256xf32>
    %691 = arith.addf %689, %690 : vector<16x256xf32>
    %692 = vector.extract_strided_slice %691 {offsets = [0, 0], sizes = [8, 256], strides = [1, 1]} : vector<16x256xf32> to vector<8x256xf32>
    %cst_425 = arith.constant 0.000000e+00 : f32
    %693 = vector.broadcast %cst_425 : f32 to vector<8x256xf32>
    %694 = arith.cmpf olt, %692, %693 : vector<8x256xf32>
    %cst_426 = arith.constant -1.000000e+00 : f32
    %cst_427 = arith.constant 1.000000e+00 : f32
    %695 = vector.broadcast %cst_426 : f32 to vector<8x256xf32>
    %696 = vector.broadcast %cst_427 : f32 to vector<8x256xf32>
    %697 = arith.select %694, %695, %696 : vector<8x256xi1>, vector<8x256xf32>
    %698 = math.absf %692 : vector<8x256xf32>
    %cst_428 = arith.constant 2.41421366 : f32
    %699 = vector.broadcast %cst_428 : f32 to vector<8x256xf32>
    %700 = arith.cmpf ogt, %698, %699 : vector<8x256xf32>
    %cst_429 = arith.constant 0.414213568 : f32
    %701 = vector.broadcast %cst_429 : f32 to vector<8x256xf32>
    %702 = arith.cmpf ogt, %698, %701 : vector<8x256xf32>
    %cst_430 = arith.constant 1.000000e+00 : f32
    %703 = vector.broadcast %cst_430 : f32 to vector<8x256xf32>
    %704 = arith.subf %698, %703 : vector<8x256xf32>
    %705 = arith.select %702, %704, %698 : vector<8x256xi1>, vector<8x256xf32>
    %cst_431 = arith.constant -1.000000e+00 : f32
    %706 = vector.broadcast %cst_431 : f32 to vector<8x256xf32>
    %707 = arith.select %700, %706, %705 : vector<8x256xi1>, vector<8x256xf32>
    %cst_432 = arith.constant 1.000000e+00 : f32
    %708 = vector.broadcast %cst_432 : f32 to vector<8x256xf32>
    %709 = arith.addf %698, %708 : vector<8x256xf32>
    %cst_433 = arith.constant 1.000000e+00 : f32
    %710 = vector.broadcast %cst_433 : f32 to vector<8x256xf32>
    %711 = arith.select %702, %709, %710 : vector<8x256xi1>, vector<8x256xf32>
    %712 = arith.select %700, %698, %711 : vector<8x256xi1>, vector<8x256xf32>
    %713 = arith.divf %707, %712 : vector<8x256xf32>
    %cst_434 = arith.constant 0.785398185 : f32
    %cst_435 = arith.constant 0.000000e+00 : f32
    %714 = vector.broadcast %cst_434 : f32 to vector<8x256xf32>
    %715 = vector.broadcast %cst_435 : f32 to vector<8x256xf32>
    %716 = arith.select %702, %714, %715 : vector<8x256xi1>, vector<8x256xf32>
    %cst_436 = arith.constant 1.57079637 : f32
    %717 = vector.broadcast %cst_436 : f32 to vector<8x256xf32>
    %718 = arith.select %700, %717, %716 : vector<8x256xi1>, vector<8x256xf32>
    %719 = arith.mulf %713, %713 : vector<8x256xf32>
    %cst_437 = arith.constant 0.0805374458 : f32
    %720 = vector.broadcast %cst_437 : f32 to vector<8x256xf32>
    %721 = arith.mulf %720, %719 : vector<8x256xf32>
    %cst_438 = arith.constant 0.138776854 : f32
    %722 = vector.broadcast %cst_438 : f32 to vector<8x256xf32>
    %723 = arith.subf %721, %722 : vector<8x256xf32>
    %724 = arith.mulf %723, %719 : vector<8x256xf32>
    %cst_439 = arith.constant 0.199777111 : f32
    %725 = vector.broadcast %cst_439 : f32 to vector<8x256xf32>
    %726 = arith.addf %724, %725 : vector<8x256xf32>
    %727 = arith.mulf %726, %719 : vector<8x256xf32>
    %cst_440 = arith.constant 0.333329499 : f32
    %728 = vector.broadcast %cst_440 : f32 to vector<8x256xf32>
    %729 = arith.subf %727, %728 : vector<8x256xf32>
    %730 = arith.addf %718, %713 : vector<8x256xf32>
    %731 = arith.mulf %713, %719 : vector<8x256xf32>
    %732 = arith.mulf %731, %729 : vector<8x256xf32>
    %733 = arith.addf %730, %732 : vector<8x256xf32>
    %734 = arith.mulf %697, %733 : vector<8x256xf32>
    %cst_441 = arith.constant 1.272000e+00 : f32
    %735 = vector.broadcast %cst_441 : f32 to vector<8x256xf32>
    %736 = arith.mulf %735, %734 : vector<8x256xf32>
    %cst_442 = arith.constant dense<0.000000e+00> : vector<256xf32>
    %737 = vector.multi_reduction <add>, %736, %cst_442 [0] : vector<8x256xf32> to vector<256xf32>
    %738 = vector.shape_cast %737 : vector<256xf32> to vector<1x256xf32>
    %cst_443 = arith.constant 2.000000e-01 : f32
    %739 = vector.broadcast %cst_443 : f32 to vector<1x256xf32>
    %740 = arith.mulf %738, %739 : vector<1x256xf32>
    %741 = vector.broadcast %740 : vector<1x256xf32> to vector<8x256xf32>
    %742 = arith.subf %736, %741 : vector<8x256xf32>
    %743 = math.exp %742 : vector<8x256xf32>
    %744 = arith.mulf %743, %665 : vector<8x256xf32>
    %745 = vector.extract_strided_slice %691 {offsets = [8, 0], sizes = [8, 256], strides = [1, 1]} : vector<16x256xf32> to vector<8x256xf32>
    %746 = arith.addf %744, %745 : vector<8x256xf32>
    %c4_444 = arith.constant 4 : index
    %c0_445 = arith.constant 0 : index
    %c0_446 = arith.constant 0 : index
    %c0_447 = arith.constant 0 : index
    %747 = vector.load %arg2[%c4_444, %c0_445, %c0_446, %c0_447] : memref<8x2x16x8xf32, #tpu.memory_space<vmem>>, vector<1x1x16x8xf32>
    %748 = vector.shape_cast %747 : vector<1x1x16x8xf32> to vector<16x8xf32>
    %c4_448 = arith.constant 4 : index
    %c0_449 = arith.constant 0 : index
    %c0_450 = arith.constant 0 : index
    %c0_451 = arith.constant 0 : index
    %749 = vector.load %arg3[%c4_448, %c0_449, %c0_450, %c0_451] : memref<8x2x16x1xf32, #tpu.memory_space<vmem>>, vector<1x1x16x1xf32>
    %750 = vector.shape_cast %749 : vector<1x1x16x1xf32> to vector<16x1xf32>
    %c4_452 = arith.constant 4 : index
    %c0_453 = arith.constant 0 : index
    %c0_454 = arith.constant 0 : index
    %c0_455 = arith.constant 0 : index
    %751 = vector.load %arg4[%c4_452, %c0_453, %c0_454, %c0_455] : memref<8x2x16x16xf32, #tpu.memory_space<vmem>>, vector<1x1x16x16xf32>
    %752 = vector.shape_cast %751 : vector<1x1x16x16xf32> to vector<16x16xf32>
    %c4_456 = arith.constant 4 : index
    %c0_457 = arith.constant 0 : index
    %c0_458 = arith.constant 0 : index
    %c0_459 = arith.constant 0 : index
    %753 = vector.load %arg5[%c4_456, %c0_457, %c0_458, %c0_459] : memref<8x2x16x1xf32, #tpu.memory_space<vmem>>, vector<1x1x16x1xf32>
    %754 = vector.shape_cast %753 : vector<1x1x16x1xf32> to vector<16x1xf32>
    %c4_460 = arith.constant 4 : index
    %c0_461 = arith.constant 0 : index
    %c0_462 = arith.constant 0 : index
    %c0_463 = arith.constant 0 : index
    %755 = vector.load %arg6[%c4_460, %c0_461, %c0_462, %c0_463] : memref<8x2x16x16xf32, #tpu.memory_space<vmem>>, vector<1x1x16x16xf32>
    %756 = vector.shape_cast %755 : vector<1x1x16x16xf32> to vector<16x16xf32>
    %c4_464 = arith.constant 4 : index
    %c0_465 = arith.constant 0 : index
    %c0_466 = arith.constant 0 : index
    %c0_467 = arith.constant 0 : index
    %757 = vector.load %arg7[%c4_464, %c0_465, %c0_466, %c0_467] : memref<8x2x16x1xf32, #tpu.memory_space<vmem>>, vector<1x1x16x1xf32>
    %758 = vector.shape_cast %757 : vector<1x1x16x1xf32> to vector<16x1xf32>
    %cst_468 = arith.constant dense<0.000000e+00> : vector<16x256xf32>
    %759 = tpu.matmul %748, %746, %cst_468 {dimension_numbers = #tpu.dot_dimension_numbers<[1], [0], [0], [1], [0, 0, 1, 1], [], []>} : vector<16x8xf32>, vector<8x256xf32>, vector<16x256xf32> -> vector<16x256xf32>
    %760 = vector.broadcast %750 : vector<16x1xf32> to vector<16x256xf32>
    %761 = arith.addf %759, %760 : vector<16x256xf32>
    %cst_469 = arith.constant 0.000000e+00 : f32
    %762 = vector.broadcast %cst_469 : f32 to vector<16x256xf32>
    %763 = arith.maximumf %761, %762 : vector<16x256xf32>
    %cst_470 = arith.constant dense<0.000000e+00> : vector<16x256xf32>
    %764 = tpu.matmul %752, %763, %cst_470 {dimension_numbers = #tpu.dot_dimension_numbers<[1], [0], [0], [1], [0, 0, 1, 1], [], []>} : vector<16x16xf32>, vector<16x256xf32>, vector<16x256xf32> -> vector<16x256xf32>
    %765 = vector.broadcast %754 : vector<16x1xf32> to vector<16x256xf32>
    %766 = arith.addf %764, %765 : vector<16x256xf32>
    %cst_471 = arith.constant 0.000000e+00 : f32
    %767 = vector.broadcast %cst_471 : f32 to vector<16x256xf32>
    %768 = arith.maximumf %766, %767 : vector<16x256xf32>
    %cst_472 = arith.constant dense<0.000000e+00> : vector<16x256xf32>
    %769 = tpu.matmul %756, %768, %cst_472 {dimension_numbers = #tpu.dot_dimension_numbers<[1], [0], [0], [1], [0, 0, 1, 1], [], []>} : vector<16x16xf32>, vector<16x256xf32>, vector<16x256xf32> -> vector<16x256xf32>
    %770 = vector.broadcast %758 : vector<16x1xf32> to vector<16x256xf32>
    %771 = arith.addf %769, %770 : vector<16x256xf32>
    %772 = vector.extract_strided_slice %771 {offsets = [0, 0], sizes = [8, 256], strides = [1, 1]} : vector<16x256xf32> to vector<8x256xf32>
    %cst_473 = arith.constant 0.000000e+00 : f32
    %773 = vector.broadcast %cst_473 : f32 to vector<8x256xf32>
    %774 = arith.cmpf olt, %772, %773 : vector<8x256xf32>
    %cst_474 = arith.constant -1.000000e+00 : f32
    %cst_475 = arith.constant 1.000000e+00 : f32
    %775 = vector.broadcast %cst_474 : f32 to vector<8x256xf32>
    %776 = vector.broadcast %cst_475 : f32 to vector<8x256xf32>
    %777 = arith.select %774, %775, %776 : vector<8x256xi1>, vector<8x256xf32>
    %778 = math.absf %772 : vector<8x256xf32>
    %cst_476 = arith.constant 2.41421366 : f32
    %779 = vector.broadcast %cst_476 : f32 to vector<8x256xf32>
    %780 = arith.cmpf ogt, %778, %779 : vector<8x256xf32>
    %cst_477 = arith.constant 0.414213568 : f32
    %781 = vector.broadcast %cst_477 : f32 to vector<8x256xf32>
    %782 = arith.cmpf ogt, %778, %781 : vector<8x256xf32>
    %cst_478 = arith.constant 1.000000e+00 : f32
    %783 = vector.broadcast %cst_478 : f32 to vector<8x256xf32>
    %784 = arith.subf %778, %783 : vector<8x256xf32>
    %785 = arith.select %782, %784, %778 : vector<8x256xi1>, vector<8x256xf32>
    %cst_479 = arith.constant -1.000000e+00 : f32
    %786 = vector.broadcast %cst_479 : f32 to vector<8x256xf32>
    %787 = arith.select %780, %786, %785 : vector<8x256xi1>, vector<8x256xf32>
    %cst_480 = arith.constant 1.000000e+00 : f32
    %788 = vector.broadcast %cst_480 : f32 to vector<8x256xf32>
    %789 = arith.addf %778, %788 : vector<8x256xf32>
    %cst_481 = arith.constant 1.000000e+00 : f32
    %790 = vector.broadcast %cst_481 : f32 to vector<8x256xf32>
    %791 = arith.select %782, %789, %790 : vector<8x256xi1>, vector<8x256xf32>
    %792 = arith.select %780, %778, %791 : vector<8x256xi1>, vector<8x256xf32>
    %793 = arith.divf %787, %792 : vector<8x256xf32>
    %cst_482 = arith.constant 0.785398185 : f32
    %cst_483 = arith.constant 0.000000e+00 : f32
    %794 = vector.broadcast %cst_482 : f32 to vector<8x256xf32>
    %795 = vector.broadcast %cst_483 : f32 to vector<8x256xf32>
    %796 = arith.select %782, %794, %795 : vector<8x256xi1>, vector<8x256xf32>
    %cst_484 = arith.constant 1.57079637 : f32
    %797 = vector.broadcast %cst_484 : f32 to vector<8x256xf32>
    %798 = arith.select %780, %797, %796 : vector<8x256xi1>, vector<8x256xf32>
    %799 = arith.mulf %793, %793 : vector<8x256xf32>
    %cst_485 = arith.constant 0.0805374458 : f32
    %800 = vector.broadcast %cst_485 : f32 to vector<8x256xf32>
    %801 = arith.mulf %800, %799 : vector<8x256xf32>
    %cst_486 = arith.constant 0.138776854 : f32
    %802 = vector.broadcast %cst_486 : f32 to vector<8x256xf32>
    %803 = arith.subf %801, %802 : vector<8x256xf32>
    %804 = arith.mulf %803, %799 : vector<8x256xf32>
    %cst_487 = arith.constant 0.199777111 : f32
    %805 = vector.broadcast %cst_487 : f32 to vector<8x256xf32>
    %806 = arith.addf %804, %805 : vector<8x256xf32>
    %807 = arith.mulf %806, %799 : vector<8x256xf32>
    %cst_488 = arith.constant 0.333329499 : f32
    %808 = vector.broadcast %cst_488 : f32 to vector<8x256xf32>
    %809 = arith.subf %807, %808 : vector<8x256xf32>
    %810 = arith.addf %798, %793 : vector<8x256xf32>
    %811 = arith.mulf %793, %799 : vector<8x256xf32>
    %812 = arith.mulf %811, %809 : vector<8x256xf32>
    %813 = arith.addf %810, %812 : vector<8x256xf32>
    %814 = arith.mulf %777, %813 : vector<8x256xf32>
    %cst_489 = arith.constant 1.272000e+00 : f32
    %815 = vector.broadcast %cst_489 : f32 to vector<8x256xf32>
    %816 = arith.mulf %815, %814 : vector<8x256xf32>
    %cst_490 = arith.constant dense<0.000000e+00> : vector<256xf32>
    %817 = vector.multi_reduction <add>, %816, %cst_490 [0] : vector<8x256xf32> to vector<256xf32>
    %818 = vector.shape_cast %817 : vector<256xf32> to vector<1x256xf32>
    %cst_491 = arith.constant 2.000000e-01 : f32
    %819 = vector.broadcast %cst_491 : f32 to vector<1x256xf32>
    %820 = arith.mulf %818, %819 : vector<1x256xf32>
    %821 = vector.broadcast %820 : vector<1x256xf32> to vector<8x256xf32>
    %822 = arith.subf %816, %821 : vector<8x256xf32>
    %823 = math.exp %822 : vector<8x256xf32>
    %824 = arith.mulf %823, %666 : vector<8x256xf32>
    %825 = vector.extract_strided_slice %771 {offsets = [8, 0], sizes = [8, 256], strides = [1, 1]} : vector<16x256xf32> to vector<8x256xf32>
    %826 = arith.addf %824, %825 : vector<8x256xf32>
    %c4_492 = arith.constant 4 : index
    %c0_493 = arith.constant 0 : index
    %c0_494 = arith.constant 0 : index
    %827 = vector.load %arg8[%c4_492, %c0_493, %c0_494] : memref<8x16x16xf32, #tpu.memory_space<vmem>>, vector<1x16x16xf32>
    %828 = vector.shape_cast %827 : vector<1x16x16xf32> to vector<16x16xf32>
    %829 = tpu.concatenate %746, %826 in 0 : vector<8x256xf32>, vector<8x256xf32> -> vector<16x256xf32>
    %cst_495 = arith.constant dense<0.000000e+00> : vector<16x256xf32>
    %830 = tpu.matmul %828, %829, %cst_495 {dimension_numbers = #tpu.dot_dimension_numbers<[1], [0], [0], [1], [0, 0, 1, 1], [], []>} : vector<16x16xf32>, vector<16x256xf32>, vector<16x256xf32> -> vector<16x256xf32>
    %831 = vector.extract_strided_slice %830 {offsets = [0, 0], sizes = [8, 256], strides = [1, 1]} : vector<16x256xf32> to vector<8x256xf32>
    %832 = vector.extract_strided_slice %830 {offsets = [8, 0], sizes = [8, 256], strides = [1, 1]} : vector<16x256xf32> to vector<8x256xf32>
    %c5 = arith.constant 5 : index
    %c1_496 = arith.constant 1 : index
    %c0_497 = arith.constant 0 : index
    %c0_498 = arith.constant 0 : index
    %833 = vector.load %arg2[%c5, %c1_496, %c0_497, %c0_498] : memref<8x2x16x8xf32, #tpu.memory_space<vmem>>, vector<1x1x16x8xf32>
    %834 = vector.shape_cast %833 : vector<1x1x16x8xf32> to vector<16x8xf32>
    %c5_499 = arith.constant 5 : index
    %c1_500 = arith.constant 1 : index
    %c0_501 = arith.constant 0 : index
    %c0_502 = arith.constant 0 : index
    %835 = vector.load %arg3[%c5_499, %c1_500, %c0_501, %c0_502] : memref<8x2x16x1xf32, #tpu.memory_space<vmem>>, vector<1x1x16x1xf32>
    %836 = vector.shape_cast %835 : vector<1x1x16x1xf32> to vector<16x1xf32>
    %c5_503 = arith.constant 5 : index
    %c1_504 = arith.constant 1 : index
    %c0_505 = arith.constant 0 : index
    %c0_506 = arith.constant 0 : index
    %837 = vector.load %arg4[%c5_503, %c1_504, %c0_505, %c0_506] : memref<8x2x16x16xf32, #tpu.memory_space<vmem>>, vector<1x1x16x16xf32>
    %838 = vector.shape_cast %837 : vector<1x1x16x16xf32> to vector<16x16xf32>
    %c5_507 = arith.constant 5 : index
    %c1_508 = arith.constant 1 : index
    %c0_509 = arith.constant 0 : index
    %c0_510 = arith.constant 0 : index
    %839 = vector.load %arg5[%c5_507, %c1_508, %c0_509, %c0_510] : memref<8x2x16x1xf32, #tpu.memory_space<vmem>>, vector<1x1x16x1xf32>
    %840 = vector.shape_cast %839 : vector<1x1x16x1xf32> to vector<16x1xf32>
    %c5_511 = arith.constant 5 : index
    %c1_512 = arith.constant 1 : index
    %c0_513 = arith.constant 0 : index
    %c0_514 = arith.constant 0 : index
    %841 = vector.load %arg6[%c5_511, %c1_512, %c0_513, %c0_514] : memref<8x2x16x16xf32, #tpu.memory_space<vmem>>, vector<1x1x16x16xf32>
    %842 = vector.shape_cast %841 : vector<1x1x16x16xf32> to vector<16x16xf32>
    %c5_515 = arith.constant 5 : index
    %c1_516 = arith.constant 1 : index
    %c0_517 = arith.constant 0 : index
    %c0_518 = arith.constant 0 : index
    %843 = vector.load %arg7[%c5_515, %c1_516, %c0_517, %c0_518] : memref<8x2x16x1xf32, #tpu.memory_space<vmem>>, vector<1x1x16x1xf32>
    %844 = vector.shape_cast %843 : vector<1x1x16x1xf32> to vector<16x1xf32>
    %cst_519 = arith.constant dense<0.000000e+00> : vector<16x256xf32>
    %845 = tpu.matmul %834, %832, %cst_519 {dimension_numbers = #tpu.dot_dimension_numbers<[1], [0], [0], [1], [0, 0, 1, 1], [], []>} : vector<16x8xf32>, vector<8x256xf32>, vector<16x256xf32> -> vector<16x256xf32>
    %846 = vector.broadcast %836 : vector<16x1xf32> to vector<16x256xf32>
    %847 = arith.addf %845, %846 : vector<16x256xf32>
    %cst_520 = arith.constant 0.000000e+00 : f32
    %848 = vector.broadcast %cst_520 : f32 to vector<16x256xf32>
    %849 = arith.maximumf %847, %848 : vector<16x256xf32>
    %cst_521 = arith.constant dense<0.000000e+00> : vector<16x256xf32>
    %850 = tpu.matmul %838, %849, %cst_521 {dimension_numbers = #tpu.dot_dimension_numbers<[1], [0], [0], [1], [0, 0, 1, 1], [], []>} : vector<16x16xf32>, vector<16x256xf32>, vector<16x256xf32> -> vector<16x256xf32>
    %851 = vector.broadcast %840 : vector<16x1xf32> to vector<16x256xf32>
    %852 = arith.addf %850, %851 : vector<16x256xf32>
    %cst_522 = arith.constant 0.000000e+00 : f32
    %853 = vector.broadcast %cst_522 : f32 to vector<16x256xf32>
    %854 = arith.maximumf %852, %853 : vector<16x256xf32>
    %cst_523 = arith.constant dense<0.000000e+00> : vector<16x256xf32>
    %855 = tpu.matmul %842, %854, %cst_523 {dimension_numbers = #tpu.dot_dimension_numbers<[1], [0], [0], [1], [0, 0, 1, 1], [], []>} : vector<16x16xf32>, vector<16x256xf32>, vector<16x256xf32> -> vector<16x256xf32>
    %856 = vector.broadcast %844 : vector<16x1xf32> to vector<16x256xf32>
    %857 = arith.addf %855, %856 : vector<16x256xf32>
    %858 = vector.extract_strided_slice %857 {offsets = [0, 0], sizes = [8, 256], strides = [1, 1]} : vector<16x256xf32> to vector<8x256xf32>
    %cst_524 = arith.constant 0.000000e+00 : f32
    %859 = vector.broadcast %cst_524 : f32 to vector<8x256xf32>
    %860 = arith.cmpf olt, %858, %859 : vector<8x256xf32>
    %cst_525 = arith.constant -1.000000e+00 : f32
    %cst_526 = arith.constant 1.000000e+00 : f32
    %861 = vector.broadcast %cst_525 : f32 to vector<8x256xf32>
    %862 = vector.broadcast %cst_526 : f32 to vector<8x256xf32>
    %863 = arith.select %860, %861, %862 : vector<8x256xi1>, vector<8x256xf32>
    %864 = math.absf %858 : vector<8x256xf32>
    %cst_527 = arith.constant 2.41421366 : f32
    %865 = vector.broadcast %cst_527 : f32 to vector<8x256xf32>
    %866 = arith.cmpf ogt, %864, %865 : vector<8x256xf32>
    %cst_528 = arith.constant 0.414213568 : f32
    %867 = vector.broadcast %cst_528 : f32 to vector<8x256xf32>
    %868 = arith.cmpf ogt, %864, %867 : vector<8x256xf32>
    %cst_529 = arith.constant 1.000000e+00 : f32
    %869 = vector.broadcast %cst_529 : f32 to vector<8x256xf32>
    %870 = arith.subf %864, %869 : vector<8x256xf32>
    %871 = arith.select %868, %870, %864 : vector<8x256xi1>, vector<8x256xf32>
    %cst_530 = arith.constant -1.000000e+00 : f32
    %872 = vector.broadcast %cst_530 : f32 to vector<8x256xf32>
    %873 = arith.select %866, %872, %871 : vector<8x256xi1>, vector<8x256xf32>
    %cst_531 = arith.constant 1.000000e+00 : f32
    %874 = vector.broadcast %cst_531 : f32 to vector<8x256xf32>
    %875 = arith.addf %864, %874 : vector<8x256xf32>
    %cst_532 = arith.constant 1.000000e+00 : f32
    %876 = vector.broadcast %cst_532 : f32 to vector<8x256xf32>
    %877 = arith.select %868, %875, %876 : vector<8x256xi1>, vector<8x256xf32>
    %878 = arith.select %866, %864, %877 : vector<8x256xi1>, vector<8x256xf32>
    %879 = arith.divf %873, %878 : vector<8x256xf32>
    %cst_533 = arith.constant 0.785398185 : f32
    %cst_534 = arith.constant 0.000000e+00 : f32
    %880 = vector.broadcast %cst_533 : f32 to vector<8x256xf32>
    %881 = vector.broadcast %cst_534 : f32 to vector<8x256xf32>
    %882 = arith.select %868, %880, %881 : vector<8x256xi1>, vector<8x256xf32>
    %cst_535 = arith.constant 1.57079637 : f32
    %883 = vector.broadcast %cst_535 : f32 to vector<8x256xf32>
    %884 = arith.select %866, %883, %882 : vector<8x256xi1>, vector<8x256xf32>
    %885 = arith.mulf %879, %879 : vector<8x256xf32>
    %cst_536 = arith.constant 0.0805374458 : f32
    %886 = vector.broadcast %cst_536 : f32 to vector<8x256xf32>
    %887 = arith.mulf %886, %885 : vector<8x256xf32>
    %cst_537 = arith.constant 0.138776854 : f32
    %888 = vector.broadcast %cst_537 : f32 to vector<8x256xf32>
    %889 = arith.subf %887, %888 : vector<8x256xf32>
    %890 = arith.mulf %889, %885 : vector<8x256xf32>
    %cst_538 = arith.constant 0.199777111 : f32
    %891 = vector.broadcast %cst_538 : f32 to vector<8x256xf32>
    %892 = arith.addf %890, %891 : vector<8x256xf32>
    %893 = arith.mulf %892, %885 : vector<8x256xf32>
    %cst_539 = arith.constant 0.333329499 : f32
    %894 = vector.broadcast %cst_539 : f32 to vector<8x256xf32>
    %895 = arith.subf %893, %894 : vector<8x256xf32>
    %896 = arith.addf %884, %879 : vector<8x256xf32>
    %897 = arith.mulf %879, %885 : vector<8x256xf32>
    %898 = arith.mulf %897, %895 : vector<8x256xf32>
    %899 = arith.addf %896, %898 : vector<8x256xf32>
    %900 = arith.mulf %863, %899 : vector<8x256xf32>
    %cst_540 = arith.constant 1.272000e+00 : f32
    %901 = vector.broadcast %cst_540 : f32 to vector<8x256xf32>
    %902 = arith.mulf %901, %900 : vector<8x256xf32>
    %cst_541 = arith.constant dense<0.000000e+00> : vector<256xf32>
    %903 = vector.multi_reduction <add>, %902, %cst_541 [0] : vector<8x256xf32> to vector<256xf32>
    %904 = vector.shape_cast %903 : vector<256xf32> to vector<1x256xf32>
    %cst_542 = arith.constant 2.000000e-01 : f32
    %905 = vector.broadcast %cst_542 : f32 to vector<1x256xf32>
    %906 = arith.mulf %904, %905 : vector<1x256xf32>
    %907 = vector.broadcast %906 : vector<1x256xf32> to vector<8x256xf32>
    %908 = arith.subf %902, %907 : vector<8x256xf32>
    %909 = math.exp %908 : vector<8x256xf32>
    %910 = arith.mulf %909, %831 : vector<8x256xf32>
    %911 = vector.extract_strided_slice %857 {offsets = [8, 0], sizes = [8, 256], strides = [1, 1]} : vector<16x256xf32> to vector<8x256xf32>
    %912 = arith.addf %910, %911 : vector<8x256xf32>
    %c5_543 = arith.constant 5 : index
    %c0_544 = arith.constant 0 : index
    %c0_545 = arith.constant 0 : index
    %c0_546 = arith.constant 0 : index
    %913 = vector.load %arg2[%c5_543, %c0_544, %c0_545, %c0_546] : memref<8x2x16x8xf32, #tpu.memory_space<vmem>>, vector<1x1x16x8xf32>
    %914 = vector.shape_cast %913 : vector<1x1x16x8xf32> to vector<16x8xf32>
    %c5_547 = arith.constant 5 : index
    %c0_548 = arith.constant 0 : index
    %c0_549 = arith.constant 0 : index
    %c0_550 = arith.constant 0 : index
    %915 = vector.load %arg3[%c5_547, %c0_548, %c0_549, %c0_550] : memref<8x2x16x1xf32, #tpu.memory_space<vmem>>, vector<1x1x16x1xf32>
    %916 = vector.shape_cast %915 : vector<1x1x16x1xf32> to vector<16x1xf32>
    %c5_551 = arith.constant 5 : index
    %c0_552 = arith.constant 0 : index
    %c0_553 = arith.constant 0 : index
    %c0_554 = arith.constant 0 : index
    %917 = vector.load %arg4[%c5_551, %c0_552, %c0_553, %c0_554] : memref<8x2x16x16xf32, #tpu.memory_space<vmem>>, vector<1x1x16x16xf32>
    %918 = vector.shape_cast %917 : vector<1x1x16x16xf32> to vector<16x16xf32>
    %c5_555 = arith.constant 5 : index
    %c0_556 = arith.constant 0 : index
    %c0_557 = arith.constant 0 : index
    %c0_558 = arith.constant 0 : index
    %919 = vector.load %arg5[%c5_555, %c0_556, %c0_557, %c0_558] : memref<8x2x16x1xf32, #tpu.memory_space<vmem>>, vector<1x1x16x1xf32>
    %920 = vector.shape_cast %919 : vector<1x1x16x1xf32> to vector<16x1xf32>
    %c5_559 = arith.constant 5 : index
    %c0_560 = arith.constant 0 : index
    %c0_561 = arith.constant 0 : index
    %c0_562 = arith.constant 0 : index
    %921 = vector.load %arg6[%c5_559, %c0_560, %c0_561, %c0_562] : memref<8x2x16x16xf32, #tpu.memory_space<vmem>>, vector<1x1x16x16xf32>
    %922 = vector.shape_cast %921 : vector<1x1x16x16xf32> to vector<16x16xf32>
    %c5_563 = arith.constant 5 : index
    %c0_564 = arith.constant 0 : index
    %c0_565 = arith.constant 0 : index
    %c0_566 = arith.constant 0 : index
    %923 = vector.load %arg7[%c5_563, %c0_564, %c0_565, %c0_566] : memref<8x2x16x1xf32, #tpu.memory_space<vmem>>, vector<1x1x16x1xf32>
    %924 = vector.shape_cast %923 : vector<1x1x16x1xf32> to vector<16x1xf32>
    %cst_567 = arith.constant dense<0.000000e+00> : vector<16x256xf32>
    %925 = tpu.matmul %914, %912, %cst_567 {dimension_numbers = #tpu.dot_dimension_numbers<[1], [0], [0], [1], [0, 0, 1, 1], [], []>} : vector<16x8xf32>, vector<8x256xf32>, vector<16x256xf32> -> vector<16x256xf32>
    %926 = vector.broadcast %916 : vector<16x1xf32> to vector<16x256xf32>
    %927 = arith.addf %925, %926 : vector<16x256xf32>
    %cst_568 = arith.constant 0.000000e+00 : f32
    %928 = vector.broadcast %cst_568 : f32 to vector<16x256xf32>
    %929 = arith.maximumf %927, %928 : vector<16x256xf32>
    %cst_569 = arith.constant dense<0.000000e+00> : vector<16x256xf32>
    %930 = tpu.matmul %918, %929, %cst_569 {dimension_numbers = #tpu.dot_dimension_numbers<[1], [0], [0], [1], [0, 0, 1, 1], [], []>} : vector<16x16xf32>, vector<16x256xf32>, vector<16x256xf32> -> vector<16x256xf32>
    %931 = vector.broadcast %920 : vector<16x1xf32> to vector<16x256xf32>
    %932 = arith.addf %930, %931 : vector<16x256xf32>
    %cst_570 = arith.constant 0.000000e+00 : f32
    %933 = vector.broadcast %cst_570 : f32 to vector<16x256xf32>
    %934 = arith.maximumf %932, %933 : vector<16x256xf32>
    %cst_571 = arith.constant dense<0.000000e+00> : vector<16x256xf32>
    %935 = tpu.matmul %922, %934, %cst_571 {dimension_numbers = #tpu.dot_dimension_numbers<[1], [0], [0], [1], [0, 0, 1, 1], [], []>} : vector<16x16xf32>, vector<16x256xf32>, vector<16x256xf32> -> vector<16x256xf32>
    %936 = vector.broadcast %924 : vector<16x1xf32> to vector<16x256xf32>
    %937 = arith.addf %935, %936 : vector<16x256xf32>
    %938 = vector.extract_strided_slice %937 {offsets = [0, 0], sizes = [8, 256], strides = [1, 1]} : vector<16x256xf32> to vector<8x256xf32>
    %cst_572 = arith.constant 0.000000e+00 : f32
    %939 = vector.broadcast %cst_572 : f32 to vector<8x256xf32>
    %940 = arith.cmpf olt, %938, %939 : vector<8x256xf32>
    %cst_573 = arith.constant -1.000000e+00 : f32
    %cst_574 = arith.constant 1.000000e+00 : f32
    %941 = vector.broadcast %cst_573 : f32 to vector<8x256xf32>
    %942 = vector.broadcast %cst_574 : f32 to vector<8x256xf32>
    %943 = arith.select %940, %941, %942 : vector<8x256xi1>, vector<8x256xf32>
    %944 = math.absf %938 : vector<8x256xf32>
    %cst_575 = arith.constant 2.41421366 : f32
    %945 = vector.broadcast %cst_575 : f32 to vector<8x256xf32>
    %946 = arith.cmpf ogt, %944, %945 : vector<8x256xf32>
    %cst_576 = arith.constant 0.414213568 : f32
    %947 = vector.broadcast %cst_576 : f32 to vector<8x256xf32>
    %948 = arith.cmpf ogt, %944, %947 : vector<8x256xf32>
    %cst_577 = arith.constant 1.000000e+00 : f32
    %949 = vector.broadcast %cst_577 : f32 to vector<8x256xf32>
    %950 = arith.subf %944, %949 : vector<8x256xf32>
    %951 = arith.select %948, %950, %944 : vector<8x256xi1>, vector<8x256xf32>
    %cst_578 = arith.constant -1.000000e+00 : f32
    %952 = vector.broadcast %cst_578 : f32 to vector<8x256xf32>
    %953 = arith.select %946, %952, %951 : vector<8x256xi1>, vector<8x256xf32>
    %cst_579 = arith.constant 1.000000e+00 : f32
    %954 = vector.broadcast %cst_579 : f32 to vector<8x256xf32>
    %955 = arith.addf %944, %954 : vector<8x256xf32>
    %cst_580 = arith.constant 1.000000e+00 : f32
    %956 = vector.broadcast %cst_580 : f32 to vector<8x256xf32>
    %957 = arith.select %948, %955, %956 : vector<8x256xi1>, vector<8x256xf32>
    %958 = arith.select %946, %944, %957 : vector<8x256xi1>, vector<8x256xf32>
    %959 = arith.divf %953, %958 : vector<8x256xf32>
    %cst_581 = arith.constant 0.785398185 : f32
    %cst_582 = arith.constant 0.000000e+00 : f32
    %960 = vector.broadcast %cst_581 : f32 to vector<8x256xf32>
    %961 = vector.broadcast %cst_582 : f32 to vector<8x256xf32>
    %962 = arith.select %948, %960, %961 : vector<8x256xi1>, vector<8x256xf32>
    %cst_583 = arith.constant 1.57079637 : f32
    %963 = vector.broadcast %cst_583 : f32 to vector<8x256xf32>
    %964 = arith.select %946, %963, %962 : vector<8x256xi1>, vector<8x256xf32>
    %965 = arith.mulf %959, %959 : vector<8x256xf32>
    %cst_584 = arith.constant 0.0805374458 : f32
    %966 = vector.broadcast %cst_584 : f32 to vector<8x256xf32>
    %967 = arith.mulf %966, %965 : vector<8x256xf32>
    %cst_585 = arith.constant 0.138776854 : f32
    %968 = vector.broadcast %cst_585 : f32 to vector<8x256xf32>
    %969 = arith.subf %967, %968 : vector<8x256xf32>
    %970 = arith.mulf %969, %965 : vector<8x256xf32>
    %cst_586 = arith.constant 0.199777111 : f32
    %971 = vector.broadcast %cst_586 : f32 to vector<8x256xf32>
    %972 = arith.addf %970, %971 : vector<8x256xf32>
    %973 = arith.mulf %972, %965 : vector<8x256xf32>
    %cst_587 = arith.constant 0.333329499 : f32
    %974 = vector.broadcast %cst_587 : f32 to vector<8x256xf32>
    %975 = arith.subf %973, %974 : vector<8x256xf32>
    %976 = arith.addf %964, %959 : vector<8x256xf32>
    %977 = arith.mulf %959, %965 : vector<8x256xf32>
    %978 = arith.mulf %977, %975 : vector<8x256xf32>
    %979 = arith.addf %976, %978 : vector<8x256xf32>
    %980 = arith.mulf %943, %979 : vector<8x256xf32>
    %cst_588 = arith.constant 1.272000e+00 : f32
    %981 = vector.broadcast %cst_588 : f32 to vector<8x256xf32>
    %982 = arith.mulf %981, %980 : vector<8x256xf32>
    %cst_589 = arith.constant dense<0.000000e+00> : vector<256xf32>
    %983 = vector.multi_reduction <add>, %982, %cst_589 [0] : vector<8x256xf32> to vector<256xf32>
    %984 = vector.shape_cast %983 : vector<256xf32> to vector<1x256xf32>
    %cst_590 = arith.constant 2.000000e-01 : f32
    %985 = vector.broadcast %cst_590 : f32 to vector<1x256xf32>
    %986 = arith.mulf %984, %985 : vector<1x256xf32>
    %987 = vector.broadcast %986 : vector<1x256xf32> to vector<8x256xf32>
    %988 = arith.subf %982, %987 : vector<8x256xf32>
    %989 = math.exp %988 : vector<8x256xf32>
    %990 = arith.mulf %989, %832 : vector<8x256xf32>
    %991 = vector.extract_strided_slice %937 {offsets = [8, 0], sizes = [8, 256], strides = [1, 1]} : vector<16x256xf32> to vector<8x256xf32>
    %992 = arith.addf %990, %991 : vector<8x256xf32>
    %c5_591 = arith.constant 5 : index
    %c0_592 = arith.constant 0 : index
    %c0_593 = arith.constant 0 : index
    %993 = vector.load %arg8[%c5_591, %c0_592, %c0_593] : memref<8x16x16xf32, #tpu.memory_space<vmem>>, vector<1x16x16xf32>
    %994 = vector.shape_cast %993 : vector<1x16x16xf32> to vector<16x16xf32>
    %995 = tpu.concatenate %912, %992 in 0 : vector<8x256xf32>, vector<8x256xf32> -> vector<16x256xf32>
    %cst_594 = arith.constant dense<0.000000e+00> : vector<16x256xf32>
    %996 = tpu.matmul %994, %995, %cst_594 {dimension_numbers = #tpu.dot_dimension_numbers<[1], [0], [0], [1], [0, 0, 1, 1], [], []>} : vector<16x16xf32>, vector<16x256xf32>, vector<16x256xf32> -> vector<16x256xf32>
    %997 = vector.extract_strided_slice %996 {offsets = [0, 0], sizes = [8, 256], strides = [1, 1]} : vector<16x256xf32> to vector<8x256xf32>
    %998 = vector.extract_strided_slice %996 {offsets = [8, 0], sizes = [8, 256], strides = [1, 1]} : vector<16x256xf32> to vector<8x256xf32>
    %c6 = arith.constant 6 : index
    %c1_595 = arith.constant 1 : index
    %c0_596 = arith.constant 0 : index
    %c0_597 = arith.constant 0 : index
    %999 = vector.load %arg2[%c6, %c1_595, %c0_596, %c0_597] : memref<8x2x16x8xf32, #tpu.memory_space<vmem>>, vector<1x1x16x8xf32>
    %1000 = vector.shape_cast %999 : vector<1x1x16x8xf32> to vector<16x8xf32>
    %c6_598 = arith.constant 6 : index
    %c1_599 = arith.constant 1 : index
    %c0_600 = arith.constant 0 : index
    %c0_601 = arith.constant 0 : index
    %1001 = vector.load %arg3[%c6_598, %c1_599, %c0_600, %c0_601] : memref<8x2x16x1xf32, #tpu.memory_space<vmem>>, vector<1x1x16x1xf32>
    %1002 = vector.shape_cast %1001 : vector<1x1x16x1xf32> to vector<16x1xf32>
    %c6_602 = arith.constant 6 : index
    %c1_603 = arith.constant 1 : index
    %c0_604 = arith.constant 0 : index
    %c0_605 = arith.constant 0 : index
    %1003 = vector.load %arg4[%c6_602, %c1_603, %c0_604, %c0_605] : memref<8x2x16x16xf32, #tpu.memory_space<vmem>>, vector<1x1x16x16xf32>
    %1004 = vector.shape_cast %1003 : vector<1x1x16x16xf32> to vector<16x16xf32>
    %c6_606 = arith.constant 6 : index
    %c1_607 = arith.constant 1 : index
    %c0_608 = arith.constant 0 : index
    %c0_609 = arith.constant 0 : index
    %1005 = vector.load %arg5[%c6_606, %c1_607, %c0_608, %c0_609] : memref<8x2x16x1xf32, #tpu.memory_space<vmem>>, vector<1x1x16x1xf32>
    %1006 = vector.shape_cast %1005 : vector<1x1x16x1xf32> to vector<16x1xf32>
    %c6_610 = arith.constant 6 : index
    %c1_611 = arith.constant 1 : index
    %c0_612 = arith.constant 0 : index
    %c0_613 = arith.constant 0 : index
    %1007 = vector.load %arg6[%c6_610, %c1_611, %c0_612, %c0_613] : memref<8x2x16x16xf32, #tpu.memory_space<vmem>>, vector<1x1x16x16xf32>
    %1008 = vector.shape_cast %1007 : vector<1x1x16x16xf32> to vector<16x16xf32>
    %c6_614 = arith.constant 6 : index
    %c1_615 = arith.constant 1 : index
    %c0_616 = arith.constant 0 : index
    %c0_617 = arith.constant 0 : index
    %1009 = vector.load %arg7[%c6_614, %c1_615, %c0_616, %c0_617] : memref<8x2x16x1xf32, #tpu.memory_space<vmem>>, vector<1x1x16x1xf32>
    %1010 = vector.shape_cast %1009 : vector<1x1x16x1xf32> to vector<16x1xf32>
    %cst_618 = arith.constant dense<0.000000e+00> : vector<16x256xf32>
    %1011 = tpu.matmul %1000, %998, %cst_618 {dimension_numbers = #tpu.dot_dimension_numbers<[1], [0], [0], [1], [0, 0, 1, 1], [], []>} : vector<16x8xf32>, vector<8x256xf32>, vector<16x256xf32> -> vector<16x256xf32>
    %1012 = vector.broadcast %1002 : vector<16x1xf32> to vector<16x256xf32>
    %1013 = arith.addf %1011, %1012 : vector<16x256xf32>
    %cst_619 = arith.constant 0.000000e+00 : f32
    %1014 = vector.broadcast %cst_619 : f32 to vector<16x256xf32>
    %1015 = arith.maximumf %1013, %1014 : vector<16x256xf32>
    %cst_620 = arith.constant dense<0.000000e+00> : vector<16x256xf32>
    %1016 = tpu.matmul %1004, %1015, %cst_620 {dimension_numbers = #tpu.dot_dimension_numbers<[1], [0], [0], [1], [0, 0, 1, 1], [], []>} : vector<16x16xf32>, vector<16x256xf32>, vector<16x256xf32> -> vector<16x256xf32>
    %1017 = vector.broadcast %1006 : vector<16x1xf32> to vector<16x256xf32>
    %1018 = arith.addf %1016, %1017 : vector<16x256xf32>
    %cst_621 = arith.constant 0.000000e+00 : f32
    %1019 = vector.broadcast %cst_621 : f32 to vector<16x256xf32>
    %1020 = arith.maximumf %1018, %1019 : vector<16x256xf32>
    %cst_622 = arith.constant dense<0.000000e+00> : vector<16x256xf32>
    %1021 = tpu.matmul %1008, %1020, %cst_622 {dimension_numbers = #tpu.dot_dimension_numbers<[1], [0], [0], [1], [0, 0, 1, 1], [], []>} : vector<16x16xf32>, vector<16x256xf32>, vector<16x256xf32> -> vector<16x256xf32>
    %1022 = vector.broadcast %1010 : vector<16x1xf32> to vector<16x256xf32>
    %1023 = arith.addf %1021, %1022 : vector<16x256xf32>
    %1024 = vector.extract_strided_slice %1023 {offsets = [0, 0], sizes = [8, 256], strides = [1, 1]} : vector<16x256xf32> to vector<8x256xf32>
    %cst_623 = arith.constant 0.000000e+00 : f32
    %1025 = vector.broadcast %cst_623 : f32 to vector<8x256xf32>
    %1026 = arith.cmpf olt, %1024, %1025 : vector<8x256xf32>
    %cst_624 = arith.constant -1.000000e+00 : f32
    %cst_625 = arith.constant 1.000000e+00 : f32
    %1027 = vector.broadcast %cst_624 : f32 to vector<8x256xf32>
    %1028 = vector.broadcast %cst_625 : f32 to vector<8x256xf32>
    %1029 = arith.select %1026, %1027, %1028 : vector<8x256xi1>, vector<8x256xf32>
    %1030 = math.absf %1024 : vector<8x256xf32>
    %cst_626 = arith.constant 2.41421366 : f32
    %1031 = vector.broadcast %cst_626 : f32 to vector<8x256xf32>
    %1032 = arith.cmpf ogt, %1030, %1031 : vector<8x256xf32>
    %cst_627 = arith.constant 0.414213568 : f32
    %1033 = vector.broadcast %cst_627 : f32 to vector<8x256xf32>
    %1034 = arith.cmpf ogt, %1030, %1033 : vector<8x256xf32>
    %cst_628 = arith.constant 1.000000e+00 : f32
    %1035 = vector.broadcast %cst_628 : f32 to vector<8x256xf32>
    %1036 = arith.subf %1030, %1035 : vector<8x256xf32>
    %1037 = arith.select %1034, %1036, %1030 : vector<8x256xi1>, vector<8x256xf32>
    %cst_629 = arith.constant -1.000000e+00 : f32
    %1038 = vector.broadcast %cst_629 : f32 to vector<8x256xf32>
    %1039 = arith.select %1032, %1038, %1037 : vector<8x256xi1>, vector<8x256xf32>
    %cst_630 = arith.constant 1.000000e+00 : f32
    %1040 = vector.broadcast %cst_630 : f32 to vector<8x256xf32>
    %1041 = arith.addf %1030, %1040 : vector<8x256xf32>
    %cst_631 = arith.constant 1.000000e+00 : f32
    %1042 = vector.broadcast %cst_631 : f32 to vector<8x256xf32>
    %1043 = arith.select %1034, %1041, %1042 : vector<8x256xi1>, vector<8x256xf32>
    %1044 = arith.select %1032, %1030, %1043 : vector<8x256xi1>, vector<8x256xf32>
    %1045 = arith.divf %1039, %1044 : vector<8x256xf32>
    %cst_632 = arith.constant 0.785398185 : f32
    %cst_633 = arith.constant 0.000000e+00 : f32
    %1046 = vector.broadcast %cst_632 : f32 to vector<8x256xf32>
    %1047 = vector.broadcast %cst_633 : f32 to vector<8x256xf32>
    %1048 = arith.select %1034, %1046, %1047 : vector<8x256xi1>, vector<8x256xf32>
    %cst_634 = arith.constant 1.57079637 : f32
    %1049 = vector.broadcast %cst_634 : f32 to vector<8x256xf32>
    %1050 = arith.select %1032, %1049, %1048 : vector<8x256xi1>, vector<8x256xf32>
    %1051 = arith.mulf %1045, %1045 : vector<8x256xf32>
    %cst_635 = arith.constant 0.0805374458 : f32
    %1052 = vector.broadcast %cst_635 : f32 to vector<8x256xf32>
    %1053 = arith.mulf %1052, %1051 : vector<8x256xf32>
    %cst_636 = arith.constant 0.138776854 : f32
    %1054 = vector.broadcast %cst_636 : f32 to vector<8x256xf32>
    %1055 = arith.subf %1053, %1054 : vector<8x256xf32>
    %1056 = arith.mulf %1055, %1051 : vector<8x256xf32>
    %cst_637 = arith.constant 0.199777111 : f32
    %1057 = vector.broadcast %cst_637 : f32 to vector<8x256xf32>
    %1058 = arith.addf %1056, %1057 : vector<8x256xf32>
    %1059 = arith.mulf %1058, %1051 : vector<8x256xf32>
    %cst_638 = arith.constant 0.333329499 : f32
    %1060 = vector.broadcast %cst_638 : f32 to vector<8x256xf32>
    %1061 = arith.subf %1059, %1060 : vector<8x256xf32>
    %1062 = arith.addf %1050, %1045 : vector<8x256xf32>
    %1063 = arith.mulf %1045, %1051 : vector<8x256xf32>
    %1064 = arith.mulf %1063, %1061 : vector<8x256xf32>
    %1065 = arith.addf %1062, %1064 : vector<8x256xf32>
    %1066 = arith.mulf %1029, %1065 : vector<8x256xf32>
    %cst_639 = arith.constant 1.272000e+00 : f32
    %1067 = vector.broadcast %cst_639 : f32 to vector<8x256xf32>
    %1068 = arith.mulf %1067, %1066 : vector<8x256xf32>
    %cst_640 = arith.constant dense<0.000000e+00> : vector<256xf32>
    %1069 = vector.multi_reduction <add>, %1068, %cst_640 [0] : vector<8x256xf32> to vector<256xf32>
    %1070 = vector.shape_cast %1069 : vector<256xf32> to vector<1x256xf32>
    %cst_641 = arith.constant 2.000000e-01 : f32
    %1071 = vector.broadcast %cst_641 : f32 to vector<1x256xf32>
    %1072 = arith.mulf %1070, %1071 : vector<1x256xf32>
    %1073 = vector.broadcast %1072 : vector<1x256xf32> to vector<8x256xf32>
    %1074 = arith.subf %1068, %1073 : vector<8x256xf32>
    %1075 = math.exp %1074 : vector<8x256xf32>
    %1076 = arith.mulf %1075, %997 : vector<8x256xf32>
    %1077 = vector.extract_strided_slice %1023 {offsets = [8, 0], sizes = [8, 256], strides = [1, 1]} : vector<16x256xf32> to vector<8x256xf32>
    %1078 = arith.addf %1076, %1077 : vector<8x256xf32>
    %c6_642 = arith.constant 6 : index
    %c0_643 = arith.constant 0 : index
    %c0_644 = arith.constant 0 : index
    %c0_645 = arith.constant 0 : index
    %1079 = vector.load %arg2[%c6_642, %c0_643, %c0_644, %c0_645] : memref<8x2x16x8xf32, #tpu.memory_space<vmem>>, vector<1x1x16x8xf32>
    %1080 = vector.shape_cast %1079 : vector<1x1x16x8xf32> to vector<16x8xf32>
    %c6_646 = arith.constant 6 : index
    %c0_647 = arith.constant 0 : index
    %c0_648 = arith.constant 0 : index
    %c0_649 = arith.constant 0 : index
    %1081 = vector.load %arg3[%c6_646, %c0_647, %c0_648, %c0_649] : memref<8x2x16x1xf32, #tpu.memory_space<vmem>>, vector<1x1x16x1xf32>
    %1082 = vector.shape_cast %1081 : vector<1x1x16x1xf32> to vector<16x1xf32>
    %c6_650 = arith.constant 6 : index
    %c0_651 = arith.constant 0 : index
    %c0_652 = arith.constant 0 : index
    %c0_653 = arith.constant 0 : index
    %1083 = vector.load %arg4[%c6_650, %c0_651, %c0_652, %c0_653] : memref<8x2x16x16xf32, #tpu.memory_space<vmem>>, vector<1x1x16x16xf32>
    %1084 = vector.shape_cast %1083 : vector<1x1x16x16xf32> to vector<16x16xf32>
    %c6_654 = arith.constant 6 : index
    %c0_655 = arith.constant 0 : index
    %c0_656 = arith.constant 0 : index
    %c0_657 = arith.constant 0 : index
    %1085 = vector.load %arg5[%c6_654, %c0_655, %c0_656, %c0_657] : memref<8x2x16x1xf32, #tpu.memory_space<vmem>>, vector<1x1x16x1xf32>
    %1086 = vector.shape_cast %1085 : vector<1x1x16x1xf32> to vector<16x1xf32>
    %c6_658 = arith.constant 6 : index
    %c0_659 = arith.constant 0 : index
    %c0_660 = arith.constant 0 : index
    %c0_661 = arith.constant 0 : index
    %1087 = vector.load %arg6[%c6_658, %c0_659, %c0_660, %c0_661] : memref<8x2x16x16xf32, #tpu.memory_space<vmem>>, vector<1x1x16x16xf32>
    %1088 = vector.shape_cast %1087 : vector<1x1x16x16xf32> to vector<16x16xf32>
    %c6_662 = arith.constant 6 : index
    %c0_663 = arith.constant 0 : index
    %c0_664 = arith.constant 0 : index
    %c0_665 = arith.constant 0 : index
    %1089 = vector.load %arg7[%c6_662, %c0_663, %c0_664, %c0_665] : memref<8x2x16x1xf32, #tpu.memory_space<vmem>>, vector<1x1x16x1xf32>
    %1090 = vector.shape_cast %1089 : vector<1x1x16x1xf32> to vector<16x1xf32>
    %cst_666 = arith.constant dense<0.000000e+00> : vector<16x256xf32>
    %1091 = tpu.matmul %1080, %1078, %cst_666 {dimension_numbers = #tpu.dot_dimension_numbers<[1], [0], [0], [1], [0, 0, 1, 1], [], []>} : vector<16x8xf32>, vector<8x256xf32>, vector<16x256xf32> -> vector<16x256xf32>
    %1092 = vector.broadcast %1082 : vector<16x1xf32> to vector<16x256xf32>
    %1093 = arith.addf %1091, %1092 : vector<16x256xf32>
    %cst_667 = arith.constant 0.000000e+00 : f32
    %1094 = vector.broadcast %cst_667 : f32 to vector<16x256xf32>
    %1095 = arith.maximumf %1093, %1094 : vector<16x256xf32>
    %cst_668 = arith.constant dense<0.000000e+00> : vector<16x256xf32>
    %1096 = tpu.matmul %1084, %1095, %cst_668 {dimension_numbers = #tpu.dot_dimension_numbers<[1], [0], [0], [1], [0, 0, 1, 1], [], []>} : vector<16x16xf32>, vector<16x256xf32>, vector<16x256xf32> -> vector<16x256xf32>
    %1097 = vector.broadcast %1086 : vector<16x1xf32> to vector<16x256xf32>
    %1098 = arith.addf %1096, %1097 : vector<16x256xf32>
    %cst_669 = arith.constant 0.000000e+00 : f32
    %1099 = vector.broadcast %cst_669 : f32 to vector<16x256xf32>
    %1100 = arith.maximumf %1098, %1099 : vector<16x256xf32>
    %cst_670 = arith.constant dense<0.000000e+00> : vector<16x256xf32>
    %1101 = tpu.matmul %1088, %1100, %cst_670 {dimension_numbers = #tpu.dot_dimension_numbers<[1], [0], [0], [1], [0, 0, 1, 1], [], []>} : vector<16x16xf32>, vector<16x256xf32>, vector<16x256xf32> -> vector<16x256xf32>
    %1102 = vector.broadcast %1090 : vector<16x1xf32> to vector<16x256xf32>
    %1103 = arith.addf %1101, %1102 : vector<16x256xf32>
    %1104 = vector.extract_strided_slice %1103 {offsets = [0, 0], sizes = [8, 256], strides = [1, 1]} : vector<16x256xf32> to vector<8x256xf32>
    %cst_671 = arith.constant 0.000000e+00 : f32
    %1105 = vector.broadcast %cst_671 : f32 to vector<8x256xf32>
    %1106 = arith.cmpf olt, %1104, %1105 : vector<8x256xf32>
    %cst_672 = arith.constant -1.000000e+00 : f32
    %cst_673 = arith.constant 1.000000e+00 : f32
    %1107 = vector.broadcast %cst_672 : f32 to vector<8x256xf32>
    %1108 = vector.broadcast %cst_673 : f32 to vector<8x256xf32>
    %1109 = arith.select %1106, %1107, %1108 : vector<8x256xi1>, vector<8x256xf32>
    %1110 = math.absf %1104 : vector<8x256xf32>
    %cst_674 = arith.constant 2.41421366 : f32
    %1111 = vector.broadcast %cst_674 : f32 to vector<8x256xf32>
    %1112 = arith.cmpf ogt, %1110, %1111 : vector<8x256xf32>
    %cst_675 = arith.constant 0.414213568 : f32
    %1113 = vector.broadcast %cst_675 : f32 to vector<8x256xf32>
    %1114 = arith.cmpf ogt, %1110, %1113 : vector<8x256xf32>
    %cst_676 = arith.constant 1.000000e+00 : f32
    %1115 = vector.broadcast %cst_676 : f32 to vector<8x256xf32>
    %1116 = arith.subf %1110, %1115 : vector<8x256xf32>
    %1117 = arith.select %1114, %1116, %1110 : vector<8x256xi1>, vector<8x256xf32>
    %cst_677 = arith.constant -1.000000e+00 : f32
    %1118 = vector.broadcast %cst_677 : f32 to vector<8x256xf32>
    %1119 = arith.select %1112, %1118, %1117 : vector<8x256xi1>, vector<8x256xf32>
    %cst_678 = arith.constant 1.000000e+00 : f32
    %1120 = vector.broadcast %cst_678 : f32 to vector<8x256xf32>
    %1121 = arith.addf %1110, %1120 : vector<8x256xf32>
    %cst_679 = arith.constant 1.000000e+00 : f32
    %1122 = vector.broadcast %cst_679 : f32 to vector<8x256xf32>
    %1123 = arith.select %1114, %1121, %1122 : vector<8x256xi1>, vector<8x256xf32>
    %1124 = arith.select %1112, %1110, %1123 : vector<8x256xi1>, vector<8x256xf32>
    %1125 = arith.divf %1119, %1124 : vector<8x256xf32>
    %cst_680 = arith.constant 0.785398185 : f32
    %cst_681 = arith.constant 0.000000e+00 : f32
    %1126 = vector.broadcast %cst_680 : f32 to vector<8x256xf32>
    %1127 = vector.broadcast %cst_681 : f32 to vector<8x256xf32>
    %1128 = arith.select %1114, %1126, %1127 : vector<8x256xi1>, vector<8x256xf32>
    %cst_682 = arith.constant 1.57079637 : f32
    %1129 = vector.broadcast %cst_682 : f32 to vector<8x256xf32>
    %1130 = arith.select %1112, %1129, %1128 : vector<8x256xi1>, vector<8x256xf32>
    %1131 = arith.mulf %1125, %1125 : vector<8x256xf32>
    %cst_683 = arith.constant 0.0805374458 : f32
    %1132 = vector.broadcast %cst_683 : f32 to vector<8x256xf32>
    %1133 = arith.mulf %1132, %1131 : vector<8x256xf32>
    %cst_684 = arith.constant 0.138776854 : f32
    %1134 = vector.broadcast %cst_684 : f32 to vector<8x256xf32>
    %1135 = arith.subf %1133, %1134 : vector<8x256xf32>
    %1136 = arith.mulf %1135, %1131 : vector<8x256xf32>
    %cst_685 = arith.constant 0.199777111 : f32
    %1137 = vector.broadcast %cst_685 : f32 to vector<8x256xf32>
    %1138 = arith.addf %1136, %1137 : vector<8x256xf32>
    %1139 = arith.mulf %1138, %1131 : vector<8x256xf32>
    %cst_686 = arith.constant 0.333329499 : f32
    %1140 = vector.broadcast %cst_686 : f32 to vector<8x256xf32>
    %1141 = arith.subf %1139, %1140 : vector<8x256xf32>
    %1142 = arith.addf %1130, %1125 : vector<8x256xf32>
    %1143 = arith.mulf %1125, %1131 : vector<8x256xf32>
    %1144 = arith.mulf %1143, %1141 : vector<8x256xf32>
    %1145 = arith.addf %1142, %1144 : vector<8x256xf32>
    %1146 = arith.mulf %1109, %1145 : vector<8x256xf32>
    %cst_687 = arith.constant 1.272000e+00 : f32
    %1147 = vector.broadcast %cst_687 : f32 to vector<8x256xf32>
    %1148 = arith.mulf %1147, %1146 : vector<8x256xf32>
    %cst_688 = arith.constant dense<0.000000e+00> : vector<256xf32>
    %1149 = vector.multi_reduction <add>, %1148, %cst_688 [0] : vector<8x256xf32> to vector<256xf32>
    %1150 = vector.shape_cast %1149 : vector<256xf32> to vector<1x256xf32>
    %cst_689 = arith.constant 2.000000e-01 : f32
    %1151 = vector.broadcast %cst_689 : f32 to vector<1x256xf32>
    %1152 = arith.mulf %1150, %1151 : vector<1x256xf32>
    %1153 = vector.broadcast %1152 : vector<1x256xf32> to vector<8x256xf32>
    %1154 = arith.subf %1148, %1153 : vector<8x256xf32>
    %1155 = math.exp %1154 : vector<8x256xf32>
    %1156 = arith.mulf %1155, %998 : vector<8x256xf32>
    %1157 = vector.extract_strided_slice %1103 {offsets = [8, 0], sizes = [8, 256], strides = [1, 1]} : vector<16x256xf32> to vector<8x256xf32>
    %1158 = arith.addf %1156, %1157 : vector<8x256xf32>
    %c6_690 = arith.constant 6 : index
    %c0_691 = arith.constant 0 : index
    %c0_692 = arith.constant 0 : index
    %1159 = vector.load %arg8[%c6_690, %c0_691, %c0_692] : memref<8x16x16xf32, #tpu.memory_space<vmem>>, vector<1x16x16xf32>
    %1160 = vector.shape_cast %1159 : vector<1x16x16xf32> to vector<16x16xf32>
    %1161 = tpu.concatenate %1078, %1158 in 0 : vector<8x256xf32>, vector<8x256xf32> -> vector<16x256xf32>
    %cst_693 = arith.constant dense<0.000000e+00> : vector<16x256xf32>
    %1162 = tpu.matmul %1160, %1161, %cst_693 {dimension_numbers = #tpu.dot_dimension_numbers<[1], [0], [0], [1], [0, 0, 1, 1], [], []>} : vector<16x16xf32>, vector<16x256xf32>, vector<16x256xf32> -> vector<16x256xf32>
    %1163 = vector.extract_strided_slice %1162 {offsets = [0, 0], sizes = [8, 256], strides = [1, 1]} : vector<16x256xf32> to vector<8x256xf32>
    %1164 = vector.extract_strided_slice %1162 {offsets = [8, 0], sizes = [8, 256], strides = [1, 1]} : vector<16x256xf32> to vector<8x256xf32>
    %c7 = arith.constant 7 : index
    %c1_694 = arith.constant 1 : index
    %c0_695 = arith.constant 0 : index
    %c0_696 = arith.constant 0 : index
    %1165 = vector.load %arg2[%c7, %c1_694, %c0_695, %c0_696] : memref<8x2x16x8xf32, #tpu.memory_space<vmem>>, vector<1x1x16x8xf32>
    %1166 = vector.shape_cast %1165 : vector<1x1x16x8xf32> to vector<16x8xf32>
    %c7_697 = arith.constant 7 : index
    %c1_698 = arith.constant 1 : index
    %c0_699 = arith.constant 0 : index
    %c0_700 = arith.constant 0 : index
    %1167 = vector.load %arg3[%c7_697, %c1_698, %c0_699, %c0_700] : memref<8x2x16x1xf32, #tpu.memory_space<vmem>>, vector<1x1x16x1xf32>
    %1168 = vector.shape_cast %1167 : vector<1x1x16x1xf32> to vector<16x1xf32>
    %c7_701 = arith.constant 7 : index
    %c1_702 = arith.constant 1 : index
    %c0_703 = arith.constant 0 : index
    %c0_704 = arith.constant 0 : index
    %1169 = vector.load %arg4[%c7_701, %c1_702, %c0_703, %c0_704] : memref<8x2x16x16xf32, #tpu.memory_space<vmem>>, vector<1x1x16x16xf32>
    %1170 = vector.shape_cast %1169 : vector<1x1x16x16xf32> to vector<16x16xf32>
    %c7_705 = arith.constant 7 : index
    %c1_706 = arith.constant 1 : index
    %c0_707 = arith.constant 0 : index
    %c0_708 = arith.constant 0 : index
    %1171 = vector.load %arg5[%c7_705, %c1_706, %c0_707, %c0_708] : memref<8x2x16x1xf32, #tpu.memory_space<vmem>>, vector<1x1x16x1xf32>
    %1172 = vector.shape_cast %1171 : vector<1x1x16x1xf32> to vector<16x1xf32>
    %c7_709 = arith.constant 7 : index
    %c1_710 = arith.constant 1 : index
    %c0_711 = arith.constant 0 : index
    %c0_712 = arith.constant 0 : index
    %1173 = vector.load %arg6[%c7_709, %c1_710, %c0_711, %c0_712] : memref<8x2x16x16xf32, #tpu.memory_space<vmem>>, vector<1x1x16x16xf32>
    %1174 = vector.shape_cast %1173 : vector<1x1x16x16xf32> to vector<16x16xf32>
    %c7_713 = arith.constant 7 : index
    %c1_714 = arith.constant 1 : index
    %c0_715 = arith.constant 0 : index
    %c0_716 = arith.constant 0 : index
    %1175 = vector.load %arg7[%c7_713, %c1_714, %c0_715, %c0_716] : memref<8x2x16x1xf32, #tpu.memory_space<vmem>>, vector<1x1x16x1xf32>
    %1176 = vector.shape_cast %1175 : vector<1x1x16x1xf32> to vector<16x1xf32>
    %cst_717 = arith.constant dense<0.000000e+00> : vector<16x256xf32>
    %1177 = tpu.matmul %1166, %1164, %cst_717 {dimension_numbers = #tpu.dot_dimension_numbers<[1], [0], [0], [1], [0, 0, 1, 1], [], []>} : vector<16x8xf32>, vector<8x256xf32>, vector<16x256xf32> -> vector<16x256xf32>
    %1178 = vector.broadcast %1168 : vector<16x1xf32> to vector<16x256xf32>
    %1179 = arith.addf %1177, %1178 : vector<16x256xf32>
    %cst_718 = arith.constant 0.000000e+00 : f32
    %1180 = vector.broadcast %cst_718 : f32 to vector<16x256xf32>
    %1181 = arith.maximumf %1179, %1180 : vector<16x256xf32>
    %cst_719 = arith.constant dense<0.000000e+00> : vector<16x256xf32>
    %1182 = tpu.matmul %1170, %1181, %cst_719 {dimension_numbers = #tpu.dot_dimension_numbers<[1], [0], [0], [1], [0, 0, 1, 1], [], []>} : vector<16x16xf32>, vector<16x256xf32>, vector<16x256xf32> -> vector<16x256xf32>
    %1183 = vector.broadcast %1172 : vector<16x1xf32> to vector<16x256xf32>
    %1184 = arith.addf %1182, %1183 : vector<16x256xf32>
    %cst_720 = arith.constant 0.000000e+00 : f32
    %1185 = vector.broadcast %cst_720 : f32 to vector<16x256xf32>
    %1186 = arith.maximumf %1184, %1185 : vector<16x256xf32>
    %cst_721 = arith.constant dense<0.000000e+00> : vector<16x256xf32>
    %1187 = tpu.matmul %1174, %1186, %cst_721 {dimension_numbers = #tpu.dot_dimension_numbers<[1], [0], [0], [1], [0, 0, 1, 1], [], []>} : vector<16x16xf32>, vector<16x256xf32>, vector<16x256xf32> -> vector<16x256xf32>
    %1188 = vector.broadcast %1176 : vector<16x1xf32> to vector<16x256xf32>
    %1189 = arith.addf %1187, %1188 : vector<16x256xf32>
    %1190 = vector.extract_strided_slice %1189 {offsets = [0, 0], sizes = [8, 256], strides = [1, 1]} : vector<16x256xf32> to vector<8x256xf32>
    %cst_722 = arith.constant 0.000000e+00 : f32
    %1191 = vector.broadcast %cst_722 : f32 to vector<8x256xf32>
    %1192 = arith.cmpf olt, %1190, %1191 : vector<8x256xf32>
    %cst_723 = arith.constant -1.000000e+00 : f32
    %cst_724 = arith.constant 1.000000e+00 : f32
    %1193 = vector.broadcast %cst_723 : f32 to vector<8x256xf32>
    %1194 = vector.broadcast %cst_724 : f32 to vector<8x256xf32>
    %1195 = arith.select %1192, %1193, %1194 : vector<8x256xi1>, vector<8x256xf32>
    %1196 = math.absf %1190 : vector<8x256xf32>
    %cst_725 = arith.constant 2.41421366 : f32
    %1197 = vector.broadcast %cst_725 : f32 to vector<8x256xf32>
    %1198 = arith.cmpf ogt, %1196, %1197 : vector<8x256xf32>
    %cst_726 = arith.constant 0.414213568 : f32
    %1199 = vector.broadcast %cst_726 : f32 to vector<8x256xf32>
    %1200 = arith.cmpf ogt, %1196, %1199 : vector<8x256xf32>
    %cst_727 = arith.constant 1.000000e+00 : f32
    %1201 = vector.broadcast %cst_727 : f32 to vector<8x256xf32>
    %1202 = arith.subf %1196, %1201 : vector<8x256xf32>
    %1203 = arith.select %1200, %1202, %1196 : vector<8x256xi1>, vector<8x256xf32>
    %cst_728 = arith.constant -1.000000e+00 : f32
    %1204 = vector.broadcast %cst_728 : f32 to vector<8x256xf32>
    %1205 = arith.select %1198, %1204, %1203 : vector<8x256xi1>, vector<8x256xf32>
    %cst_729 = arith.constant 1.000000e+00 : f32
    %1206 = vector.broadcast %cst_729 : f32 to vector<8x256xf32>
    %1207 = arith.addf %1196, %1206 : vector<8x256xf32>
    %cst_730 = arith.constant 1.000000e+00 : f32
    %1208 = vector.broadcast %cst_730 : f32 to vector<8x256xf32>
    %1209 = arith.select %1200, %1207, %1208 : vector<8x256xi1>, vector<8x256xf32>
    %1210 = arith.select %1198, %1196, %1209 : vector<8x256xi1>, vector<8x256xf32>
    %1211 = arith.divf %1205, %1210 : vector<8x256xf32>
    %cst_731 = arith.constant 0.785398185 : f32
    %cst_732 = arith.constant 0.000000e+00 : f32
    %1212 = vector.broadcast %cst_731 : f32 to vector<8x256xf32>
    %1213 = vector.broadcast %cst_732 : f32 to vector<8x256xf32>
    %1214 = arith.select %1200, %1212, %1213 : vector<8x256xi1>, vector<8x256xf32>
    %cst_733 = arith.constant 1.57079637 : f32
    %1215 = vector.broadcast %cst_733 : f32 to vector<8x256xf32>
    %1216 = arith.select %1198, %1215, %1214 : vector<8x256xi1>, vector<8x256xf32>
    %1217 = arith.mulf %1211, %1211 : vector<8x256xf32>
    %cst_734 = arith.constant 0.0805374458 : f32
    %1218 = vector.broadcast %cst_734 : f32 to vector<8x256xf32>
    %1219 = arith.mulf %1218, %1217 : vector<8x256xf32>
    %cst_735 = arith.constant 0.138776854 : f32
    %1220 = vector.broadcast %cst_735 : f32 to vector<8x256xf32>
    %1221 = arith.subf %1219, %1220 : vector<8x256xf32>
    %1222 = arith.mulf %1221, %1217 : vector<8x256xf32>
    %cst_736 = arith.constant 0.199777111 : f32
    %1223 = vector.broadcast %cst_736 : f32 to vector<8x256xf32>
    %1224 = arith.addf %1222, %1223 : vector<8x256xf32>
    %1225 = arith.mulf %1224, %1217 : vector<8x256xf32>
    %cst_737 = arith.constant 0.333329499 : f32
    %1226 = vector.broadcast %cst_737 : f32 to vector<8x256xf32>
    %1227 = arith.subf %1225, %1226 : vector<8x256xf32>
    %1228 = arith.addf %1216, %1211 : vector<8x256xf32>
    %1229 = arith.mulf %1211, %1217 : vector<8x256xf32>
    %1230 = arith.mulf %1229, %1227 : vector<8x256xf32>
    %1231 = arith.addf %1228, %1230 : vector<8x256xf32>
    %1232 = arith.mulf %1195, %1231 : vector<8x256xf32>
    %cst_738 = arith.constant 1.272000e+00 : f32
    %1233 = vector.broadcast %cst_738 : f32 to vector<8x256xf32>
    %1234 = arith.mulf %1233, %1232 : vector<8x256xf32>
    %cst_739 = arith.constant dense<0.000000e+00> : vector<256xf32>
    %1235 = vector.multi_reduction <add>, %1234, %cst_739 [0] : vector<8x256xf32> to vector<256xf32>
    %1236 = vector.shape_cast %1235 : vector<256xf32> to vector<1x256xf32>
    %cst_740 = arith.constant 2.000000e-01 : f32
    %1237 = vector.broadcast %cst_740 : f32 to vector<1x256xf32>
    %1238 = arith.mulf %1236, %1237 : vector<1x256xf32>
    %1239 = vector.broadcast %1238 : vector<1x256xf32> to vector<8x256xf32>
    %1240 = arith.subf %1234, %1239 : vector<8x256xf32>
    %1241 = math.exp %1240 : vector<8x256xf32>
    %1242 = arith.mulf %1241, %1163 : vector<8x256xf32>
    %1243 = vector.extract_strided_slice %1189 {offsets = [8, 0], sizes = [8, 256], strides = [1, 1]} : vector<16x256xf32> to vector<8x256xf32>
    %1244 = arith.addf %1242, %1243 : vector<8x256xf32>
    %c7_741 = arith.constant 7 : index
    %c0_742 = arith.constant 0 : index
    %c0_743 = arith.constant 0 : index
    %c0_744 = arith.constant 0 : index
    %1245 = vector.load %arg2[%c7_741, %c0_742, %c0_743, %c0_744] : memref<8x2x16x8xf32, #tpu.memory_space<vmem>>, vector<1x1x16x8xf32>
    %1246 = vector.shape_cast %1245 : vector<1x1x16x8xf32> to vector<16x8xf32>
    %c7_745 = arith.constant 7 : index
    %c0_746 = arith.constant 0 : index
    %c0_747 = arith.constant 0 : index
    %c0_748 = arith.constant 0 : index
    %1247 = vector.load %arg3[%c7_745, %c0_746, %c0_747, %c0_748] : memref<8x2x16x1xf32, #tpu.memory_space<vmem>>, vector<1x1x16x1xf32>
    %1248 = vector.shape_cast %1247 : vector<1x1x16x1xf32> to vector<16x1xf32>
    %c7_749 = arith.constant 7 : index
    %c0_750 = arith.constant 0 : index
    %c0_751 = arith.constant 0 : index
    %c0_752 = arith.constant 0 : index
    %1249 = vector.load %arg4[%c7_749, %c0_750, %c0_751, %c0_752] : memref<8x2x16x16xf32, #tpu.memory_space<vmem>>, vector<1x1x16x16xf32>
    %1250 = vector.shape_cast %1249 : vector<1x1x16x16xf32> to vector<16x16xf32>
    %c7_753 = arith.constant 7 : index
    %c0_754 = arith.constant 0 : index
    %c0_755 = arith.constant 0 : index
    %c0_756 = arith.constant 0 : index
    %1251 = vector.load %arg5[%c7_753, %c0_754, %c0_755, %c0_756] : memref<8x2x16x1xf32, #tpu.memory_space<vmem>>, vector<1x1x16x1xf32>
    %1252 = vector.shape_cast %1251 : vector<1x1x16x1xf32> to vector<16x1xf32>
    %c7_757 = arith.constant 7 : index
    %c0_758 = arith.constant 0 : index
    %c0_759 = arith.constant 0 : index
    %c0_760 = arith.constant 0 : index
    %1253 = vector.load %arg6[%c7_757, %c0_758, %c0_759, %c0_760] : memref<8x2x16x16xf32, #tpu.memory_space<vmem>>, vector<1x1x16x16xf32>
    %1254 = vector.shape_cast %1253 : vector<1x1x16x16xf32> to vector<16x16xf32>
    %c7_761 = arith.constant 7 : index
    %c0_762 = arith.constant 0 : index
    %c0_763 = arith.constant 0 : index
    %c0_764 = arith.constant 0 : index
    %1255 = vector.load %arg7[%c7_761, %c0_762, %c0_763, %c0_764] : memref<8x2x16x1xf32, #tpu.memory_space<vmem>>, vector<1x1x16x1xf32>
    %1256 = vector.shape_cast %1255 : vector<1x1x16x1xf32> to vector<16x1xf32>
    %cst_765 = arith.constant dense<0.000000e+00> : vector<16x256xf32>
    %1257 = tpu.matmul %1246, %1244, %cst_765 {dimension_numbers = #tpu.dot_dimension_numbers<[1], [0], [0], [1], [0, 0, 1, 1], [], []>} : vector<16x8xf32>, vector<8x256xf32>, vector<16x256xf32> -> vector<16x256xf32>
    %1258 = vector.broadcast %1248 : vector<16x1xf32> to vector<16x256xf32>
    %1259 = arith.addf %1257, %1258 : vector<16x256xf32>
    %cst_766 = arith.constant 0.000000e+00 : f32
    %1260 = vector.broadcast %cst_766 : f32 to vector<16x256xf32>
    %1261 = arith.maximumf %1259, %1260 : vector<16x256xf32>
    %cst_767 = arith.constant dense<0.000000e+00> : vector<16x256xf32>
    %1262 = tpu.matmul %1250, %1261, %cst_767 {dimension_numbers = #tpu.dot_dimension_numbers<[1], [0], [0], [1], [0, 0, 1, 1], [], []>} : vector<16x16xf32>, vector<16x256xf32>, vector<16x256xf32> -> vector<16x256xf32>
    %1263 = vector.broadcast %1252 : vector<16x1xf32> to vector<16x256xf32>
    %1264 = arith.addf %1262, %1263 : vector<16x256xf32>
    %cst_768 = arith.constant 0.000000e+00 : f32
    %1265 = vector.broadcast %cst_768 : f32 to vector<16x256xf32>
    %1266 = arith.maximumf %1264, %1265 : vector<16x256xf32>
    %cst_769 = arith.constant dense<0.000000e+00> : vector<16x256xf32>
    %1267 = tpu.matmul %1254, %1266, %cst_769 {dimension_numbers = #tpu.dot_dimension_numbers<[1], [0], [0], [1], [0, 0, 1, 1], [], []>} : vector<16x16xf32>, vector<16x256xf32>, vector<16x256xf32> -> vector<16x256xf32>
    %1268 = vector.broadcast %1256 : vector<16x1xf32> to vector<16x256xf32>
    %1269 = arith.addf %1267, %1268 : vector<16x256xf32>
    %1270 = vector.extract_strided_slice %1269 {offsets = [0, 0], sizes = [8, 256], strides = [1, 1]} : vector<16x256xf32> to vector<8x256xf32>
    %cst_770 = arith.constant 0.000000e+00 : f32
    %1271 = vector.broadcast %cst_770 : f32 to vector<8x256xf32>
    %1272 = arith.cmpf olt, %1270, %1271 : vector<8x256xf32>
    %cst_771 = arith.constant -1.000000e+00 : f32
    %cst_772 = arith.constant 1.000000e+00 : f32
    %1273 = vector.broadcast %cst_771 : f32 to vector<8x256xf32>
    %1274 = vector.broadcast %cst_772 : f32 to vector<8x256xf32>
    %1275 = arith.select %1272, %1273, %1274 : vector<8x256xi1>, vector<8x256xf32>
    %1276 = math.absf %1270 : vector<8x256xf32>
    %cst_773 = arith.constant 2.41421366 : f32
    %1277 = vector.broadcast %cst_773 : f32 to vector<8x256xf32>
    %1278 = arith.cmpf ogt, %1276, %1277 : vector<8x256xf32>
    %cst_774 = arith.constant 0.414213568 : f32
    %1279 = vector.broadcast %cst_774 : f32 to vector<8x256xf32>
    %1280 = arith.cmpf ogt, %1276, %1279 : vector<8x256xf32>
    %cst_775 = arith.constant 1.000000e+00 : f32
    %1281 = vector.broadcast %cst_775 : f32 to vector<8x256xf32>
    %1282 = arith.subf %1276, %1281 : vector<8x256xf32>
    %1283 = arith.select %1280, %1282, %1276 : vector<8x256xi1>, vector<8x256xf32>
    %cst_776 = arith.constant -1.000000e+00 : f32
    %1284 = vector.broadcast %cst_776 : f32 to vector<8x256xf32>
    %1285 = arith.select %1278, %1284, %1283 : vector<8x256xi1>, vector<8x256xf32>
    %cst_777 = arith.constant 1.000000e+00 : f32
    %1286 = vector.broadcast %cst_777 : f32 to vector<8x256xf32>
    %1287 = arith.addf %1276, %1286 : vector<8x256xf32>
    %cst_778 = arith.constant 1.000000e+00 : f32
    %1288 = vector.broadcast %cst_778 : f32 to vector<8x256xf32>
    %1289 = arith.select %1280, %1287, %1288 : vector<8x256xi1>, vector<8x256xf32>
    %1290 = arith.select %1278, %1276, %1289 : vector<8x256xi1>, vector<8x256xf32>
    %1291 = arith.divf %1285, %1290 : vector<8x256xf32>
    %cst_779 = arith.constant 0.785398185 : f32
    %cst_780 = arith.constant 0.000000e+00 : f32
    %1292 = vector.broadcast %cst_779 : f32 to vector<8x256xf32>
    %1293 = vector.broadcast %cst_780 : f32 to vector<8x256xf32>
    %1294 = arith.select %1280, %1292, %1293 : vector<8x256xi1>, vector<8x256xf32>
    %cst_781 = arith.constant 1.57079637 : f32
    %1295 = vector.broadcast %cst_781 : f32 to vector<8x256xf32>
    %1296 = arith.select %1278, %1295, %1294 : vector<8x256xi1>, vector<8x256xf32>
    %1297 = arith.mulf %1291, %1291 : vector<8x256xf32>
    %cst_782 = arith.constant 0.0805374458 : f32
    %1298 = vector.broadcast %cst_782 : f32 to vector<8x256xf32>
    %1299 = arith.mulf %1298, %1297 : vector<8x256xf32>
    %cst_783 = arith.constant 0.138776854 : f32
    %1300 = vector.broadcast %cst_783 : f32 to vector<8x256xf32>
    %1301 = arith.subf %1299, %1300 : vector<8x256xf32>
    %1302 = arith.mulf %1301, %1297 : vector<8x256xf32>
    %cst_784 = arith.constant 0.199777111 : f32
    %1303 = vector.broadcast %cst_784 : f32 to vector<8x256xf32>
    %1304 = arith.addf %1302, %1303 : vector<8x256xf32>
    %1305 = arith.mulf %1304, %1297 : vector<8x256xf32>
    %cst_785 = arith.constant 0.333329499 : f32
    %1306 = vector.broadcast %cst_785 : f32 to vector<8x256xf32>
    %1307 = arith.subf %1305, %1306 : vector<8x256xf32>
    %1308 = arith.addf %1296, %1291 : vector<8x256xf32>
    %1309 = arith.mulf %1291, %1297 : vector<8x256xf32>
    %1310 = arith.mulf %1309, %1307 : vector<8x256xf32>
    %1311 = arith.addf %1308, %1310 : vector<8x256xf32>
    %1312 = arith.mulf %1275, %1311 : vector<8x256xf32>
    %cst_786 = arith.constant 1.272000e+00 : f32
    %1313 = vector.broadcast %cst_786 : f32 to vector<8x256xf32>
    %1314 = arith.mulf %1313, %1312 : vector<8x256xf32>
    %cst_787 = arith.constant dense<0.000000e+00> : vector<256xf32>
    %1315 = vector.multi_reduction <add>, %1314, %cst_787 [0] : vector<8x256xf32> to vector<256xf32>
    %1316 = vector.shape_cast %1315 : vector<256xf32> to vector<1x256xf32>
    %cst_788 = arith.constant 2.000000e-01 : f32
    %1317 = vector.broadcast %cst_788 : f32 to vector<1x256xf32>
    %1318 = arith.mulf %1316, %1317 : vector<1x256xf32>
    %1319 = vector.broadcast %1318 : vector<1x256xf32> to vector<8x256xf32>
    %1320 = arith.subf %1314, %1319 : vector<8x256xf32>
    %1321 = math.exp %1320 : vector<8x256xf32>
    %1322 = arith.mulf %1321, %1164 : vector<8x256xf32>
    %1323 = vector.extract_strided_slice %1269 {offsets = [8, 0], sizes = [8, 256], strides = [1, 1]} : vector<16x256xf32> to vector<8x256xf32>
    %1324 = arith.addf %1322, %1323 : vector<8x256xf32>
    %c7_789 = arith.constant 7 : index
    %c0_790 = arith.constant 0 : index
    %c0_791 = arith.constant 0 : index
    %1325 = vector.load %arg8[%c7_789, %c0_790, %c0_791] : memref<8x16x16xf32, #tpu.memory_space<vmem>>, vector<1x16x16xf32>
    %1326 = vector.shape_cast %1325 : vector<1x16x16xf32> to vector<16x16xf32>
    %1327 = tpu.concatenate %1244, %1324 in 0 : vector<8x256xf32>, vector<8x256xf32> -> vector<16x256xf32>
    %cst_792 = arith.constant dense<0.000000e+00> : vector<16x256xf32>
    %1328 = tpu.matmul %1326, %1327, %cst_792 {dimension_numbers = #tpu.dot_dimension_numbers<[1], [0], [0], [1], [0, 0, 1, 1], [], []>} : vector<16x16xf32>, vector<16x256xf32>, vector<16x256xf32> -> vector<16x256xf32>
    %c0_793 = arith.constant 0 : index
    %c0_794 = arith.constant 0 : index
    %1329 = vector.load %arg9[%c0_793, %c0_794] : memref<16x256xf32, #tpu.memory_space<vmem>>, vector<16x256xf32>
    tpu.vector_store %arg9[%c0_793, %c0_794], %1328 {strides = array<i32>} : memref<16x256xf32, #tpu.memory_space<vmem>>, vector<16x256xf32>,
    return
  }
  func.func @transform_0(%arg0: i32) -> (i32, i32) {
    %c0_i32 = arith.constant 0 : i32
    %c0_i32_0 = arith.constant 0 : i32
    return %c0_i32, %arg0 : i32, i32
  }
  func.func @transform_1(%arg0: i32) -> (i32, i32, i32, i32) {
    %c0_i32 = arith.constant 0 : i32
    %c0_i32_0 = arith.constant 0 : i32
    %c0_i32_1 = arith.constant 0 : i32
    %c0_i32_2 = arith.constant 0 : i32
    %c0_i32_3 = arith.constant 0 : i32
    return %c0_i32, %c0_i32_0, %c0_i32_1, %c0_i32_2 : i32, i32, i32, i32
  }
  func.func @transform_2(%arg0: i32) -> (i32, i32, i32, i32) {
    %c0_i32 = arith.constant 0 : i32
    %c0_i32_0 = arith.constant 0 : i32
    %c0_i32_1 = arith.constant 0 : i32
    %c0_i32_2 = arith.constant 0 : i32
    %c0_i32_3 = arith.constant 0 : i32
    return %c0_i32, %c0_i32_0, %c0_i32_1, %c0_i32_2 : i32, i32, i32, i32
  }
  func.func @transform_3(%arg0: i32) -> (i32, i32, i32, i32) {
    %c0_i32 = arith.constant 0 : i32
    %c0_i32_0 = arith.constant 0 : i32
    %c0_i32_1 = arith.constant 0 : i32
    %c0_i32_2 = arith.constant 0 : i32
    %c0_i32_3 = arith.constant 0 : i32
    return %c0_i32, %c0_i32_0, %c0_i32_1, %c0_i32_2 : i32, i32, i32, i32
  }
  func.func @transform_4(%arg0: i32) -> (i32, i32, i32, i32) {
    %c0_i32 = arith.constant 0 : i32
    %c0_i32_0 = arith.constant 0 : i32
    %c0_i32_1 = arith.constant 0 : i32
    %c0_i32_2 = arith.constant 0 : i32
    %c0_i32_3 = arith.constant 0 : i32
    return %c0_i32, %c0_i32_0, %c0_i32_1, %c0_i32_2 : i32, i32, i32, i32
  }
  func.func @transform_5(%arg0: i32) -> (i32, i32, i32, i32) {
    %c0_i32 = arith.constant 0 : i32
    %c0_i32_0 = arith.constant 0 : i32
    %c0_i32_1 = arith.constant 0 : i32
    %c0_i32_2 = arith.constant 0 : i32
    %c0_i32_3 = arith.constant 0 : i32
    return %c0_i32, %c0_i32_0, %c0_i32_1, %c0_i32_2 : i32, i32, i32, i32
  }
  func.func @transform_6(%arg0: i32) -> (i32, i32, i32, i32) {
    %c0_i32 = arith.constant 0 : i32
    %c0_i32_0 = arith.constant 0 : i32
    %c0_i32_1 = arith.constant 0 : i32
    %c0_i32_2 = arith.constant 0 : i32
    %c0_i32_3 = arith.constant 0 : i32
    return %c0_i32, %c0_i32_0, %c0_i32_1, %c0_i32_2 : i32, i32, i32, i32
  }
  func.func @transform_7(%arg0: i32) -> (i32, i32, i32) {
    %c0_i32 = arith.constant 0 : i32
    %c0_i32_0 = arith.constant 0 : i32
    %c0_i32_1 = arith.constant 0 : i32
    %c0_i32_2 = arith.constant 0 : i32
    return %c0_i32, %c0_i32_0, %c0_i32_1 : i32, i32, i32
  }
  func.func @transform_8(%arg0: i32) -> (i32, i32) {
    %c0_i32 = arith.constant 0 : i32
    %c0_i32_0 = arith.constant 0 : i32
    return %c0_i32, %arg0 : i32, i32
  }
}

</mosaic_0001>

<llo_original>
// kernel: gin_forward.1
$region0: #{gin_forward.1}
  #allocation0 [shape = 'u32[]', space=smem, size = 0x4, offset = 0x4, fixed_abs, tag = 'smem constant byte address 0x4 - core index']
  #allocation1 [shape = 'u32[72,128]{1,0:T(1,128)}', space=vmem, size = 0x9000, scoped, tag = 'internal scratch']
  %s0 = inlined_call_operand.vmem [shape: f32[16,512], index: 0, kind: input, shape index: {}]
  %s1 = inlined_call_operand.vmem [shape: f32[8,2,16,8], index: 1, kind: input, shape index: {}]
  %s2 = inlined_call_operand.vmem [shape: f32[8,2,16,1], index: 2, kind: input, shape index: {}]
  %s3 = inlined_call_operand.vmem [shape: f32[8,2,16,16], index: 3, kind: input, shape index: {}]
  %s4 = inlined_call_operand.vmem [shape: f32[8,2,16,1], index: 4, kind: input, shape index: {}]
  %s5 = inlined_call_operand.vmem [shape: f32[8,2,16,16], index: 5, kind: input, shape index: {}]
  %s6 = inlined_call_operand.vmem [shape: f32[8,2,16,1], index: 6, kind: input, shape index: {}]
  %s7 = inlined_call_operand.vmem [shape: f32[8,16,16], index: 7, kind: input, shape index: {}]
  %s8 = inlined_call_operand.vmem [shape: f32[16,512], index: 8, kind: output, shape index: {}]
  %s9 = sld [smem:[#allocation0]]
  $region107: #{gin_forward.1} parent=0
    _
  %s11 = ssub.s32 1, %s9
  %s12 = scalar_select 0, %s11, %s9
  $region1: #{gin_forward.1} parent=0
    #allocation2 [shape = 'u8[32768]{0}', space=vmem, size = 0x8000, scoped, tag = 'input window, operand 0']
    #allocation3 [shape = 'u8[32768]{0}', space=vmem, size = 0x8000, scoped, tag = 'output window, operand 0']
    loop: start=0, step=1, limit=4
    $region2: #{gin_forward.1} parent=1 // loop_pre_header
      _
    $region3: #{gin_forward.1} parent=1 // loop_header
      %s14 = sphi 0, %s18
      %p15 = scmp.ge.s32.totalorder %s14, 4
      %s24 = sphi 0, %s26
      %s27 = sphi 0, %s24
      %s28 = sphi 0, %s27
      %s44 = sphi 0, %s28
      %s48 = sphi 0, %s48
      %s50 = sphi 0, %s48
      %s51 = sphi 0, %s50
      %s65 = sphi 0, %s51
      %s69 = sphi 0, %s69
      %s71 = sphi 0, %s69
      %s72 = sphi 0, %s71
      %s86 = sphi 0, %s72
      %s90 = sphi 0, %s90
      %s92 = sphi 0, %s90
      %s93 = sphi 0, %s92
      %s107 = sphi 0, %s93
      %s111 = sphi 0, %s111
      %s113 = sphi 0, %s111
      %s114 = sphi 0, %s113
      %s128 = sphi 0, %s114
      %s132 = sphi 0, %s132
      %s134 = sphi 0, %s132
      %s135 = sphi 0, %s134
      %s149 = sphi 0, %s135
      %s153 = sphi 0, %s153
      %s155 = sphi 0, %s153
      %s156 = sphi 0, %s155
      %s170 = sphi 0, %s156
      %s174 = sphi 0, %s174
      %s176 = sphi 0, %s174
      %s177 = sphi 0, %s176
      %s191 = sphi 0, %s177
      %s197 = sphi 0, %s199
      %s200 = sphi 0, %s197
      %s201 = sphi 0, %s200
      %s217 = sphi 0, %s201
    $region4: #{gin_forward.1} parent=1 // loop_header_branch
      %17 = sbr.rel (%p15) target = $region8
    $region5: #{gin_forward.1} parent=1 // loop_body
      %s19 = ssub.s32 %s14, 1
      %s20 = ssub.s32 %s14, 2
      %s21 = sadd.s32 %s14, 1
      %s22 = ssub.s32 %s14, %s21
      %p23 = scmp.eq.s32.totalorder %s22, 0
      %s25 = sadd.s32 %s24, 1
      %s26 = scalar_select %p23, %s24, %s25
      %p29 = pneg %p23
      %p30 = scmp.eq.s32.totalorder %s14, 1
      %p31 = por %p29, %p30
      %p32 = scmp.ne.s32.totalorder %s24, %s27
      %p33 = scmp.eq.s32.totalorder %s14, 0
      %p34 = por %p32, %p33
      %p35 = scmp.ne.s32.totalorder %s24, %s27
      %p36 = scmp.eq.s32.totalorder %s19, 1
      %p37 = por %p35, %p36
      %p38 = scmp.ne.s32.totalorder %s27, %s28
      %p39 = scmp.eq.s32.totalorder %s19, 0
      %p40 = por %p38, %p39
      %p41 = scmp.ne.s32.totalorder %s27, %s28
      %p42 = scmp.eq.s32.totalorder %s20, 1
      %p43 = por %p41, %p42
      %p45 = scmp.ne.s32.totalorder %s28, %s44
      %p46 = scmp.eq.s32.totalorder %s20, 0
      %p47 = por %p45, %p46
      %s49 = sadd.s32 %s48, 1
      %p52 = scmp.eq.s32.totalorder %s14, 1
      %p53 = scmp.ne.s32.totalorder %s48, %s50
      %p54 = scmp.eq.s32.totalorder %s14, 0
      %p55 = por %p53, %p54
      %p56 = scmp.ne.s32.totalorder %s48, %s50
      %p57 = scmp.eq.s32.totalorder %s19, 1
      %p58 = por %p56, %p57
      %p59 = scmp.ne.s32.totalorder %s50, %s51
      %p60 = scmp.eq.s32.totalorder %s19, 0
      %p61 = por %p59, %p60
      %p62 = scmp.ne.s32.totalorder %s50, %s51
      %p63 = scmp.eq.s32.totalorder %s20, 1
      %p64 = por %p62, %p63
      %p66 = scmp.ne.s32.totalorder %s51, %s65
      %p67 = scmp.eq.s32.totalorder %s20, 0
      %p68 = por %p66, %p67
      %s70 = sadd.s32 %s69, 1
      %p73 = scmp.eq.s32.totalorder %s14, 1
      %p74 = scmp.ne.s32.totalorder %s69, %s71
      %p75 = scmp.eq.s32.totalorder %s14, 0
      %p76 = por %p74, %p75
      %p77 = scmp.ne.s32.totalorder %s69, %s71
      %p78 = scmp.eq.s32.totalorder %s19, 1
      %p79 = por %p77, %p78
      %p80 = scmp.ne.s32.totalorder %s71, %s72
      %p81 = scmp.eq.s32.totalorder %s19, 0
      %p82 = por %p80, %p81
      %p83 = scmp.ne.s32.totalorder %s71, %s72
      %p84 = scmp.eq.s32.totalorder %s20, 1
      %p85 = por %p83, %p84
      %p87 = scmp.ne.s32.totalorder %s72, %s86
      %p88 = scmp.eq.s32.totalorder %s20, 0
      %p89 = por %p87, %p88
      %s91 = sadd.s32 %s90, 1
      %p94 = scmp.eq.s32.totalorder %s14, 1
      %p95 = scmp.ne.s32.totalorder %s90, %s92
      %p96 = scmp.eq.s32.totalorder %s14, 0
      %p97 = por %p95, %p96
      %p98 = scmp.ne.s32.totalorder %s90, %s92
      %p99 = scmp.eq.s32.totalorder %s19, 1
      %p100 = por %p98, %p99
      %p101 = scmp.ne.s32.totalorder %s92, %s93
      %p102 = scmp.eq.s32.totalorder %s19, 0
      %p103 = por %p101, %p102
      %p104 = scmp.ne.s32.totalorder %s92, %s93
      %p105 = scmp.eq.s32.totalorder %s20, 1
      %p106 = por %p104, %p105
      %p108 = scmp.ne.s32.totalorder %s93, %s107
      %p109 = scmp.eq.s32.totalorder %s20, 0
      %p110 = por %p108, %p109
      %s112 = sadd.s32 %s111, 1
      %p115 = scmp.eq.s32.totalorder %s14, 1
      %p116 = scmp.ne.s32.totalorder %s111, %s113
      %p117 = scmp.eq.s32.totalorder %s14, 0
      %p118 = por %p116, %p117
      %p119 = scmp.ne.s32.totalorder %s111, %s113
      %p120 = scmp.eq.s32.totalorder %s19, 1
      %p121 = por %p119, %p120
      %p122 = scmp.ne.s32.totalorder %s113, %s114
      %p123 = scmp.eq.s32.totalorder %s19, 0
      %p124 = por %p122, %p123
      %p125 = scmp.ne.s32.totalorder %s113, %s114
      %p126 = scmp.eq.s32.totalorder %s20, 1
      %p127 = por %p125, %p126
      %p129 = scmp.ne.s32.totalorder %s114, %s128
      %p130 = scmp.eq.s32.totalorder %s20, 0
      %p131 = por %p129, %p130
      %s133 = sadd.s32 %s132, 1
      %p136 = scmp.eq.s32.totalorder %s14, 1
      %p137 = scmp.ne.s32.totalorder %s132, %s134
      %p138 = scmp.eq.s32.totalorder %s14, 0
      %p139 = por %p137, %p138
      %p140 = scmp.ne.s32.totalorder %s132, %s134
      %p141 = scmp.eq.s32.totalorder %s19, 1
      %p142 = por %p140, %p141
      %p143 = scmp.ne.s32.totalorder %s134, %s135
      %p144 = scmp.eq.s32.totalorder %s19, 0
      %p145 = por %p143, %p144
      %p146 = scmp.ne.s32.totalorder %s134, %s135
      %p147 = scmp.eq.s32.totalorder %s20, 1
      %p148 = por %p146, %p147
      %p150 = scmp.ne.s32.totalorder %s135, %s149
      %p151 = scmp.eq.s32.totalorder %s20, 0
      %p152 = por %p150, %p151
      %s154 = sadd.s32 %s153, 1
      %p157 = scmp.eq.s32.totalorder %s14, 1
      %p158 = scmp.ne.s32.totalorder %s153, %s155
      %p159 = scmp.eq.s32.totalorder %s14, 0
      %p160 = por %p158, %p159
      %p161 = scmp.ne.s32.totalorder %s153, %s155
      %p162 = scmp.eq.s32.totalorder %s19, 1
      %p163 = por %p161, %p162
      %p164 = scmp.ne.s32.totalorder %s155, %s156
      %p165 = scmp.eq.s32.totalorder %s19, 0
      %p166 = por %p164, %p165
      %p167 = scmp.ne.s32.totalorder %s155, %s156
      %p168 = scmp.eq.s32.totalorder %s20, 1
      %p169 = por %p167, %p168
      %p171 = scmp.ne.s32.totalorder %s156, %s170
      %p172 = scmp.eq.s32.totalorder %s20, 0
      %p173 = por %p171, %p172
      %s175 = sadd.s32 %s174, 1
      %p178 = scmp.eq.s32.totalorder %s14, 1
      %p179 = scmp.ne.s32.totalorder %s174, %s176
      %p180 = scmp.eq.s32.totalorder %s14, 0
      %p181 = por %p179, %p180
      %p182 = scmp.ne.s32.totalorder %s174, %s176
      %p183 = scmp.eq.s32.totalorder %s19, 1
      %p184 = por %p182, %p183
      %p185 = scmp.ne.s32.totalorder %s176, %s177
      %p186 = scmp.eq.s32.totalorder %s19, 0
      %p187 = por %p185, %p186
      %p188 = scmp.ne.s32.totalorder %s176, %s177
      %p189 = scmp.eq.s32.totalorder %s20, 1
      %p190 = por %p188, %p189
      %p192 = scmp.ne.s32.totalorder %s177, %s191
      %p193 = scmp.eq.s32.totalorder %s20, 0
      %p194 = por %p192, %p193
      %s195 = ssub.s32 %s14, %s21
      %p196 = scmp.eq.s32.totalorder %s195, 0
      %s198 = sadd.s32 %s197, 1
      %s199 = scalar_select %p196, %s197, %s198
      %p202 = pneg %p196
      %p203 = scmp.eq.s32.totalorder %s14, 1
      %p204 = por %p202, %p203
      %p205 = scmp.ne.s32.totalorder %s197, %s200
      %p206 = scmp.eq.s32.totalorder %s14, 0
      %p207 = por %p205, %p206
      %p208 = scmp.ne.s32.totalorder %s197, %s200
      %p209 = scmp.eq.s32.totalorder %s19, 1
      %p210 = por %p208, %p209
      %p211 = scmp.ne.s32.totalorder %s200, %s201
      %p212 = scmp.eq.s32.totalorder %s19, 0
      %p213 = por %p211, %p212
      %p214 = scmp.ne.s32.totalorder %s200, %s201
      %p215 = scmp.eq.s32.totalorder %s20, 1
      %p216 = por %p214, %p215
      %p218 = scmp.ne.s32.totalorder %s201, %s217
      %p219 = scmp.eq.s32.totalorder %s20, 0
      %p220 = por %p218, %p219
      %p221 = scmp.le.s32.totalorder 1, %s14
      %p222 = scmp.lt.s32.totalorder %s14, 3
      %p223 = pnand %p221, %p222
      %p224 = pneg %p223
      // Predicated region
      $region9: #{gin_forward.1} parent=5 // pred_check
        _
      $region10: #{gin_forward.1} parent=5 // pred_check_branch
        %226 = sbr.rel (%p223) target = $region12
      $region11: #{gin_forward.1} parent=5 // pred_region
        %s227 = ssub.s32 %s14, 1
        // Predicated region
        $region13: #{gin_forward.1} parent=11 // pred_check
          %p228 = pneg %p61
        $region14: #{gin_forward.1} parent=11 // pred_check_branch
          %230 = sbr.rel (%p228) target = $region16
        $region15: #{gin_forward.1} parent=11 // pred_region
          _
        $region16: #{gin_forward.1} parent=11 // pred_fallthru
          _
        // Predicated region
        $region17: #{gin_forward.1} parent=11 // pred_check
          %p231 = pneg %p82
        $region18: #{gin_forward.1} parent=11 // pred_check_branch
          %233 = sbr.rel (%p231) target = $region20
        $region19: #{gin_forward.1} parent=11 // pred_region
          _
        $region20: #{gin_forward.1} parent=11 // pred_fallthru
          _
        // Predicated region
        $region21: #{gin_forward.1} parent=11 // pred_check
          %p234 = pneg %p103
        $region22: #{gin_forward.1} parent=11 // pred_check_branch
          %236 = sbr.rel (%p234) target = $region24
        $region23: #{gin_forward.1} parent=11 // pred_region
          _
        $region24: #{gin_forward.1} parent=11 // pred_fallthru
          _
        // Predicated region
        $region25: #{gin_forward.1} parent=11 // pred_check
          %p237 = pneg %p124
        $region26: #{gin_forward.1} parent=11 // pred_check_branch
          %239 = sbr.rel (%p237) target = $region28
        $region27: #{gin_forward.1} parent=11 // pred_region
          _
        $region28: #{gin_forward.1} parent=11 // pred_fallthru
          _
        // Predicated region
        $region29: #{gin_forward.1} parent=11 // pred_check
          %p240 = pneg %p145
        $region30: #{gin_forward.1} parent=11 // pred_check_branch
          %242 = sbr.rel (%p240) target = $region32
        $region31: #{gin_forward.1} parent=11 // pred_region
          _
        $region32: #{gin_forward.1} parent=11 // pred_fallthru
          _
        // Predicated region
        $region33: #{gin_forward.1} parent=11 // pred_check
          %p243 = pneg %p166
        $region34: #{gin_forward.1} parent=11 // pred_check_branch
          %245 = sbr.rel (%p243) target = $region36
        $region35: #{gin_forward.1} parent=11 // pred_region
          _
        $region36: #{gin_forward.1} parent=11 // pred_fallthru
          _
        // Predicated region
        $region37: #{gin_forward.1} parent=11 // pred_check
          %p246 = pneg %p187
        $region38: #{gin_forward.1} parent=11 // pred_check_branch
          %248 = sbr.rel (%p246) target = $region40
        $region39: #{gin_forward.1} parent=11 // pred_region
          _
        $region40: #{gin_forward.1} parent=11 // pred_fallthru
          _
      $region12: #{gin_forward.1} parent=5 // pred_fallthru
        _
      %p249 = scmp.lt.s32.totalorder %s14, 2
      // Predicated region
      $region41: #{gin_forward.1} parent=5 // pred_check
        %p250 = pneg %p249
      $region42: #{gin_forward.1} parent=5 // pred_check_branch
        %252 = sbr.rel (%p250) target = $region44
      $region43: #{gin_forward.1} parent=5 // pred_region
        // Predicated region
        $region45: #{gin_forward.1} parent=43 // pred_check
          %p253 = pneg %p34
        $region46: #{gin_forward.1} parent=43 // pred_check_branch
          %255 = sbr.rel (%p253) target = $region48
        $region47: #{gin_forward.1} parent=43 // pred_region
          %s256 = sand.u32 %s24, 1
          %s257 = sand.u32 %s24, 1
          %s258 = smul.addr %s257, 32
          %s259 = scalar_lea.vmem [#allocation2], %s258
          %s260 = smul.u32 2, %s14
          %s261 = smul.addr %s260, 8
          %s262 = scalar_lea.vmem %s0, %s261
          // Predicated region
          $region49: #{gin_forward.1} parent=47 // pred_check
            _
          $region50: #{gin_forward.1} parent=47 // pred_check_branch
            %264 = sbr.rel (0) target = $region52
          $region51: #{gin_forward.1} parent=47 // pred_region
            // Predicated region
            $region53: #{gin_forward.1} parent=51 // pred_check
              _
            $region54: #{gin_forward.1} parent=51 // pred_check_branch
              %266 = sbr.rel (0) target = $region56
            $region55: #{gin_forward.1} parent=51 // pred_region
              loop: start=0, step=1, limit=1
              $region57: #{gin_forward.1} parent=55 // loop_pre_header
                _
              $region58: #{gin_forward.1} parent=55 // loop_header
                %s268 = sphi 0, %s272
                %p269 = scmp.ge.s32.totalorder %s268, 1
                %s273 = sphi %s262, %s262
                %s274 = sphi %s259, %s259
              $region59: #{gin_forward.1} parent=55 // loop_header_branch
                %271 = sbr.rel (%p269) target = $region63
              $region60: #{gin_forward.1} parent=55 // loop_body
                %v275 = vld [vmem:[%s273] sm:$0xff]
                %276 = vst [vmem:[%s274] sm:$0xff] %v275
                %v277 = vld [vmem:[%s273 + $0x8] sm:$0xff]
                %278 = vst [vmem:[%s274 + $0x8] sm:$0xff] %v277
                %v279 = vld [vmem:[%s273 + $0x20] sm:$0xff]
                %280 = vst [vmem:[%s274 + $0x10] sm:$0xff] %v279
                %v281 = vld [vmem:[%s273 + $0x28] sm:$0xff]
                %282 = vst [vmem:[%s274 + $0x18] sm:$0xff] %v281
              $region61: #{gin_forward.1} parent=55 // loop_footer
                %s272 = sadd.s32 1, %s268
              $region62: #{gin_forward.1} parent=55 // loop_footer_branch
                %267 = sbr.rel target = $region58
              $region63: #{gin_forward.1} parent=55 // loop_exit
                _
            $region56: #{gin_forward.1} parent=51 // pred_fallthru
              _
            // Predicated region
            $region64: #{gin_forward.1} parent=51 // pred_check
              _
            $region65: #{gin_forward.1} parent=51 // pred_check_branch
              %284 = sbr.rel target = $region67
            $region66: #{gin_forward.1} parent=51 // pred_region
              _
            $region67: #{gin_forward.1} parent=51 // pred_fallthru
              _
          $region52: #{gin_forward.1} parent=47 // pred_fallthru
            _
          %285 = vnop
        $region48: #{gin_forward.1} parent=43 // pred_fallthru
          _
      $region44: #{gin_forward.1} parent=5 // pred_fallthru
        _
      %p286 = scmp.le.s32.totalorder 1, %s14
      %p287 = scmp.lt.s32.totalorder %s14, 3
      %p288 = pnand %p286, %p287
      %p289 = pneg %p288
      // Predicated region
      $region68: #{gin_forward.1} parent=5 // pred_check
        _
      $region69: #{gin_forward.1} parent=5 // pred_check_branch
        %291 = sbr.rel (%p288) target = $region71
      $region70: #{gin_forward.1} parent=5 // pred_region
        %s292 = ssub.s32 %s14, 1
        %s293 = sand.u32 %s27, 1
        %s294 = sand.u32 %s27, 1
        %s295 = smul.addr %s294, 32
        %s296 = scalar_lea.vmem [#allocation2], %s295
        // Predicated region
        $region72: #{gin_forward.1} parent=70 // pred_check
          %p297 = pneg %p40
        $region73: #{gin_forward.1} parent=70 // pred_check_branch
          %299 = sbr.rel (%p297) target = $region75
        $region74: #{gin_forward.1} parent=70 // pred_region
          _
        $region75: #{gin_forward.1} parent=70 // pred_fallthru
          _
        %s300 = sand.u32 %s27, 1
        %s301 = sand.u32 %s27, 1
        %s302 = smul.addr %s301, 32
        %s303 = scalar_lea.vmem [#allocation2], %s302
        %p304 = pneg %p40
        %p305 = pneg %p37
        %p306 = pneg %p61
        %p307 = pneg %p58
        %p308 = pneg %p82
        %p309 = pneg %p79
        %p310 = pneg %p103
        %p311 = pneg %p100
        %p312 = pneg %p124
        %p313 = pneg %p121
        %p314 = pneg %p145
        %p315 = pneg %p142
        %p316 = pneg %p166
        %p317 = pneg %p163
        %p318 = pneg %p187
        %p319 = pneg %p184
        %p320 = pneg %p213
        %p321 = pneg %p210
        %s322 = sand.u32 %s200, 1
        %s323 = sand.u32 %s200, 1
        %s324 = smul.addr %s323, 32
        %s325 = scalar_lea.vmem [#allocation3], %s324
        %s326 = smul.u32 2, %s19
        %s327 = smul.u32 2, %s19
        %v328 = vld [vmem:[%s296] sm:$0xff]
        %v329 = vld [vmem:[%s296 + $0x8] sm:$0xff]
        %v330 = vld [vmem:[%s296 + $0x10] sm:$0xff]
        %v331 = vld [vmem:[%s296 + $0x18] sm:$0xff]
        %s332 = scalar_lea.vmem %s1, 16
        %v333 = vld [vmem:[%s332] sm:$0xff]
        %v334 = vld [vmem:[%s332 + $0x8] sm:$0xff]
        %s335 = scalar_lea.vmem %s2, 16
        %v336 = vld [vmem:[%s335] sm:$0xff]
        %v337 = vld [vmem:[%s335 + $0x8] sm:$0xff]
        %s338 = scalar_lea.vmem %s3, 16
        %v339 = vld [vmem:[%s338] sm:$0xff]
        %v340 = vld [vmem:[%s338 + $0x8] sm:$0xff]
        %s341 = scalar_lea.vmem %s4, 16
        %v342 = vld [vmem:[%s341] sm:$0xff]
        %v343 = vld [vmem:[%s341 + $0x8] sm:$0xff]
        %s344 = scalar_lea.vmem %s5, 16
        %v345 = vld [vmem:[%s344] sm:$0xff]
        %v346 = vld [vmem:[%s344 + $0x8] sm:$0xff]
        %s347 = scalar_lea.vmem %s6, 16
        %v348 = vld [vmem:[%s347] sm:$0xff]
        %v349 = vld [vmem:[%s347 + $0x8] sm:$0xff]
        %351 = vset.pattern.permute.xlu0 0
        %352 = vperm.xlu0 %351, %v336
        %v353 = vpop.permute.xlu0 %352
        %356 = vset.pattern.permute.xlu0 0
        %357 = vperm.xlu0 %356, %v337
        %v358 = vpop.permute.xlu0 %357
        %vm360 = vcmask 64512
        %v362 = vsel %vm360, %v333, 0
        %v365 = vsel %vm360, %v334, 0
        %367 = vmatpush.msra.mxu0 0.0
        %368 = vmatpush.msra.mxu0 0.0
        %369 = vmatpush.msra.mxu0 0.0
        %370 = vmatpush.msra.mxu0 0.0
        %371 = vmatpush.msra.mxu0 0.0
        %372 = vmatpush.msra.mxu0 0.0
        %373 = vmatpush.msra.mxu0 0.0
        %374 = vmatpush.msra.mxu0 0.0
        %375 = vmatpush.msra.mxu0 0.0
        %376 = vmatpush.msra.mxu0 0.0
        %377 = vmatpush.msra.mxu0 0.0
        %378 = vmatpush.msra.mxu0 0.0
        %379 = vmatpush.msra.mxu0 0.0
        %380 = vmatpush.msra.mxu0 0.0
        %381 = vmatpush.msra.mxu0 0.0
        %382 = vmatpush.msra.mxu0 %v330
        %383 = vmatmul.f32.gmra.mxu0 %v362
        %v384 = vpop.f32.mrf.mxu0
        %v385 = vadd.f32 %v353, %v384
        %386 = vmatmul.f32.gmra.mxu0 %v365
        %v387 = vpop.f32.mrf.mxu0
        %v388 = vadd.f32 %v358, %v387
        %389 = vdwg.mxu0
        %390 = vmatpush.msra.mxu0 0.0
        %391 = vmatpush.msra.mxu0 0.0
        %392 = vmatpush.msra.mxu0 0.0
        %393 = vmatpush.msra.mxu0 0.0
        %394 = vmatpush.msra.mxu0 0.0
        %395 = vmatpush.msra.mxu0 0.0
        %396 = vmatpush.msra.mxu0 0.0
        %397 = vmatpush.msra.mxu0 0.0
        %398 = vmatpush.msra.mxu0 0.0
        %399 = vmatpush.msra.mxu0 0.0
        %400 = vmatpush.msra.mxu0 0.0
        %401 = vmatpush.msra.mxu0 0.0
        %402 = vmatpush.msra.mxu0 0.0
        %403 = vmatpush.msra.mxu0 0.0
        %404 = vmatpush.msra.mxu0 0.0
        %405 = vmatpush.msra.mxu0 %v331
        %406 = vmatmul.f32.gmra.mxu0 %v362
        %v407 = vpop.f32.mrf.mxu0
        %v408 = vadd.f32 %v353, %v407
        %409 = vmatmul.f32.gmra.mxu0 %v365
        %v410 = vpop.f32.mrf.mxu0
        %v411 = vadd.f32 %v358, %v410
        %412 = vdwg.mxu0
        %v413 = vmax.f32 %v385, 0.0
        %v414 = vmax.f32 %v408, 0.0
        %v415 = vmax.f32 %v388, 0.0
        %v416 = vmax.f32 %v411, 0.0
        %418 = vset.pattern.permute.xlu0 0
        %419 = vperm.xlu0 %418, %v342
        %v420 = vpop.permute.xlu0 %419
        %423 = vset.pattern.permute.xlu0 0
        %424 = vperm.xlu0 %423, %v343
        %v425 = vpop.permute.xlu0 %424
        %vm427 = vcmask 130048
        %v429 = vsel %vm427, %v339, 0
        %v432 = vsel %vm427, %v340, 0
        %434 = vmatpush.msra.mxu0 0.0
        %435 = vmatpush.msra.mxu0 0.0
        %436 = vmatpush.msra.mxu0 0.0
        %437 = vmatpush.msra.mxu0 0.0
        %438 = vmatpush.msra.mxu0 0.0
        %439 = vmatpush.msra.mxu0 0.0
        %440 = vmatpush.msra.mxu0 0.0
        %441 = vmatpush.msra.mxu0 0.0
        %442 = vmatpush.msra.mxu0 0.0
        %443 = vmatpush.msra.mxu0 0.0
        %444 = vmatpush.msra.mxu0 0.0
        %445 = vmatpush.msra.mxu0 0.0
        %446 = vmatpush.msra.mxu0 0.0
        %447 = vmatpush.msra.mxu0 0.0
        %448 = vmatpush.msra.mxu0 %v415
        %449 = vmatpush.msra.mxu0 %v413
        %450 = vmatmul.f32.gmra.mxu0 %v429
        %v451 = vpop.f32.mrf.mxu0
        %v452 = vadd.f32 %v420, %v451
        %453 = vmatmul.f32.gmra.mxu0 %v432
        %v454 = vpop.f32.mrf.mxu0
        %v455 = vadd.f32 %v425, %v454
        %456 = vdwg.mxu0
        %457 = vmatpush.msra.mxu0 0.0
        %458 = vmatpush.msra.mxu0 0.0
        %459 = vmatpush.msra.mxu0 0.0
        %460 = vmatpush.msra.mxu0 0.0
        %461 = vmatpush.msra.mxu0 0.0
        %462 = vmatpush.msra.mxu0 0.0
        %463 = vmatpush.msra.mxu0 0.0
        %464 = vmatpush.msra.mxu0 0.0
        %465 = vmatpush.msra.mxu0 0.0
        %466 = vmatpush.msra.mxu0 0.0
        %467 = vmatpush.msra.mxu0 0.0
        %468 = vmatpush.msra.mxu0 0.0
        %469 = vmatpush.msra.mxu0 0.0
        %470 = vmatpush.msra.mxu0 0.0
        %471 = vmatpush.msra.mxu0 %v416
        %472 = vmatpush.msra.mxu0 %v414
        %473 = vmatmul.f32.gmra.mxu0 %v429
        %v474 = vpop.f32.mrf.mxu0
        %v475 = vadd.f32 %v420, %v474
        %476 = vmatmul.f32.gmra.mxu0 %v432
        %v477 = vpop.f32.mrf.mxu0
        %v478 = vadd.f32 %v425, %v477
        %479 = vdwg.mxu0
        %v480 = vmax.f32 %v452, 0.0
        %v481 = vmax.f32 %v475, 0.0
        %v482 = vmax.f32 %v455, 0.0
        %v483 = vmax.f32 %v478, 0.0
        %485 = vset.pattern.permute.xlu0 0
        %486 = vperm.xlu0 %485, %v348
        %v487 = vpop.permute.xlu0 %486
        %490 = vset.pattern.permute.xlu0 0
        %491 = vperm.xlu0 %490, %v349
        %v492 = vpop.permute.xlu0 %491
        %v495 = vsel %vm427, %v345, 0
        %v498 = vsel %vm427, %v346, 0
        %500 = vmatpush.msra.mxu0 0.0
        %501 = vmatpush.msra.mxu0 0.0
        %502 = vmatpush.msra.mxu0 0.0
        %503 = vmatpush.msra.mxu0 0.0
        %504 = vmatpush.msra.mxu0 0.0
        %505 = vmatpush.msra.mxu0 0.0
        %506 = vmatpush.msra.mxu0 0.0
        %507 = vmatpush.msra.mxu0 0.0
        %508 = vmatpush.msra.mxu0 0.0
        %509 = vmatpush.msra.mxu0 0.0
        %510 = vmatpush.msra.mxu0 0.0
        %511 = vmatpush.msra.mxu0 0.0
        %512 = vmatpush.msra.mxu0 0.0
        %513 = vmatpush.msra.mxu0 0.0
        %514 = vmatpush.msra.mxu0 %v482
        %515 = vmatpush.msra.mxu0 %v480
        %516 = vmatmul.f32.gmra.mxu0 %v495
        %v517 = vpop.f32.mrf.mxu0
        %v518 = vadd.f32 %v487, %v517
        %519 = vmatmul.f32.gmra.mxu0 %v498
        %v520 = vpop.f32.mrf.mxu0
        %v521 = vadd.f32 %v492, %v520
        %522 = vdwg.mxu0
        %523 = vmatpush.msra.mxu0 0.0
        %524 = vmatpush.msra.mxu0 0.0
        %525 = vmatpush.msra.mxu0 0.0
        %526 = vmatpush.msra.mxu0 0.0
        %527 = vmatpush.msra.mxu0 0.0
        %528 = vmatpush.msra.mxu0 0.0
        %529 = vmatpush.msra.mxu0 0.0
        %530 = vmatpush.msra.mxu0 0.0
        %531 = vmatpush.msra.mxu0 0.0
        %532 = vmatpush.msra.mxu0 0.0
        %533 = vmatpush.msra.mxu0 0.0
        %534 = vmatpush.msra.mxu0 0.0
        %535 = vmatpush.msra.mxu0 0.0
        %536 = vmatpush.msra.mxu0 0.0
        %537 = vmatpush.msra.mxu0 %v483
        %538 = vmatpush.msra.mxu0 %v481
        %539 = vmatmul.f32.gmra.mxu0 %v495
        %v540 = vpop.f32.mrf.mxu0
        %v541 = vadd.f32 %v487, %v540
        %542 = vmatmul.f32.gmra.mxu0 %v498
        %v543 = vpop.f32.mrf.mxu0
        %v544 = vadd.f32 %v492, %v543
        %545 = vdwg.mxu0
        %vm546 = vcmp.lt.f32.partialorder %v518, 0.0
        %vm547 = vcmp.lt.f32.partialorder %v541, 0.0
        %v548 = vsel %vm546, -1.0, 1.0
        %v549 = vsel %vm547, -1.0, 1.0
        %v550 = vand.u32 2147483647, %v518
        %v551 = vand.u32 2147483647, %v541
        %vm552 = vcmp.gt.f32.partialorder %v550, 2.4142137
        %vm553 = vcmp.gt.f32.partialorder %v551, 2.4142137
        %vm554 = vcmp.gt.f32.partialorder %v550, 0.41421357
        %vm555 = vcmp.gt.f32.partialorder %v551, 0.41421357
        %v556 = vsub.f32 %v550, 1.0
        %v557 = vsub.f32 %v551, 1.0
        %v558 = vsel %vm554, %v556, %v550
        %v559 = vsel %vm555, %v557, %v551
        %v560 = vsel %vm552, -1.0, %v558
        %v561 = vsel %vm553, -1.0, %v559
        %v562 = vadd.f32 %v550, 1.0
        %v563 = vadd.f32 %v551, 1.0
        %v564 = vsel %vm554, %v562, 1.0
        %v565 = vsel %vm555, %v563, 1.0
        %v566 = vsel %vm552, %v550, %v564
        %v567 = vsel %vm553, %v551, %v565
        %v568 = vrcp.pop %v566
        %v569 = vmul.f32 %v566, %v568
        %v570 = vsub.f32 1.0, %v569
        %v571 = vmul.f32 %v568, %v570
        %v572 = vadd.f32 %v568, %v571
        %vm573 = vweird.f32 %v566
        %vm574 = vweird.f32 %v568
        %vm575 = vmor %vm573, %vm574
        %v576 = vsel %vm575, %v568, %v572
        %v577 = vand.u32 2147483647, %v566
        %vm578 = vcmp.eq.f32.partialorder %v577, 8.507059e+37
        %v579 = vand.u32 %v566, 2147483648
        %v580 = vor.u32 1.1754944e-38, %v579
        %v581 = vsel %vm578, %v580, %v576
        %v582 = vmul.f32 %v560, %v581
        %v583 = vrcp.pop %v567
        %v584 = vmul.f32 %v567, %v583
        %v585 = vsub.f32 1.0, %v584
        %v586 = vmul.f32 %v583, %v585
        %v587 = vadd.f32 %v583, %v586
        %vm588 = vweird.f32 %v567
        %vm589 = vweird.f32 %v583
        %vm590 = vmor %vm588, %vm589
        %v591 = vsel %vm590, %v583, %v587
        %v592 = vand.u32 2147483647, %v567
        %vm593 = vcmp.eq.f32.partialorder %v592, 8.507059e+37
        %v594 = vand.u32 %v567, 2147483648
        %v595 = vor.u32 1.1754944e-38, %v594
        %v596 = vsel %vm593, %v595, %v591
        %v597 = vmul.f32 %v561, %v596
        %v598 = vsel %vm554, 0.7853982, 0.0
        %v599 = vsel %vm555, 0.7853982, 0.0
        %v600 = vsel %vm552, 1.5707964, %v598
        %v601 = vsel %vm553, 1.5707964, %v599
        %v602 = vmul.f32 %v582, %v582
        %v603 = vmul.f32 %v597, %v597
        %v604 = vmul.f32 %v602, 0.080537446
        %v605 = vmul.f32 %v603, 0.080537446
        %v606 = vsub.f32 %v604, 0.13877685
        %v607 = vsub.f32 %v605, 0.13877685
        %v608 = vmul.f32 %v606, %v602
        %v609 = vmul.f32 %v607, %v603
        %v610 = vadd.f32 %v608, 0.19977711
        %v611 = vadd.f32 %v609, 0.19977711
        %v612 = vmul.f32 %v610, %v602
        %v613 = vmul.f32 %v611, %v603
        %v614 = vsub.f32 %v612, 0.3333295
        %v615 = vsub.f32 %v613, 0.3333295
        %v616 = vadd.f32 %v600, %v582
        %v617 = vadd.f32 %v601, %v597
        %v618 = vmul.f32 %v582, %v602
        %v619 = vmul.f32 %v597, %v603
        %v620 = vmul.f32 %v618, %v614
        %v621 = vmul.f32 %v619, %v615
        %v622 = vadd.f32 %v616, %v620
        %v623 = vadd.f32 %v617, %v621
        %v624 = vmul.f32 %v548, %v622
        %v625 = vmul.f32 %v549, %v623
        %v626 = vmul.f32 %v624, 1.272
        %v627 = vmul.f32 %v625, 1.272
        %v628 = vrot.slane %v626, 4
        %v629 = vadd.f32 %v626, %v628
        %v630 = vrot.slane %v629, 2
        %v631 = vadd.f32 %v629, %v630
        %v632 = vrot.slane %v631, 1
        %v633 = vadd.f32 %v631, %v632
        %v634 = vrot.slane %v627, 4
        %v635 = vadd.f32 %v627, %v634
        %v636 = vrot.slane %v635, 2
        %v637 = vadd.f32 %v635, %v636
        %v638 = vrot.slane %v637, 1
        %v639 = vadd.f32 %v637, %v638
        %v640 = vmul.f32 %v633, 0.2
        %v641 = vmul.f32 %v639, 0.2
        %v642 = vsub.f32 %v626, %v640
        %v643 = vsub.f32 %v627, %v641
        %v644 = vmul.f32 %v642, 1.442695
        %v645 = vpow.pop %v644
        %v646 = vmul.f32 %v643, 1.442695
        %v647 = vpow.pop %v646
        %v648 = vmul.f32 %v645, %v328
        %v649 = vmul.f32 %v647, %v329
        %v650 = vadd.f32 %v648, %v521
        %v651 = vadd.f32 %v649, %v544
        %v652 = vld [vmem:[%s1] sm:$0xff]
        %v653 = vld [vmem:[%s1 + $0x8] sm:$0xff]
        %v654 = vld [vmem:[%s2] sm:$0xff]
        %v655 = vld [vmem:[%s2 + $0x8] sm:$0xff]
        %v656 = vld [vmem:[%s3] sm:$0xff]
        %v657 = vld [vmem:[%s3 + $0x8] sm:$0xff]
        %v658 = vld [vmem:[%s4] sm:$0xff]
        %v659 = vld [vmem:[%s4 + $0x8] sm:$0xff]
        %v660 = vld [vmem:[%s5] sm:$0xff]
        %v661 = vld [vmem:[%s5 + $0x8] sm:$0xff]
        %v662 = vld [vmem:[%s6] sm:$0xff]
        %v663 = vld [vmem:[%s6 + $0x8] sm:$0xff]
        %665 = vset.pattern.permute.xlu0 0
        %666 = vperm.xlu0 %665, %v654
        %v667 = vpop.permute.xlu0 %666
        %670 = vset.pattern.permute.xlu0 0
        %671 = vperm.xlu0 %670, %v655
        %v672 = vpop.permute.xlu0 %671
        %v675 = vsel %vm360, %v652, 0
        %v678 = vsel %vm360, %v653, 0
        %680 = vmatpush.msra.mxu0 0.0
        %681 = vmatpush.msra.mxu0 0.0
        %682 = vmatpush.msra.mxu0 0.0
        %683 = vmatpush.msra.mxu0 0.0
        %684 = vmatpush.msra.mxu0 0.0
        %685 = vmatpush.msra.mxu0 0.0
        %686 = vmatpush.msra.mxu0 0.0
        %687 = vmatpush.msra.mxu0 0.0
        %688 = vmatpush.msra.mxu0 0.0
        %689 = vmatpush.msra.mxu0 0.0
        %690 = vmatpush.msra.mxu0 0.0
        %691 = vmatpush.msra.mxu0 0.0
        %692 = vmatpush.msra.mxu0 0.0
        %693 = vmatpush.msra.mxu0 0.0
        %694 = vmatpush.msra.mxu0 0.0
        %695 = vmatpush.msra.mxu0 %v650
        %696 = vmatmul.f32.gmra.mxu0 %v675
        %v697 = vpop.f32.mrf.mxu0
        %v698 = vadd.f32 %v667, %v697
        %699 = vmatmul.f32.gmra.mxu0 %v678
        %v700 = vpop.f32.mrf.mxu0
        %v701 = vadd.f32 %v672, %v700
        %702 = vdwg.mxu0
        %703 = vmatpush.msra.mxu0 0.0
        %704 = vmatpush.msra.mxu0 0.0
        %705 = vmatpush.msra.mxu0 0.0
        %706 = vmatpush.msra.mxu0 0.0
        %707 = vmatpush.msra.mxu0 0.0
        %708 = vmatpush.msra.mxu0 0.0
        %709 = vmatpush.msra.mxu0 0.0
        %710 = vmatpush.msra.mxu0 0.0
        %711 = vmatpush.msra.mxu0 0.0
        %712 = vmatpush.msra.mxu0 0.0
        %713 = vmatpush.msra.mxu0 0.0
        %714 = vmatpush.msra.mxu0 0.0
        %715 = vmatpush.msra.mxu0 0.0
        %716 = vmatpush.msra.mxu0 0.0
        %717 = vmatpush.msra.mxu0 0.0
        %718 = vmatpush.msra.mxu0 %v651
        %719 = vmatmul.f32.gmra.mxu0 %v675
        %v720 = vpop.f32.mrf.mxu0
        %v721 = vadd.f32 %v667, %v720
        %722 = vmatmul.f32.gmra.mxu0 %v678
        %v723 = vpop.f32.mrf.mxu0
        %v724 = vadd.f32 %v672, %v723
        %725 = vdwg.mxu0
        %v726 = vmax.f32 %v698, 0.0
        %v727 = vmax.f32 %v721, 0.0
        %v728 = vmax.f32 %v701, 0.0
        %v729 = vmax.f32 %v724, 0.0
        %731 = vset.pattern.permute.xlu0 0
        %732 = vperm.xlu0 %731, %v658
        %v733 = vpop.permute.xlu0 %732
        %736 = vset.pattern.permute.xlu0 0
        %737 = vperm.xlu0 %736, %v659
        %v738 = vpop.permute.xlu0 %737
        %v741 = vsel %vm427, %v656, 0
        %v744 = vsel %vm427, %v657, 0
        %746 = vmatpush.msra.mxu0 0.0
        %747 = vmatpush.msra.mxu0 0.0
        %748 = vmatpush.msra.mxu0 0.0
        %749 = vmatpush.msra.mxu0 0.0
        %750 = vmatpush.msra.mxu0 0.0
        %751 = vmatpush.msra.mxu0 0.0
        %752 = vmatpush.msra.mxu0 0.0
        %753 = vmatpush.msra.mxu0 0.0
        %754 = vmatpush.msra.mxu0 0.0
        %755 = vmatpush.msra.mxu0 0.0
        %756 = vmatpush.msra.mxu0 0.0
        %757 = vmatpush.msra.mxu0 0.0
        %758 = vmatpush.msra.mxu0 0.0
        %759 = vmatpush.msra.mxu0 0.0
        %760 = vmatpush.msra.mxu0 %v728
        %761 = vmatpush.msra.mxu0 %v726
        %762 = vmatmul.f32.gmra.mxu0 %v741
        %v763 = vpop.f32.mrf.mxu0
        %v764 = vadd.f32 %v733, %v763
        %765 = vmatmul.f32.gmra.mxu0 %v744
        %v766 = vpop.f32.mrf.mxu0
        %v767 = vadd.f32 %v738, %v766
        %768 = vdwg.mxu0
        %769 = vmatpush.msra.mxu0 0.0
        %770 = vmatpush.msra.mxu0 0.0
        %771 = vmatpush.msra.mxu0 0.0
        %772 = vmatpush.msra.mxu0 0.0
        %773 = vmatpush.msra.mxu0 0.0
        %774 = vmatpush.msra.mxu0 0.0
        %775 = vmatpush.msra.mxu0 0.0
        %776 = vmatpush.msra.mxu0 0.0
        %777 = vmatpush.msra.mxu0 0.0
        %778 = vmatpush.msra.mxu0 0.0
        %779 = vmatpush.msra.mxu0 0.0
        %780 = vmatpush.msra.mxu0 0.0
        %781 = vmatpush.msra.mxu0 0.0
        %782 = vmatpush.msra.mxu0 0.0
        %783 = vmatpush.msra.mxu0 %v729
        %784 = vmatpush.msra.mxu0 %v727
        %785 = vmatmul.f32.gmra.mxu0 %v741
        %v786 = vpop.f32.mrf.mxu0
        %v787 = vadd.f32 %v733, %v786
        %788 = vmatmul.f32.gmra.mxu0 %v744
        %v789 = vpop.f32.mrf.mxu0
        %v790 = vadd.f32 %v738, %v789
        %791 = vdwg.mxu0
        %v792 = vmax.f32 %v764, 0.0
        %v793 = vmax.f32 %v787, 0.0
        %v794 = vmax.f32 %v767, 0.0
        %v795 = vmax.f32 %v790, 0.0
        %797 = vset.pattern.permute.xlu0 0
        %798 = vperm.xlu0 %797, %v662
        %v799 = vpop.permute.xlu0 %798
        %802 = vset.pattern.permute.xlu0 0
        %803 = vperm.xlu0 %802, %v663
        %v804 = vpop.permute.xlu0 %803
        %v807 = vsel %vm427, %v660, 0
        %v810 = vsel %vm427, %v661, 0
        %812 = vmatpush.msra.mxu0 0.0
        %813 = vmatpush.msra.mxu0 0.0
        %814 = vmatpush.msra.mxu0 0.0
        %815 = vmatpush.msra.mxu0 0.0
        %816 = vmatpush.msra.mxu0 0.0
        %817 = vmatpush.msra.mxu0 0.0
        %818 = vmatpush.msra.mxu0 0.0
        %819 = vmatpush.msra.mxu0 0.0
        %820 = vmatpush.msra.mxu0 0.0
        %821 = vmatpush.msra.mxu0 0.0
        %822 = vmatpush.msra.mxu0 0.0
        %823 = vmatpush.msra.mxu0 0.0
        %824 = vmatpush.msra.mxu0 0.0
        %825 = vmatpush.msra.mxu0 0.0
        %826 = vmatpush.msra.mxu0 %v794
        %827 = vmatpush.msra.mxu0 %v792
        %828 = vmatmul.f32.gmra.mxu0 %v807
        %v829 = vpop.f32.mrf.mxu0
        %v830 = vadd.f32 %v799, %v829
        %831 = vmatmul.f32.gmra.mxu0 %v810
        %v832 = vpop.f32.mrf.mxu0
        %v833 = vadd.f32 %v804, %v832
        %834 = vdwg.mxu0
        %835 = vmatpush.msra.mxu0 0.0
        %836 = vmatpush.msra.mxu0 0.0
        %837 = vmatpush.msra.mxu0 0.0
        %838 = vmatpush.msra.mxu0 0.0
        %839 = vmatpush.msra.mxu0 0.0
        %840 = vmatpush.msra.mxu0 0.0
        %841 = vmatpush.msra.mxu0 0.0
        %842 = vmatpush.msra.mxu0 0.0
        %843 = vmatpush.msra.mxu0 0.0
        %844 = vmatpush.msra.mxu0 0.0
        %845 = vmatpush.msra.mxu0 0.0
        %846 = vmatpush.msra.mxu0 0.0
        %847 = vmatpush.msra.mxu0 0.0
        %848 = vmatpush.msra.mxu0 0.0
        %849 = vmatpush.msra.mxu0 %v795
        %850 = vmatpush.msra.mxu0 %v793
        %851 = vmatmul.f32.gmra.mxu0 %v807
        %v852 = vpop.f32.mrf.mxu0
        %v853 = vadd.f32 %v799, %v852
        %854 = vmatmul.f32.gmra.mxu0 %v810
        %v855 = vpop.f32.mrf.mxu0
        %v856 = vadd.f32 %v804, %v855
        %857 = vdwg.mxu0
        %vm858 = vcmp.lt.f32.partialorder %v830, 0.0
        %vm859 = vcmp.lt.f32.partialorder %v853, 0.0
        %v860 = vsel %vm858, -1.0, 1.0
        %v861 = vsel %vm859, -1.0, 1.0
        %v862 = vand.u32 2147483647, %v830
        %v863 = vand.u32 2147483647, %v853
        %vm864 = vcmp.gt.f32.partialorder %v862, 2.4142137
        %vm865 = vcmp.gt.f32.partialorder %v863, 2.4142137
        %vm866 = vcmp.gt.f32.partialorder %v862, 0.41421357
        %vm867 = vcmp.gt.f32.partialorder %v863, 0.41421357
        %v868 = vsub.f32 %v862, 1.0
        %v869 = vsub.f32 %v863, 1.0
        %v870 = vsel %vm866, %v868, %v862
        %v871 = vsel %vm867, %v869, %v863
        %v872 = vsel %vm864, -1.0, %v870
        %v873 = vsel %vm865, -1.0, %v871
        %v874 = vadd.f32 %v862, 1.0
        %v875 = vadd.f32 %v863, 1.0
        %v876 = vsel %vm866, %v874, 1.0
        %v877 = vsel %vm867, %v875, 1.0
        %v878 = vsel %vm864, %v862, %v876
        %v879 = vsel %vm865, %v863, %v877
        %v880 = vrcp.pop %v878
        %v881 = vmul.f32 %v878, %v880
        %v882 = vsub.f32 1.0, %v881
        %v883 = vmul.f32 %v880, %v882
        %v884 = vadd.f32 %v880, %v883
        %vm885 = vweird.f32 %v878
        %vm886 = vweird.f32 %v880
        %vm887 = vmor %vm885, %vm886
        %v888 = vsel %vm887, %v880, %v884
        %v889 = vand.u32 2147483647, %v878
        %vm890 = vcmp.eq.f32.partialorder %v889, 8.507059e+37
        %v891 = vand.u32 %v878, 2147483648
        %v892 = vor.u32 1.1754944e-38, %v891
        %v893 = vsel %vm890, %v892, %v888
        %v894 = vmul.f32 %v872, %v893
        %v895 = vrcp.pop %v879
        %v896 = vmul.f32 %v879, %v895
        %v897 = vsub.f32 1.0, %v896
        %v898 = vmul.f32 %v895, %v897
        %v899 = vadd.f32 %v895, %v898
        %vm900 = vweird.f32 %v879
        %vm901 = vweird.f32 %v895
        %vm902 = vmor %vm900, %vm901
        %v903 = vsel %vm902, %v895, %v899
        %v904 = vand.u32 2147483647, %v879
        %vm905 = vcmp.eq.f32.partialorder %v904, 8.507059e+37
        %v906 = vand.u32 %v879, 2147483648
        %v907 = vor.u32 1.1754944e-38, %v906
        %v908 = vsel %vm905, %v907, %v903
        %v909 = vmul.f32 %v873, %v908
        %v910 = vsel %vm866, 0.7853982, 0.0
        %v911 = vsel %vm867, 0.7853982, 0.0
        %v912 = vsel %vm864, 1.5707964, %v910
        %v913 = vsel %vm865, 1.5707964, %v911
        %v914 = vmul.f32 %v894, %v894
        %v915 = vmul.f32 %v909, %v909
        %v916 = vmul.f32 %v914, 0.080537446
        %v917 = vmul.f32 %v915, 0.080537446
        %v918 = vsub.f32 %v916, 0.13877685
        %v919 = vsub.f32 %v917, 0.13877685
        %v920 = vmul.f32 %v918, %v914
        %v921 = vmul.f32 %v919, %v915
        %v922 = vadd.f32 %v920, 0.19977711
        %v923 = vadd.f32 %v921, 0.19977711
        %v924 = vmul.f32 %v922, %v914
        %v925 = vmul.f32 %v923, %v915
        %v926 = vsub.f32 %v924, 0.3333295
        %v927 = vsub.f32 %v925, 0.3333295
        %v928 = vadd.f32 %v912, %v894
        %v929 = vadd.f32 %v913, %v909
        %v930 = vmul.f32 %v894, %v914
        %v931 = vmul.f32 %v909, %v915
        %v932 = vmul.f32 %v930, %v926
        %v933 = vmul.f32 %v931, %v927
        %v934 = vadd.f32 %v928, %v932
        %v935 = vadd.f32 %v929, %v933
        %v936 = vmul.f32 %v860, %v934
        %v937 = vmul.f32 %v861, %v935
        %v938 = vmul.f32 %v936, 1.272
        %v939 = vmul.f32 %v937, 1.272
        %v940 = vrot.slane %v938, 4
        %v941 = vadd.f32 %v938, %v940
        %v942 = vrot.slane %v941, 2
        %v943 = vadd.f32 %v941, %v942
        %v944 = vrot.slane %v943, 1
        %v945 = vadd.f32 %v943, %v944
        %v946 = vrot.slane %v939, 4
        %v947 = vadd.f32 %v939, %v946
        %v948 = vrot.slane %v947, 2
        %v949 = vadd.f32 %v947, %v948
        %v950 = vrot.slane %v949, 1
        %v951 = vadd.f32 %v949, %v950
        %v952 = vmul.f32 %v945, 0.2
        %v953 = vmul.f32 %v951, 0.2
        %v954 = vsub.f32 %v938, %v952
        %v955 = vsub.f32 %v939, %v953
        %v956 = vmul.f32 %v954, 1.442695
        %v957 = vpow.pop %v956
        %v958 = vmul.f32 %v955, 1.442695
        %v959 = vpow.pop %v958
        %v960 = vmul.f32 %v957, %v330
        %v961 = vmul.f32 %v959, %v331
        %v962 = vadd.f32 %v960, %v833
        %v963 = vadd.f32 %v961, %v856
        %v964 = vld [vmem:[%s7] sm:$0xff]
        %v965 = vld [vmem:[%s7 + $0x8] sm:$0xff]
        %v967 = vsel %vm427, %v964, 0
        %v970 = vsel %vm427, %v965, 0
        %972 = vmatpush.msra.mxu0 0.0
        %973 = vmatpush.msra.mxu0 0.0
        %974 = vmatpush.msra.mxu0 0.0
        %975 = vmatpush.msra.mxu0 0.0
        %976 = vmatpush.msra.mxu0 0.0
        %977 = vmatpush.msra.mxu0 0.0
        %978 = vmatpush.msra.mxu0 0.0
        %979 = vmatpush.msra.mxu0 0.0
        %980 = vmatpush.msra.mxu0 0.0
        %981 = vmatpush.msra.mxu0 0.0
        %982 = vmatpush.msra.mxu0 0.0
        %983 = vmatpush.msra.mxu0 0.0
        %984 = vmatpush.msra.mxu0 0.0
        %985 = vmatpush.msra.mxu0 0.0
        %986 = vmatpush.msra.mxu0 %v962
        %987 = vmatpush.msra.mxu0 %v650
        %988 = vmatmul.f32.gmra.mxu0 %v967
        %v989 = vpop.f32.mrf.mxu0
        %v990 = vadd.f32 0.0, %v989
        %991 = vmatmul.f32.gmra.mxu0 %v970
        %v992 = vpop.f32.mrf.mxu0
        %v993 = vadd.f32 0.0, %v992
        %994 = vdwg.mxu0
        %995 = vmatpush.msra.mxu0 0.0
        %996 = vmatpush.msra.mxu0 0.0
        %997 = vmatpush.msra.mxu0 0.0
        %998 = vmatpush.msra.mxu0 0.0
        %999 = vmatpush.msra.mxu0 0.0
        %1000 = vmatpush.msra.mxu0 0.0
        %1001 = vmatpush.msra.mxu0 0.0
        %1002 = vmatpush.msra.mxu0 0.0
        %1003 = vmatpush.msra.mxu0 0.0
        %1004 = vmatpush.msra.mxu0 0.0
        %1005 = vmatpush.msra.mxu0 0.0
        %1006 = vmatpush.msra.mxu0 0.0
        %1007 = vmatpush.msra.mxu0 0.0
        %1008 = vmatpush.msra.mxu0 0.0
        %1009 = vmatpush.msra.mxu0 %v963
        %1010 = vmatpush.msra.mxu0 %v651
        %1011 = vmatmul.f32.gmra.mxu0 %v967
        %v1012 = vpop.f32.mrf.mxu0
        %v1013 = vadd.f32 0.0, %v1012
        %1014 = vmatmul.f32.gmra.mxu0 %v970
        %v1015 = vpop.f32.mrf.mxu0
        %v1016 = vadd.f32 0.0, %v1015
        %1017 = vdwg.mxu0
        %s1018 = scalar_lea.vmem %s1, 48
        %v1019 = vld [vmem:[%s1018] sm:$0xff]
        %v1020 = vld [vmem:[%s1018 + $0x8] sm:$0xff]
        %s1021 = scalar_lea.vmem %s2, 48
        %v1022 = vld [vmem:[%s1021] sm:$0xff]
        %v1023 = vld [vmem:[%s1021 + $0x8] sm:$0xff]
        %s1024 = scalar_lea.vmem %s3, 48
        %v1025 = vld [vmem:[%s1024] sm:$0xff]
        %v1026 = vld [vmem:[%s1024 + $0x8] sm:$0xff]
        %s1027 = scalar_lea.vmem %s4, 48
        %v1028 = vld [vmem:[%s1027] sm:$0xff]
        %v1029 = vld [vmem:[%s1027 + $0x8] sm:$0xff]
        %s1030 = scalar_lea.vmem %s5, 48
        %v1031 = vld [vmem:[%s1030] sm:$0xff]
        %v1032 = vld [vmem:[%s1030 + $0x8] sm:$0xff]
        %s1033 = scalar_lea.vmem %s6, 48
        %v1034 = vld [vmem:[%s1033] sm:$0xff]
        %v1035 = vld [vmem:[%s1033 + $0x8] sm:$0xff]
        %1037 = vset.pattern.permute.xlu0 0
        %1038 = vperm.xlu0 %1037, %v1022
        %v1039 = vpop.permute.xlu0 %1038
        %1042 = vset.pattern.permute.xlu0 0
        %1043 = vperm.xlu0 %1042, %v1023
        %v1044 = vpop.permute.xlu0 %1043
        %v1047 = vsel %vm360, %v1019, 0
        %v1050 = vsel %vm360, %v1020, 0
        %1052 = vmatpush.msra.mxu0 0.0
        %1053 = vmatpush.msra.mxu0 0.0
        %1054 = vmatpush.msra.mxu0 0.0
        %1055 = vmatpush.msra.mxu0 0.0
        %1056 = vmatpush.msra.mxu0 0.0
        %1057 = vmatpush.msra.mxu0 0.0
        %1058 = vmatpush.msra.mxu0 0.0
        %1059 = vmatpush.msra.mxu0 0.0
        %1060 = vmatpush.msra.mxu0 0.0
        %1061 = vmatpush.msra.mxu0 0.0
        %1062 = vmatpush.msra.mxu0 0.0
        %1063 = vmatpush.msra.mxu0 0.0
        %1064 = vmatpush.msra.mxu0 0.0
        %1065 = vmatpush.msra.mxu0 0.0
        %1066 = vmatpush.msra.mxu0 0.0
        %1067 = vmatpush.msra.mxu0 %v993
        %1068 = vmatmul.f32.gmra.mxu0 %v1047
        %v1069 = vpop.f32.mrf.mxu0
        %v1070 = vadd.f32 %v1039, %v1069
        %1071 = vmatmul.f32.gmra.mxu0 %v1050
        %v1072 = vpop.f32.mrf.mxu0
        %v1073 = vadd.f32 %v1044, %v1072
        %1074 = vdwg.mxu0
        %1075 = vmatpush.msra.mxu0 0.0
        %1076 = vmatpush.msra.mxu0 0.0
        %1077 = vmatpush.msra.mxu0 0.0
        %1078 = vmatpush.msra.mxu0 0.0
        %1079 = vmatpush.msra.mxu0 0.0
        %1080 = vmatpush.msra.mxu0 0.0
        %1081 = vmatpush.msra.mxu0 0.0
        %1082 = vmatpush.msra.mxu0 0.0
        %1083 = vmatpush.msra.mxu0 0.0
        %1084 = vmatpush.msra.mxu0 0.0
        %1085 = vmatpush.msra.mxu0 0.0
        %1086 = vmatpush.msra.mxu0 0.0
        %1087 = vmatpush.msra.mxu0 0.0
        %1088 = vmatpush.msra.mxu0 0.0
        %1089 = vmatpush.msra.mxu0 0.0
        %1090 = vmatpush.msra.mxu0 %v1016
        %1091 = vmatmul.f32.gmra.mxu0 %v1047
        %v1092 = vpop.f32.mrf.mxu0
        %v1093 = vadd.f32 %v1039, %v1092
        %1094 = vmatmul.f32.gmra.mxu0 %v1050
        %v1095 = vpop.f32.mrf.mxu0
        %v1096 = vadd.f32 %v1044, %v1095
        %1097 = vdwg.mxu0
        %v1098 = vmax.f32 %v1070, 0.0
        %v1099 = vmax.f32 %v1093, 0.0
        %v1100 = vmax.f32 %v1073, 0.0
        %v1101 = vmax.f32 %v1096, 0.0
        %1103 = vset.pattern.permute.xlu0 0
        %1104 = vperm.xlu0 %1103, %v1028
        %v1105 = vpop.permute.xlu0 %1104
        %1108 = vset.pattern.permute.xlu0 0
        %1109 = vperm.xlu0 %1108, %v1029
        %v1110 = vpop.permute.xlu0 %1109
        %v1113 = vsel %vm427, %v1025, 0
        %v1116 = vsel %vm427, %v1026, 0
        %1118 = vmatpush.msra.mxu0 0.0
        %1119 = vmatpush.msra.mxu0 0.0
        %1120 = vmatpush.msra.mxu0 0.0
        %1121 = vmatpush.msra.mxu0 0.0
        %1122 = vmatpush.msra.mxu0 0.0
        %1123 = vmatpush.msra.mxu0 0.0
        %1124 = vmatpush.msra.mxu0 0.0
        %1125 = vmatpush.msra.mxu0 0.0
        %1126 = vmatpush.msra.mxu0 0.0
        %1127 = vmatpush.msra.mxu0 0.0
        %1128 = vmatpush.msra.mxu0 0.0
        %1129 = vmatpush.msra.mxu0 0.0
        %1130 = vmatpush.msra.mxu0 0.0
        %1131 = vmatpush.msra.mxu0 0.0
        %1132 = vmatpush.msra.mxu0 %v1100
        %1133 = vmatpush.msra.mxu0 %v1098
        %1134 = vmatmul.f32.gmra.mxu0 %v1113
        %v1135 = vpop.f32.mrf.mxu0
        %v1136 = vadd.f32 %v1105, %v1135
        %1137 = vmatmul.f32.gmra.mxu0 %v1116
        %v1138 = vpop.f32.mrf.mxu0
        %v1139 = vadd.f32 %v1110, %v1138
        %1140 = vdwg.mxu0
        %1141 = vmatpush.msra.mxu0 0.0
        %1142 = vmatpush.msra.mxu0 0.0
        %1143 = vmatpush.msra.mxu0 0.0
        %1144 = vmatpush.msra.mxu0 0.0
        %1145 = vmatpush.msra.mxu0 0.0
        %1146 = vmatpush.msra.mxu0 0.0
        %1147 = vmatpush.msra.mxu0 0.0
        %1148 = vmatpush.msra.mxu0 0.0
        %1149 = vmatpush.msra.mxu0 0.0
        %1150 = vmatpush.msra.mxu0 0.0
        %1151 = vmatpush.msra.mxu0 0.0
        %1152 = vmatpush.msra.mxu0 0.0
        %1153 = vmatpush.msra.mxu0 0.0
        %1154 = vmatpush.msra.mxu0 0.0
        %1155 = vmatpush.msra.mxu0 %v1101
        %1156 = vmatpush.msra.mxu0 %v1099
        %1157 = vmatmul.f32.gmra.mxu0 %v1113
        %v1158 = vpop.f32.mrf.mxu0
        %v1159 = vadd.f32 %v1105, %v1158
        %1160 = vmatmul.f32.gmra.mxu0 %v1116
        %v1161 = vpop.f32.mrf.mxu0
        %v1162 = vadd.f32 %v1110, %v1161
        %1163 = vdwg.mxu0
        %v1164 = vmax.f32 %v1136, 0.0
        %v1165 = vmax.f32 %v1159, 0.0
        %v1166 = vmax.f32 %v1139, 0.0
        %v1167 = vmax.f32 %v1162, 0.0
        %1169 = vset.pattern.permute.xlu0 0
        %1170 = vperm.xlu0 %1169, %v1034
        %v1171 = vpop.permute.xlu0 %1170
        %1174 = vset.pattern.permute.xlu0 0
        %1175 = vperm.xlu0 %1174, %v1035
        %v1176 = vpop.permute.xlu0 %1175
        %v1179 = vsel %vm427, %v1031, 0
        %v1182 = vsel %vm427, %v1032, 0
        %1184 = vmatpush.msra.mxu0 0.0
        %1185 = vmatpush.msra.mxu0 0.0
        %1186 = vmatpush.msra.mxu0 0.0
        %1187 = vmatpush.msra.mxu0 0.0
        %1188 = vmatpush.msra.mxu0 0.0
        %1189 = vmatpush.msra.mxu0 0.0
        %1190 = vmatpush.msra.mxu0 0.0
        %1191 = vmatpush.msra.mxu0 0.0
        %1192 = vmatpush.msra.mxu0 0.0
        %1193 = vmatpush.msra.mxu0 0.0
        %1194 = vmatpush.msra.mxu0 0.0
        %1195 = vmatpush.msra.mxu0 0.0
        %1196 = vmatpush.msra.mxu0 0.0
        %1197 = vmatpush.msra.mxu0 0.0
        %1198 = vmatpush.msra.mxu0 %v1166
        %1199 = vmatpush.msra.mxu0 %v1164
        %1200 = vmatmul.f32.gmra.mxu0 %v1179
        %v1201 = vpop.f32.mrf.mxu0
        %v1202 = vadd.f32 %v1171, %v1201
        %1203 = vmatmul.f32.gmra.mxu0 %v1182
        %v1204 = vpop.f32.mrf.mxu0
        %v1205 = vadd.f32 %v1176, %v1204
        %1206 = vdwg.mxu0
        %1207 = vmatpush.msra.mxu0 0.0
        %1208 = vmatpush.msra.mxu0 0.0
        %1209 = vmatpush.msra.mxu0 0.0
        %1210 = vmatpush.msra.mxu0 0.0
        %1211 = vmatpush.msra.mxu0 0.0
        %1212 = vmatpush.msra.mxu0 0.0
        %1213 = vmatpush.msra.mxu0 0.0
        %1214 = vmatpush.msra.mxu0 0.0
        %1215 = vmatpush.msra.mxu0 0.0
        %1216 = vmatpush.msra.mxu0 0.0
        %1217 = vmatpush.msra.mxu0 0.0
        %1218 = vmatpush.msra.mxu0 0.0
        %1219 = vmatpush.msra.mxu0 0.0
        %1220 = vmatpush.msra.mxu0 0.0
        %1221 = vmatpush.msra.mxu0 %v1167
        %1222 = vmatpush.msra.mxu0 %v1165
        %1223 = vmatmul.f32.gmra.mxu0 %v1179
        %v1224 = vpop.f32.mrf.mxu0
        %v1225 = vadd.f32 %v1171, %v1224
        %1226 = vmatmul.f32.gmra.mxu0 %v1182
        %v1227 = vpop.f32.mrf.mxu0
        %v1228 = vadd.f32 %v1176, %v1227
        %1229 = vdwg.mxu0
        %vm1230 = vcmp.lt.f32.partialorder %v1202, 0.0
        %vm1231 = vcmp.lt.f32.partialorder %v1225, 0.0
        %v1232 = vsel %vm1230, -1.0, 1.0
        %v1233 = vsel %vm1231, -1.0, 1.0
        %v1234 = vand.u32 2147483647, %v1202
        %v1235 = vand.u32 2147483647, %v1225
        %vm1236 = vcmp.gt.f32.partialorder %v1234, 2.4142137
        %vm1237 = vcmp.gt.f32.partialorder %v1235, 2.4142137
        %vm1238 = vcmp.gt.f32.partialorder %v1234, 0.41421357
        %vm1239 = vcmp.gt.f32.partialorder %v1235, 0.41421357
        %v1240 = vsub.f32 %v1234, 1.0
        %v1241 = vsub.f32 %v1235, 1.0
        %v1242 = vsel %vm1238, %v1240, %v1234
        %v1243 = vsel %vm1239, %v1241, %v1235
        %v1244 = vsel %vm1236, -1.0, %v1242
        %v1245 = vsel %vm1237, -1.0, %v1243
        %v1246 = vadd.f32 %v1234, 1.0
        %v1247 = vadd.f32 %v1235, 1.0
        %v1248 = vsel %vm1238, %v1246, 1.0
        %v1249 = vsel %vm1239, %v1247, 1.0
        %v1250 = vsel %vm1236, %v1234, %v1248
        %v1251 = vsel %vm1237, %v1235, %v1249
        %v1252 = vrcp.pop %v1250
        %v1253 = vmul.f32 %v1250, %v1252
        %v1254 = vsub.f32 1.0, %v1253
        %v1255 = vmul.f32 %v1252, %v1254
        %v1256 = vadd.f32 %v1252, %v1255
        %vm1257 = vweird.f32 %v1250
        %vm1258 = vweird.f32 %v1252
        %vm1259 = vmor %vm1257, %vm1258
        %v1260 = vsel %vm1259, %v1252, %v1256
        %v1261 = vand.u32 2147483647, %v1250
        %vm1262 = vcmp.eq.f32.partialorder %v1261, 8.507059e+37
        %v1263 = vand.u32 %v1250, 2147483648
        %v1264 = vor.u32 1.1754944e-38, %v1263
        %v1265 = vsel %vm1262, %v1264, %v1260
        %v1266 = vmul.f32 %v1244, %v1265
        %v1267 = vrcp.pop %v1251
        %v1268 = vmul.f32 %v1251, %v1267
        %v1269 = vsub.f32 1.0, %v1268
        %v1270 = vmul.f32 %v1267, %v1269
        %v1271 = vadd.f32 %v1267, %v1270
        %vm1272 = vweird.f32 %v1251
        %vm1273 = vweird.f32 %v1267
        %vm1274 = vmor %vm1272, %vm1273
        %v1275 = vsel %vm1274, %v1267, %v1271
        %v1276 = vand.u32 2147483647, %v1251
        %vm1277 = vcmp.eq.f32.partialorder %v1276, 8.507059e+37
        %v1278 = vand.u32 %v1251, 2147483648
        %v1279 = vor.u32 1.1754944e-38, %v1278
        %v1280 = vsel %vm1277, %v1279, %v1275
        %v1281 = vmul.f32 %v1245, %v1280
        %v1282 = vsel %vm1238, 0.7853982, 0.0
        %v1283 = vsel %vm1239, 0.7853982, 0.0
        %v1284 = vsel %vm1236, 1.5707964, %v1282
        %v1285 = vsel %vm1237, 1.5707964, %v1283
        %v1286 = vmul.f32 %v1266, %v1266
        %v1287 = vmul.f32 %v1281, %v1281
        %v1288 = vmul.f32 %v1286, 0.080537446
        %v1289 = vmul.f32 %v1287, 0.080537446
        %v1290 = vsub.f32 %v1288, 0.13877685
        %v1291 = vsub.f32 %v1289, 0.13877685
        %v1292 = vmul.f32 %v1290, %v1286
        %v1293 = vmul.f32 %v1291, %v1287
        %v1294 = vadd.f32 %v1292, 0.19977711
        %v1295 = vadd.f32 %v1293, 0.19977711
        %v1296 = vmul.f32 %v1294, %v1286
        %v1297 = vmul.f32 %v1295, %v1287
        %v1298 = vsub.f32 %v1296, 0.3333295
        %v1299 = vsub.f32 %v1297, 0.3333295
        %v1300 = vadd.f32 %v1284, %v1266
        %v1301 = vadd.f32 %v1285, %v1281
        %v1302 = vmul.f32 %v1266, %v1286
        %v1303 = vmul.f32 %v1281, %v1287
        %v1304 = vmul.f32 %v1302, %v1298
        %v1305 = vmul.f32 %v1303, %v1299
        %v1306 = vadd.f32 %v1300, %v1304
        %v1307 = vadd.f32 %v1301, %v1305
        %v1308 = vmul.f32 %v1232, %v1306
        %v1309 = vmul.f32 %v1233, %v1307
        %v1310 = vmul.f32 %v1308, 1.272
        %v1311 = vmul.f32 %v1309, 1.272
        %v1312 = vrot.slane %v1310, 4
        %v1313 = vadd.f32 %v1310, %v1312
        %v1314 = vrot.slane %v1313, 2
        %v1315 = vadd.f32 %v1313, %v1314
        %v1316 = vrot.slane %v1315, 1
        %v1317 = vadd.f32 %v1315, %v1316
        %v1318 = vrot.slane %v1311, 4
        %v1319 = vadd.f32 %v1311, %v1318
        %v1320 = vrot.slane %v1319, 2
        %v1321 = vadd.f32 %v1319, %v1320
        %v1322 = vrot.slane %v1321, 1
        %v1323 = vadd.f32 %v1321, %v1322
        %v1324 = vmul.f32 %v1317, 0.2
        %v1325 = vmul.f32 %v1323, 0.2
        %v1326 = vsub.f32 %v1310, %v1324
        %v1327 = vsub.f32 %v1311, %v1325
        %v1328 = vmul.f32 %v1326, 1.442695
        %v1329 = vpow.pop %v1328
        %v1330 = vmul.f32 %v1327, 1.442695
        %v1331 = vpow.pop %v1330
        %v1332 = vmul.f32 %v1329, %v990
        %v1333 = vmul.f32 %v1331, %v1013
        %v1334 = vadd.f32 %v1332, %v1205
        %v1335 = vadd.f32 %v1333, %v1228
        %s1336 = scalar_lea.vmem %s1, 32
        %v1337 = vld [vmem:[%s1336] sm:$0xff]
        %v1338 = vld [vmem:[%s1336 + $0x8] sm:$0xff]
        %s1339 = scalar_lea.vmem %s2, 32
        %v1340 = vld [vmem:[%s1339] sm:$0xff]
        %v1341 = vld [vmem:[%s1339 + $0x8] sm:$0xff]
        %s1342 = scalar_lea.vmem %s3, 32
        %v1343 = vld [vmem:[%s1342] sm:$0xff]
        %v1344 = vld [vmem:[%s1342 + $0x8] sm:$0xff]
        %s1345 = scalar_lea.vmem %s4, 32
        %v1346 = vld [vmem:[%s1345] sm:$0xff]
        %v1347 = vld [vmem:[%s1345 + $0x8] sm:$0xff]
        %s1348 = scalar_lea.vmem %s5, 32
        %v1349 = vld [vmem:[%s1348] sm:$0xff]
        %v1350 = vld [vmem:[%s1348 + $0x8] sm:$0xff]
        %s1351 = scalar_lea.vmem %s6, 32
        %v1352 = vld [vmem:[%s1351] sm:$0xff]
        %v1353 = vld [vmem:[%s1351 + $0x8] sm:$0xff]
        %1355 = vset.pattern.permute.xlu0 0
        %1356 = vperm.xlu0 %1355, %v1340
        %v1357 = vpop.permute.xlu0 %1356
        %1360 = vset.pattern.permute.xlu0 0
        %1361 = vperm.xlu0 %1360, %v1341
        %v1362 = vpop.permute.xlu0 %1361
        %v1365 = vsel %vm360, %v1337, 0
        %v1368 = vsel %vm360, %v1338, 0
        %1370 = vmatpush.msra.mxu0 0.0
        %1371 = vmatpush.msra.mxu0 0.0
        %1372 = vmatpush.msra.mxu0 0.0
        %1373 = vmatpush.msra.mxu0 0.0
        %1374 = vmatpush.msra.mxu0 0.0
        %1375 = vmatpush.msra.mxu0 0.0
        %1376 = vmatpush.msra.mxu0 0.0
        %1377 = vmatpush.msra.mxu0 0.0
        %1378 = vmatpush.msra.mxu0 0.0
        %1379 = vmatpush.msra.mxu0 0.0
        %1380 = vmatpush.msra.mxu0 0.0
        %1381 = vmatpush.msra.mxu0 0.0
        %1382 = vmatpush.msra.mxu0 0.0
        %1383 = vmatpush.msra.mxu0 0.0
        %1384 = vmatpush.msra.mxu0 0.0
        %1385 = vmatpush.msra.mxu0 %v1334
        %1386 = vmatmul.f32.gmra.mxu0 %v1365
        %v1387 = vpop.f32.mrf.mxu0
        %v1388 = vadd.f32 %v1357, %v1387
        %1389 = vmatmul.f32.gmra.mxu0 %v1368
        %v1390 = vpop.f32.mrf.mxu0
        %v1391 = vadd.f32 %v1362, %v1390
        %1392 = vdwg.mxu0
        %1393 = vmatpush.msra.mxu0 0.0
        %1394 = vmatpush.msra.mxu0 0.0
        %1395 = vmatpush.msra.mxu0 0.0
        %1396 = vmatpush.msra.mxu0 0.0
        %1397 = vmatpush.msra.mxu0 0.0
        %1398 = vmatpush.msra.mxu0 0.0
        %1399 = vmatpush.msra.mxu0 0.0
        %1400 = vmatpush.msra.mxu0 0.0
        %1401 = vmatpush.msra.mxu0 0.0
        %1402 = vmatpush.msra.mxu0 0.0
        %1403 = vmatpush.msra.mxu0 0.0
        %1404 = vmatpush.msra.mxu0 0.0
        %1405 = vmatpush.msra.mxu0 0.0
        %1406 = vmatpush.msra.mxu0 0.0
        %1407 = vmatpush.msra.mxu0 0.0
        %1408 = vmatpush.msra.mxu0 %v1335
        %1409 = vmatmul.f32.gmra.mxu0 %v1365
        %v1410 = vpop.f32.mrf.mxu0
        %v1411 = vadd.f32 %v1357, %v1410
        %1412 = vmatmul.f32.gmra.mxu0 %v1368
        %v1413 = vpop.f32.mrf.mxu0
        %v1414 = vadd.f32 %v1362, %v1413
        %1415 = vdwg.mxu0
        %v1416 = vmax.f32 %v1388, 0.0
        %v1417 = vmax.f32 %v1411, 0.0
        %v1418 = vmax.f32 %v1391, 0.0
        %v1419 = vmax.f32 %v1414, 0.0
        %1421 = vset.pattern.permute.xlu0 0
        %1422 = vperm.xlu0 %1421, %v1346
        %v1423 = vpop.permute.xlu0 %1422
        %1426 = vset.pattern.permute.xlu0 0
        %1427 = vperm.xlu0 %1426, %v1347
        %v1428 = vpop.permute.xlu0 %1427
        %v1431 = vsel %vm427, %v1343, 0
        %v1434 = vsel %vm427, %v1344, 0
        %1436 = vmatpush.msra.mxu0 0.0
        %1437 = vmatpush.msra.mxu0 0.0
        %1438 = vmatpush.msra.mxu0 0.0
        %1439 = vmatpush.msra.mxu0 0.0
        %1440 = vmatpush.msra.mxu0 0.0
        %1441 = vmatpush.msra.mxu0 0.0
        %1442 = vmatpush.msra.mxu0 0.0
        %1443 = vmatpush.msra.mxu0 0.0
        %1444 = vmatpush.msra.mxu0 0.0
        %1445 = vmatpush.msra.mxu0 0.0
        %1446 = vmatpush.msra.mxu0 0.0
        %1447 = vmatpush.msra.mxu0 0.0
        %1448 = vmatpush.msra.mxu0 0.0
        %1449 = vmatpush.msra.mxu0 0.0
        %1450 = vmatpush.msra.mxu0 %v1418
        %1451 = vmatpush.msra.mxu0 %v1416
        %1452 = vmatmul.f32.gmra.mxu0 %v1431
        %v1453 = vpop.f32.mrf.mxu0
        %v1454 = vadd.f32 %v1423, %v1453
        %1455 = vmatmul.f32.gmra.mxu0 %v1434
        %v1456 = vpop.f32.mrf.mxu0
        %v1457 = vadd.f32 %v1428, %v1456
        %1458 = vdwg.mxu0
        %1459 = vmatpush.msra.mxu0 0.0
        %1460 = vmatpush.msra.mxu0 0.0
        %1461 = vmatpush.msra.mxu0 0.0
        %1462 = vmatpush.msra.mxu0 0.0
        %1463 = vmatpush.msra.mxu0 0.0
        %1464 = vmatpush.msra.mxu0 0.0
        %1465 = vmatpush.msra.mxu0 0.0
        %1466 = vmatpush.msra.mxu0 0.0
        %1467 = vmatpush.msra.mxu0 0.0
        %1468 = vmatpush.msra.mxu0 0.0
        %1469 = vmatpush.msra.mxu0 0.0
        %1470 = vmatpush.msra.mxu0 0.0
        %1471 = vmatpush.msra.mxu0 0.0
        %1472 = vmatpush.msra.mxu0 0.0
        %1473 = vmatpush.msra.mxu0 %v1419
        %1474 = vmatpush.msra.mxu0 %v1417
        %1475 = vmatmul.f32.gmra.mxu0 %v1431
        %v1476 = vpop.f32.mrf.mxu0
        %v1477 = vadd.f32 %v1423, %v1476
        %1478 = vmatmul.f32.gmra.mxu0 %v1434
        %v1479 = vpop.f32.mrf.mxu0
        %v1480 = vadd.f32 %v1428, %v1479
        %1481 = vdwg.mxu0
        %v1482 = vmax.f32 %v1454, 0.0
        %v1483 = vmax.f32 %v1477, 0.0
        %v1484 = vmax.f32 %v1457, 0.0
        %v1485 = vmax.f32 %v1480, 0.0
        %1487 = vset.pattern.permute.xlu0 0
        %1488 = vperm.xlu0 %1487, %v1352
        %v1489 = vpop.permute.xlu0 %1488
        %1492 = vset.pattern.permute.xlu0 0
        %1493 = vperm.xlu0 %1492, %v1353
        %v1494 = vpop.permute.xlu0 %1493
        %v1497 = vsel %vm427, %v1349, 0
        %v1500 = vsel %vm427, %v1350, 0
        %1502 = vmatpush.msra.mxu0 0.0
        %1503 = vmatpush.msra.mxu0 0.0
        %1504 = vmatpush.msra.mxu0 0.0
        %1505 = vmatpush.msra.mxu0 0.0
        %1506 = vmatpush.msra.mxu0 0.0
        %1507 = vmatpush.msra.mxu0 0.0
        %1508 = vmatpush.msra.mxu0 0.0
        %1509 = vmatpush.msra.mxu0 0.0
        %1510 = vmatpush.msra.mxu0 0.0
        %1511 = vmatpush.msra.mxu0 0.0
        %1512 = vmatpush.msra.mxu0 0.0
        %1513 = vmatpush.msra.mxu0 0.0
        %1514 = vmatpush.msra.mxu0 0.0
        %1515 = vmatpush.msra.mxu0 0.0
        %1516 = vmatpush.msra.mxu0 %v1484
        %1517 = vmatpush.msra.mxu0 %v1482
        %1518 = vmatmul.f32.gmra.mxu0 %v1497
        %v1519 = vpop.f32.mrf.mxu0
        %v1520 = vadd.f32 %v1489, %v1519
        %1521 = vmatmul.f32.gmra.mxu0 %v1500
        %v1522 = vpop.f32.mrf.mxu0
        %v1523 = vadd.f32 %v1494, %v1522
        %1524 = vdwg.mxu0
        %1525 = vmatpush.msra.mxu0 0.0
        %1526 = vmatpush.msra.mxu0 0.0
        %1527 = vmatpush.msra.mxu0 0.0
        %1528 = vmatpush.msra.mxu0 0.0
        %1529 = vmatpush.msra.mxu0 0.0
        %1530 = vmatpush.msra.mxu0 0.0
        %1531 = vmatpush.msra.mxu0 0.0
        %1532 = vmatpush.msra.mxu0 0.0
        %1533 = vmatpush.msra.mxu0 0.0
        %1534 = vmatpush.msra.mxu0 0.0
        %1535 = vmatpush.msra.mxu0 0.0
        %1536 = vmatpush.msra.mxu0 0.0
        %1537 = vmatpush.msra.mxu0 0.0
        %1538 = vmatpush.msra.mxu0 0.0
        %1539 = vmatpush.msra.mxu0 %v1485
        %1540 = vmatpush.msra.mxu0 %v1483
        %1541 = vmatmul.f32.gmra.mxu0 %v1497
        %v1542 = vpop.f32.mrf.mxu0
        %v1543 = vadd.f32 %v1489, %v1542
        %1544 = vmatmul.f32.gmra.mxu0 %v1500
        %v1545 = vpop.f32.mrf.mxu0
        %v1546 = vadd.f32 %v1494, %v1545
        %1547 = vdwg.mxu0
        %vm1548 = vcmp.lt.f32.partialorder %v1520, 0.0
        %vm1549 = vcmp.lt.f32.partialorder %v1543, 0.0
        %v1550 = vsel %vm1548, -1.0, 1.0
        %v1551 = vsel %vm1549, -1.0, 1.0
        %v1552 = vand.u32 2147483647, %v1520
        %v1553 = vand.u32 2147483647, %v1543
        %vm1554 = vcmp.gt.f32.partialorder %v1552, 2.4142137
        %vm1555 = vcmp.gt.f32.partialorder %v1553, 2.4142137
        %vm1556 = vcmp.gt.f32.partialorder %v1552, 0.41421357
        %vm1557 = vcmp.gt.f32.partialorder %v1553, 0.41421357
        %v1558 = vsub.f32 %v1552, 1.0
        %v1559 = vsub.f32 %v1553, 1.0
        %v1560 = vsel %vm1556, %v1558, %v1552
        %v1561 = vsel %vm1557, %v1559, %v1553
        %v1562 = vsel %vm1554, -1.0, %v1560
        %v1563 = vsel %vm1555, -1.0, %v1561
        %v1564 = vadd.f32 %v1552, 1.0
        %v1565 = vadd.f32 %v1553, 1.0
        %v1566 = vsel %vm1556, %v1564, 1.0
        %v1567 = vsel %vm1557, %v1565, 1.0
        %v1568 = vsel %vm1554, %v1552, %v1566
        %v1569 = vsel %vm1555, %v1553, %v1567
        %v1570 = vrcp.pop %v1568
        %v1571 = vmul.f32 %v1568, %v1570
        %v1572 = vsub.f32 1.0, %v1571
        %v1573 = vmul.f32 %v1570, %v1572
        %v1574 = vadd.f32 %v1570, %v1573
        %vm1575 = vweird.f32 %v1568
        %vm1576 = vweird.f32 %v1570
        %vm1577 = vmor %vm1575, %vm1576
        %v1578 = vsel %vm1577, %v1570, %v1574
        %v1579 = vand.u32 2147483647, %v1568
        %vm1580 = vcmp.eq.f32.partialorder %v1579, 8.507059e+37
        %v1581 = vand.u32 %v1568, 2147483648
        %v1582 = vor.u32 1.1754944e-38, %v1581
        %v1583 = vsel %vm1580, %v1582, %v1578
        %v1584 = vmul.f32 %v1562, %v1583
        %v1585 = vrcp.pop %v1569
        %v1586 = vmul.f32 %v1569, %v1585
        %v1587 = vsub.f32 1.0, %v1586
        %v1588 = vmul.f32 %v1585, %v1587
        %v1589 = vadd.f32 %v1585, %v1588
        %vm1590 = vweird.f32 %v1569
        %vm1591 = vweird.f32 %v1585
        %vm1592 = vmor %vm1590, %vm1591
        %v1593 = vsel %vm1592, %v1585, %v1589
        %v1594 = vand.u32 2147483647, %v1569
        %vm1595 = vcmp.eq.f32.partialorder %v1594, 8.507059e+37
        %v1596 = vand.u32 %v1569, 2147483648
        %v1597 = vor.u32 1.1754944e-38, %v1596
        %v1598 = vsel %vm1595, %v1597, %v1593
        %v1599 = vmul.f32 %v1563, %v1598
        %v1600 = vsel %vm1556, 0.7853982, 0.0
        %v1601 = vsel %vm1557, 0.7853982, 0.0
        %v1602 = vsel %vm1554, 1.5707964, %v1600
        %v1603 = vsel %vm1555, 1.5707964, %v1601
        %v1604 = vmul.f32 %v1584, %v1584
        %v1605 = vmul.f32 %v1599, %v1599
        %v1606 = vmul.f32 %v1604, 0.080537446
        %v1607 = vmul.f32 %v1605, 0.080537446
        %v1608 = vsub.f32 %v1606, 0.13877685
        %v1609 = vsub.f32 %v1607, 0.13877685
        %v1610 = vmul.f32 %v1608, %v1604
        %v1611 = vmul.f32 %v1609, %v1605
        %v1612 = vadd.f32 %v1610, 0.19977711
        %v1613 = vadd.f32 %v1611, 0.19977711
        %v1614 = vmul.f32 %v1612, %v1604
        %v1615 = vmul.f32 %v1613, %v1605
        %v1616 = vsub.f32 %v1614, 0.3333295
        %v1617 = vsub.f32 %v1615, 0.3333295
        %v1618 = vadd.f32 %v1602, %v1584
        %v1619 = vadd.f32 %v1603, %v1599
        %v1620 = vmul.f32 %v1584, %v1604
        %v1621 = vmul.f32 %v1599, %v1605
        %v1622 = vmul.f32 %v1620, %v1616
        %v1623 = vmul.f32 %v1621, %v1617
        %v1624 = vadd.f32 %v1618, %v1622
        %v1625 = vadd.f32 %v1619, %v1623
        %v1626 = vmul.f32 %v1550, %v1624
        %v1627 = vmul.f32 %v1551, %v1625
        %v1628 = vmul.f32 %v1626, 1.272
        %v1629 = vmul.f32 %v1627, 1.272
        %v1630 = vrot.slane %v1628, 4
        %v1631 = vadd.f32 %v1628, %v1630
        %v1632 = vrot.slane %v1631, 2
        %v1633 = vadd.f32 %v1631, %v1632
        %v1634 = vrot.slane %v1633, 1
        %v1635 = vadd.f32 %v1633, %v1634
        %v1636 = vrot.slane %v1629, 4
        %v1637 = vadd.f32 %v1629, %v1636
        %v1638 = vrot.slane %v1637, 2
        %v1639 = vadd.f32 %v1637, %v1638
        %v1640 = vrot.slane %v1639, 1
        %v1641 = vadd.f32 %v1639, %v1640
        %v1642 = vmul.f32 %v1635, 0.2
        %v1643 = vmul.f32 %v1641, 0.2
        %v1644 = vsub.f32 %v1628, %v1642
        %v1645 = vsub.f32 %v1629, %v1643
        %v1646 = vmul.f32 %v1644, 1.442695
        %v1647 = vpow.pop %v1646
        %v1648 = vmul.f32 %v1645, 1.442695
        %v1649 = vpow.pop %v1648
        %v1650 = vmul.f32 %v1647, %v993
        %v1651 = vmul.f32 %v1649, %v1016
        %v1652 = vadd.f32 %v1650, %v1523
        %v1653 = vadd.f32 %v1651, %v1546
        %s1654 = scalar_lea.vmem %s7, 16
        %v1655 = vld [vmem:[%s1654] sm:$0xff]
        %v1656 = vld [vmem:[%s1654 + $0x8] sm:$0xff]
        %v1658 = vsel %vm427, %v1655, 0
        %v1661 = vsel %vm427, %v1656, 0
        %1663 = vmatpush.msra.mxu0 0.0
        %1664 = vmatpush.msra.mxu0 0.0
        %1665 = vmatpush.msra.mxu0 0.0
        %1666 = vmatpush.msra.mxu0 0.0
        %1667 = vmatpush.msra.mxu0 0.0
        %1668 = vmatpush.msra.mxu0 0.0
        %1669 = vmatpush.msra.mxu0 0.0
        %1670 = vmatpush.msra.mxu0 0.0
        %1671 = vmatpush.msra.mxu0 0.0
        %1672 = vmatpush.msra.mxu0 0.0
        %1673 = vmatpush.msra.mxu0 0.0
        %1674 = vmatpush.msra.mxu0 0.0
        %1675 = vmatpush.msra.mxu0 0.0
        %1676 = vmatpush.msra.mxu0 0.0
        %1677 = vmatpush.msra.mxu0 %v1652
        %1678 = vmatpush.msra.mxu0 %v1334
        %1679 = vmatmul.f32.gmra.mxu0 %v1658
        %v1680 = vpop.f32.mrf.mxu0
        %v1681 = vadd.f32 0.0, %v1680
        %1682 = vmatmul.f32.gmra.mxu0 %v1661
        %v1683 = vpop.f32.mrf.mxu0
        %v1684 = vadd.f32 0.0, %v1683
        %1685 = vdwg.mxu0
        %1686 = vmatpush.msra.mxu0 0.0
        %1687 = vmatpush.msra.mxu0 0.0
        %1688 = vmatpush.msra.mxu0 0.0
        %1689 = vmatpush.msra.mxu0 0.0
        %1690 = vmatpush.msra.mxu0 0.0
        %1691 = vmatpush.msra.mxu0 0.0
        %1692 = vmatpush.msra.mxu0 0.0
        %1693 = vmatpush.msra.mxu0 0.0
        %1694 = vmatpush.msra.mxu0 0.0
        %1695 = vmatpush.msra.mxu0 0.0
        %1696 = vmatpush.msra.mxu0 0.0
        %1697 = vmatpush.msra.mxu0 0.0
        %1698 = vmatpush.msra.mxu0 0.0
        %1699 = vmatpush.msra.mxu0 0.0
        %1700 = vmatpush.msra.mxu0 %v1653
        %1701 = vmatpush.msra.mxu0 %v1335
        %1702 = vmatmul.f32.gmra.mxu0 %v1658
        %v1703 = vpop.f32.mrf.mxu0
        %v1704 = vadd.f32 0.0, %v1703
        %1705 = vmatmul.f32.gmra.mxu0 %v1661
        %v1706 = vpop.f32.mrf.mxu0
        %v1707 = vadd.f32 0.0, %v1706
        %1708 = vdwg.mxu0
        %s1709 = scalar_lea.vmem %s1, 80
        %v1710 = vld [vmem:[%s1709] sm:$0xff]
        %v1711 = vld [vmem:[%s1709 + $0x8] sm:$0xff]
        %s1712 = scalar_lea.vmem %s2, 80
        %v1713 = vld [vmem:[%s1712] sm:$0xff]
        %v1714 = vld [vmem:[%s1712 + $0x8] sm:$0xff]
        %s1715 = scalar_lea.vmem %s3, 80
        %v1716 = vld [vmem:[%s1715] sm:$0xff]
        %v1717 = vld [vmem:[%s1715 + $0x8] sm:$0xff]
        %s1718 = scalar_lea.vmem %s4, 80
        %v1719 = vld [vmem:[%s1718] sm:$0xff]
        %v1720 = vld [vmem:[%s1718 + $0x8] sm:$0xff]
        %s1721 = scalar_lea.vmem %s5, 80
        %v1722 = vld [vmem:[%s1721] sm:$0xff]
        %v1723 = vld [vmem:[%s1721 + $0x8] sm:$0xff]
        %s1724 = scalar_lea.vmem %s6, 80
        %v1725 = vld [vmem:[%s1724] sm:$0xff]
        %v1726 = vld [vmem:[%s1724 + $0x8] sm:$0xff]
        %1728 = vset.pattern.permute.xlu0 0
        %1729 = vperm.xlu0 %1728, %v1713
        %v1730 = vpop.permute.xlu0 %1729
        %1733 = vset.pattern.permute.xlu0 0
        %1734 = vperm.xlu0 %1733, %v1714
        %v1735 = vpop.permute.xlu0 %1734
        %v1738 = vsel %vm360, %v1710, 0
        %v1741 = vsel %vm360, %v1711, 0
        %1743 = vmatpush.msra.mxu0 0.0
        %1744 = vmatpush.msra.mxu0 0.0
        %1745 = vmatpush.msra.mxu0 0.0
        %1746 = vmatpush.msra.mxu0 0.0
        %1747 = vmatpush.msra.mxu0 0.0
        %1748 = vmatpush.msra.mxu0 0.0
        %1749 = vmatpush.msra.mxu0 0.0
        %1750 = vmatpush.msra.mxu0 0.0
        %1751 = vmatpush.msra.mxu0 0.0
        %1752 = vmatpush.msra.mxu0 0.0
        %1753 = vmatpush.msra.mxu0 0.0
        %1754 = vmatpush.msra.mxu0 0.0
        %1755 = vmatpush.msra.mxu0 0.0
        %1756 = vmatpush.msra.mxu0 0.0
        %1757 = vmatpush.msra.mxu0 0.0
        %1758 = vmatpush.msra.mxu0 %v1684
        %1759 = vmatmul.f32.gmra.mxu0 %v1738
        %v1760 = vpop.f32.mrf.mxu0
        %v1761 = vadd.f32 %v1730, %v1760
        %1762 = vmatmul.f32.gmra.mxu0 %v1741
        %v1763 = vpop.f32.mrf.mxu0
        %v1764 = vadd.f32 %v1735, %v1763
        %1765 = vdwg.mxu0
        %1766 = vmatpush.msra.mxu0 0.0
        %1767 = vmatpush.msra.mxu0 0.0
        %1768 = vmatpush.msra.mxu0 0.0
        %1769 = vmatpush.msra.mxu0 0.0
        %1770 = vmatpush.msra.mxu0 0.0
        %1771 = vmatpush.msra.mxu0 0.0
        %1772 = vmatpush.msra.mxu0 0.0
        %1773 = vmatpush.msra.mxu0 0.0
        %1774 = vmatpush.msra.mxu0 0.0
        %1775 = vmatpush.msra.mxu0 0.0
        %1776 = vmatpush.msra.mxu0 0.0
        %1777 = vmatpush.msra.mxu0 0.0
        %1778 = vmatpush.msra.mxu0 0.0
        %1779 = vmatpush.msra.mxu0 0.0
        %1780 = vmatpush.msra.mxu0 0.0
        %1781 = vmatpush.msra.mxu0 %v1707
        %1782 = vmatmul.f32.gmra.mxu0 %v1738
        %v1783 = vpop.f32.mrf.mxu0
        %v1784 = vadd.f32 %v1730, %v1783
        %1785 = vmatmul.f32.gmra.mxu0 %v1741
        %v1786 = vpop.f32.mrf.mxu0
        %v1787 = vadd.f32 %v1735, %v1786
        %1788 = vdwg.mxu0
        %v1789 = vmax.f32 %v1761, 0.0
        %v1790 = vmax.f32 %v1784, 0.0
        %v1791 = vmax.f32 %v1764, 0.0
        %v1792 = vmax.f32 %v1787, 0.0
        %1794 = vset.pattern.permute.xlu0 0
        %1795 = vperm.xlu0 %1794, %v1719
        %v1796 = vpop.permute.xlu0 %1795
        %1799 = vset.pattern.permute.xlu0 0
        %1800 = vperm.xlu0 %1799, %v1720
        %v1801 = vpop.permute.xlu0 %1800
        %v1804 = vsel %vm427, %v1716, 0
        %v1807 = vsel %vm427, %v1717, 0
        %1809 = vmatpush.msra.mxu0 0.0
        %1810 = vmatpush.msra.mxu0 0.0
        %1811 = vmatpush.msra.mxu0 0.0
        %1812 = vmatpush.msra.mxu0 0.0
        %1813 = vmatpush.msra.mxu0 0.0
        %1814 = vmatpush.msra.mxu0 0.0
        %1815 = vmatpush.msra.mxu0 0.0
        %1816 = vmatpush.msra.mxu0 0.0
        %1817 = vmatpush.msra.mxu0 0.0
        %1818 = vmatpush.msra.mxu0 0.0
        %1819 = vmatpush.msra.mxu0 0.0
        %1820 = vmatpush.msra.mxu0 0.0
        %1821 = vmatpush.msra.mxu0 0.0
        %1822 = vmatpush.msra.mxu0 0.0
        %1823 = vmatpush.msra.mxu0 %v1791
        %1824 = vmatpush.msra.mxu0 %v1789
        %1825 = vmatmul.f32.gmra.mxu0 %v1804
        %v1826 = vpop.f32.mrf.mxu0
        %v1827 = vadd.f32 %v1796, %v1826
        %1828 = vmatmul.f32.gmra.mxu0 %v1807
        %v1829 = vpop.f32.mrf.mxu0
        %v1830 = vadd.f32 %v1801, %v1829
        %1831 = vdwg.mxu0
        %1832 = vmatpush.msra.mxu0 0.0
        %1833 = vmatpush.msra.mxu0 0.0
        %1834 = vmatpush.msra.mxu0 0.0
        %1835 = vmatpush.msra.mxu0 0.0
        %1836 = vmatpush.msra.mxu0 0.0
        %1837 = vmatpush.msra.mxu0 0.0
        %1838 = vmatpush.msra.mxu0 0.0
        %1839 = vmatpush.msra.mxu0 0.0
        %1840 = vmatpush.msra.mxu0 0.0
        %1841 = vmatpush.msra.mxu0 0.0
        %1842 = vmatpush.msra.mxu0 0.0
        %1843 = vmatpush.msra.mxu0 0.0
        %1844 = vmatpush.msra.mxu0 0.0
        %1845 = vmatpush.msra.mxu0 0.0
        %1846 = vmatpush.msra.mxu0 %v1792
        %1847 = vmatpush.msra.mxu0 %v1790
        %1848 = vmatmul.f32.gmra.mxu0 %v1804
        %v1849 = vpop.f32.mrf.mxu0
        %v1850 = vadd.f32 %v1796, %v1849
        %1851 = vmatmul.f32.gmra.mxu0 %v1807
        %v1852 = vpop.f32.mrf.mxu0
        %v1853 = vadd.f32 %v1801, %v1852
        %1854 = vdwg.mxu0
        %v1855 = vmax.f32 %v1827, 0.0
        %v1856 = vmax.f32 %v1850, 0.0
        %v1857 = vmax.f32 %v1830, 0.0
        %v1858 = vmax.f32 %v1853, 0.0
        %1860 = vset.pattern.permute.xlu0 0
        %1861 = vperm.xlu0 %1860, %v1725
        %v1862 = vpop.permute.xlu0 %1861
        %1865 = vset.pattern.permute.xlu0 0
        %1866 = vperm.xlu0 %1865, %v1726
        %v1867 = vpop.permute.xlu0 %1866
        %v1870 = vsel %vm427, %v1722, 0
        %v1873 = vsel %vm427, %v1723, 0
        %1875 = vmatpush.msra.mxu0 0.0
        %1876 = vmatpush.msra.mxu0 0.0
        %1877 = vmatpush.msra.mxu0 0.0
        %1878 = vmatpush.msra.mxu0 0.0
        %1879 = vmatpush.msra.mxu0 0.0
        %1880 = vmatpush.msra.mxu0 0.0
        %1881 = vmatpush.msra.mxu0 0.0
        %1882 = vmatpush.msra.mxu0 0.0
        %1883 = vmatpush.msra.mxu0 0.0
        %1884 = vmatpush.msra.mxu0 0.0
        %1885 = vmatpush.msra.mxu0 0.0
        %1886 = vmatpush.msra.mxu0 0.0
        %1887 = vmatpush.msra.mxu0 0.0
        %1888 = vmatpush.msra.mxu0 0.0
        %1889 = vmatpush.msra.mxu0 %v1857
        %1890 = vmatpush.msra.mxu0 %v1855
        %1891 = vmatmul.f32.gmra.mxu0 %v1870
        %v1892 = vpop.f32.mrf.mxu0
        %v1893 = vadd.f32 %v1862, %v1892
        %1894 = vmatmul.f32.gmra.mxu0 %v1873
        %v1895 = vpop.f32.mrf.mxu0
        %v1896 = vadd.f32 %v1867, %v1895
        %1897 = vdwg.mxu0
        %1898 = vmatpush.msra.mxu0 0.0
        %1899 = vmatpush.msra.mxu0 0.0
        %1900 = vmatpush.msra.mxu0 0.0
        %1901 = vmatpush.msra.mxu0 0.0
        %1902 = vmatpush.msra.mxu0 0.0
        %1903 = vmatpush.msra.mxu0 0.0
        %1904 = vmatpush.msra.mxu0 0.0
        %1905 = vmatpush.msra.mxu0 0.0
        %1906 = vmatpush.msra.mxu0 0.0
        %1907 = vmatpush.msra.mxu0 0.0
        %1908 = vmatpush.msra.mxu0 0.0
        %1909 = vmatpush.msra.mxu0 0.0
        %1910 = vmatpush.msra.mxu0 0.0
        %1911 = vmatpush.msra.mxu0 0.0
        %1912 = vmatpush.msra.mxu0 %v1858
        %1913 = vmatpush.msra.mxu0 %v1856
        %1914 = vmatmul.f32.gmra.mxu0 %v1870
        %v1915 = vpop.f32.mrf.mxu0
        %v1916 = vadd.f32 %v1862, %v1915
        %1917 = vmatmul.f32.gmra.mxu0 %v1873
        %v1918 = vpop.f32.mrf.mxu0
        %v1919 = vadd.f32 %v1867, %v1918
        %1920 = vdwg.mxu0
        %vm1921 = vcmp.lt.f32.partialorder %v1893, 0.0
        %vm1922 = vcmp.lt.f32.partialorder %v1916, 0.0
        %v1923 = vsel %vm1921, -1.0, 1.0
        %v1924 = vsel %vm1922, -1.0, 1.0
        %v1925 = vand.u32 2147483647, %v1893
        %v1926 = vand.u32 2147483647, %v1916
        %vm1927 = vcmp.gt.f32.partialorder %v1925, 2.4142137
        %vm1928 = vcmp.gt.f32.partialorder %v1926, 2.4142137
        %vm1929 = vcmp.gt.f32.partialorder %v1925, 0.41421357
        %vm1930 = vcmp.gt.f32.partialorder %v1926, 0.41421357
        %v1931 = vsub.f32 %v1925, 1.0
        %v1932 = vsub.f32 %v1926, 1.0
        %v1933 = vsel %vm1929, %v1931, %v1925
        %v1934 = vsel %vm1930, %v1932, %v1926
        %v1935 = vsel %vm1927, -1.0, %v1933
        %v1936 = vsel %vm1928, -1.0, %v1934
        %v1937 = vadd.f32 %v1925, 1.0
        %v1938 = vadd.f32 %v1926, 1.0
        %v1939 = vsel %vm1929, %v1937, 1.0
        %v1940 = vsel %vm1930, %v1938, 1.0
        %v1941 = vsel %vm1927, %v1925, %v1939
        %v1942 = vsel %vm1928, %v1926, %v1940
        %v1943 = vrcp.pop %v1941
        %v1944 = vmul.f32 %v1941, %v1943
        %v1945 = vsub.f32 1.0, %v1944
        %v1946 = vmul.f32 %v1943, %v1945
        %v1947 = vadd.f32 %v1943, %v1946
        %vm1948 = vweird.f32 %v1941
        %vm1949 = vweird.f32 %v1943
        %vm1950 = vmor %vm1948, %vm1949
        %v1951 = vsel %vm1950, %v1943, %v1947
        %v1952 = vand.u32 2147483647, %v1941
        %vm1953 = vcmp.eq.f32.partialorder %v1952, 8.507059e+37
        %v1954 = vand.u32 %v1941, 2147483648
        %v1955 = vor.u32 1.1754944e-38, %v1954
        %v1956 = vsel %vm1953, %v1955, %v1951
        %v1957 = vmul.f32 %v1935, %v1956
        %v1958 = vrcp.pop %v1942
        %v1959 = vmul.f32 %v1942, %v1958
        %v1960 = vsub.f32 1.0, %v1959
        %v1961 = vmul.f32 %v1958, %v1960
        %v1962 = vadd.f32 %v1958, %v1961
        %vm1963 = vweird.f32 %v1942
        %vm1964 = vweird.f32 %v1958
        %vm1965 = vmor %vm1963, %vm1964
        %v1966 = vsel %vm1965, %v1958, %v1962
        %v1967 = vand.u32 2147483647, %v1942
        %vm1968 = vcmp.eq.f32.partialorder %v1967, 8.507059e+37
        %v1969 = vand.u32 %v1942, 2147483648
        %v1970 = vor.u32 1.1754944e-38, %v1969
        %v1971 = vsel %vm1968, %v1970, %v1966
        %v1972 = vmul.f32 %v1936, %v1971
        %v1973 = vsel %vm1929, 0.7853982, 0.0
        %v1974 = vsel %vm1930, 0.7853982, 0.0
        %v1975 = vsel %vm1927, 1.5707964, %v1973
        %v1976 = vsel %vm1928, 1.5707964, %v1974
        %v1977 = vmul.f32 %v1957, %v1957
        %v1978 = vmul.f32 %v1972, %v1972
        %v1979 = vmul.f32 %v1977, 0.080537446
        %v1980 = vmul.f32 %v1978, 0.080537446
        %v1981 = vsub.f32 %v1979, 0.13877685
        %v1982 = vsub.f32 %v1980, 0.13877685
        %v1983 = vmul.f32 %v1981, %v1977
        %v1984 = vmul.f32 %v1982, %v1978
        %v1985 = vadd.f32 %v1983, 0.19977711
        %v1986 = vadd.f32 %v1984, 0.19977711
        %v1987 = vmul.f32 %v1985, %v1977
        %v1988 = vmul.f32 %v1986, %v1978
        %v1989 = vsub.f32 %v1987, 0.3333295
        %v1990 = vsub.f32 %v1988, 0.3333295
        %v1991 = vadd.f32 %v1975, %v1957
        %v1992 = vadd.f32 %v1976, %v1972
        %v1993 = vmul.f32 %v1957, %v1977
        %v1994 = vmul.f32 %v1972, %v1978
        %v1995 = vmul.f32 %v1993, %v1989
        %v1996 = vmul.f32 %v1994, %v1990
        %v1997 = vadd.f32 %v1991, %v1995
        %v1998 = vadd.f32 %v1992, %v1996
        %v1999 = vmul.f32 %v1923, %v1997
        %v2000 = vmul.f32 %v1924, %v1998
        %v2001 = vmul.f32 %v1999, 1.272
        %v2002 = vmul.f32 %v2000, 1.272
        %v2003 = vrot.slane %v2001, 4
        %v2004 = vadd.f32 %v2001, %v2003
        %v2005 = vrot.slane %v2004, 2
        %v2006 = vadd.f32 %v2004, %v2005
        %v2007 = vrot.slane %v2006, 1
        %v2008 = vadd.f32 %v2006, %v2007
        %v2009 = vrot.slane %v2002, 4
        %v2010 = vadd.f32 %v2002, %v2009
        %v2011 = vrot.slane %v2010, 2
        %v2012 = vadd.f32 %v2010, %v2011
        %v2013 = vrot.slane %v2012, 1
        %v2014 = vadd.f32 %v2012, %v2013
        %v2015 = vmul.f32 %v2008, 0.2
        %v2016 = vmul.f32 %v2014, 0.2
        %v2017 = vsub.f32 %v2001, %v2015
        %v2018 = vsub.f32 %v2002, %v2016
        %v2019 = vmul.f32 %v2017, 1.442695
        %v2020 = vpow.pop %v2019
        %v2021 = vmul.f32 %v2018, 1.442695
        %v2022 = vpow.pop %v2021
        %v2023 = vmul.f32 %v2020, %v1681
        %v2024 = vmul.f32 %v2022, %v1704
        %v2025 = vadd.f32 %v2023, %v1896
        %v2026 = vadd.f32 %v2024, %v1919
        %s2027 = scalar_lea.vmem %s1, 64
        %v2028 = vld [vmem:[%s2027] sm:$0xff]
        %v2029 = vld [vmem:[%s2027 + $0x8] sm:$0xff]
        %s2030 = scalar_lea.vmem %s2, 64
        %v2031 = vld [vmem:[%s2030] sm:$0xff]
        %v2032 = vld [vmem:[%s2030 + $0x8] sm:$0xff]
        %s2033 = scalar_lea.vmem %s3, 64
        %v2034 = vld [vmem:[%s2033] sm:$0xff]
        %v2035 = vld [vmem:[%s2033 + $0x8] sm:$0xff]
        %s2036 = scalar_lea.vmem %s4, 64
        %v2037 = vld [vmem:[%s2036] sm:$0xff]
        %v2038 = vld [vmem:[%s2036 + $0x8] sm:$0xff]
        %s2039 = scalar_lea.vmem %s5, 64
        %v2040 = vld [vmem:[%s2039] sm:$0xff]
        %v2041 = vld [vmem:[%s2039 + $0x8] sm:$0xff]
        %s2042 = scalar_lea.vmem %s6, 64
        %v2043 = vld [vmem:[%s2042] sm:$0xff]
        %v2044 = vld [vmem:[%s2042 + $0x8] sm:$0xff]
        %2046 = vset.pattern.permute.xlu0 0
        %2047 = vperm.xlu0 %2046, %v2031
        %v2048 = vpop.permute.xlu0 %2047
        %2051 = vset.pattern.permute.xlu0 0
        %2052 = vperm.xlu0 %2051, %v2032
        %v2053 = vpop.permute.xlu0 %2052
        %v2056 = vsel %vm360, %v2028, 0
        %v2059 = vsel %vm360, %v2029, 0
        %2061 = vmatpush.msra.mxu0 0.0
        %2062 = vmatpush.msra.mxu0 0.0
        %2063 = vmatpush.msra.mxu0 0.0
        %2064 = vmatpush.msra.mxu0 0.0
        %2065 = vmatpush.msra.mxu0 0.0
        %2066 = vmatpush.msra.mxu0 0.0
        %2067 = vmatpush.msra.mxu0 0.0
        %2068 = vmatpush.msra.mxu0 0.0
        %2069 = vmatpush.msra.mxu0 0.0
        %2070 = vmatpush.msra.mxu0 0.0
        %2071 = vmatpush.msra.mxu0 0.0
        %2072 = vmatpush.msra.mxu0 0.0
        %2073 = vmatpush.msra.mxu0 0.0
        %2074 = vmatpush.msra.mxu0 0.0
        %2075 = vmatpush.msra.mxu0 0.0
        %2076 = vmatpush.msra.mxu0 %v2025
        %2077 = vmatmul.f32.gmra.mxu0 %v2056
        %v2078 = vpop.f32.mrf.mxu0
        %v2079 = vadd.f32 %v2048, %v2078
        %2080 = vmatmul.f32.gmra.mxu0 %v2059
        %v2081 = vpop.f32.mrf.mxu0
        %v2082 = vadd.f32 %v2053, %v2081
        %2083 = vdwg.mxu0
        %2084 = vmatpush.msra.mxu0 0.0
        %2085 = vmatpush.msra.mxu0 0.0
        %2086 = vmatpush.msra.mxu0 0.0
        %2087 = vmatpush.msra.mxu0 0.0
        %2088 = vmatpush.msra.mxu0 0.0
        %2089 = vmatpush.msra.mxu0 0.0
        %2090 = vmatpush.msra.mxu0 0.0
        %2091 = vmatpush.msra.mxu0 0.0
        %2092 = vmatpush.msra.mxu0 0.0
        %2093 = vmatpush.msra.mxu0 0.0
        %2094 = vmatpush.msra.mxu0 0.0
        %2095 = vmatpush.msra.mxu0 0.0
        %2096 = vmatpush.msra.mxu0 0.0
        %2097 = vmatpush.msra.mxu0 0.0
        %2098 = vmatpush.msra.mxu0 0.0
        %2099 = vmatpush.msra.mxu0 %v2026
        %2100 = vmatmul.f32.gmra.mxu0 %v2056
        %v2101 = vpop.f32.mrf.mxu0
        %v2102 = vadd.f32 %v2048, %v2101
        %2103 = vmatmul.f32.gmra.mxu0 %v2059
        %v2104 = vpop.f32.mrf.mxu0
        %v2105 = vadd.f32 %v2053, %v2104
        %2106 = vdwg.mxu0
        %v2107 = vmax.f32 %v2079, 0.0
        %v2108 = vmax.f32 %v2102, 0.0
        %v2109 = vmax.f32 %v2082, 0.0
        %v2110 = vmax.f32 %v2105, 0.0
        %2112 = vset.pattern.permute.xlu0 0
        %2113 = vperm.xlu0 %2112, %v2037
        %v2114 = vpop.permute.xlu0 %2113
        %2117 = vset.pattern.permute.xlu0 0
        %2118 = vperm.xlu0 %2117, %v2038
        %v2119 = vpop.permute.xlu0 %2118
        %v2122 = vsel %vm427, %v2034, 0
        %v2125 = vsel %vm427, %v2035, 0
        %2127 = vmatpush.msra.mxu0 0.0
        %2128 = vmatpush.msra.mxu0 0.0
        %2129 = vmatpush.msra.mxu0 0.0
        %2130 = vmatpush.msra.mxu0 0.0
        %2131 = vmatpush.msra.mxu0 0.0
        %2132 = vmatpush.msra.mxu0 0.0
        %2133 = vmatpush.msra.mxu0 0.0
        %2134 = vmatpush.msra.mxu0 0.0
        %2135 = vmatpush.msra.mxu0 0.0
        %2136 = vmatpush.msra.mxu0 0.0
        %2137 = vmatpush.msra.mxu0 0.0
        %2138 = vmatpush.msra.mxu0 0.0
        %2139 = vmatpush.msra.mxu0 0.0
        %2140 = vmatpush.msra.mxu0 0.0
        %2141 = vmatpush.msra.mxu0 %v2109
        %2142 = vmatpush.msra.mxu0 %v2107
        %2143 = vmatmul.f32.gmra.mxu0 %v2122
        %v2144 = vpop.f32.mrf.mxu0
        %v2145 = vadd.f32 %v2114, %v2144
        %2146 = vmatmul.f32.gmra.mxu0 %v2125
        %v2147 = vpop.f32.mrf.mxu0
        %v2148 = vadd.f32 %v2119, %v2147
        %2149 = vdwg.mxu0
        %2150 = vmatpush.msra.mxu0 0.0
        %2151 = vmatpush.msra.mxu0 0.0
        %2152 = vmatpush.msra.mxu0 0.0
        %2153 = vmatpush.msra.mxu0 0.0
        %2154 = vmatpush.msra.mxu0 0.0
        %2155 = vmatpush.msra.mxu0 0.0
        %2156 = vmatpush.msra.mxu0 0.0
        %2157 = vmatpush.msra.mxu0 0.0
        %2158 = vmatpush.msra.mxu0 0.0
        %2159 = vmatpush.msra.mxu0 0.0
        %2160 = vmatpush.msra.mxu0 0.0
        %2161 = vmatpush.msra.mxu0 0.0
        %2162 = vmatpush.msra.mxu0 0.0
        %2163 = vmatpush.msra.mxu0 0.0
        %2164 = vmatpush.msra.mxu0 %v2110
        %2165 = vmatpush.msra.mxu0 %v2108
        %2166 = vmatmul.f32.gmra.mxu0 %v2122
        %v2167 = vpop.f32.mrf.mxu0
        %v2168 = vadd.f32 %v2114, %v2167
        %2169 = vmatmul.f32.gmra.mxu0 %v2125
        %v2170 = vpop.f32.mrf.mxu0
        %v2171 = vadd.f32 %v2119, %v2170
        %2172 = vdwg.mxu0
        %v2173 = vmax.f32 %v2145, 0.0
        %v2174 = vmax.f32 %v2168, 0.0
        %v2175 = vmax.f32 %v2148, 0.0
        %v2176 = vmax.f32 %v2171, 0.0
        %2178 = vset.pattern.permute.xlu0 0
        %2179 = vperm.xlu0 %2178, %v2043
        %v2180 = vpop.permute.xlu0 %2179
        %2183 = vset.pattern.permute.xlu0 0
        %2184 = vperm.xlu0 %2183, %v2044
        %v2185 = vpop.permute.xlu0 %2184
        %v2188 = vsel %vm427, %v2040, 0
        %v2191 = vsel %vm427, %v2041, 0
        %2193 = vmatpush.msra.mxu0 0.0
        %2194 = vmatpush.msra.mxu0 0.0
        %2195 = vmatpush.msra.mxu0 0.0
        %2196 = vmatpush.msra.mxu0 0.0
        %2197 = vmatpush.msra.mxu0 0.0
        %2198 = vmatpush.msra.mxu0 0.0
        %2199 = vmatpush.msra.mxu0 0.0
        %2200 = vmatpush.msra.mxu0 0.0
        %2201 = vmatpush.msra.mxu0 0.0
        %2202 = vmatpush.msra.mxu0 0.0
        %2203 = vmatpush.msra.mxu0 0.0
        %2204 = vmatpush.msra.mxu0 0.0
        %2205 = vmatpush.msra.mxu0 0.0
        %2206 = vmatpush.msra.mxu0 0.0
        %2207 = vmatpush.msra.mxu0 %v2175
        %2208 = vmatpush.msra.mxu0 %v2173
        %2209 = vmatmul.f32.gmra.mxu0 %v2188
        %v2210 = vpop.f32.mrf.mxu0
        %v2211 = vadd.f32 %v2180, %v2210
        %2212 = vmatmul.f32.gmra.mxu0 %v2191
        %v2213 = vpop.f32.mrf.mxu0
        %v2214 = vadd.f32 %v2185, %v2213
        %2215 = vdwg.mxu0
        %2216 = vmatpush.msra.mxu0 0.0
        %2217 = vmatpush.msra.mxu0 0.0
        %2218 = vmatpush.msra.mxu0 0.0
        %2219 = vmatpush.msra.mxu0 0.0
        %2220 = vmatpush.msra.mxu0 0.0
        %2221 = vmatpush.msra.mxu0 0.0
        %2222 = vmatpush.msra.mxu0 0.0
        %2223 = vmatpush.msra.mxu0 0.0
        %2224 = vmatpush.msra.mxu0 0.0
        %2225 = vmatpush.msra.mxu0 0.0
        %2226 = vmatpush.msra.mxu0 0.0
        %2227 = vmatpush.msra.mxu0 0.0
        %2228 = vmatpush.msra.mxu0 0.0
        %2229 = vmatpush.msra.mxu0 0.0
        %2230 = vmatpush.msra.mxu0 %v2176
        %2231 = vmatpush.msra.mxu0 %v2174
        %2232 = vmatmul.f32.gmra.mxu0 %v2188
        %v2233 = vpop.f32.mrf.mxu0
        %v2234 = vadd.f32 %v2180, %v2233
        %2235 = vmatmul.f32.gmra.mxu0 %v2191
        %v2236 = vpop.f32.mrf.mxu0
        %v2237 = vadd.f32 %v2185, %v2236
        %2238 = vdwg.mxu0
        %vm2239 = vcmp.lt.f32.partialorder %v2211, 0.0
        %vm2240 = vcmp.lt.f32.partialorder %v2234, 0.0
        %v2241 = vsel %vm2239, -1.0, 1.0
        %v2242 = vsel %vm2240, -1.0, 1.0
        %v2243 = vand.u32 2147483647, %v2211
        %v2244 = vand.u32 2147483647, %v2234
        %vm2245 = vcmp.gt.f32.partialorder %v2243, 2.4142137
        %vm2246 = vcmp.gt.f32.partialorder %v2244, 2.4142137
        %vm2247 = vcmp.gt.f32.partialorder %v2243, 0.41421357
        %vm2248 = vcmp.gt.f32.partialorder %v2244, 0.41421357
        %v2249 = vsub.f32 %v2243, 1.0
        %v2250 = vsub.f32 %v2244, 1.0
        %v2251 = vsel %vm2247, %v2249, %v2243
        %v2252 = vsel %vm2248, %v2250, %v2244
        %v2253 = vsel %vm2245, -1.0, %v2251
        %v2254 = vsel %vm2246, -1.0, %v2252
        %v2255 = vadd.f32 %v2243, 1.0
        %v2256 = vadd.f32 %v2244, 1.0
        %v2257 = vsel %vm2247, %v2255, 1.0
        %v2258 = vsel %vm2248, %v2256, 1.0
        %v2259 = vsel %vm2245, %v2243, %v2257
        %v2260 = vsel %vm2246, %v2244, %v2258
        %v2261 = vrcp.pop %v2259
        %v2262 = vmul.f32 %v2259, %v2261
        %v2263 = vsub.f32 1.0, %v2262
        %v2264 = vmul.f32 %v2261, %v2263
        %v2265 = vadd.f32 %v2261, %v2264
        %vm2266 = vweird.f32 %v2259
        %vm2267 = vweird.f32 %v2261
        %vm2268 = vmor %vm2266, %vm2267
        %v2269 = vsel %vm2268, %v2261, %v2265
        %v2270 = vand.u32 2147483647, %v2259
        %vm2271 = vcmp.eq.f32.partialorder %v2270, 8.507059e+37
        %v2272 = vand.u32 %v2259, 2147483648
        %v2273 = vor.u32 1.1754944e-38, %v2272
        %v2274 = vsel %vm2271, %v2273, %v2269
        %v2275 = vmul.f32 %v2253, %v2274
        %v2276 = vrcp.pop %v2260
        %v2277 = vmul.f32 %v2260, %v2276
        %v2278 = vsub.f32 1.0, %v2277
        %v2279 = vmul.f32 %v2276, %v2278
        %v2280 = vadd.f32 %v2276, %v2279
        %vm2281 = vweird.f32 %v2260
        %vm2282 = vweird.f32 %v2276
        %vm2283 = vmor %vm2281, %vm2282
        %v2284 = vsel %vm2283, %v2276, %v2280
        %v2285 = vand.u32 2147483647, %v2260
        %vm2286 = vcmp.eq.f32.partialorder %v2285, 8.507059e+37
        %v2287 = vand.u32 %v2260, 2147483648
        %v2288 = vor.u32 1.1754944e-38, %v2287
        %v2289 = vsel %vm2286, %v2288, %v2284
        %v2290 = vmul.f32 %v2254, %v2289
        %v2291 = vsel %vm2247, 0.7853982, 0.0
        %v2292 = vsel %vm2248, 0.7853982, 0.0
        %v2293 = vsel %vm2245, 1.5707964, %v2291
        %v2294 = vsel %vm2246, 1.5707964, %v2292
        %v2295 = vmul.f32 %v2275, %v2275
        %v2296 = vmul.f32 %v2290, %v2290
        %v2297 = vmul.f32 %v2295, 0.080537446
        %v2298 = vmul.f32 %v2296, 0.080537446
        %v2299 = vsub.f32 %v2297, 0.13877685
        %v2300 = vsub.f32 %v2298, 0.13877685
        %v2301 = vmul.f32 %v2299, %v2295
        %v2302 = vmul.f32 %v2300, %v2296
        %v2303 = vadd.f32 %v2301, 0.19977711
        %v2304 = vadd.f32 %v2302, 0.19977711
        %v2305 = vmul.f32 %v2303, %v2295
        %v2306 = vmul.f32 %v2304, %v2296
        %v2307 = vsub.f32 %v2305, 0.3333295
        %v2308 = vsub.f32 %v2306, 0.3333295
        %v2309 = vadd.f32 %v2293, %v2275
        %v2310 = vadd.f32 %v2294, %v2290
        %v2311 = vmul.f32 %v2275, %v2295
        %v2312 = vmul.f32 %v2290, %v2296
        %v2313 = vmul.f32 %v2311, %v2307
        %v2314 = vmul.f32 %v2312, %v2308
        %v2315 = vadd.f32 %v2309, %v2313
        %v2316 = vadd.f32 %v2310, %v2314
        %v2317 = vmul.f32 %v2241, %v2315
        %v2318 = vmul.f32 %v2242, %v2316
        %v2319 = vmul.f32 %v2317, 1.272
        %v2320 = vmul.f32 %v2318, 1.272
        %v2321 = vrot.slane %v2319, 4
        %v2322 = vadd.f32 %v2319, %v2321
        %v2323 = vrot.slane %v2322, 2
        %v2324 = vadd.f32 %v2322, %v2323
        %v2325 = vrot.slane %v2324, 1
        %v2326 = vadd.f32 %v2324, %v2325
        %v2327 = vrot.slane %v2320, 4
        %v2328 = vadd.f32 %v2320, %v2327
        %v2329 = vrot.slane %v2328, 2
        %v2330 = vadd.f32 %v2328, %v2329
        %v2331 = vrot.slane %v2330, 1
        %v2332 = vadd.f32 %v2330, %v2331
        %v2333 = vmul.f32 %v2326, 0.2
        %v2334 = vmul.f32 %v2332, 0.2
        %v2335 = vsub.f32 %v2319, %v2333
        %v2336 = vsub.f32 %v2320, %v2334
        %v2337 = vmul.f32 %v2335, 1.442695
        %v2338 = vpow.pop %v2337
        %v2339 = vmul.f32 %v2336, 1.442695
        %v2340 = vpow.pop %v2339
        %v2341 = vmul.f32 %v2338, %v1684
        %v2342 = vmul.f32 %v2340, %v1707
        %v2343 = vadd.f32 %v2341, %v2214
        %v2344 = vadd.f32 %v2342, %v2237
        %s2345 = scalar_lea.vmem %s7, 32
        %v2346 = vld [vmem:[%s2345] sm:$0xff]
        %v2347 = vld [vmem:[%s2345 + $0x8] sm:$0xff]
        %v2349 = vsel %vm427, %v2346, 0
        %v2352 = vsel %vm427, %v2347, 0
        %2354 = vmatpush.msra.mxu0 0.0
        %2355 = vmatpush.msra.mxu0 0.0
        %2356 = vmatpush.msra.mxu0 0.0
        %2357 = vmatpush.msra.mxu0 0.0
        %2358 = vmatpush.msra.mxu0 0.0
        %2359 = vmatpush.msra.mxu0 0.0
        %2360 = vmatpush.msra.mxu0 0.0
        %2361 = vmatpush.msra.mxu0 0.0
        %2362 = vmatpush.msra.mxu0 0.0
        %2363 = vmatpush.msra.mxu0 0.0
        %2364 = vmatpush.msra.mxu0 0.0
        %2365 = vmatpush.msra.mxu0 0.0
        %2366 = vmatpush.msra.mxu0 0.0
        %2367 = vmatpush.msra.mxu0 0.0
        %2368 = vmatpush.msra.mxu0 %v2343
        %2369 = vmatpush.msra.mxu0 %v2025
        %2370 = vmatmul.f32.gmra.mxu0 %v2349
        %v2371 = vpop.f32.mrf.mxu0
        %v2372 = vadd.f32 0.0, %v2371
        %2373 = vmatmul.f32.gmra.mxu0 %v2352
        %v2374 = vpop.f32.mrf.mxu0
        %v2375 = vadd.f32 0.0, %v2374
        %2376 = vdwg.mxu0
        %2377 = vmatpush.msra.mxu0 0.0
        %2378 = vmatpush.msra.mxu0 0.0
        %2379 = vmatpush.msra.mxu0 0.0
        %2380 = vmatpush.msra.mxu0 0.0
        %2381 = vmatpush.msra.mxu0 0.0
        %2382 = vmatpush.msra.mxu0 0.0
        %2383 = vmatpush.msra.mxu0 0.0
        %2384 = vmatpush.msra.mxu0 0.0
        %2385 = vmatpush.msra.mxu0 0.0
        %2386 = vmatpush.msra.mxu0 0.0
        %2387 = vmatpush.msra.mxu0 0.0
        %2388 = vmatpush.msra.mxu0 0.0
        %2389 = vmatpush.msra.mxu0 0.0
        %2390 = vmatpush.msra.mxu0 0.0
        %2391 = vmatpush.msra.mxu0 %v2344
        %2392 = vmatpush.msra.mxu0 %v2026
        %2393 = vmatmul.f32.gmra.mxu0 %v2349
        %v2394 = vpop.f32.mrf.mxu0
        %v2395 = vadd.f32 0.0, %v2394
        %2396 = vmatmul.f32.gmra.mxu0 %v2352
        %v2397 = vpop.f32.mrf.mxu0
        %v2398 = vadd.f32 0.0, %v2397
        %2399 = vdwg.mxu0
        %s2400 = scalar_lea.vmem %s1, 112
        %v2401 = vld [vmem:[%s2400] sm:$0xff]
        %v2402 = vld [vmem:[%s2400 + $0x8] sm:$0xff]
        %s2403 = scalar_lea.vmem %s2, 112
        %v2404 = vld [vmem:[%s2403] sm:$0xff]
        %v2405 = vld [vmem:[%s2403 + $0x8] sm:$0xff]
        %s2406 = scalar_lea.vmem %s3, 112
        %v2407 = vld [vmem:[%s2406] sm:$0xff]
        %v2408 = vld [vmem:[%s2406 + $0x8] sm:$0xff]
        %s2409 = scalar_lea.vmem %s4, 112
        %v2410 = vld [vmem:[%s2409] sm:$0xff]
        %v2411 = vld [vmem:[%s2409 + $0x8] sm:$0xff]
        %s2412 = scalar_lea.vmem %s5, 112
        %v2413 = vld [vmem:[%s2412] sm:$0xff]
        %v2414 = vld [vmem:[%s2412 + $0x8] sm:$0xff]
        %s2415 = scalar_lea.vmem %s6, 112
        %v2416 = vld [vmem:[%s2415] sm:$0xff]
        %v2417 = vld [vmem:[%s2415 + $0x8] sm:$0xff]
        %2419 = vset.pattern.permute.xlu0 0
        %2420 = vperm.xlu0 %2419, %v2404
        %v2421 = vpop.permute.xlu0 %2420
        %2424 = vset.pattern.permute.xlu0 0
        %2425 = vperm.xlu0 %2424, %v2405
        %v2426 = vpop.permute.xlu0 %2425
        %v2429 = vsel %vm360, %v2401, 0
        %v2432 = vsel %vm360, %v2402, 0
        %2434 = vmatpush.msra.mxu0 0.0
        %2435 = vmatpush.msra.mxu0 0.0
        %2436 = vmatpush.msra.mxu0 0.0
        %2437 = vmatpush.msra.mxu0 0.0
        %2438 = vmatpush.msra.mxu0 0.0
        %2439 = vmatpush.msra.mxu0 0.0
        %2440 = vmatpush.msra.mxu0 0.0
        %2441 = vmatpush.msra.mxu0 0.0
        %2442 = vmatpush.msra.mxu0 0.0
        %2443 = vmatpush.msra.mxu0 0.0
        %2444 = vmatpush.msra.mxu0 0.0
        %2445 = vmatpush.msra.mxu0 0.0
        %2446 = vmatpush.msra.mxu0 0.0
        %2447 = vmatpush.msra.mxu0 0.0
        %2448 = vmatpush.msra.mxu0 0.0
        %2449 = vmatpush.msra.mxu0 %v2375
        %2450 = vmatmul.f32.gmra.mxu0 %v2429
        %v2451 = vpop.f32.mrf.mxu0
        %v2452 = vadd.f32 %v2421, %v2451
        %2453 = vmatmul.f32.gmra.mxu0 %v2432
        %v2454 = vpop.f32.mrf.mxu0
        %v2455 = vadd.f32 %v2426, %v2454
        %2456 = vdwg.mxu0
        %2457 = vmatpush.msra.mxu0 0.0
        %2458 = vmatpush.msra.mxu0 0.0
        %2459 = vmatpush.msra.mxu0 0.0
        %2460 = vmatpush.msra.mxu0 0.0
        %2461 = vmatpush.msra.mxu0 0.0
        %2462 = vmatpush.msra.mxu0 0.0
        %2463 = vmatpush.msra.mxu0 0.0
        %2464 = vmatpush.msra.mxu0 0.0
        %2465 = vmatpush.msra.mxu0 0.0
        %2466 = vmatpush.msra.mxu0 0.0
        %2467 = vmatpush.msra.mxu0 0.0
        %2468 = vmatpush.msra.mxu0 0.0
        %2469 = vmatpush.msra.mxu0 0.0
        %2470 = vmatpush.msra.mxu0 0.0
        %2471 = vmatpush.msra.mxu0 0.0
        %2472 = vmatpush.msra.mxu0 %v2398
        %2473 = vmatmul.f32.gmra.mxu0 %v2429
        %v2474 = vpop.f32.mrf.mxu0
        %v2475 = vadd.f32 %v2421, %v2474
        %2476 = vmatmul.f32.gmra.mxu0 %v2432
        %v2477 = vpop.f32.mrf.mxu0
        %v2478 = vadd.f32 %v2426, %v2477
        %2479 = vdwg.mxu0
        %v2480 = vmax.f32 %v2452, 0.0
        %v2481 = vmax.f32 %v2475, 0.0
        %v2482 = vmax.f32 %v2455, 0.0
        %v2483 = vmax.f32 %v2478, 0.0
        %2485 = vset.pattern.permute.xlu0 0
        %2486 = vperm.xlu0 %2485, %v2410
        %v2487 = vpop.permute.xlu0 %2486
        %2490 = vset.pattern.permute.xlu0 0
        %2491 = vperm.xlu0 %2490, %v2411
        %v2492 = vpop.permute.xlu0 %2491
        %v2495 = vsel %vm427, %v2407, 0
        %v2498 = vsel %vm427, %v2408, 0
        %2500 = vmatpush.msra.mxu0 0.0
        %2501 = vmatpush.msra.mxu0 0.0
        %2502 = vmatpush.msra.mxu0 0.0
        %2503 = vmatpush.msra.mxu0 0.0
        %2504 = vmatpush.msra.mxu0 0.0
        %2505 = vmatpush.msra.mxu0 0.0
        %2506 = vmatpush.msra.mxu0 0.0
        %2507 = vmatpush.msra.mxu0 0.0
        %2508 = vmatpush.msra.mxu0 0.0
        %2509 = vmatpush.msra.mxu0 0.0
        %2510 = vmatpush.msra.mxu0 0.0
        %2511 = vmatpush.msra.mxu0 0.0
        %2512 = vmatpush.msra.mxu0 0.0
        %2513 = vmatpush.msra.mxu0 0.0
        %2514 = vmatpush.msra.mxu0 %v2482
        %2515 = vmatpush.msra.mxu0 %v2480
        %2516 = vmatmul.f32.gmra.mxu0 %v2495
        %v2517 = vpop.f32.mrf.mxu0
        %v2518 = vadd.f32 %v2487, %v2517
        %2519 = vmatmul.f32.gmra.mxu0 %v2498
        %v2520 = vpop.f32.mrf.mxu0
        %v2521 = vadd.f32 %v2492, %v2520
        %2522 = vdwg.mxu0
        %2523 = vmatpush.msra.mxu0 0.0
        %2524 = vmatpush.msra.mxu0 0.0
        %2525 = vmatpush.msra.mxu0 0.0
        %2526 = vmatpush.msra.mxu0 0.0
        %2527 = vmatpush.msra.mxu0 0.0
        %2528 = vmatpush.msra.mxu0 0.0
        %2529 = vmatpush.msra.mxu0 0.0
        %2530 = vmatpush.msra.mxu0 0.0
        %2531 = vmatpush.msra.mxu0 0.0
        %2532 = vmatpush.msra.mxu0 0.0
        %2533 = vmatpush.msra.mxu0 0.0
        %2534 = vmatpush.msra.mxu0 0.0
        %2535 = vmatpush.msra.mxu0 0.0
        %2536 = vmatpush.msra.mxu0 0.0
        %2537 = vmatpush.msra.mxu0 %v2483
        %2538 = vmatpush.msra.mxu0 %v2481
        %2539 = vmatmul.f32.gmra.mxu0 %v2495
        %v2540 = vpop.f32.mrf.mxu0
        %v2541 = vadd.f32 %v2487, %v2540
        %2542 = vmatmul.f32.gmra.mxu0 %v2498
        %v2543 = vpop.f32.mrf.mxu0
        %v2544 = vadd.f32 %v2492, %v2543
        %2545 = vdwg.mxu0
        %v2546 = vmax.f32 %v2518, 0.0
        %v2547 = vmax.f32 %v2541, 0.0
        %v2548 = vmax.f32 %v2521, 0.0
        %v2549 = vmax.f32 %v2544, 0.0
        %2551 = vset.pattern.permute.xlu0 0
        %2552 = vperm.xlu0 %2551, %v2416
        %v2553 = vpop.permute.xlu0 %2552
        %2556 = vset.pattern.permute.xlu0 0
        %2557 = vperm.xlu0 %2556, %v2417
        %v2558 = vpop.permute.xlu0 %2557
        %v2561 = vsel %vm427, %v2413, 0
        %v2564 = vsel %vm427, %v2414, 0
        %2566 = vmatpush.msra.mxu0 0.0
        %2567 = vmatpush.msra.mxu0 0.0
        %2568 = vmatpush.msra.mxu0 0.0
        %2569 = vmatpush.msra.mxu0 0.0
        %2570 = vmatpush.msra.mxu0 0.0
        %2571 = vmatpush.msra.mxu0 0.0
        %2572 = vmatpush.msra.mxu0 0.0
        %2573 = vmatpush.msra.mxu0 0.0
        %2574 = vmatpush.msra.mxu0 0.0
        %2575 = vmatpush.msra.mxu0 0.0
        %2576 = vmatpush.msra.mxu0 0.0
        %2577 = vmatpush.msra.mxu0 0.0
        %2578 = vmatpush.msra.mxu0 0.0
        %2579 = vmatpush.msra.mxu0 0.0
        %2580 = vmatpush.msra.mxu0 %v2548
        %2581 = vmatpush.msra.mxu0 %v2546
        %2582 = vmatmul.f32.gmra.mxu0 %v2561
        %v2583 = vpop.f32.mrf.mxu0
        %v2584 = vadd.f32 %v2553, %v2583
        %2585 = vmatmul.f32.gmra.mxu0 %v2564
        %v2586 = vpop.f32.mrf.mxu0
        %v2587 = vadd.f32 %v2558, %v2586
        %2588 = vdwg.mxu0
        %2589 = vmatpush.msra.mxu0 0.0
        %2590 = vmatpush.msra.mxu0 0.0
        %2591 = vmatpush.msra.mxu0 0.0
        %2592 = vmatpush.msra.mxu0 0.0
        %2593 = vmatpush.msra.mxu0 0.0
        %2594 = vmatpush.msra.mxu0 0.0
        %2595 = vmatpush.msra.mxu0 0.0
        %2596 = vmatpush.msra.mxu0 0.0
        %2597 = vmatpush.msra.mxu0 0.0
        %2598 = vmatpush.msra.mxu0 0.0
        %2599 = vmatpush.msra.mxu0 0.0
        %2600 = vmatpush.msra.mxu0 0.0
        %2601 = vmatpush.msra.mxu0 0.0
        %2602 = vmatpush.msra.mxu0 0.0
        %2603 = vmatpush.msra.mxu0 %v2549
        %2604 = vmatpush.msra.mxu0 %v2547
        %2605 = vmatmul.f32.gmra.mxu0 %v2561
        %v2606 = vpop.f32.mrf.mxu0
        %v2607 = vadd.f32 %v2553, %v2606
        %2608 = vmatmul.f32.gmra.mxu0 %v2564
        %v2609 = vpop.f32.mrf.mxu0
        %v2610 = vadd.f32 %v2558, %v2609
        %2611 = vdwg.mxu0
        %vm2612 = vcmp.lt.f32.partialorder %v2584, 0.0
        %vm2613 = vcmp.lt.f32.partialorder %v2607, 0.0
        %v2614 = vsel %vm2612, -1.0, 1.0
        %v2615 = vsel %vm2613, -1.0, 1.0
        %v2616 = vand.u32 2147483647, %v2584
        %v2617 = vand.u32 2147483647, %v2607
        %vm2618 = vcmp.gt.f32.partialorder %v2616, 2.4142137
        %vm2619 = vcmp.gt.f32.partialorder %v2617, 2.4142137
        %vm2620 = vcmp.gt.f32.partialorder %v2616, 0.41421357
        %vm2621 = vcmp.gt.f32.partialorder %v2617, 0.41421357
        %v2622 = vsub.f32 %v2616, 1.0
        %v2623 = vsub.f32 %v2617, 1.0
        %v2624 = vsel %vm2620, %v2622, %v2616
        %v2625 = vsel %vm2621, %v2623, %v2617
        %v2626 = vsel %vm2618, -1.0, %v2624
        %v2627 = vsel %vm2619, -1.0, %v2625
        %v2628 = vadd.f32 %v2616, 1.0
        %v2629 = vadd.f32 %v2617, 1.0
        %v2630 = vsel %vm2620, %v2628, 1.0
        %v2631 = vsel %vm2621, %v2629, 1.0
        %v2632 = vsel %vm2618, %v2616, %v2630
        %v2633 = vsel %vm2619, %v2617, %v2631
        %v2634 = vrcp.pop %v2632
        %v2635 = vmul.f32 %v2632, %v2634
        %v2636 = vsub.f32 1.0, %v2635
        %v2637 = vmul.f32 %v2634, %v2636
        %v2638 = vadd.f32 %v2634, %v2637
        %vm2639 = vweird.f32 %v2632
        %vm2640 = vweird.f32 %v2634
        %vm2641 = vmor %vm2639, %vm2640
        %v2642 = vsel %vm2641, %v2634, %v2638
        %v2643 = vand.u32 2147483647, %v2632
        %vm2644 = vcmp.eq.f32.partialorder %v2643, 8.507059e+37
        %v2645 = vand.u32 %v2632, 2147483648
        %v2646 = vor.u32 1.1754944e-38, %v2645
        %v2647 = vsel %vm2644, %v2646, %v2642
        %v2648 = vmul.f32 %v2626, %v2647
        %v2649 = vrcp.pop %v2633
        %v2650 = vmul.f32 %v2633, %v2649
        %v2651 = vsub.f32 1.0, %v2650
        %v2652 = vmul.f32 %v2649, %v2651
        %v2653 = vadd.f32 %v2649, %v2652
        %vm2654 = vweird.f32 %v2633
        %vm2655 = vweird.f32 %v2649
        %vm2656 = vmor %vm2654, %vm2655
        %v2657 = vsel %vm2656, %v2649, %v2653
        %v2658 = vand.u32 2147483647, %v2633
        %vm2659 = vcmp.eq.f32.partialorder %v2658, 8.507059e+37
        %v2660 = vand.u32 %v2633, 2147483648
        %v2661 = vor.u32 1.1754944e-38, %v2660
        %v2662 = vsel %vm2659, %v2661, %v2657
        %v2663 = vmul.f32 %v2627, %v2662
        %v2664 = vsel %vm2620, 0.7853982, 0.0
        %v2665 = vsel %vm2621, 0.7853982, 0.0
        %v2666 = vsel %vm2618, 1.5707964, %v2664
        %v2667 = vsel %vm2619, 1.5707964, %v2665
        %v2668 = vmul.f32 %v2648, %v2648
        %v2669 = vmul.f32 %v2663, %v2663
        %v2670 = vmul.f32 %v2668, 0.080537446
        %v2671 = vmul.f32 %v2669, 0.080537446
        %v2672 = vsub.f32 %v2670, 0.13877685
        %v2673 = vsub.f32 %v2671, 0.13877685
        %v2674 = vmul.f32 %v2672, %v2668
        %v2675 = vmul.f32 %v2673, %v2669
        %v2676 = vadd.f32 %v2674, 0.19977711
        %v2677 = vadd.f32 %v2675, 0.19977711
        %v2678 = vmul.f32 %v2676, %v2668
        %v2679 = vmul.f32 %v2677, %v2669
        %v2680 = vsub.f32 %v2678, 0.3333295
        %v2681 = vsub.f32 %v2679, 0.3333295
        %v2682 = vadd.f32 %v2666, %v2648
        %v2683 = vadd.f32 %v2667, %v2663
        %v2684 = vmul.f32 %v2648, %v2668
        %v2685 = vmul.f32 %v2663, %v2669
        %v2686 = vmul.f32 %v2684, %v2680
        %v2687 = vmul.f32 %v2685, %v2681
        %v2688 = vadd.f32 %v2682, %v2686
        %v2689 = vadd.f32 %v2683, %v2687
        %v2690 = vmul.f32 %v2614, %v2688
        %v2691 = vmul.f32 %v2615, %v2689
        %v2692 = vmul.f32 %v2690, 1.272
        %v2693 = vmul.f32 %v2691, 1.272
        %v2694 = vrot.slane %v2692, 4
        %v2695 = vadd.f32 %v2692, %v2694
        %v2696 = vrot.slane %v2695, 2
        %v2697 = vadd.f32 %v2695, %v2696
        %v2698 = vrot.slane %v2697, 1
        %v2699 = vadd.f32 %v2697, %v2698
        %v2700 = vrot.slane %v2693, 4
        %v2701 = vadd.f32 %v2693, %v2700
        %v2702 = vrot.slane %v2701, 2
        %v2703 = vadd.f32 %v2701, %v2702
        %v2704 = vrot.slane %v2703, 1
        %v2705 = vadd.f32 %v2703, %v2704
        %v2706 = vmul.f32 %v2699, 0.2
        %v2707 = vmul.f32 %v2705, 0.2
        %v2708 = vsub.f32 %v2692, %v2706
        %v2709 = vsub.f32 %v2693, %v2707
        %v2710 = vmul.f32 %v2708, 1.442695
        %v2711 = vpow.pop %v2710
        %v2712 = vmul.f32 %v2709, 1.442695
        %v2713 = vpow.pop %v2712
        %v2714 = vmul.f32 %v2711, %v2372
        %v2715 = vmul.f32 %v2713, %v2395
        %v2716 = vadd.f32 %v2714, %v2587
        %v2717 = vadd.f32 %v2715, %v2610
        %s2718 = scalar_lea.vmem %s1, 96
        %v2719 = vld [vmem:[%s2718] sm:$0xff]
        %v2720 = vld [vmem:[%s2718 + $0x8] sm:$0xff]
        %s2721 = scalar_lea.vmem %s2, 96
        %v2722 = vld [vmem:[%s2721] sm:$0xff]
        %v2723 = vld [vmem:[%s2721 + $0x8] sm:$0xff]
        %s2724 = scalar_lea.vmem %s3, 96
        %v2725 = vld [vmem:[%s2724] sm:$0xff]
        %v2726 = vld [vmem:[%s2724 + $0x8] sm:$0xff]
        %s2727 = scalar_lea.vmem %s4, 96
        %v2728 = vld [vmem:[%s2727] sm:$0xff]
        %v2729 = vld [vmem:[%s2727 + $0x8] sm:$0xff]
        %s2730 = scalar_lea.vmem %s5, 96
        %v2731 = vld [vmem:[%s2730] sm:$0xff]
        %v2732 = vld [vmem:[%s2730 + $0x8] sm:$0xff]
        %s2733 = scalar_lea.vmem %s6, 96
        %v2734 = vld [vmem:[%s2733] sm:$0xff]
        %v2735 = vld [vmem:[%s2733 + $0x8] sm:$0xff]
        %2737 = vset.pattern.permute.xlu0 0
        %2738 = vperm.xlu0 %2737, %v2722
        %v2739 = vpop.permute.xlu0 %2738
        %2742 = vset.pattern.permute.xlu0 0
        %2743 = vperm.xlu0 %2742, %v2723
        %v2744 = vpop.permute.xlu0 %2743
        %v2747 = vsel %vm360, %v2719, 0
        %v2750 = vsel %vm360, %v2720, 0
        %2752 = vmatpush.msra.mxu0 0.0
        %2753 = vmatpush.msra.mxu0 0.0
        %2754 = vmatpush.msra.mxu0 0.0
        %2755 = vmatpush.msra.mxu0 0.0
        %2756 = vmatpush.msra.mxu0 0.0
        %2757 = vmatpush.msra.mxu0 0.0
        %2758 = vmatpush.msra.mxu0 0.0
        %2759 = vmatpush.msra.mxu0 0.0
        %2760 = vmatpush.msra.mxu0 0.0
        %2761 = vmatpush.msra.mxu0 0.0
        %2762 = vmatpush.msra.mxu0 0.0
        %2763 = vmatpush.msra.mxu0 0.0
        %2764 = vmatpush.msra.mxu0 0.0
        %2765 = vmatpush.msra.mxu0 0.0
        %2766 = vmatpush.msra.mxu0 0.0
        %2767 = vmatpush.msra.mxu0 %v2716
        %2768 = vmatmul.f32.gmra.mxu0 %v2747
        %v2769 = vpop.f32.mrf.mxu0
        %v2770 = vadd.f32 %v2739, %v2769
        %2771 = vmatmul.f32.gmra.mxu0 %v2750
        %v2772 = vpop.f32.mrf.mxu0
        %v2773 = vadd.f32 %v2744, %v2772
        %2774 = vdwg.mxu0
        %2775 = vmatpush.msra.mxu0 0.0
        %2776 = vmatpush.msra.mxu0 0.0
        %2777 = vmatpush.msra.mxu0 0.0
        %2778 = vmatpush.msra.mxu0 0.0
        %2779 = vmatpush.msra.mxu0 0.0
        %2780 = vmatpush.msra.mxu0 0.0
        %2781 = vmatpush.msra.mxu0 0.0
        %2782 = vmatpush.msra.mxu0 0.0
        %2783 = vmatpush.msra.mxu0 0.0
        %2784 = vmatpush.msra.mxu0 0.0
        %2785 = vmatpush.msra.mxu0 0.0
        %2786 = vmatpush.msra.mxu0 0.0
        %2787 = vmatpush.msra.mxu0 0.0
        %2788 = vmatpush.msra.mxu0 0.0
        %2789 = vmatpush.msra.mxu0 0.0
        %2790 = vmatpush.msra.mxu0 %v2717
        %2791 = vmatmul.f32.gmra.mxu0 %v2747
        %v2792 = vpop.f32.mrf.mxu0
        %v2793 = vadd.f32 %v2739, %v2792
        %2794 = vmatmul.f32.gmra.mxu0 %v2750
        %v2795 = vpop.f32.mrf.mxu0
        %v2796 = vadd.f32 %v2744, %v2795
        %2797 = vdwg.mxu0
        %v2798 = vmax.f32 %v2770, 0.0
        %v2799 = vmax.f32 %v2793, 0.0
        %v2800 = vmax.f32 %v2773, 0.0
        %v2801 = vmax.f32 %v2796, 0.0
        %2803 = vset.pattern.permute.xlu0 0
        %2804 = vperm.xlu0 %2803, %v2728
        %v2805 = vpop.permute.xlu0 %2804
        %2808 = vset.pattern.permute.xlu0 0
        %2809 = vperm.xlu0 %2808, %v2729
        %v2810 = vpop.permute.xlu0 %2809
        %v2813 = vsel %vm427, %v2725, 0
        %v2816 = vsel %vm427, %v2726, 0
        %2818 = vmatpush.msra.mxu0 0.0
        %2819 = vmatpush.msra.mxu0 0.0
        %2820 = vmatpush.msra.mxu0 0.0
        %2821 = vmatpush.msra.mxu0 0.0
        %2822 = vmatpush.msra.mxu0 0.0
        %2823 = vmatpush.msra.mxu0 0.0
        %2824 = vmatpush.msra.mxu0 0.0
        %2825 = vmatpush.msra.mxu0 0.0
        %2826 = vmatpush.msra.mxu0 0.0
        %2827 = vmatpush.msra.mxu0 0.0
        %2828 = vmatpush.msra.mxu0 0.0
        %2829 = vmatpush.msra.mxu0 0.0
        %2830 = vmatpush.msra.mxu0 0.0
        %2831 = vmatpush.msra.mxu0 0.0
        %2832 = vmatpush.msra.mxu0 %v2800
        %2833 = vmatpush.msra.mxu0 %v2798
        %2834 = vmatmul.f32.gmra.mxu0 %v2813
        %v2835 = vpop.f32.mrf.mxu0
        %v2836 = vadd.f32 %v2805, %v2835
        %2837 = vmatmul.f32.gmra.mxu0 %v2816
        %v2838 = vpop.f32.mrf.mxu0
        %v2839 = vadd.f32 %v2810, %v2838
        %2840 = vdwg.mxu0
        %2841 = vmatpush.msra.mxu0 0.0
        %2842 = vmatpush.msra.mxu0 0.0
        %2843 = vmatpush.msra.mxu0 0.0
        %2844 = vmatpush.msra.mxu0 0.0
        %2845 = vmatpush.msra.mxu0 0.0
        %2846 = vmatpush.msra.mxu0 0.0
        %2847 = vmatpush.msra.mxu0 0.0
        %2848 = vmatpush.msra.mxu0 0.0
        %2849 = vmatpush.msra.mxu0 0.0
        %2850 = vmatpush.msra.mxu0 0.0
        %2851 = vmatpush.msra.mxu0 0.0
        %2852 = vmatpush.msra.mxu0 0.0
        %2853 = vmatpush.msra.mxu0 0.0
        %2854 = vmatpush.msra.mxu0 0.0
        %2855 = vmatpush.msra.mxu0 %v2801
        %2856 = vmatpush.msra.mxu0 %v2799
        %2857 = vmatmul.f32.gmra.mxu0 %v2813
        %v2858 = vpop.f32.mrf.mxu0
        %v2859 = vadd.f32 %v2805, %v2858
        %2860 = vmatmul.f32.gmra.mxu0 %v2816
        %v2861 = vpop.f32.mrf.mxu0
        %v2862 = vadd.f32 %v2810, %v2861
        %2863 = vdwg.mxu0
        %v2864 = vmax.f32 %v2836, 0.0
        %v2865 = vmax.f32 %v2859, 0.0
        %v2866 = vmax.f32 %v2839, 0.0
        %v2867 = vmax.f32 %v2862, 0.0
        %2869 = vset.pattern.permute.xlu0 0
        %2870 = vperm.xlu0 %2869, %v2734
        %v2871 = vpop.permute.xlu0 %2870
        %2874 = vset.pattern.permute.xlu0 0
        %2875 = vperm.xlu0 %2874, %v2735
        %v2876 = vpop.permute.xlu0 %2875
        %v2879 = vsel %vm427, %v2731, 0
        %v2882 = vsel %vm427, %v2732, 0
        %2884 = vmatpush.msra.mxu0 0.0
        %2885 = vmatpush.msra.mxu0 0.0
        %2886 = vmatpush.msra.mxu0 0.0
        %2887 = vmatpush.msra.mxu0 0.0
        %2888 = vmatpush.msra.mxu0 0.0
        %2889 = vmatpush.msra.mxu0 0.0
        %2890 = vmatpush.msra.mxu0 0.0
        %2891 = vmatpush.msra.mxu0 0.0
        %2892 = vmatpush.msra.mxu0 0.0
        %2893 = vmatpush.msra.mxu0 0.0
        %2894 = vmatpush.msra.mxu0 0.0
        %2895 = vmatpush.msra.mxu0 0.0
        %2896 = vmatpush.msra.mxu0 0.0
        %2897 = vmatpush.msra.mxu0 0.0
        %2898 = vmatpush.msra.mxu0 %v2866
        %2899 = vmatpush.msra.mxu0 %v2864
        %2900 = vmatmul.f32.gmra.mxu0 %v2879
        %v2901 = vpop.f32.mrf.mxu0
        %v2902 = vadd.f32 %v2871, %v2901
        %2903 = vmatmul.f32.gmra.mxu0 %v2882
        %v2904 = vpop.f32.mrf.mxu0
        %v2905 = vadd.f32 %v2876, %v2904
        %2906 = vdwg.mxu0
        %2907 = vmatpush.msra.mxu0 0.0
        %2908 = vmatpush.msra.mxu0 0.0
        %2909 = vmatpush.msra.mxu0 0.0
        %2910 = vmatpush.msra.mxu0 0.0
        %2911 = vmatpush.msra.mxu0 0.0
        %2912 = vmatpush.msra.mxu0 0.0
        %2913 = vmatpush.msra.mxu0 0.0
        %2914 = vmatpush.msra.mxu0 0.0
        %2915 = vmatpush.msra.mxu0 0.0
        %2916 = vmatpush.msra.mxu0 0.0
        %2917 = vmatpush.msra.mxu0 0.0
        %2918 = vmatpush.msra.mxu0 0.0
        %2919 = vmatpush.msra.mxu0 0.0
        %2920 = vmatpush.msra.mxu0 0.0
        %2921 = vmatpush.msra.mxu0 %v2867
        %2922 = vmatpush.msra.mxu0 %v2865
        %2923 = vmatmul.f32.gmra.mxu0 %v2879
        %v2924 = vpop.f32.mrf.mxu0
        %v2925 = vadd.f32 %v2871, %v2924
        %2926 = vmatmul.f32.gmra.mxu0 %v2882
        %v2927 = vpop.f32.mrf.mxu0
        %v2928 = vadd.f32 %v2876, %v2927
        %2929 = vdwg.mxu0
        %vm2930 = vcmp.lt.f32.partialorder %v2902, 0.0
        %vm2931 = vcmp.lt.f32.partialorder %v2925, 0.0
        %v2932 = vsel %vm2930, -1.0, 1.0
        %v2933 = vsel %vm2931, -1.0, 1.0
        %v2934 = vand.u32 2147483647, %v2902
        %v2935 = vand.u32 2147483647, %v2925
        %vm2936 = vcmp.gt.f32.partialorder %v2934, 2.4142137
        %vm2937 = vcmp.gt.f32.partialorder %v2935, 2.4142137
        %vm2938 = vcmp.gt.f32.partialorder %v2934, 0.41421357
        %vm2939 = vcmp.gt.f32.partialorder %v2935, 0.41421357
        %v2940 = vsub.f32 %v2934, 1.0
        %v2941 = vsub.f32 %v2935, 1.0
        %v2942 = vsel %vm2938, %v2940, %v2934
        %v2943 = vsel %vm2939, %v2941, %v2935
        %v2944 = vsel %vm2936, -1.0, %v2942
        %v2945 = vsel %vm2937, -1.0, %v2943
        %v2946 = vadd.f32 %v2934, 1.0
        %v2947 = vadd.f32 %v2935, 1.0
        %v2948 = vsel %vm2938, %v2946, 1.0
        %v2949 = vsel %vm2939, %v2947, 1.0
        %v2950 = vsel %vm2936, %v2934, %v2948
        %v2951 = vsel %vm2937, %v2935, %v2949
        %v2952 = vrcp.pop %v2950
        %v2953 = vmul.f32 %v2950, %v2952
        %v2954 = vsub.f32 1.0, %v2953
        %v2955 = vmul.f32 %v2952, %v2954
        %v2956 = vadd.f32 %v2952, %v2955
        %vm2957 = vweird.f32 %v2950
        %vm2958 = vweird.f32 %v2952
        %vm2959 = vmor %vm2957, %vm2958
        %v2960 = vsel %vm2959, %v2952, %v2956
        %v2961 = vand.u32 2147483647, %v2950
        %vm2962 = vcmp.eq.f32.partialorder %v2961, 8.507059e+37
        %v2963 = vand.u32 %v2950, 2147483648
        %v2964 = vor.u32 1.1754944e-38, %v2963
        %v2965 = vsel %vm2962, %v2964, %v2960
        %v2966 = vmul.f32 %v2944, %v2965
        %v2967 = vrcp.pop %v2951
        %v2968 = vmul.f32 %v2951, %v2967
        %v2969 = vsub.f32 1.0, %v2968
        %v2970 = vmul.f32 %v2967, %v2969
        %v2971 = vadd.f32 %v2967, %v2970
        %vm2972 = vweird.f32 %v2951
        %vm2973 = vweird.f32 %v2967
        %vm2974 = vmor %vm2972, %vm2973
        %v2975 = vsel %vm2974, %v2967, %v2971
        %v2976 = vand.u32 2147483647, %v2951
        %vm2977 = vcmp.eq.f32.partialorder %v2976, 8.507059e+37
        %v2978 = vand.u32 %v2951, 2147483648
        %v2979 = vor.u32 1.1754944e-38, %v2978
        %v2980 = vsel %vm2977, %v2979, %v2975
        %v2981 = vmul.f32 %v2945, %v2980
        %v2982 = vsel %vm2938, 0.7853982, 0.0
        %v2983 = vsel %vm2939, 0.7853982, 0.0
        %v2984 = vsel %vm2936, 1.5707964, %v2982
        %v2985 = vsel %vm2937, 1.5707964, %v2983
        %v2986 = vmul.f32 %v2966, %v2966
        %v2987 = vmul.f32 %v2981, %v2981
        %v2988 = vmul.f32 %v2986, 0.080537446
        %v2989 = vmul.f32 %v2987, 0.080537446
        %v2990 = vsub.f32 %v2988, 0.13877685
        %v2991 = vsub.f32 %v2989, 0.13877685
        %v2992 = vmul.f32 %v2990, %v2986
        %v2993 = vmul.f32 %v2991, %v2987
        %v2994 = vadd.f32 %v2992, 0.19977711
        %v2995 = vadd.f32 %v2993, 0.19977711
        %v2996 = vmul.f32 %v2994, %v2986
        %v2997 = vmul.f32 %v2995, %v2987
        %v2998 = vsub.f32 %v2996, 0.3333295
        %v2999 = vsub.f32 %v2997, 0.3333295
        %v3000 = vadd.f32 %v2984, %v2966
        %v3001 = vadd.f32 %v2985, %v2981
        %v3002 = vmul.f32 %v2966, %v2986
        %v3003 = vmul.f32 %v2981, %v2987
        %v3004 = vmul.f32 %v3002, %v2998
        %v3005 = vmul.f32 %v3003, %v2999
        %v3006 = vadd.f32 %v3000, %v3004
        %v3007 = vadd.f32 %v3001, %v3005
        %v3008 = vmul.f32 %v2932, %v3006
        %v3009 = vmul.f32 %v2933, %v3007
        %v3010 = vmul.f32 %v3008, 1.272
        %v3011 = vmul.f32 %v3009, 1.272
        %v3012 = vrot.slane %v3010, 4
        %v3013 = vadd.f32 %v3010, %v3012
        %v3014 = vrot.slane %v3013, 2
        %v3015 = vadd.f32 %v3013, %v3014
        %v3016 = vrot.slane %v3015, 1
        %v3017 = vadd.f32 %v3015, %v3016
        %v3018 = vrot.slane %v3011, 4
        %v3019 = vadd.f32 %v3011, %v3018
        %v3020 = vrot.slane %v3019, 2
        %v3021 = vadd.f32 %v3019, %v3020
        %v3022 = vrot.slane %v3021, 1
        %v3023 = vadd.f32 %v3021, %v3022
        %v3024 = vmul.f32 %v3017, 0.2
        %v3025 = vmul.f32 %v3023, 0.2
        %v3026 = vsub.f32 %v3010, %v3024
        %v3027 = vsub.f32 %v3011, %v3025
        %v3028 = vmul.f32 %v3026, 1.442695
        %v3029 = vpow.pop %v3028
        %v3030 = vmul.f32 %v3027, 1.442695
        %v3031 = vpow.pop %v3030
        %v3032 = vmul.f32 %v3029, %v2375
        %v3033 = vmul.f32 %v3031, %v2398
        %v3034 = vadd.f32 %v3032, %v2905
        %v3035 = vadd.f32 %v3033, %v2928
        %s3036 = scalar_lea.vmem %s7, 48
        %v3037 = vld [vmem:[%s3036] sm:$0xff]
        %v3038 = vld [vmem:[%s3036 + $0x8] sm:$0xff]
        %v3040 = vsel %vm427, %v3037, 0
        %v3043 = vsel %vm427, %v3038, 0
        %3045 = vmatpush.msra.mxu0 0.0
        %3046 = vmatpush.msra.mxu0 0.0
        %3047 = vmatpush.msra.mxu0 0.0
        %3048 = vmatpush.msra.mxu0 0.0
        %3049 = vmatpush.msra.mxu0 0.0
        %3050 = vmatpush.msra.mxu0 0.0
        %3051 = vmatpush.msra.mxu0 0.0
        %3052 = vmatpush.msra.mxu0 0.0
        %3053 = vmatpush.msra.mxu0 0.0
        %3054 = vmatpush.msra.mxu0 0.0
        %3055 = vmatpush.msra.mxu0 0.0
        %3056 = vmatpush.msra.mxu0 0.0
        %3057 = vmatpush.msra.mxu0 0.0
        %3058 = vmatpush.msra.mxu0 0.0
        %3059 = vmatpush.msra.mxu0 %v3034
        %3060 = vmatpush.msra.mxu0 %v2716
        %3061 = vmatmul.f32.gmra.mxu0 %v3040
        %v3062 = vpop.f32.mrf.mxu0
        %v3063 = vadd.f32 0.0, %v3062
        %3064 = vmatmul.f32.gmra.mxu0 %v3043
        %v3065 = vpop.f32.mrf.mxu0
        %v3066 = vadd.f32 0.0, %v3065
        %3067 = vdwg.mxu0
        %3068 = vmatpush.msra.mxu0 0.0
        %3069 = vmatpush.msra.mxu0 0.0
        %3070 = vmatpush.msra.mxu0 0.0
        %3071 = vmatpush.msra.mxu0 0.0
        %3072 = vmatpush.msra.mxu0 0.0
        %3073 = vmatpush.msra.mxu0 0.0
        %3074 = vmatpush.msra.mxu0 0.0
        %3075 = vmatpush.msra.mxu0 0.0
        %3076 = vmatpush.msra.mxu0 0.0
        %3077 = vmatpush.msra.mxu0 0.0
        %3078 = vmatpush.msra.mxu0 0.0
        %3079 = vmatpush.msra.mxu0 0.0
        %3080 = vmatpush.msra.mxu0 0.0
        %3081 = vmatpush.msra.mxu0 0.0
        %3082 = vmatpush.msra.mxu0 %v3035
        %3083 = vmatpush.msra.mxu0 %v2717
        %3084 = vmatmul.f32.gmra.mxu0 %v3040
        %v3085 = vpop.f32.mrf.mxu0
        %v3086 = vadd.f32 0.0, %v3085
        %3087 = vmatmul.f32.gmra.mxu0 %v3043
        %v3088 = vpop.f32.mrf.mxu0
        %v3089 = vadd.f32 0.0, %v3088
        %3090 = vdwg.mxu0
        %s3091 = scalar_lea.vmem %s1, 144
        %v3092 = vld [vmem:[%s3091] sm:$0xff]
        %v3093 = vld [vmem:[%s3091 + $0x8] sm:$0xff]
        %s3094 = scalar_lea.vmem %s2, 144
        %v3095 = vld [vmem:[%s3094] sm:$0xff]
        %v3096 = vld [vmem:[%s3094 + $0x8] sm:$0xff]
        %s3097 = scalar_lea.vmem %s3, 144
        %v3098 = vld [vmem:[%s3097] sm:$0xff]
        %v3099 = vld [vmem:[%s3097 + $0x8] sm:$0xff]
        %s3100 = scalar_lea.vmem %s4, 144
        %v3101 = vld [vmem:[%s3100] sm:$0xff]
        %v3102 = vld [vmem:[%s3100 + $0x8] sm:$0xff]
        %s3103 = scalar_lea.vmem %s5, 144
        %v3104 = vld [vmem:[%s3103] sm:$0xff]
        %v3105 = vld [vmem:[%s3103 + $0x8] sm:$0xff]
        %s3106 = scalar_lea.vmem %s6, 144
        %v3107 = vld [vmem:[%s3106] sm:$0xff]
        %v3108 = vld [vmem:[%s3106 + $0x8] sm:$0xff]
        %3110 = vset.pattern.permute.xlu0 0
        %3111 = vperm.xlu0 %3110, %v3095
        %v3112 = vpop.permute.xlu0 %3111
        %3115 = vset.pattern.permute.xlu0 0
        %3116 = vperm.xlu0 %3115, %v3096
        %v3117 = vpop.permute.xlu0 %3116
        %v3120 = vsel %vm360, %v3092, 0
        %v3123 = vsel %vm360, %v3093, 0
        %3125 = vmatpush.msra.mxu0 0.0
        %3126 = vmatpush.msra.mxu0 0.0
        %3127 = vmatpush.msra.mxu0 0.0
        %3128 = vmatpush.msra.mxu0 0.0
        %3129 = vmatpush.msra.mxu0 0.0
        %3130 = vmatpush.msra.mxu0 0.0
        %3131 = vmatpush.msra.mxu0 0.0
        %3132 = vmatpush.msra.mxu0 0.0
        %3133 = vmatpush.msra.mxu0 0.0
        %3134 = vmatpush.msra.mxu0 0.0
        %3135 = vmatpush.msra.mxu0 0.0
        %3136 = vmatpush.msra.mxu0 0.0
        %3137 = vmatpush.msra.mxu0 0.0
        %3138 = vmatpush.msra.mxu0 0.0
        %3139 = vmatpush.msra.mxu0 0.0
        %3140 = vmatpush.msra.mxu0 %v3066
        %3141 = vmatmul.f32.gmra.mxu0 %v3120
        %v3142 = vpop.f32.mrf.mxu0
        %v3143 = vadd.f32 %v3112, %v3142
        %3144 = vmatmul.f32.gmra.mxu0 %v3123
        %v3145 = vpop.f32.mrf.mxu0
        %v3146 = vadd.f32 %v3117, %v3145
        %3147 = vdwg.mxu0
        %3148 = vmatpush.msra.mxu0 0.0
        %3149 = vmatpush.msra.mxu0 0.0
        %3150 = vmatpush.msra.mxu0 0.0
        %3151 = vmatpush.msra.mxu0 0.0
        %3152 = vmatpush.msra.mxu0 0.0
        %3153 = vmatpush.msra.mxu0 0.0
        %3154 = vmatpush.msra.mxu0 0.0
        %3155 = vmatpush.msra.mxu0 0.0
        %3156 = vmatpush.msra.mxu0 0.0
        %3157 = vmatpush.msra.mxu0 0.0
        %3158 = vmatpush.msra.mxu0 0.0
        %3159 = vmatpush.msra.mxu0 0.0
        %3160 = vmatpush.msra.mxu0 0.0
        %3161 = vmatpush.msra.mxu0 0.0
        %3162 = vmatpush.msra.mxu0 0.0
        %3163 = vmatpush.msra.mxu0 %v3089
        %3164 = vmatmul.f32.gmra.mxu0 %v3120
        %v3165 = vpop.f32.mrf.mxu0
        %v3166 = vadd.f32 %v3112, %v3165
        %3167 = vmatmul.f32.gmra.mxu0 %v3123
        %v3168 = vpop.f32.mrf.mxu0
        %v3169 = vadd.f32 %v3117, %v3168
        %3170 = vdwg.mxu0
        %v3171 = vmax.f32 %v3143, 0.0
        %v3172 = vmax.f32 %v3166, 0.0
        %v3173 = vmax.f32 %v3146, 0.0
        %v3174 = vmax.f32 %v3169, 0.0
        %3176 = vset.pattern.permute.xlu0 0
        %3177 = vperm.xlu0 %3176, %v3101
        %v3178 = vpop.permute.xlu0 %3177
        %3181 = vset.pattern.permute.xlu0 0
        %3182 = vperm.xlu0 %3181, %v3102
        %v3183 = vpop.permute.xlu0 %3182
        %v3186 = vsel %vm427, %v3098, 0
        %v3189 = vsel %vm427, %v3099, 0
        %3191 = vmatpush.msra.mxu0 0.0
        %3192 = vmatpush.msra.mxu0 0.0
        %3193 = vmatpush.msra.mxu0 0.0
        %3194 = vmatpush.msra.mxu0 0.0
        %3195 = vmatpush.msra.mxu0 0.0
        %3196 = vmatpush.msra.mxu0 0.0
        %3197 = vmatpush.msra.mxu0 0.0
        %3198 = vmatpush.msra.mxu0 0.0
        %3199 = vmatpush.msra.mxu0 0.0
        %3200 = vmatpush.msra.mxu0 0.0
        %3201 = vmatpush.msra.mxu0 0.0
        %3202 = vmatpush.msra.mxu0 0.0
        %3203 = vmatpush.msra.mxu0 0.0
        %3204 = vmatpush.msra.mxu0 0.0
        %3205 = vmatpush.msra.mxu0 %v3173
        %3206 = vmatpush.msra.mxu0 %v3171
        %3207 = vmatmul.f32.gmra.mxu0 %v3186
        %v3208 = vpop.f32.mrf.mxu0
        %v3209 = vadd.f32 %v3178, %v3208
        %3210 = vmatmul.f32.gmra.mxu0 %v3189
        %v3211 = vpop.f32.mrf.mxu0
        %v3212 = vadd.f32 %v3183, %v3211
        %3213 = vdwg.mxu0
        %3214 = vmatpush.msra.mxu0 0.0
        %3215 = vmatpush.msra.mxu0 0.0
        %3216 = vmatpush.msra.mxu0 0.0
        %3217 = vmatpush.msra.mxu0 0.0
        %3218 = vmatpush.msra.mxu0 0.0
        %3219 = vmatpush.msra.mxu0 0.0
        %3220 = vmatpush.msra.mxu0 0.0
        %3221 = vmatpush.msra.mxu0 0.0
        %3222 = vmatpush.msra.mxu0 0.0
        %3223 = vmatpush.msra.mxu0 0.0
        %3224 = vmatpush.msra.mxu0 0.0
        %3225 = vmatpush.msra.mxu0 0.0
        %3226 = vmatpush.msra.mxu0 0.0
        %3227 = vmatpush.msra.mxu0 0.0
        %3228 = vmatpush.msra.mxu0 %v3174
        %3229 = vmatpush.msra.mxu0 %v3172
        %3230 = vmatmul.f32.gmra.mxu0 %v3186
        %v3231 = vpop.f32.mrf.mxu0
        %v3232 = vadd.f32 %v3178, %v3231
        %3233 = vmatmul.f32.gmra.mxu0 %v3189
        %v3234 = vpop.f32.mrf.mxu0
        %v3235 = vadd.f32 %v3183, %v3234
        %3236 = vdwg.mxu0
        %v3237 = vmax.f32 %v3209, 0.0
        %v3238 = vmax.f32 %v3232, 0.0
        %v3239 = vmax.f32 %v3212, 0.0
        %v3240 = vmax.f32 %v3235, 0.0
        %3242 = vset.pattern.permute.xlu0 0
        %3243 = vperm.xlu0 %3242, %v3107
        %v3244 = vpop.permute.xlu0 %3243
        %3247 = vset.pattern.permute.xlu0 0
        %3248 = vperm.xlu0 %3247, %v3108
        %v3249 = vpop.permute.xlu0 %3248
        %v3252 = vsel %vm427, %v3104, 0
        %v3255 = vsel %vm427, %v3105, 0
        %3257 = vmatpush.msra.mxu0 0.0
        %3258 = vmatpush.msra.mxu0 0.0
        %3259 = vmatpush.msra.mxu0 0.0
        %3260 = vmatpush.msra.mxu0 0.0
        %3261 = vmatpush.msra.mxu0 0.0
        %3262 = vmatpush.msra.mxu0 0.0
        %3263 = vmatpush.msra.mxu0 0.0
        %3264 = vmatpush.msra.mxu0 0.0
        %3265 = vmatpush.msra.mxu0 0.0
        %3266 = vmatpush.msra.mxu0 0.0
        %3267 = vmatpush.msra.mxu0 0.0
        %3268 = vmatpush.msra.mxu0 0.0
        %3269 = vmatpush.msra.mxu0 0.0
        %3270 = vmatpush.msra.mxu0 0.0
        %3271 = vmatpush.msra.mxu0 %v3239
        %3272 = vmatpush.msra.mxu0 %v3237
        %3273 = vmatmul.f32.gmra.mxu0 %v3252
        %v3274 = vpop.f32.mrf.mxu0
        %v3275 = vadd.f32 %v3244, %v3274
        %3276 = vmatmul.f32.gmra.mxu0 %v3255
        %v3277 = vpop.f32.mrf.mxu0
        %v3278 = vadd.f32 %v3249, %v3277
        %3279 = vdwg.mxu0
        %3280 = vmatpush.msra.mxu0 0.0
        %3281 = vmatpush.msra.mxu0 0.0
        %3282 = vmatpush.msra.mxu0 0.0
        %3283 = vmatpush.msra.mxu0 0.0
        %3284 = vmatpush.msra.mxu0 0.0
        %3285 = vmatpush.msra.mxu0 0.0
        %3286 = vmatpush.msra.mxu0 0.0
        %3287 = vmatpush.msra.mxu0 0.0
        %3288 = vmatpush.msra.mxu0 0.0
        %3289 = vmatpush.msra.mxu0 0.0
        %3290 = vmatpush.msra.mxu0 0.0
        %3291 = vmatpush.msra.mxu0 0.0
        %3292 = vmatpush.msra.mxu0 0.0
        %3293 = vmatpush.msra.mxu0 0.0
        %3294 = vmatpush.msra.mxu0 %v3240
        %3295 = vmatpush.msra.mxu0 %v3238
        %3296 = vmatmul.f32.gmra.mxu0 %v3252
        %v3297 = vpop.f32.mrf.mxu0
        %v3298 = vadd.f32 %v3244, %v3297
        %3299 = vmatmul.f32.gmra.mxu0 %v3255
        %v3300 = vpop.f32.mrf.mxu0
        %v3301 = vadd.f32 %v3249, %v3300
        %3302 = vdwg.mxu0
        %vm3303 = vcmp.lt.f32.partialorder %v3275, 0.0
        %vm3304 = vcmp.lt.f32.partialorder %v3298, 0.0
        %v3305 = vsel %vm3303, -1.0, 1.0
        %v3306 = vsel %vm3304, -1.0, 1.0
        %v3307 = vand.u32 2147483647, %v3275
        %v3308 = vand.u32 2147483647, %v3298
        %vm3309 = vcmp.gt.f32.partialorder %v3307, 2.4142137
        %vm3310 = vcmp.gt.f32.partialorder %v3308, 2.4142137
        %vm3311 = vcmp.gt.f32.partialorder %v3307, 0.41421357
        %vm3312 = vcmp.gt.f32.partialorder %v3308, 0.41421357
        %v3313 = vsub.f32 %v3307, 1.0
        %v3314 = vsub.f32 %v3308, 1.0
        %v3315 = vsel %vm3311, %v3313, %v3307
        %v3316 = vsel %vm3312, %v3314, %v3308
        %v3317 = vsel %vm3309, -1.0, %v3315
        %v3318 = vsel %vm3310, -1.0, %v3316
        %v3319 = vadd.f32 %v3307, 1.0
        %v3320 = vadd.f32 %v3308, 1.0
        %v3321 = vsel %vm3311, %v3319, 1.0
        %v3322 = vsel %vm3312, %v3320, 1.0
        %v3323 = vsel %vm3309, %v3307, %v3321
        %v3324 = vsel %vm3310, %v3308, %v3322
        %v3325 = vrcp.pop %v3323
        %v3326 = vmul.f32 %v3323, %v3325
        %v3327 = vsub.f32 1.0, %v3326
        %v3328 = vmul.f32 %v3325, %v3327
        %v3329 = vadd.f32 %v3325, %v3328
        %vm3330 = vweird.f32 %v3323
        %vm3331 = vweird.f32 %v3325
        %vm3332 = vmor %vm3330, %vm3331
        %v3333 = vsel %vm3332, %v3325, %v3329
        %v3334 = vand.u32 2147483647, %v3323
        %vm3335 = vcmp.eq.f32.partialorder %v3334, 8.507059e+37
        %v3336 = vand.u32 %v3323, 2147483648
        %v3337 = vor.u32 1.1754944e-38, %v3336
        %v3338 = vsel %vm3335, %v3337, %v3333
        %v3339 = vmul.f32 %v3317, %v3338
        %v3340 = vrcp.pop %v3324
        %v3341 = vmul.f32 %v3324, %v3340
        %v3342 = vsub.f32 1.0, %v3341
        %v3343 = vmul.f32 %v3340, %v3342
        %v3344 = vadd.f32 %v3340, %v3343
        %vm3345 = vweird.f32 %v3324
        %vm3346 = vweird.f32 %v3340
        %vm3347 = vmor %vm3345, %vm3346
        %v3348 = vsel %vm3347, %v3340, %v3344
        %v3349 = vand.u32 2147483647, %v3324
        %vm3350 = vcmp.eq.f32.partialorder %v3349, 8.507059e+37
        %v3351 = vand.u32 %v3324, 2147483648
        %v3352 = vor.u32 1.1754944e-38, %v3351
        %v3353 = vsel %vm3350, %v3352, %v3348
        %v3354 = vmul.f32 %v3318, %v3353
        %v3355 = vsel %vm3311, 0.7853982, 0.0
        %v3356 = vsel %vm3312, 0.7853982, 0.0
        %v3357 = vsel %vm3309, 1.5707964, %v3355
        %v3358 = vsel %vm3310, 1.5707964, %v3356
        %v3359 = vmul.f32 %v3339, %v3339
        %v3360 = vmul.f32 %v3354, %v3354
        %v3361 = vmul.f32 %v3359, 0.080537446
        %v3362 = vmul.f32 %v3360, 0.080537446
        %v3363 = vsub.f32 %v3361, 0.13877685
        %v3364 = vsub.f32 %v3362, 0.13877685
        %v3365 = vmul.f32 %v3363, %v3359
        %v3366 = vmul.f32 %v3364, %v3360
        %v3367 = vadd.f32 %v3365, 0.19977711
        %v3368 = vadd.f32 %v3366, 0.19977711
        %v3369 = vmul.f32 %v3367, %v3359
        %v3370 = vmul.f32 %v3368, %v3360
        %v3371 = vsub.f32 %v3369, 0.3333295
        %v3372 = vsub.f32 %v3370, 0.3333295
        %v3373 = vadd.f32 %v3357, %v3339
        %v3374 = vadd.f32 %v3358, %v3354
        %v3375 = vmul.f32 %v3339, %v3359
        %v3376 = vmul.f32 %v3354, %v3360
        %v3377 = vmul.f32 %v3375, %v3371
        %v3378 = vmul.f32 %v3376, %v3372
        %v3379 = vadd.f32 %v3373, %v3377
        %v3380 = vadd.f32 %v3374, %v3378
        %v3381 = vmul.f32 %v3305, %v3379
        %v3382 = vmul.f32 %v3306, %v3380
        %v3383 = vmul.f32 %v3381, 1.272
        %v3384 = vmul.f32 %v3382, 1.272
        %v3385 = vrot.slane %v3383, 4
        %v3386 = vadd.f32 %v3383, %v3385
        %v3387 = vrot.slane %v3386, 2
        %v3388 = vadd.f32 %v3386, %v3387
        %v3389 = vrot.slane %v3388, 1
        %v3390 = vadd.f32 %v3388, %v3389
        %v3391 = vrot.slane %v3384, 4
        %v3392 = vadd.f32 %v3384, %v3391
        %v3393 = vrot.slane %v3392, 2
        %v3394 = vadd.f32 %v3392, %v3393
        %v3395 = vrot.slane %v3394, 1
        %v3396 = vadd.f32 %v3394, %v3395
        %v3397 = vmul.f32 %v3390, 0.2
        %v3398 = vmul.f32 %v3396, 0.2
        %v3399 = vsub.f32 %v3383, %v3397
        %v3400 = vsub.f32 %v3384, %v3398
        %v3401 = vmul.f32 %v3399, 1.442695
        %v3402 = vpow.pop %v3401
        %v3403 = vmul.f32 %v3400, 1.442695
        %v3404 = vpow.pop %v3403
        %v3405 = vmul.f32 %v3402, %v3063
        %v3406 = vmul.f32 %v3404, %v3086
        %v3407 = vadd.f32 %v3405, %v3278
        %v3408 = vadd.f32 %v3406, %v3301
        %s3409 = scalar_lea.vmem %s1, 128
        %v3410 = vld [vmem:[%s3409] sm:$0xff]
        %v3411 = vld [vmem:[%s3409 + $0x8] sm:$0xff]
        %s3412 = scalar_lea.vmem %s2, 128
        %v3413 = vld [vmem:[%s3412] sm:$0xff]
        %v3414 = vld [vmem:[%s3412 + $0x8] sm:$0xff]
        %s3415 = scalar_lea.vmem %s3, 128
        %v3416 = vld [vmem:[%s3415] sm:$0xff]
        %v3417 = vld [vmem:[%s3415 + $0x8] sm:$0xff]
        %s3418 = scalar_lea.vmem %s4, 128
        %v3419 = vld [vmem:[%s3418] sm:$0xff]
        %v3420 = vld [vmem:[%s3418 + $0x8] sm:$0xff]
        %s3421 = scalar_lea.vmem %s5, 128
        %v3422 = vld [vmem:[%s3421] sm:$0xff]
        %v3423 = vld [vmem:[%s3421 + $0x8] sm:$0xff]
        %s3424 = scalar_lea.vmem %s6, 128
        %v3425 = vld [vmem:[%s3424] sm:$0xff]
        %v3426 = vld [vmem:[%s3424 + $0x8] sm:$0xff]
        %3428 = vset.pattern.permute.xlu0 0
        %3429 = vperm.xlu0 %3428, %v3413
        %v3430 = vpop.permute.xlu0 %3429
        %3433 = vset.pattern.permute.xlu0 0
        %3434 = vperm.xlu0 %3433, %v3414
        %v3435 = vpop.permute.xlu0 %3434
        %v3438 = vsel %vm360, %v3410, 0
        %v3441 = vsel %vm360, %v3411, 0
        %3443 = vmatpush.msra.mxu0 0.0
        %3444 = vmatpush.msra.mxu0 0.0
        %3445 = vmatpush.msra.mxu0 0.0
        %3446 = vmatpush.msra.mxu0 0.0
        %3447 = vmatpush.msra.mxu0 0.0
        %3448 = vmatpush.msra.mxu0 0.0
        %3449 = vmatpush.msra.mxu0 0.0
        %3450 = vmatpush.msra.mxu0 0.0
        %3451 = vmatpush.msra.mxu0 0.0
        %3452 = vmatpush.msra.mxu0 0.0
        %3453 = vmatpush.msra.mxu0 0.0
        %3454 = vmatpush.msra.mxu0 0.0
        %3455 = vmatpush.msra.mxu0 0.0
        %3456 = vmatpush.msra.mxu0 0.0
        %3457 = vmatpush.msra.mxu0 0.0
        %3458 = vmatpush.msra.mxu0 %v3407
        %3459 = vmatmul.f32.gmra.mxu0 %v3438
        %v3460 = vpop.f32.mrf.mxu0
        %v3461 = vadd.f32 %v3430, %v3460
        %3462 = vmatmul.f32.gmra.mxu0 %v3441
        %v3463 = vpop.f32.mrf.mxu0
        %v3464 = vadd.f32 %v3435, %v3463
        %3465 = vdwg.mxu0
        %3466 = vmatpush.msra.mxu0 0.0
        %3467 = vmatpush.msra.mxu0 0.0
        %3468 = vmatpush.msra.mxu0 0.0
        %3469 = vmatpush.msra.mxu0 0.0
        %3470 = vmatpush.msra.mxu0 0.0
        %3471 = vmatpush.msra.mxu0 0.0
        %3472 = vmatpush.msra.mxu0 0.0
        %3473 = vmatpush.msra.mxu0 0.0
        %3474 = vmatpush.msra.mxu0 0.0
        %3475 = vmatpush.msra.mxu0 0.0
        %3476 = vmatpush.msra.mxu0 0.0
        %3477 = vmatpush.msra.mxu0 0.0
        %3478 = vmatpush.msra.mxu0 0.0
        %3479 = vmatpush.msra.mxu0 0.0
        %3480 = vmatpush.msra.mxu0 0.0
        %3481 = vmatpush.msra.mxu0 %v3408
        %3482 = vmatmul.f32.gmra.mxu0 %v3438
        %v3483 = vpop.f32.mrf.mxu0
        %v3484 = vadd.f32 %v3430, %v3483
        %3485 = vmatmul.f32.gmra.mxu0 %v3441
        %v3486 = vpop.f32.mrf.mxu0
        %v3487 = vadd.f32 %v3435, %v3486
        %3488 = vdwg.mxu0
        %v3489 = vmax.f32 %v3461, 0.0
        %v3490 = vmax.f32 %v3484, 0.0
        %v3491 = vmax.f32 %v3464, 0.0
        %v3492 = vmax.f32 %v3487, 0.0
        %3494 = vset.pattern.permute.xlu0 0
        %3495 = vperm.xlu0 %3494, %v3419
        %v3496 = vpop.permute.xlu0 %3495
        %3499 = vset.pattern.permute.xlu0 0
        %3500 = vperm.xlu0 %3499, %v3420
        %v3501 = vpop.permute.xlu0 %3500
        %v3504 = vsel %vm427, %v3416, 0
        %v3507 = vsel %vm427, %v3417, 0
        %3509 = vmatpush.msra.mxu0 0.0
        %3510 = vmatpush.msra.mxu0 0.0
        %3511 = vmatpush.msra.mxu0 0.0
        %3512 = vmatpush.msra.mxu0 0.0
        %3513 = vmatpush.msra.mxu0 0.0
        %3514 = vmatpush.msra.mxu0 0.0
        %3515 = vmatpush.msra.mxu0 0.0
        %3516 = vmatpush.msra.mxu0 0.0
        %3517 = vmatpush.msra.mxu0 0.0
        %3518 = vmatpush.msra.mxu0 0.0
        %3519 = vmatpush.msra.mxu0 0.0
        %3520 = vmatpush.msra.mxu0 0.0
        %3521 = vmatpush.msra.mxu0 0.0
        %3522 = vmatpush.msra.mxu0 0.0
        %3523 = vmatpush.msra.mxu0 %v3491
        %3524 = vmatpush.msra.mxu0 %v3489
        %3525 = vmatmul.f32.gmra.mxu0 %v3504
        %v3526 = vpop.f32.mrf.mxu0
        %v3527 = vadd.f32 %v3496, %v3526
        %3528 = vmatmul.f32.gmra.mxu0 %v3507
        %v3529 = vpop.f32.mrf.mxu0
        %v3530 = vadd.f32 %v3501, %v3529
        %3531 = vdwg.mxu0
        %3532 = vmatpush.msra.mxu0 0.0
        %3533 = vmatpush.msra.mxu0 0.0
        %3534 = vmatpush.msra.mxu0 0.0
        %3535 = vmatpush.msra.mxu0 0.0
        %3536 = vmatpush.msra.mxu0 0.0
        %3537 = vmatpush.msra.mxu0 0.0
        %3538 = vmatpush.msra.mxu0 0.0
        %3539 = vmatpush.msra.mxu0 0.0
        %3540 = vmatpush.msra.mxu0 0.0
        %3541 = vmatpush.msra.mxu0 0.0
        %3542 = vmatpush.msra.mxu0 0.0
        %3543 = vmatpush.msra.mxu0 0.0
        %3544 = vmatpush.msra.mxu0 0.0
        %3545 = vmatpush.msra.mxu0 0.0
        %3546 = vmatpush.msra.mxu0 %v3492
        %3547 = vmatpush.msra.mxu0 %v3490
        %3548 = vmatmul.f32.gmra.mxu0 %v3504
        %v3549 = vpop.f32.mrf.mxu0
        %v3550 = vadd.f32 %v3496, %v3549
        %3551 = vmatmul.f32.gmra.mxu0 %v3507
        %v3552 = vpop.f32.mrf.mxu0
        %v3553 = vadd.f32 %v3501, %v3552
        %3554 = vdwg.mxu0
        %v3555 = vmax.f32 %v3527, 0.0
        %v3556 = vmax.f32 %v3550, 0.0
        %v3557 = vmax.f32 %v3530, 0.0
        %v3558 = vmax.f32 %v3553, 0.0
        %3560 = vset.pattern.permute.xlu0 0
        %3561 = vperm.xlu0 %3560, %v3425
        %v3562 = vpop.permute.xlu0 %3561
        %3565 = vset.pattern.permute.xlu0 0
        %3566 = vperm.xlu0 %3565, %v3426
        %v3567 = vpop.permute.xlu0 %3566
        %v3570 = vsel %vm427, %v3422, 0
        %v3573 = vsel %vm427, %v3423, 0
        %3575 = vmatpush.msra.mxu0 0.0
        %3576 = vmatpush.msra.mxu0 0.0
        %3577 = vmatpush.msra.mxu0 0.0
        %3578 = vmatpush.msra.mxu0 0.0
        %3579 = vmatpush.msra.mxu0 0.0
        %3580 = vmatpush.msra.mxu0 0.0
        %3581 = vmatpush.msra.mxu0 0.0
        %3582 = vmatpush.msra.mxu0 0.0
        %3583 = vmatpush.msra.mxu0 0.0
        %3584 = vmatpush.msra.mxu0 0.0
        %3585 = vmatpush.msra.mxu0 0.0
        %3586 = vmatpush.msra.mxu0 0.0
        %3587 = vmatpush.msra.mxu0 0.0
        %3588 = vmatpush.msra.mxu0 0.0
        %3589 = vmatpush.msra.mxu0 %v3557
        %3590 = vmatpush.msra.mxu0 %v3555
        %3591 = vmatmul.f32.gmra.mxu0 %v3570
        %v3592 = vpop.f32.mrf.mxu0
        %v3593 = vadd.f32 %v3562, %v3592
        %3594 = vmatmul.f32.gmra.mxu0 %v3573
        %v3595 = vpop.f32.mrf.mxu0
        %v3596 = vadd.f32 %v3567, %v3595
        %3597 = vdwg.mxu0
        %3598 = vmatpush.msra.mxu0 0.0
        %3599 = vmatpush.msra.mxu0 0.0
        %3600 = vmatpush.msra.mxu0 0.0
        %3601 = vmatpush.msra.mxu0 0.0
        %3602 = vmatpush.msra.mxu0 0.0
        %3603 = vmatpush.msra.mxu0 0.0
        %3604 = vmatpush.msra.mxu0 0.0
        %3605 = vmatpush.msra.mxu0 0.0
        %3606 = vmatpush.msra.mxu0 0.0
        %3607 = vmatpush.msra.mxu0 0.0
        %3608 = vmatpush.msra.mxu0 0.0
        %3609 = vmatpush.msra.mxu0 0.0
        %3610 = vmatpush.msra.mxu0 0.0
        %3611 = vmatpush.msra.mxu0 0.0
        %3612 = vmatpush.msra.mxu0 %v3558
        %3613 = vmatpush.msra.mxu0 %v3556
        %3614 = vmatmul.f32.gmra.mxu0 %v3570
        %v3615 = vpop.f32.mrf.mxu0
        %v3616 = vadd.f32 %v3562, %v3615
        %3617 = vmatmul.f32.gmra.mxu0 %v3573
        %v3618 = vpop.f32.mrf.mxu0
        %v3619 = vadd.f32 %v3567, %v3618
        %3620 = vdwg.mxu0
        %vm3621 = vcmp.lt.f32.partialorder %v3593, 0.0
        %vm3622 = vcmp.lt.f32.partialorder %v3616, 0.0
        %v3623 = vsel %vm3621, -1.0, 1.0
        %v3624 = vsel %vm3622, -1.0, 1.0
        %v3625 = vand.u32 2147483647, %v3593
        %v3626 = vand.u32 2147483647, %v3616
        %vm3627 = vcmp.gt.f32.partialorder %v3625, 2.4142137
        %vm3628 = vcmp.gt.f32.partialorder %v3626, 2.4142137
        %vm3629 = vcmp.gt.f32.partialorder %v3625, 0.41421357
        %vm3630 = vcmp.gt.f32.partialorder %v3626, 0.41421357
        %v3631 = vsub.f32 %v3625, 1.0
        %v3632 = vsub.f32 %v3626, 1.0
        %v3633 = vsel %vm3629, %v3631, %v3625
        %v3634 = vsel %vm3630, %v3632, %v3626
        %v3635 = vsel %vm3627, -1.0, %v3633
        %v3636 = vsel %vm3628, -1.0, %v3634
        %v3637 = vadd.f32 %v3625, 1.0
        %v3638 = vadd.f32 %v3626, 1.0
        %v3639 = vsel %vm3629, %v3637, 1.0
        %v3640 = vsel %vm3630, %v3638, 1.0
        %v3641 = vsel %vm3627, %v3625, %v3639
        %v3642 = vsel %vm3628, %v3626, %v3640
        %v3643 = vrcp.pop %v3641
        %v3644 = vmul.f32 %v3641, %v3643
        %v3645 = vsub.f32 1.0, %v3644
        %v3646 = vmul.f32 %v3643, %v3645
        %v3647 = vadd.f32 %v3643, %v3646
        %vm3648 = vweird.f32 %v3641
        %vm3649 = vweird.f32 %v3643
        %vm3650 = vmor %vm3648, %vm3649
        %v3651 = vsel %vm3650, %v3643, %v3647
        %v3652 = vand.u32 2147483647, %v3641
        %vm3653 = vcmp.eq.f32.partialorder %v3652, 8.507059e+37
        %v3654 = vand.u32 %v3641, 2147483648
        %v3655 = vor.u32 1.1754944e-38, %v3654
        %v3656 = vsel %vm3653, %v3655, %v3651
        %v3657 = vmul.f32 %v3635, %v3656
        %v3658 = vrcp.pop %v3642
        %v3659 = vmul.f32 %v3642, %v3658
        %v3660 = vsub.f32 1.0, %v3659
        %v3661 = vmul.f32 %v3658, %v3660
        %v3662 = vadd.f32 %v3658, %v3661
        %vm3663 = vweird.f32 %v3642
        %vm3664 = vweird.f32 %v3658
        %vm3665 = vmor %vm3663, %vm3664
        %v3666 = vsel %vm3665, %v3658, %v3662
        %v3667 = vand.u32 2147483647, %v3642
        %vm3668 = vcmp.eq.f32.partialorder %v3667, 8.507059e+37
        %v3669 = vand.u32 %v3642, 2147483648
        %v3670 = vor.u32 1.1754944e-38, %v3669
        %v3671 = vsel %vm3668, %v3670, %v3666
        %v3672 = vmul.f32 %v3636, %v3671
        %v3673 = vsel %vm3629, 0.7853982, 0.0
        %v3674 = vsel %vm3630, 0.7853982, 0.0
        %v3675 = vsel %vm3627, 1.5707964, %v3673
        %v3676 = vsel %vm3628, 1.5707964, %v3674
        %v3677 = vmul.f32 %v3657, %v3657
        %v3678 = vmul.f32 %v3672, %v3672
        %v3679 = vmul.f32 %v3677, 0.080537446
        %v3680 = vmul.f32 %v3678, 0.080537446
        %v3681 = vsub.f32 %v3679, 0.13877685
        %v3682 = vsub.f32 %v3680, 0.13877685
        %v3683 = vmul.f32 %v3681, %v3677
        %v3684 = vmul.f32 %v3682, %v3678
        %v3685 = vadd.f32 %v3683, 0.19977711
        %v3686 = vadd.f32 %v3684, 0.19977711
        %v3687 = vmul.f32 %v3685, %v3677
        %v3688 = vmul.f32 %v3686, %v3678
        %v3689 = vsub.f32 %v3687, 0.3333295
        %v3690 = vsub.f32 %v3688, 0.3333295
        %v3691 = vadd.f32 %v3675, %v3657
        %v3692 = vadd.f32 %v3676, %v3672
        %v3693 = vmul.f32 %v3657, %v3677
        %v3694 = vmul.f32 %v3672, %v3678
        %v3695 = vmul.f32 %v3693, %v3689
        %v3696 = vmul.f32 %v3694, %v3690
        %v3697 = vadd.f32 %v3691, %v3695
        %v3698 = vadd.f32 %v3692, %v3696
        %v3699 = vmul.f32 %v3623, %v3697
        %v3700 = vmul.f32 %v3624, %v3698
        %v3701 = vmul.f32 %v3699, 1.272
        %v3702 = vmul.f32 %v3700, 1.272
        %v3703 = vrot.slane %v3701, 4
        %v3704 = vadd.f32 %v3701, %v3703
        %v3705 = vrot.slane %v3704, 2
        %v3706 = vadd.f32 %v3704, %v3705
        %v3707 = vrot.slane %v3706, 1
        %v3708 = vadd.f32 %v3706, %v3707
        %v3709 = vrot.slane %v3702, 4
        %v3710 = vadd.f32 %v3702, %v3709
        %v3711 = vrot.slane %v3710, 2
        %v3712 = vadd.f32 %v3710, %v3711
        %v3713 = vrot.slane %v3712, 1
        %v3714 = vadd.f32 %v3712, %v3713
        %v3715 = vmul.f32 %v3708, 0.2
        %v3716 = vmul.f32 %v3714, 0.2
        %v3717 = vsub.f32 %v3701, %v3715
        %v3718 = vsub.f32 %v3702, %v3716
        %v3719 = vmul.f32 %v3717, 1.442695
        %v3720 = vpow.pop %v3719
        %v3721 = vmul.f32 %v3718, 1.442695
        %v3722 = vpow.pop %v3721
        %v3723 = vmul.f32 %v3720, %v3066
        %v3724 = vmul.f32 %v3722, %v3089
        %v3725 = vadd.f32 %v3723, %v3596
        %v3726 = vadd.f32 %v3724, %v3619
        %s3727 = scalar_lea.vmem %s7, 64
        %v3728 = vld [vmem:[%s3727] sm:$0xff]
        %v3729 = vld [vmem:[%s3727 + $0x8] sm:$0xff]
        %v3731 = vsel %vm427, %v3728, 0
        %v3734 = vsel %vm427, %v3729, 0
        %3736 = vmatpush.msra.mxu0 0.0
        %3737 = vmatpush.msra.mxu0 0.0
        %3738 = vmatpush.msra.mxu0 0.0
        %3739 = vmatpush.msra.mxu0 0.0
        %3740 = vmatpush.msra.mxu0 0.0
        %3741 = vmatpush.msra.mxu0 0.0
        %3742 = vmatpush.msra.mxu0 0.0
        %3743 = vmatpush.msra.mxu0 0.0
        %3744 = vmatpush.msra.mxu0 0.0
        %3745 = vmatpush.msra.mxu0 0.0
        %3746 = vmatpush.msra.mxu0 0.0
        %3747 = vmatpush.msra.mxu0 0.0
        %3748 = vmatpush.msra.mxu0 0.0
        %3749 = vmatpush.msra.mxu0 0.0
        %3750 = vmatpush.msra.mxu0 %v3725
        %3751 = vmatpush.msra.mxu0 %v3407
        %3752 = vmatmul.f32.gmra.mxu0 %v3731
        %v3753 = vpop.f32.mrf.mxu0
        %v3754 = vadd.f32 0.0, %v3753
        %3755 = vmatmul.f32.gmra.mxu0 %v3734
        %v3756 = vpop.f32.mrf.mxu0
        %v3757 = vadd.f32 0.0, %v3756
        %3758 = vdwg.mxu0
        %3759 = vmatpush.msra.mxu0 0.0
        %3760 = vmatpush.msra.mxu0 0.0
        %3761 = vmatpush.msra.mxu0 0.0
        %3762 = vmatpush.msra.mxu0 0.0
        %3763 = vmatpush.msra.mxu0 0.0
        %3764 = vmatpush.msra.mxu0 0.0
        %3765 = vmatpush.msra.mxu0 0.0
        %3766 = vmatpush.msra.mxu0 0.0
        %3767 = vmatpush.msra.mxu0 0.0
        %3768 = vmatpush.msra.mxu0 0.0
        %3769 = vmatpush.msra.mxu0 0.0
        %3770 = vmatpush.msra.mxu0 0.0
        %3771 = vmatpush.msra.mxu0 0.0
        %3772 = vmatpush.msra.mxu0 0.0
        %3773 = vmatpush.msra.mxu0 %v3726
        %3774 = vmatpush.msra.mxu0 %v3408
        %3775 = vmatmul.f32.gmra.mxu0 %v3731
        %v3776 = vpop.f32.mrf.mxu0
        %v3777 = vadd.f32 0.0, %v3776
        %3778 = vmatmul.f32.gmra.mxu0 %v3734
        %v3779 = vpop.f32.mrf.mxu0
        %v3780 = vadd.f32 0.0, %v3779
        %3781 = vdwg.mxu0
        %s3782 = scalar_lea.vmem %s1, 176
        %v3783 = vld [vmem:[%s3782] sm:$0xff]
        %v3784 = vld [vmem:[%s3782 + $0x8] sm:$0xff]
        %s3785 = scalar_lea.vmem %s2, 176
        %v3786 = vld [vmem:[%s3785] sm:$0xff]
        %v3787 = vld [vmem:[%s3785 + $0x8] sm:$0xff]
        %s3788 = scalar_lea.vmem %s3, 176
        %v3789 = vld [vmem:[%s3788] sm:$0xff]
        %v3790 = vld [vmem:[%s3788 + $0x8] sm:$0xff]
        %s3791 = scalar_lea.vmem %s4, 176
        %v3792 = vld [vmem:[%s3791] sm:$0xff]
        %v3793 = vld [vmem:[%s3791 + $0x8] sm:$0xff]
        %s3794 = scalar_lea.vmem %s5, 176
        %v3795 = vld [vmem:[%s3794] sm:$0xff]
        %v3796 = vld [vmem:[%s3794 + $0x8] sm:$0xff]
        %s3797 = scalar_lea.vmem %s6, 176
        %v3798 = vld [vmem:[%s3797] sm:$0xff]
        %v3799 = vld [vmem:[%s3797 + $0x8] sm:$0xff]
        %3801 = vset.pattern.permute.xlu0 0
        %3802 = vperm.xlu0 %3801, %v3786
        %v3803 = vpop.permute.xlu0 %3802
        %3806 = vset.pattern.permute.xlu0 0
        %3807 = vperm.xlu0 %3806, %v3787
        %v3808 = vpop.permute.xlu0 %3807
        %v3811 = vsel %vm360, %v3783, 0
        %v3814 = vsel %vm360, %v3784, 0
        %3816 = vmatpush.msra.mxu0 0.0
        %3817 = vmatpush.msra.mxu0 0.0
        %3818 = vmatpush.msra.mxu0 0.0
        %3819 = vmatpush.msra.mxu0 0.0
        %3820 = vmatpush.msra.mxu0 0.0
        %3821 = vmatpush.msra.mxu0 0.0
        %3822 = vmatpush.msra.mxu0 0.0
        %3823 = vmatpush.msra.mxu0 0.0
        %3824 = vmatpush.msra.mxu0 0.0
        %3825 = vmatpush.msra.mxu0 0.0
        %3826 = vmatpush.msra.mxu0 0.0
        %3827 = vmatpush.msra.mxu0 0.0
        %3828 = vmatpush.msra.mxu0 0.0
        %3829 = vmatpush.msra.mxu0 0.0
        %3830 = vmatpush.msra.mxu0 0.0
        %3831 = vmatpush.msra.mxu0 %v3757
        %3832 = vmatmul.f32.gmra.mxu0 %v3811
        %v3833 = vpop.f32.mrf.mxu0
        %v3834 = vadd.f32 %v3803, %v3833
        %3835 = vmatmul.f32.gmra.mxu0 %v3814
        %v3836 = vpop.f32.mrf.mxu0
        %v3837 = vadd.f32 %v3808, %v3836
        %3838 = vdwg.mxu0
        %3839 = vmatpush.msra.mxu0 0.0
        %3840 = vmatpush.msra.mxu0 0.0
        %3841 = vmatpush.msra.mxu0 0.0
        %3842 = vmatpush.msra.mxu0 0.0
        %3843 = vmatpush.msra.mxu0 0.0
        %3844 = vmatpush.msra.mxu0 0.0
        %3845 = vmatpush.msra.mxu0 0.0
        %3846 = vmatpush.msra.mxu0 0.0
        %3847 = vmatpush.msra.mxu0 0.0
        %3848 = vmatpush.msra.mxu0 0.0
        %3849 = vmatpush.msra.mxu0 0.0
        %3850 = vmatpush.msra.mxu0 0.0
        %3851 = vmatpush.msra.mxu0 0.0
        %3852 = vmatpush.msra.mxu0 0.0
        %3853 = vmatpush.msra.mxu0 0.0
        %3854 = vmatpush.msra.mxu0 %v3780
        %3855 = vmatmul.f32.gmra.mxu0 %v3811
        %v3856 = vpop.f32.mrf.mxu0
        %v3857 = vadd.f32 %v3803, %v3856
        %3858 = vmatmul.f32.gmra.mxu0 %v3814
        %v3859 = vpop.f32.mrf.mxu0
        %v3860 = vadd.f32 %v3808, %v3859
        %3861 = vdwg.mxu0
        %v3862 = vmax.f32 %v3834, 0.0
        %v3863 = vmax.f32 %v3857, 0.0
        %v3864 = vmax.f32 %v3837, 0.0
        %v3865 = vmax.f32 %v3860, 0.0
        %3867 = vset.pattern.permute.xlu0 0
        %3868 = vperm.xlu0 %3867, %v3792
        %v3869 = vpop.permute.xlu0 %3868
        %3872 = vset.pattern.permute.xlu0 0
        %3873 = vperm.xlu0 %3872, %v3793
        %v3874 = vpop.permute.xlu0 %3873
        %v3877 = vsel %vm427, %v3789, 0
        %v3880 = vsel %vm427, %v3790, 0
        %3882 = vmatpush.msra.mxu0 0.0
        %3883 = vmatpush.msra.mxu0 0.0
        %3884 = vmatpush.msra.mxu0 0.0
        %3885 = vmatpush.msra.mxu0 0.0
        %3886 = vmatpush.msra.mxu0 0.0
        %3887 = vmatpush.msra.mxu0 0.0
        %3888 = vmatpush.msra.mxu0 0.0
        %3889 = vmatpush.msra.mxu0 0.0
        %3890 = vmatpush.msra.mxu0 0.0
        %3891 = vmatpush.msra.mxu0 0.0
        %3892 = vmatpush.msra.mxu0 0.0
        %3893 = vmatpush.msra.mxu0 0.0
        %3894 = vmatpush.msra.mxu0 0.0
        %3895 = vmatpush.msra.mxu0 0.0
        %3896 = vmatpush.msra.mxu0 %v3864
        %3897 = vmatpush.msra.mxu0 %v3862
        %3898 = vmatmul.f32.gmra.mxu0 %v3877
        %v3899 = vpop.f32.mrf.mxu0
        %v3900 = vadd.f32 %v3869, %v3899
        %3901 = vmatmul.f32.gmra.mxu0 %v3880
        %v3902 = vpop.f32.mrf.mxu0
        %v3903 = vadd.f32 %v3874, %v3902
        %3904 = vdwg.mxu0
        %3905 = vmatpush.msra.mxu0 0.0
        %3906 = vmatpush.msra.mxu0 0.0
        %3907 = vmatpush.msra.mxu0 0.0
        %3908 = vmatpush.msra.mxu0 0.0
        %3909 = vmatpush.msra.mxu0 0.0
        %3910 = vmatpush.msra.mxu0 0.0
        %3911 = vmatpush.msra.mxu0 0.0
        %3912 = vmatpush.msra.mxu0 0.0
        %3913 = vmatpush.msra.mxu0 0.0
        %3914 = vmatpush.msra.mxu0 0.0
        %3915 = vmatpush.msra.mxu0 0.0
        %3916 = vmatpush.msra.mxu0 0.0
        %3917 = vmatpush.msra.mxu0 0.0
        %3918 = vmatpush.msra.mxu0 0.0
        %3919 = vmatpush.msra.mxu0 %v3865
        %3920 = vmatpush.msra.mxu0 %v3863
        %3921 = vmatmul.f32.gmra.mxu0 %v3877
        %v3922 = vpop.f32.mrf.mxu0
        %v3923 = vadd.f32 %v3869, %v3922
        %3924 = vmatmul.f32.gmra.mxu0 %v3880
        %v3925 = vpop.f32.mrf.mxu0
        %v3926 = vadd.f32 %v3874, %v3925
        %3927 = vdwg.mxu0
        %v3928 = vmax.f32 %v3900, 0.0
        %v3929 = vmax.f32 %v3923, 0.0
        %v3930 = vmax.f32 %v3903, 0.0
        %v3931 = vmax.f32 %v3926, 0.0
        %3933 = vset.pattern.permute.xlu0 0
        %3934 = vperm.xlu0 %3933, %v3798
        %v3935 = vpop.permute.xlu0 %3934
        %3938 = vset.pattern.permute.xlu0 0
        %3939 = vperm.xlu0 %3938, %v3799
        %v3940 = vpop.permute.xlu0 %3939
        %v3943 = vsel %vm427, %v3795, 0
        %v3946 = vsel %vm427, %v3796, 0
        %3948 = vmatpush.msra.mxu0 0.0
        %3949 = vmatpush.msra.mxu0 0.0
        %3950 = vmatpush.msra.mxu0 0.0
        %3951 = vmatpush.msra.mxu0 0.0
        %3952 = vmatpush.msra.mxu0 0.0
        %3953 = vmatpush.msra.mxu0 0.0
        %3954 = vmatpush.msra.mxu0 0.0
        %3955 = vmatpush.msra.mxu0 0.0
        %3956 = vmatpush.msra.mxu0 0.0
        %3957 = vmatpush.msra.mxu0 0.0
        %3958 = vmatpush.msra.mxu0 0.0
        %3959 = vmatpush.msra.mxu0 0.0
        %3960 = vmatpush.msra.mxu0 0.0
        %3961 = vmatpush.msra.mxu0 0.0
        %3962 = vmatpush.msra.mxu0 %v3930
        %3963 = vmatpush.msra.mxu0 %v3928
        %3964 = vmatmul.f32.gmra.mxu0 %v3943
        %v3965 = vpop.f32.mrf.mxu0
        %v3966 = vadd.f32 %v3935, %v3965
        %3967 = vmatmul.f32.gmra.mxu0 %v3946
        %v3968 = vpop.f32.mrf.mxu0
        %v3969 = vadd.f32 %v3940, %v3968
        %3970 = vdwg.mxu0
        %3971 = vmatpush.msra.mxu0 0.0
        %3972 = vmatpush.msra.mxu0 0.0
        %3973 = vmatpush.msra.mxu0 0.0
        %3974 = vmatpush.msra.mxu0 0.0
        %3975 = vmatpush.msra.mxu0 0.0
        %3976 = vmatpush.msra.mxu0 0.0
        %3977 = vmatpush.msra.mxu0 0.0
        %3978 = vmatpush.msra.mxu0 0.0
        %3979 = vmatpush.msra.mxu0 0.0
        %3980 = vmatpush.msra.mxu0 0.0
        %3981 = vmatpush.msra.mxu0 0.0
        %3982 = vmatpush.msra.mxu0 0.0
        %3983 = vmatpush.msra.mxu0 0.0
        %3984 = vmatpush.msra.mxu0 0.0
        %3985 = vmatpush.msra.mxu0 %v3931
        %3986 = vmatpush.msra.mxu0 %v3929
        %3987 = vmatmul.f32.gmra.mxu0 %v3943
        %v3988 = vpop.f32.mrf.mxu0
        %v3989 = vadd.f32 %v3935, %v3988
        %3990 = vmatmul.f32.gmra.mxu0 %v3946
        %v3991 = vpop.f32.mrf.mxu0
        %v3992 = vadd.f32 %v3940, %v3991
        %3993 = vdwg.mxu0
        %vm3994 = vcmp.lt.f32.partialorder %v3966, 0.0
        %vm3995 = vcmp.lt.f32.partialorder %v3989, 0.0
        %v3996 = vsel %vm3994, -1.0, 1.0
        %v3997 = vsel %vm3995, -1.0, 1.0
        %v3998 = vand.u32 2147483647, %v3966
        %v3999 = vand.u32 2147483647, %v3989
        %vm4000 = vcmp.gt.f32.partialorder %v3998, 2.4142137
        %vm4001 = vcmp.gt.f32.partialorder %v3999, 2.4142137
        %vm4002 = vcmp.gt.f32.partialorder %v3998, 0.41421357
        %vm4003 = vcmp.gt.f32.partialorder %v3999, 0.41421357
        %v4004 = vsub.f32 %v3998, 1.0
        %v4005 = vsub.f32 %v3999, 1.0
        %v4006 = vsel %vm4002, %v4004, %v3998
        %v4007 = vsel %vm4003, %v4005, %v3999
        %v4008 = vsel %vm4000, -1.0, %v4006
        %v4009 = vsel %vm4001, -1.0, %v4007
        %v4010 = vadd.f32 %v3998, 1.0
        %v4011 = vadd.f32 %v3999, 1.0
        %v4012 = vsel %vm4002, %v4010, 1.0
        %v4013 = vsel %vm4003, %v4011, 1.0
        %v4014 = vsel %vm4000, %v3998, %v4012
        %v4015 = vsel %vm4001, %v3999, %v4013
        %v4016 = vrcp.pop %v4014
        %v4017 = vmul.f32 %v4014, %v4016
        %v4018 = vsub.f32 1.0, %v4017
        %v4019 = vmul.f32 %v4016, %v4018
        %v4020 = vadd.f32 %v4016, %v4019
        %vm4021 = vweird.f32 %v4014
        %vm4022 = vweird.f32 %v4016
        %vm4023 = vmor %vm4021, %vm4022
        %v4024 = vsel %vm4023, %v4016, %v4020
        %v4025 = vand.u32 2147483647, %v4014
        %vm4026 = vcmp.eq.f32.partialorder %v4025, 8.507059e+37
        %v4027 = vand.u32 %v4014, 2147483648
        %v4028 = vor.u32 1.1754944e-38, %v4027
        %v4029 = vsel %vm4026, %v4028, %v4024
        %v4030 = vmul.f32 %v4008, %v4029
        %v4031 = vrcp.pop %v4015
        %v4032 = vmul.f32 %v4015, %v4031
        %v4033 = vsub.f32 1.0, %v4032
        %v4034 = vmul.f32 %v4031, %v4033
        %v4035 = vadd.f32 %v4031, %v4034
        %vm4036 = vweird.f32 %v4015
        %vm4037 = vweird.f32 %v4031
        %vm4038 = vmor %vm4036, %vm4037
        %v4039 = vsel %vm4038, %v4031, %v4035
        %v4040 = vand.u32 2147483647, %v4015
        %vm4041 = vcmp.eq.f32.partialorder %v4040, 8.507059e+37
        %v4042 = vand.u32 %v4015, 2147483648
        %v4043 = vor.u32 1.1754944e-38, %v4042
        %v4044 = vsel %vm4041, %v4043, %v4039
        %v4045 = vmul.f32 %v4009, %v4044
        %v4046 = vsel %vm4002, 0.7853982, 0.0
        %v4047 = vsel %vm4003, 0.7853982, 0.0
        %v4048 = vsel %vm4000, 1.5707964, %v4046
        %v4049 = vsel %vm4001, 1.5707964, %v4047
        %v4050 = vmul.f32 %v4030, %v4030
        %v4051 = vmul.f32 %v4045, %v4045
        %v4052 = vmul.f32 %v4050, 0.080537446
        %v4053 = vmul.f32 %v4051, 0.080537446
        %v4054 = vsub.f32 %v4052, 0.13877685
        %v4055 = vsub.f32 %v4053, 0.13877685
        %v4056 = vmul.f32 %v4054, %v4050
        %v4057 = vmul.f32 %v4055, %v4051
        %v4058 = vadd.f32 %v4056, 0.19977711
        %v4059 = vadd.f32 %v4057, 0.19977711
        %v4060 = vmul.f32 %v4058, %v4050
        %v4061 = vmul.f32 %v4059, %v4051
        %v4062 = vsub.f32 %v4060, 0.3333295
        %v4063 = vsub.f32 %v4061, 0.3333295
        %v4064 = vadd.f32 %v4048, %v4030
        %v4065 = vadd.f32 %v4049, %v4045
        %v4066 = vmul.f32 %v4030, %v4050
        %v4067 = vmul.f32 %v4045, %v4051
        %v4068 = vmul.f32 %v4066, %v4062
        %v4069 = vmul.f32 %v4067, %v4063
        %v4070 = vadd.f32 %v4064, %v4068
        %v4071 = vadd.f32 %v4065, %v4069
        %v4072 = vmul.f32 %v3996, %v4070
        %v4073 = vmul.f32 %v3997, %v4071
        %v4074 = vmul.f32 %v4072, 1.272
        %v4075 = vmul.f32 %v4073, 1.272
        %v4076 = vrot.slane %v4074, 4
        %v4077 = vadd.f32 %v4074, %v4076
        %v4078 = vrot.slane %v4077, 2
        %v4079 = vadd.f32 %v4077, %v4078
        %v4080 = vrot.slane %v4079, 1
        %v4081 = vadd.f32 %v4079, %v4080
        %v4082 = vrot.slane %v4075, 4
        %v4083 = vadd.f32 %v4075, %v4082
        %v4084 = vrot.slane %v4083, 2
        %v4085 = vadd.f32 %v4083, %v4084
        %v4086 = vrot.slane %v4085, 1
        %v4087 = vadd.f32 %v4085, %v4086
        %v4088 = vmul.f32 %v4081, 0.2
        %v4089 = vmul.f32 %v4087, 0.2
        %v4090 = vsub.f32 %v4074, %v4088
        %v4091 = vsub.f32 %v4075, %v4089
        %v4092 = vmul.f32 %v4090, 1.442695
        %v4093 = vpow.pop %v4092
        %v4094 = vmul.f32 %v4091, 1.442695
        %v4095 = vpow.pop %v4094
        %v4096 = vmul.f32 %v4093, %v3754
        %v4097 = vmul.f32 %v4095, %v3777
        %v4098 = vadd.f32 %v4096, %v3969
        %v4099 = vadd.f32 %v4097, %v3992
        %s4100 = scalar_lea.vmem %s1, 160
        %v4101 = vld [vmem:[%s4100] sm:$0xff]
        %v4102 = vld [vmem:[%s4100 + $0x8] sm:$0xff]
        %s4103 = scalar_lea.vmem %s2, 160
        %v4104 = vld [vmem:[%s4103] sm:$0xff]
        %v4105 = vld [vmem:[%s4103 + $0x8] sm:$0xff]
        %s4106 = scalar_lea.vmem %s3, 160
        %v4107 = vld [vmem:[%s4106] sm:$0xff]
        %v4108 = vld [vmem:[%s4106 + $0x8] sm:$0xff]
        %s4109 = scalar_lea.vmem %s4, 160
        %v4110 = vld [vmem:[%s4109] sm:$0xff]
        %v4111 = vld [vmem:[%s4109 + $0x8] sm:$0xff]
        %s4112 = scalar_lea.vmem %s5, 160
        %v4113 = vld [vmem:[%s4112] sm:$0xff]
        %v4114 = vld [vmem:[%s4112 + $0x8] sm:$0xff]
        %s4115 = scalar_lea.vmem %s6, 160
        %v4116 = vld [vmem:[%s4115] sm:$0xff]
        %v4117 = vld [vmem:[%s4115 + $0x8] sm:$0xff]
        %4119 = vset.pattern.permute.xlu0 0
        %4120 = vperm.xlu0 %4119, %v4104
        %v4121 = vpop.permute.xlu0 %4120
        %4124 = vset.pattern.permute.xlu0 0
        %4125 = vperm.xlu0 %4124, %v4105
        %v4126 = vpop.permute.xlu0 %4125
        %v4129 = vsel %vm360, %v4101, 0
        %v4132 = vsel %vm360, %v4102, 0
        %4134 = vmatpush.msra.mxu0 0.0
        %4135 = vmatpush.msra.mxu0 0.0
        %4136 = vmatpush.msra.mxu0 0.0
        %4137 = vmatpush.msra.mxu0 0.0
        %4138 = vmatpush.msra.mxu0 0.0
        %4139 = vmatpush.msra.mxu0 0.0
        %4140 = vmatpush.msra.mxu0 0.0
        %4141 = vmatpush.msra.mxu0 0.0
        %4142 = vmatpush.msra.mxu0 0.0
        %4143 = vmatpush.msra.mxu0 0.0
        %4144 = vmatpush.msra.mxu0 0.0
        %4145 = vmatpush.msra.mxu0 0.0
        %4146 = vmatpush.msra.mxu0 0.0
        %4147 = vmatpush.msra.mxu0 0.0
        %4148 = vmatpush.msra.mxu0 0.0
        %4149 = vmatpush.msra.mxu0 %v4098
        %4150 = vmatmul.f32.gmra.mxu0 %v4129
        %v4151 = vpop.f32.mrf.mxu0
        %v4152 = vadd.f32 %v4121, %v4151
        %4153 = vmatmul.f32.gmra.mxu0 %v4132
        %v4154 = vpop.f32.mrf.mxu0
        %v4155 = vadd.f32 %v4126, %v4154
        %4156 = vdwg.mxu0
        %4157 = vmatpush.msra.mxu0 0.0
        %4158 = vmatpush.msra.mxu0 0.0
        %4159 = vmatpush.msra.mxu0 0.0
        %4160 = vmatpush.msra.mxu0 0.0
        %4161 = vmatpush.msra.mxu0 0.0
        %4162 = vmatpush.msra.mxu0 0.0
        %4163 = vmatpush.msra.mxu0 0.0
        %4164 = vmatpush.msra.mxu0 0.0
        %4165 = vmatpush.msra.mxu0 0.0
        %4166 = vmatpush.msra.mxu0 0.0
        %4167 = vmatpush.msra.mxu0 0.0
        %4168 = vmatpush.msra.mxu0 0.0
        %4169 = vmatpush.msra.mxu0 0.0
        %4170 = vmatpush.msra.mxu0 0.0
        %4171 = vmatpush.msra.mxu0 0.0
        %4172 = vmatpush.msra.mxu0 %v4099
        %4173 = vmatmul.f32.gmra.mxu0 %v4129
        %v4174 = vpop.f32.mrf.mxu0
        %v4175 = vadd.f32 %v4121, %v4174
        %4176 = vmatmul.f32.gmra.mxu0 %v4132
        %v4177 = vpop.f32.mrf.mxu0
        %v4178 = vadd.f32 %v4126, %v4177
        %4179 = vdwg.mxu0
        %v4180 = vmax.f32 %v4152, 0.0
        %v4181 = vmax.f32 %v4175, 0.0
        %v4182 = vmax.f32 %v4155, 0.0
        %v4183 = vmax.f32 %v4178, 0.0
        %4185 = vset.pattern.permute.xlu0 0
        %4186 = vperm.xlu0 %4185, %v4110
        %v4187 = vpop.permute.xlu0 %4186
        %4190 = vset.pattern.permute.xlu0 0
        %4191 = vperm.xlu0 %4190, %v4111
        %v4192 = vpop.permute.xlu0 %4191
        %v4195 = vsel %vm427, %v4107, 0
        %v4198 = vsel %vm427, %v4108, 0
        %4200 = vmatpush.msra.mxu0 0.0
        %4201 = vmatpush.msra.mxu0 0.0
        %4202 = vmatpush.msra.mxu0 0.0
        %4203 = vmatpush.msra.mxu0 0.0
        %4204 = vmatpush.msra.mxu0 0.0
        %4205 = vmatpush.msra.mxu0 0.0
        %4206 = vmatpush.msra.mxu0 0.0
        %4207 = vmatpush.msra.mxu0 0.0
        %4208 = vmatpush.msra.mxu0 0.0
        %4209 = vmatpush.msra.mxu0 0.0
        %4210 = vmatpush.msra.mxu0 0.0
        %4211 = vmatpush.msra.mxu0 0.0
        %4212 = vmatpush.msra.mxu0 0.0
        %4213 = vmatpush.msra.mxu0 0.0
        %4214 = vmatpush.msra.mxu0 %v4182
        %4215 = vmatpush.msra.mxu0 %v4180
        %4216 = vmatmul.f32.gmra.mxu0 %v4195
        %v4217 = vpop.f32.mrf.mxu0
        %v4218 = vadd.f32 %v4187, %v4217
        %4219 = vmatmul.f32.gmra.mxu0 %v4198
        %v4220 = vpop.f32.mrf.mxu0
        %v4221 = vadd.f32 %v4192, %v4220
        %4222 = vdwg.mxu0
        %4223 = vmatpush.msra.mxu0 0.0
        %4224 = vmatpush.msra.mxu0 0.0
        %4225 = vmatpush.msra.mxu0 0.0
        %4226 = vmatpush.msra.mxu0 0.0
        %4227 = vmatpush.msra.mxu0 0.0
        %4228 = vmatpush.msra.mxu0 0.0
        %4229 = vmatpush.msra.mxu0 0.0
        %4230 = vmatpush.msra.mxu0 0.0
        %4231 = vmatpush.msra.mxu0 0.0
        %4232 = vmatpush.msra.mxu0 0.0
        %4233 = vmatpush.msra.mxu0 0.0
        %4234 = vmatpush.msra.mxu0 0.0
        %4235 = vmatpush.msra.mxu0 0.0
        %4236 = vmatpush.msra.mxu0 0.0
        %4237 = vmatpush.msra.mxu0 %v4183
        %4238 = vmatpush.msra.mxu0 %v4181
        %4239 = vmatmul.f32.gmra.mxu0 %v4195
        %v4240 = vpop.f32.mrf.mxu0
        %v4241 = vadd.f32 %v4187, %v4240
        %4242 = vmatmul.f32.gmra.mxu0 %v4198
        %v4243 = vpop.f32.mrf.mxu0
        %v4244 = vadd.f32 %v4192, %v4243
        %4245 = vdwg.mxu0
        %v4246 = vmax.f32 %v4218, 0.0
        %v4247 = vmax.f32 %v4241, 0.0
        %v4248 = vmax.f32 %v4221, 0.0
        %v4249 = vmax.f32 %v4244, 0.0
        %4251 = vset.pattern.permute.xlu0 0
        %4252 = vperm.xlu0 %4251, %v4116
        %v4253 = vpop.permute.xlu0 %4252
        %4256 = vset.pattern.permute.xlu0 0
        %4257 = vperm.xlu0 %4256, %v4117
        %v4258 = vpop.permute.xlu0 %4257
        %v4261 = vsel %vm427, %v4113, 0
        %v4264 = vsel %vm427, %v4114, 0
        %4266 = vmatpush.msra.mxu0 0.0
        %4267 = vmatpush.msra.mxu0 0.0
        %4268 = vmatpush.msra.mxu0 0.0
        %4269 = vmatpush.msra.mxu0 0.0
        %4270 = vmatpush.msra.mxu0 0.0
        %4271 = vmatpush.msra.mxu0 0.0
        %4272 = vmatpush.msra.mxu0 0.0
        %4273 = vmatpush.msra.mxu0 0.0
        %4274 = vmatpush.msra.mxu0 0.0
        %4275 = vmatpush.msra.mxu0 0.0
        %4276 = vmatpush.msra.mxu0 0.0
        %4277 = vmatpush.msra.mxu0 0.0
        %4278 = vmatpush.msra.mxu0 0.0
        %4279 = vmatpush.msra.mxu0 0.0
        %4280 = vmatpush.msra.mxu0 %v4248
        %4281 = vmatpush.msra.mxu0 %v4246
        %4282 = vmatmul.f32.gmra.mxu0 %v4261
        %v4283 = vpop.f32.mrf.mxu0
        %v4284 = vadd.f32 %v4253, %v4283
        %4285 = vmatmul.f32.gmra.mxu0 %v4264
        %v4286 = vpop.f32.mrf.mxu0
        %v4287 = vadd.f32 %v4258, %v4286
        %4288 = vdwg.mxu0
        %4289 = vmatpush.msra.mxu0 0.0
        %4290 = vmatpush.msra.mxu0 0.0
        %4291 = vmatpush.msra.mxu0 0.0
        %4292 = vmatpush.msra.mxu0 0.0
        %4293 = vmatpush.msra.mxu0 0.0
        %4294 = vmatpush.msra.mxu0 0.0
        %4295 = vmatpush.msra.mxu0 0.0
        %4296 = vmatpush.msra.mxu0 0.0
        %4297 = vmatpush.msra.mxu0 0.0
        %4298 = vmatpush.msra.mxu0 0.0
        %4299 = vmatpush.msra.mxu0 0.0
        %4300 = vmatpush.msra.mxu0 0.0
        %4301 = vmatpush.msra.mxu0 0.0
        %4302 = vmatpush.msra.mxu0 0.0
        %4303 = vmatpush.msra.mxu0 %v4249
        %4304 = vmatpush.msra.mxu0 %v4247
        %4305 = vmatmul.f32.gmra.mxu0 %v4261
        %v4306 = vpop.f32.mrf.mxu0
        %v4307 = vadd.f32 %v4253, %v4306
        %4308 = vmatmul.f32.gmra.mxu0 %v4264
        %v4309 = vpop.f32.mrf.mxu0
        %v4310 = vadd.f32 %v4258, %v4309
        %4311 = vdwg.mxu0
        %vm4312 = vcmp.lt.f32.partialorder %v4284, 0.0
        %vm4313 = vcmp.lt.f32.partialorder %v4307, 0.0
        %v4314 = vsel %vm4312, -1.0, 1.0
        %v4315 = vsel %vm4313, -1.0, 1.0
        %v4316 = vand.u32 2147483647, %v4284
        %v4317 = vand.u32 2147483647, %v4307
        %vm4318 = vcmp.gt.f32.partialorder %v4316, 2.4142137
        %vm4319 = vcmp.gt.f32.partialorder %v4317, 2.4142137
        %vm4320 = vcmp.gt.f32.partialorder %v4316, 0.41421357
        %vm4321 = vcmp.gt.f32.partialorder %v4317, 0.41421357
        %v4322 = vsub.f32 %v4316, 1.0
        %v4323 = vsub.f32 %v4317, 1.0
        %v4324 = vsel %vm4320, %v4322, %v4316
        %v4325 = vsel %vm4321, %v4323, %v4317
        %v4326 = vsel %vm4318, -1.0, %v4324
        %v4327 = vsel %vm4319, -1.0, %v4325
        %v4328 = vadd.f32 %v4316, 1.0
        %v4329 = vadd.f32 %v4317, 1.0
        %v4330 = vsel %vm4320, %v4328, 1.0
        %v4331 = vsel %vm4321, %v4329, 1.0
        %v4332 = vsel %vm4318, %v4316, %v4330
        %v4333 = vsel %vm4319, %v4317, %v4331
        %v4334 = vrcp.pop %v4332
        %v4335 = vmul.f32 %v4332, %v4334
        %v4336 = vsub.f32 1.0, %v4335
        %v4337 = vmul.f32 %v4334, %v4336
        %v4338 = vadd.f32 %v4334, %v4337
        %vm4339 = vweird.f32 %v4332
        %vm4340 = vweird.f32 %v4334
        %vm4341 = vmor %vm4339, %vm4340
        %v4342 = vsel %vm4341, %v4334, %v4338
        %v4343 = vand.u32 2147483647, %v4332
        %vm4344 = vcmp.eq.f32.partialorder %v4343, 8.507059e+37
        %v4345 = vand.u32 %v4332, 2147483648
        %v4346 = vor.u32 1.1754944e-38, %v4345
        %v4347 = vsel %vm4344, %v4346, %v4342
        %v4348 = vmul.f32 %v4326, %v4347
        %v4349 = vrcp.pop %v4333
        %v4350 = vmul.f32 %v4333, %v4349
        %v4351 = vsub.f32 1.0, %v4350
        %v4352 = vmul.f32 %v4349, %v4351
        %v4353 = vadd.f32 %v4349, %v4352
        %vm4354 = vweird.f32 %v4333
        %vm4355 = vweird.f32 %v4349
        %vm4356 = vmor %vm4354, %vm4355
        %v4357 = vsel %vm4356, %v4349, %v4353
        %v4358 = vand.u32 2147483647, %v4333
        %vm4359 = vcmp.eq.f32.partialorder %v4358, 8.507059e+37
        %v4360 = vand.u32 %v4333, 2147483648
        %v4361 = vor.u32 1.1754944e-38, %v4360
        %v4362 = vsel %vm4359, %v4361, %v4357
        %v4363 = vmul.f32 %v4327, %v4362
        %v4364 = vsel %vm4320, 0.7853982, 0.0
        %v4365 = vsel %vm4321, 0.7853982, 0.0
        %v4366 = vsel %vm4318, 1.5707964, %v4364
        %v4367 = vsel %vm4319, 1.5707964, %v4365
        %v4368 = vmul.f32 %v4348, %v4348
        %v4369 = vmul.f32 %v4363, %v4363
        %v4370 = vmul.f32 %v4368, 0.080537446
        %v4371 = vmul.f32 %v4369, 0.080537446
        %v4372 = vsub.f32 %v4370, 0.13877685
        %v4373 = vsub.f32 %v4371, 0.13877685
        %v4374 = vmul.f32 %v4372, %v4368
        %v4375 = vmul.f32 %v4373, %v4369
        %v4376 = vadd.f32 %v4374, 0.19977711
        %v4377 = vadd.f32 %v4375, 0.19977711
        %v4378 = vmul.f32 %v4376, %v4368
        %v4379 = vmul.f32 %v4377, %v4369
        %v4380 = vsub.f32 %v4378, 0.3333295
        %v4381 = vsub.f32 %v4379, 0.3333295
        %v4382 = vadd.f32 %v4366, %v4348
        %v4383 = vadd.f32 %v4367, %v4363
        %v4384 = vmul.f32 %v4348, %v4368
        %v4385 = vmul.f32 %v4363, %v4369
        %v4386 = vmul.f32 %v4384, %v4380
        %v4387 = vmul.f32 %v4385, %v4381
        %v4388 = vadd.f32 %v4382, %v4386
        %v4389 = vadd.f32 %v4383, %v4387
        %v4390 = vmul.f32 %v4314, %v4388
        %v4391 = vmul.f32 %v4315, %v4389
        %v4392 = vmul.f32 %v4390, 1.272
        %v4393 = vmul.f32 %v4391, 1.272
        %v4394 = vrot.slane %v4392, 4
        %v4395 = vadd.f32 %v4392, %v4394
        %v4396 = vrot.slane %v4395, 2
        %v4397 = vadd.f32 %v4395, %v4396
        %v4398 = vrot.slane %v4397, 1
        %v4399 = vadd.f32 %v4397, %v4398
        %v4400 = vrot.slane %v4393, 4
        %v4401 = vadd.f32 %v4393, %v4400
        %v4402 = vrot.slane %v4401, 2
        %v4403 = vadd.f32 %v4401, %v4402
        %v4404 = vrot.slane %v4403, 1
        %v4405 = vadd.f32 %v4403, %v4404
        %v4406 = vmul.f32 %v4399, 0.2
        %v4407 = vmul.f32 %v4405, 0.2
        %v4408 = vsub.f32 %v4392, %v4406
        %v4409 = vsub.f32 %v4393, %v4407
        %v4410 = vmul.f32 %v4408, 1.442695
        %v4411 = vpow.pop %v4410
        %v4412 = vmul.f32 %v4409, 1.442695
        %v4413 = vpow.pop %v4412
        %v4414 = vmul.f32 %v4411, %v3757
        %v4415 = vmul.f32 %v4413, %v3780
        %v4416 = vadd.f32 %v4414, %v4287
        %v4417 = vadd.f32 %v4415, %v4310
        %s4418 = scalar_lea.vmem %s7, 80
        %v4419 = vld [vmem:[%s4418] sm:$0xff]
        %v4420 = vld [vmem:[%s4418 + $0x8] sm:$0xff]
        %v4422 = vsel %vm427, %v4419, 0
        %v4425 = vsel %vm427, %v4420, 0
        %4427 = vmatpush.msra.mxu0 0.0
        %4428 = vmatpush.msra.mxu0 0.0
        %4429 = vmatpush.msra.mxu0 0.0
        %4430 = vmatpush.msra.mxu0 0.0
        %4431 = vmatpush.msra.mxu0 0.0
        %4432 = vmatpush.msra.mxu0 0.0
        %4433 = vmatpush.msra.mxu0 0.0
        %4434 = vmatpush.msra.mxu0 0.0
        %4435 = vmatpush.msra.mxu0 0.0
        %4436 = vmatpush.msra.mxu0 0.0
        %4437 = vmatpush.msra.mxu0 0.0
        %4438 = vmatpush.msra.mxu0 0.0
        %4439 = vmatpush.msra.mxu0 0.0
        %4440 = vmatpush.msra.mxu0 0.0
        %4441 = vmatpush.msra.mxu0 %v4416
        %4442 = vmatpush.msra.mxu0 %v4098
        %4443 = vmatmul.f32.gmra.mxu0 %v4422
        %v4444 = vpop.f32.mrf.mxu0
        %v4445 = vadd.f32 0.0, %v4444
        %4446 = vmatmul.f32.gmra.mxu0 %v4425
        %v4447 = vpop.f32.mrf.mxu0
        %v4448 = vadd.f32 0.0, %v4447
        %4449 = vdwg.mxu0
        %4450 = vmatpush.msra.mxu0 0.0
        %4451 = vmatpush.msra.mxu0 0.0
        %4452 = vmatpush.msra.mxu0 0.0
        %4453 = vmatpush.msra.mxu0 0.0
        %4454 = vmatpush.msra.mxu0 0.0
        %4455 = vmatpush.msra.mxu0 0.0
        %4456 = vmatpush.msra.mxu0 0.0
        %4457 = vmatpush.msra.mxu0 0.0
        %4458 = vmatpush.msra.mxu0 0.0
        %4459 = vmatpush.msra.mxu0 0.0
        %4460 = vmatpush.msra.mxu0 0.0
        %4461 = vmatpush.msra.mxu0 0.0
        %4462 = vmatpush.msra.mxu0 0.0
        %4463 = vmatpush.msra.mxu0 0.0
        %4464 = vmatpush.msra.mxu0 %v4417
        %4465 = vmatpush.msra.mxu0 %v4099
        %4466 = vmatmul.f32.gmra.mxu0 %v4422
        %v4467 = vpop.f32.mrf.mxu0
        %v4468 = vadd.f32 0.0, %v4467
        %4469 = vmatmul.f32.gmra.mxu0 %v4425
        %v4470 = vpop.f32.mrf.mxu0
        %v4471 = vadd.f32 0.0, %v4470
        %4472 = vdwg.mxu0
        %s4473 = scalar_lea.vmem %s1, 208
        %v4474 = vld [vmem:[%s4473] sm:$0xff]
        %v4475 = vld [vmem:[%s4473 + $0x8] sm:$0xff]
        %s4476 = scalar_lea.vmem %s2, 208
        %v4477 = vld [vmem:[%s4476] sm:$0xff]
        %v4478 = vld [vmem:[%s4476 + $0x8] sm:$0xff]
        %s4479 = scalar_lea.vmem %s3, 208
        %v4480 = vld [vmem:[%s4479] sm:$0xff]
        %v4481 = vld [vmem:[%s4479 + $0x8] sm:$0xff]
        %s4482 = scalar_lea.vmem %s4, 208
        %v4483 = vld [vmem:[%s4482] sm:$0xff]
        %v4484 = vld [vmem:[%s4482 + $0x8] sm:$0xff]
        %s4485 = scalar_lea.vmem %s5, 208
        %v4486 = vld [vmem:[%s4485] sm:$0xff]
        %v4487 = vld [vmem:[%s4485 + $0x8] sm:$0xff]
        %s4488 = scalar_lea.vmem %s6, 208
        %v4489 = vld [vmem:[%s4488] sm:$0xff]
        %v4490 = vld [vmem:[%s4488 + $0x8] sm:$0xff]
        %4492 = vset.pattern.permute.xlu0 0
        %4493 = vperm.xlu0 %4492, %v4477
        %v4494 = vpop.permute.xlu0 %4493
        %4497 = vset.pattern.permute.xlu0 0
        %4498 = vperm.xlu0 %4497, %v4478
        %v4499 = vpop.permute.xlu0 %4498
        %v4502 = vsel %vm360, %v4474, 0
        %v4505 = vsel %vm360, %v4475, 0
        %4507 = vmatpush.msra.mxu0 0.0
        %4508 = vmatpush.msra.mxu0 0.0
        %4509 = vmatpush.msra.mxu0 0.0
        %4510 = vmatpush.msra.mxu0 0.0
        %4511 = vmatpush.msra.mxu0 0.0
        %4512 = vmatpush.msra.mxu0 0.0
        %4513 = vmatpush.msra.mxu0 0.0
        %4514 = vmatpush.msra.mxu0 0.0
        %4515 = vmatpush.msra.mxu0 0.0
        %4516 = vmatpush.msra.mxu0 0.0
        %4517 = vmatpush.msra.mxu0 0.0
        %4518 = vmatpush.msra.mxu0 0.0
        %4519 = vmatpush.msra.mxu0 0.0
        %4520 = vmatpush.msra.mxu0 0.0
        %4521 = vmatpush.msra.mxu0 0.0
        %4522 = vmatpush.msra.mxu0 %v4448
        %4523 = vmatmul.f32.gmra.mxu0 %v4502
        %v4524 = vpop.f32.mrf.mxu0
        %v4525 = vadd.f32 %v4494, %v4524
        %4526 = vmatmul.f32.gmra.mxu0 %v4505
        %v4527 = vpop.f32.mrf.mxu0
        %v4528 = vadd.f32 %v4499, %v4527
        %4529 = vdwg.mxu0
        %4530 = vmatpush.msra.mxu0 0.0
        %4531 = vmatpush.msra.mxu0 0.0
        %4532 = vmatpush.msra.mxu0 0.0
        %4533 = vmatpush.msra.mxu0 0.0
        %4534 = vmatpush.msra.mxu0 0.0
        %4535 = vmatpush.msra.mxu0 0.0
        %4536 = vmatpush.msra.mxu0 0.0
        %4537 = vmatpush.msra.mxu0 0.0
        %4538 = vmatpush.msra.mxu0 0.0
        %4539 = vmatpush.msra.mxu0 0.0
        %4540 = vmatpush.msra.mxu0 0.0
        %4541 = vmatpush.msra.mxu0 0.0
        %4542 = vmatpush.msra.mxu0 0.0
        %4543 = vmatpush.msra.mxu0 0.0
        %4544 = vmatpush.msra.mxu0 0.0
        %4545 = vmatpush.msra.mxu0 %v4471
        %4546 = vmatmul.f32.gmra.mxu0 %v4502
        %v4547 = vpop.f32.mrf.mxu0
        %v4548 = vadd.f32 %v4494, %v4547
        %4549 = vmatmul.f32.gmra.mxu0 %v4505
        %v4550 = vpop.f32.mrf.mxu0
        %v4551 = vadd.f32 %v4499, %v4550
        %4552 = vdwg.mxu0
        %v4553 = vmax.f32 %v4525, 0.0
        %v4554 = vmax.f32 %v4548, 0.0
        %v4555 = vmax.f32 %v4528, 0.0
        %v4556 = vmax.f32 %v4551, 0.0
        %4558 = vset.pattern.permute.xlu0 0
        %4559 = vperm.xlu0 %4558, %v4483
        %v4560 = vpop.permute.xlu0 %4559
        %4563 = vset.pattern.permute.xlu0 0
        %4564 = vperm.xlu0 %4563, %v4484
        %v4565 = vpop.permute.xlu0 %4564
        %v4568 = vsel %vm427, %v4480, 0
        %v4571 = vsel %vm427, %v4481, 0
        %4573 = vmatpush.msra.mxu0 0.0
        %4574 = vmatpush.msra.mxu0 0.0
        %4575 = vmatpush.msra.mxu0 0.0
        %4576 = vmatpush.msra.mxu0 0.0
        %4577 = vmatpush.msra.mxu0 0.0
        %4578 = vmatpush.msra.mxu0 0.0
        %4579 = vmatpush.msra.mxu0 0.0
        %4580 = vmatpush.msra.mxu0 0.0
        %4581 = vmatpush.msra.mxu0 0.0
        %4582 = vmatpush.msra.mxu0 0.0
        %4583 = vmatpush.msra.mxu0 0.0
        %4584 = vmatpush.msra.mxu0 0.0
        %4585 = vmatpush.msra.mxu0 0.0
        %4586 = vmatpush.msra.mxu0 0.0
        %4587 = vmatpush.msra.mxu0 %v4555
        %4588 = vmatpush.msra.mxu0 %v4553
        %4589 = vmatmul.f32.gmra.mxu0 %v4568
        %v4590 = vpop.f32.mrf.mxu0
        %v4591 = vadd.f32 %v4560, %v4590
        %4592 = vmatmul.f32.gmra.mxu0 %v4571
        %v4593 = vpop.f32.mrf.mxu0
        %v4594 = vadd.f32 %v4565, %v4593
        %4595 = vdwg.mxu0
        %4596 = vmatpush.msra.mxu0 0.0
        %4597 = vmatpush.msra.mxu0 0.0
        %4598 = vmatpush.msra.mxu0 0.0
        %4599 = vmatpush.msra.mxu0 0.0
        %4600 = vmatpush.msra.mxu0 0.0
        %4601 = vmatpush.msra.mxu0 0.0
        %4602 = vmatpush.msra.mxu0 0.0
        %4603 = vmatpush.msra.mxu0 0.0
        %4604 = vmatpush.msra.mxu0 0.0
        %4605 = vmatpush.msra.mxu0 0.0
        %4606 = vmatpush.msra.mxu0 0.0
        %4607 = vmatpush.msra.mxu0 0.0
        %4608 = vmatpush.msra.mxu0 0.0
        %4609 = vmatpush.msra.mxu0 0.0
        %4610 = vmatpush.msra.mxu0 %v4556
        %4611 = vmatpush.msra.mxu0 %v4554
        %4612 = vmatmul.f32.gmra.mxu0 %v4568
        %v4613 = vpop.f32.mrf.mxu0
        %v4614 = vadd.f32 %v4560, %v4613
        %4615 = vmatmul.f32.gmra.mxu0 %v4571
        %v4616 = vpop.f32.mrf.mxu0
        %v4617 = vadd.f32 %v4565, %v4616
        %4618 = vdwg.mxu0
        %v4619 = vmax.f32 %v4591, 0.0
        %v4620 = vmax.f32 %v4614, 0.0
        %v4621 = vmax.f32 %v4594, 0.0
        %v4622 = vmax.f32 %v4617, 0.0
        %4624 = vset.pattern.permute.xlu0 0
        %4625 = vperm.xlu0 %4624, %v4489
        %v4626 = vpop.permute.xlu0 %4625
        %4629 = vset.pattern.permute.xlu0 0
        %4630 = vperm.xlu0 %4629, %v4490
        %v4631 = vpop.permute.xlu0 %4630
        %v4634 = vsel %vm427, %v4486, 0
        %v4637 = vsel %vm427, %v4487, 0
        %4639 = vmatpush.msra.mxu0 0.0
        %4640 = vmatpush.msra.mxu0 0.0
        %4641 = vmatpush.msra.mxu0 0.0
        %4642 = vmatpush.msra.mxu0 0.0
        %4643 = vmatpush.msra.mxu0 0.0
        %4644 = vmatpush.msra.mxu0 0.0
        %4645 = vmatpush.msra.mxu0 0.0
        %4646 = vmatpush.msra.mxu0 0.0
        %4647 = vmatpush.msra.mxu0 0.0
        %4648 = vmatpush.msra.mxu0 0.0
        %4649 = vmatpush.msra.mxu0 0.0
        %4650 = vmatpush.msra.mxu0 0.0
        %4651 = vmatpush.msra.mxu0 0.0
        %4652 = vmatpush.msra.mxu0 0.0
        %4653 = vmatpush.msra.mxu0 %v4621
        %4654 = vmatpush.msra.mxu0 %v4619
        %4655 = vmatmul.f32.gmra.mxu0 %v4634
        %v4656 = vpop.f32.mrf.mxu0
        %v4657 = vadd.f32 %v4626, %v4656
        %4658 = vmatmul.f32.gmra.mxu0 %v4637
        %v4659 = vpop.f32.mrf.mxu0
        %v4660 = vadd.f32 %v4631, %v4659
        %4661 = vdwg.mxu0
        %4662 = vmatpush.msra.mxu0 0.0
        %4663 = vmatpush.msra.mxu0 0.0
        %4664 = vmatpush.msra.mxu0 0.0
        %4665 = vmatpush.msra.mxu0 0.0
        %4666 = vmatpush.msra.mxu0 0.0
        %4667 = vmatpush.msra.mxu0 0.0
        %4668 = vmatpush.msra.mxu0 0.0
        %4669 = vmatpush.msra.mxu0 0.0
        %4670 = vmatpush.msra.mxu0 0.0
        %4671 = vmatpush.msra.mxu0 0.0
        %4672 = vmatpush.msra.mxu0 0.0
        %4673 = vmatpush.msra.mxu0 0.0
        %4674 = vmatpush.msra.mxu0 0.0
        %4675 = vmatpush.msra.mxu0 0.0
        %4676 = vmatpush.msra.mxu0 %v4622
        %4677 = vmatpush.msra.mxu0 %v4620
        %4678 = vmatmul.f32.gmra.mxu0 %v4634
        %v4679 = vpop.f32.mrf.mxu0
        %v4680 = vadd.f32 %v4626, %v4679
        %4681 = vmatmul.f32.gmra.mxu0 %v4637
        %v4682 = vpop.f32.mrf.mxu0
        %v4683 = vadd.f32 %v4631, %v4682
        %4684 = vdwg.mxu0
        %vm4685 = vcmp.lt.f32.partialorder %v4657, 0.0
        %vm4686 = vcmp.lt.f32.partialorder %v4680, 0.0
        %v4687 = vsel %vm4685, -1.0, 1.0
        %v4688 = vsel %vm4686, -1.0, 1.0
        %v4689 = vand.u32 2147483647, %v4657
        %v4690 = vand.u32 2147483647, %v4680
        %vm4691 = vcmp.gt.f32.partialorder %v4689, 2.4142137
        %vm4692 = vcmp.gt.f32.partialorder %v4690, 2.4142137
        %vm4693 = vcmp.gt.f32.partialorder %v4689, 0.41421357
        %vm4694 = vcmp.gt.f32.partialorder %v4690, 0.41421357
        %v4695 = vsub.f32 %v4689, 1.0
        %v4696 = vsub.f32 %v4690, 1.0
        %v4697 = vsel %vm4693, %v4695, %v4689
        %v4698 = vsel %vm4694, %v4696, %v4690
        %v4699 = vsel %vm4691, -1.0, %v4697
        %v4700 = vsel %vm4692, -1.0, %v4698
        %v4701 = vadd.f32 %v4689, 1.0
        %v4702 = vadd.f32 %v4690, 1.0
        %v4703 = vsel %vm4693, %v4701, 1.0
        %v4704 = vsel %vm4694, %v4702, 1.0
        %v4705 = vsel %vm4691, %v4689, %v4703
        %v4706 = vsel %vm4692, %v4690, %v4704
        %v4707 = vrcp.pop %v4705
        %v4708 = vmul.f32 %v4705, %v4707
        %v4709 = vsub.f32 1.0, %v4708
        %v4710 = vmul.f32 %v4707, %v4709
        %v4711 = vadd.f32 %v4707, %v4710
        %vm4712 = vweird.f32 %v4705
        %vm4713 = vweird.f32 %v4707
        %vm4714 = vmor %vm4712, %vm4713
        %v4715 = vsel %vm4714, %v4707, %v4711
        %v4716 = vand.u32 2147483647, %v4705
        %vm4717 = vcmp.eq.f32.partialorder %v4716, 8.507059e+37
        %v4718 = vand.u32 %v4705, 2147483648
        %v4719 = vor.u32 1.1754944e-38, %v4718
        %v4720 = vsel %vm4717, %v4719, %v4715
        %v4721 = vmul.f32 %v4699, %v4720
        %v4722 = vrcp.pop %v4706
        %v4723 = vmul.f32 %v4706, %v4722
        %v4724 = vsub.f32 1.0, %v4723
        %v4725 = vmul.f32 %v4722, %v4724
        %v4726 = vadd.f32 %v4722, %v4725
        %vm4727 = vweird.f32 %v4706
        %vm4728 = vweird.f32 %v4722
        %vm4729 = vmor %vm4727, %vm4728
        %v4730 = vsel %vm4729, %v4722, %v4726
        %v4731 = vand.u32 2147483647, %v4706
        %vm4732 = vcmp.eq.f32.partialorder %v4731, 8.507059e+37
        %v4733 = vand.u32 %v4706, 2147483648
        %v4734 = vor.u32 1.1754944e-38, %v4733
        %v4735 = vsel %vm4732, %v4734, %v4730
        %v4736 = vmul.f32 %v4700, %v4735
        %v4737 = vsel %vm4693, 0.7853982, 0.0
        %v4738 = vsel %vm4694, 0.7853982, 0.0
        %v4739 = vsel %vm4691, 1.5707964, %v4737
        %v4740 = vsel %vm4692, 1.5707964, %v4738
        %v4741 = vmul.f32 %v4721, %v4721
        %v4742 = vmul.f32 %v4736, %v4736
        %v4743 = vmul.f32 %v4741, 0.080537446
        %v4744 = vmul.f32 %v4742, 0.080537446
        %v4745 = vsub.f32 %v4743, 0.13877685
        %v4746 = vsub.f32 %v4744, 0.13877685
        %v4747 = vmul.f32 %v4745, %v4741
        %v4748 = vmul.f32 %v4746, %v4742
        %v4749 = vadd.f32 %v4747, 0.19977711
        %v4750 = vadd.f32 %v4748, 0.19977711
        %v4751 = vmul.f32 %v4749, %v4741
        %v4752 = vmul.f32 %v4750, %v4742
        %v4753 = vsub.f32 %v4751, 0.3333295
        %v4754 = vsub.f32 %v4752, 0.3333295
        %v4755 = vadd.f32 %v4739, %v4721
        %v4756 = vadd.f32 %v4740, %v4736
        %v4757 = vmul.f32 %v4721, %v4741
        %v4758 = vmul.f32 %v4736, %v4742
        %v4759 = vmul.f32 %v4757, %v4753
        %v4760 = vmul.f32 %v4758, %v4754
        %v4761 = vadd.f32 %v4755, %v4759
        %v4762 = vadd.f32 %v4756, %v4760
        %v4763 = vmul.f32 %v4687, %v4761
        %v4764 = vmul.f32 %v4688, %v4762
        %v4765 = vmul.f32 %v4763, 1.272
        %v4766 = vmul.f32 %v4764, 1.272
        %v4767 = vrot.slane %v4765, 4
        %v4768 = vadd.f32 %v4765, %v4767
        %v4769 = vrot.slane %v4768, 2
        %v4770 = vadd.f32 %v4768, %v4769
        %v4771 = vrot.slane %v4770, 1
        %v4772 = vadd.f32 %v4770, %v4771
        %v4773 = vrot.slane %v4766, 4
        %v4774 = vadd.f32 %v4766, %v4773
        %v4775 = vrot.slane %v4774, 2
        %v4776 = vadd.f32 %v4774, %v4775
        %v4777 = vrot.slane %v4776, 1
        %v4778 = vadd.f32 %v4776, %v4777
        %v4779 = vmul.f32 %v4772, 0.2
        %v4780 = vmul.f32 %v4778, 0.2
        %v4781 = vsub.f32 %v4765, %v4779
        %v4782 = vsub.f32 %v4766, %v4780
        %v4783 = vmul.f32 %v4781, 1.442695
        %v4784 = vpow.pop %v4783
        %v4785 = vmul.f32 %v4782, 1.442695
        %v4786 = vpow.pop %v4785
        %v4787 = vmul.f32 %v4784, %v4445
        %v4788 = vmul.f32 %v4786, %v4468
        %v4789 = vadd.f32 %v4787, %v4660
        %v4790 = vadd.f32 %v4788, %v4683
        %s4791 = scalar_lea.vmem %s1, 192
        %v4792 = vld [vmem:[%s4791] sm:$0xff]
        %v4793 = vld [vmem:[%s4791 + $0x8] sm:$0xff]
        %s4794 = scalar_lea.vmem %s2, 192
        %v4795 = vld [vmem:[%s4794] sm:$0xff]
        %v4796 = vld [vmem:[%s4794 + $0x8] sm:$0xff]
        %s4797 = scalar_lea.vmem %s3, 192
        %v4798 = vld [vmem:[%s4797] sm:$0xff]
        %v4799 = vld [vmem:[%s4797 + $0x8] sm:$0xff]
        %s4800 = scalar_lea.vmem %s4, 192
        %v4801 = vld [vmem:[%s4800] sm:$0xff]
        %v4802 = vld [vmem:[%s4800 + $0x8] sm:$0xff]
        %s4803 = scalar_lea.vmem %s5, 192
        %v4804 = vld [vmem:[%s4803] sm:$0xff]
        %v4805 = vld [vmem:[%s4803 + $0x8] sm:$0xff]
        %s4806 = scalar_lea.vmem %s6, 192
        %v4807 = vld [vmem:[%s4806] sm:$0xff]
        %v4808 = vld [vmem:[%s4806 + $0x8] sm:$0xff]
        %4810 = vset.pattern.permute.xlu0 0
        %4811 = vperm.xlu0 %4810, %v4795
        %v4812 = vpop.permute.xlu0 %4811
        %4815 = vset.pattern.permute.xlu0 0
        %4816 = vperm.xlu0 %4815, %v4796
        %v4817 = vpop.permute.xlu0 %4816
        %v4820 = vsel %vm360, %v4792, 0
        %v4823 = vsel %vm360, %v4793, 0
        %4825 = vmatpush.msra.mxu0 0.0
        %4826 = vmatpush.msra.mxu0 0.0
        %4827 = vmatpush.msra.mxu0 0.0
        %4828 = vmatpush.msra.mxu0 0.0
        %4829 = vmatpush.msra.mxu0 0.0
        %4830 = vmatpush.msra.mxu0 0.0
        %4831 = vmatpush.msra.mxu0 0.0
        %4832 = vmatpush.msra.mxu0 0.0
        %4833 = vmatpush.msra.mxu0 0.0
        %4834 = vmatpush.msra.mxu0 0.0
        %4835 = vmatpush.msra.mxu0 0.0
        %4836 = vmatpush.msra.mxu0 0.0
        %4837 = vmatpush.msra.mxu0 0.0
        %4838 = vmatpush.msra.mxu0 0.0
        %4839 = vmatpush.msra.mxu0 0.0
        %4840 = vmatpush.msra.mxu0 %v4789
        %4841 = vmatmul.f32.gmra.mxu0 %v4820
        %v4842 = vpop.f32.mrf.mxu0
        %v4843 = vadd.f32 %v4812, %v4842
        %4844 = vmatmul.f32.gmra.mxu0 %v4823
        %v4845 = vpop.f32.mrf.mxu0
        %v4846 = vadd.f32 %v4817, %v4845
        %4847 = vdwg.mxu0
        %4848 = vmatpush.msra.mxu0 0.0
        %4849 = vmatpush.msra.mxu0 0.0
        %4850 = vmatpush.msra.mxu0 0.0
        %4851 = vmatpush.msra.mxu0 0.0
        %4852 = vmatpush.msra.mxu0 0.0
        %4853 = vmatpush.msra.mxu0 0.0
        %4854 = vmatpush.msra.mxu0 0.0
        %4855 = vmatpush.msra.mxu0 0.0
        %4856 = vmatpush.msra.mxu0 0.0
        %4857 = vmatpush.msra.mxu0 0.0
        %4858 = vmatpush.msra.mxu0 0.0
        %4859 = vmatpush.msra.mxu0 0.0
        %4860 = vmatpush.msra.mxu0 0.0
        %4861 = vmatpush.msra.mxu0 0.0
        %4862 = vmatpush.msra.mxu0 0.0
        %4863 = vmatpush.msra.mxu0 %v4790
        %4864 = vmatmul.f32.gmra.mxu0 %v4820
        %v4865 = vpop.f32.mrf.mxu0
        %v4866 = vadd.f32 %v4812, %v4865
        %4867 = vmatmul.f32.gmra.mxu0 %v4823
        %v4868 = vpop.f32.mrf.mxu0
        %v4869 = vadd.f32 %v4817, %v4868
        %4870 = vdwg.mxu0
        %v4871 = vmax.f32 %v4843, 0.0
        %v4872 = vmax.f32 %v4866, 0.0
        %v4873 = vmax.f32 %v4846, 0.0
        %v4874 = vmax.f32 %v4869, 0.0
        %4876 = vset.pattern.permute.xlu0 0
        %4877 = vperm.xlu0 %4876, %v4801
        %v4878 = vpop.permute.xlu0 %4877
        %4881 = vset.pattern.permute.xlu0 0
        %4882 = vperm.xlu0 %4881, %v4802
        %v4883 = vpop.permute.xlu0 %4882
        %v4886 = vsel %vm427, %v4798, 0
        %v4889 = vsel %vm427, %v4799, 0
        %4891 = vmatpush.msra.mxu0 0.0
        %4892 = vmatpush.msra.mxu0 0.0
        %4893 = vmatpush.msra.mxu0 0.0
        %4894 = vmatpush.msra.mxu0 0.0
        %4895 = vmatpush.msra.mxu0 0.0
        %4896 = vmatpush.msra.mxu0 0.0
        %4897 = vmatpush.msra.mxu0 0.0
        %4898 = vmatpush.msra.mxu0 0.0
        %4899 = vmatpush.msra.mxu0 0.0
        %4900 = vmatpush.msra.mxu0 0.0
        %4901 = vmatpush.msra.mxu0 0.0
        %4902 = vmatpush.msra.mxu0 0.0
        %4903 = vmatpush.msra.mxu0 0.0
        %4904 = vmatpush.msra.mxu0 0.0
        %4905 = vmatpush.msra.mxu0 %v4873
        %4906 = vmatpush.msra.mxu0 %v4871
        %4907 = vmatmul.f32.gmra.mxu0 %v4886
        %v4908 = vpop.f32.mrf.mxu0
        %v4909 = vadd.f32 %v4878, %v4908
        %4910 = vmatmul.f32.gmra.mxu0 %v4889
        %v4911 = vpop.f32.mrf.mxu0
        %v4912 = vadd.f32 %v4883, %v4911
        %4913 = vdwg.mxu0
        %4914 = vmatpush.msra.mxu0 0.0
        %4915 = vmatpush.msra.mxu0 0.0
        %4916 = vmatpush.msra.mxu0 0.0
        %4917 = vmatpush.msra.mxu0 0.0
        %4918 = vmatpush.msra.mxu0 0.0
        %4919 = vmatpush.msra.mxu0 0.0
        %4920 = vmatpush.msra.mxu0 0.0
        %4921 = vmatpush.msra.mxu0 0.0
        %4922 = vmatpush.msra.mxu0 0.0
        %4923 = vmatpush.msra.mxu0 0.0
        %4924 = vmatpush.msra.mxu0 0.0
        %4925 = vmatpush.msra.mxu0 0.0
        %4926 = vmatpush.msra.mxu0 0.0
        %4927 = vmatpush.msra.mxu0 0.0
        %4928 = vmatpush.msra.mxu0 %v4874
        %4929 = vmatpush.msra.mxu0 %v4872
        %4930 = vmatmul.f32.gmra.mxu0 %v4886
        %v4931 = vpop.f32.mrf.mxu0
        %v4932 = vadd.f32 %v4878, %v4931
        %4933 = vmatmul.f32.gmra.mxu0 %v4889
        %v4934 = vpop.f32.mrf.mxu0
        %v4935 = vadd.f32 %v4883, %v4934
        %4936 = vdwg.mxu0
        %v4937 = vmax.f32 %v4909, 0.0
        %v4938 = vmax.f32 %v4932, 0.0
        %v4939 = vmax.f32 %v4912, 0.0
        %v4940 = vmax.f32 %v4935, 0.0
        %4942 = vset.pattern.permute.xlu0 0
        %4943 = vperm.xlu0 %4942, %v4807
        %v4944 = vpop.permute.xlu0 %4943
        %4947 = vset.pattern.permute.xlu0 0
        %4948 = vperm.xlu0 %4947, %v4808
        %v4949 = vpop.permute.xlu0 %4948
        %v4952 = vsel %vm427, %v4804, 0
        %v4955 = vsel %vm427, %v4805, 0
        %4957 = vmatpush.msra.mxu0 0.0
        %4958 = vmatpush.msra.mxu0 0.0
        %4959 = vmatpush.msra.mxu0 0.0
        %4960 = vmatpush.msra.mxu0 0.0
        %4961 = vmatpush.msra.mxu0 0.0
        %4962 = vmatpush.msra.mxu0 0.0
        %4963 = vmatpush.msra.mxu0 0.0
        %4964 = vmatpush.msra.mxu0 0.0
        %4965 = vmatpush.msra.mxu0 0.0
        %4966 = vmatpush.msra.mxu0 0.0
        %4967 = vmatpush.msra.mxu0 0.0
        %4968 = vmatpush.msra.mxu0 0.0
        %4969 = vmatpush.msra.mxu0 0.0
        %4970 = vmatpush.msra.mxu0 0.0
        %4971 = vmatpush.msra.mxu0 %v4939
        %4972 = vmatpush.msra.mxu0 %v4937
        %4973 = vmatmul.f32.gmra.mxu0 %v4952
        %v4974 = vpop.f32.mrf.mxu0
        %v4975 = vadd.f32 %v4944, %v4974
        %4976 = vmatmul.f32.gmra.mxu0 %v4955
        %v4977 = vpop.f32.mrf.mxu0
        %v4978 = vadd.f32 %v4949, %v4977
        %4979 = vdwg.mxu0
        %4980 = vmatpush.msra.mxu0 0.0
        %4981 = vmatpush.msra.mxu0 0.0
        %4982 = vmatpush.msra.mxu0 0.0
        %4983 = vmatpush.msra.mxu0 0.0
        %4984 = vmatpush.msra.mxu0 0.0
        %4985 = vmatpush.msra.mxu0 0.0
        %4986 = vmatpush.msra.mxu0 0.0
        %4987 = vmatpush.msra.mxu0 0.0
        %4988 = vmatpush.msra.mxu0 0.0
        %4989 = vmatpush.msra.mxu0 0.0
        %4990 = vmatpush.msra.mxu0 0.0
        %4991 = vmatpush.msra.mxu0 0.0
        %4992 = vmatpush.msra.mxu0 0.0
        %4993 = vmatpush.msra.mxu0 0.0
        %4994 = vmatpush.msra.mxu0 %v4940
        %4995 = vmatpush.msra.mxu0 %v4938
        %4996 = vmatmul.f32.gmra.mxu0 %v4952
        %v4997 = vpop.f32.mrf.mxu0
        %v4998 = vadd.f32 %v4944, %v4997
        %4999 = vmatmul.f32.gmra.mxu0 %v4955
        %v5000 = vpop.f32.mrf.mxu0
        %v5001 = vadd.f32 %v4949, %v5000
        %5002 = vdwg.mxu0
        %vm5003 = vcmp.lt.f32.partialorder %v4975, 0.0
        %vm5004 = vcmp.lt.f32.partialorder %v4998, 0.0
        %v5005 = vsel %vm5003, -1.0, 1.0
        %v5006 = vsel %vm5004, -1.0, 1.0
        %v5007 = vand.u32 2147483647, %v4975
        %v5008 = vand.u32 2147483647, %v4998
        %vm5009 = vcmp.gt.f32.partialorder %v5007, 2.4142137
        %vm5010 = vcmp.gt.f32.partialorder %v5008, 2.4142137
        %vm5011 = vcmp.gt.f32.partialorder %v5007, 0.41421357
        %vm5012 = vcmp.gt.f32.partialorder %v5008, 0.41421357
        %v5013 = vsub.f32 %v5007, 1.0
        %v5014 = vsub.f32 %v5008, 1.0
        %v5015 = vsel %vm5011, %v5013, %v5007
        %v5016 = vsel %vm5012, %v5014, %v5008
        %v5017 = vsel %vm5009, -1.0, %v5015
        %v5018 = vsel %vm5010, -1.0, %v5016
        %v5019 = vadd.f32 %v5007, 1.0
        %v5020 = vadd.f32 %v5008, 1.0
        %v5021 = vsel %vm5011, %v5019, 1.0
        %v5022 = vsel %vm5012, %v5020, 1.0
        %v5023 = vsel %vm5009, %v5007, %v5021
        %v5024 = vsel %vm5010, %v5008, %v5022
        %v5025 = vrcp.pop %v5023
        %v5026 = vmul.f32 %v5023, %v5025
        %v5027 = vsub.f32 1.0, %v5026
        %v5028 = vmul.f32 %v5025, %v5027
        %v5029 = vadd.f32 %v5025, %v5028
        %vm5030 = vweird.f32 %v5023
        %vm5031 = vweird.f32 %v5025
        %vm5032 = vmor %vm5030, %vm5031
        %v5033 = vsel %vm5032, %v5025, %v5029
        %v5034 = vand.u32 2147483647, %v5023
        %vm5035 = vcmp.eq.f32.partialorder %v5034, 8.507059e+37
        %v5036 = vand.u32 %v5023, 2147483648
        %v5037 = vor.u32 1.1754944e-38, %v5036
        %v5038 = vsel %vm5035, %v5037, %v5033
        %v5039 = vmul.f32 %v5017, %v5038
        %v5040 = vrcp.pop %v5024
        %v5041 = vmul.f32 %v5024, %v5040
        %v5042 = vsub.f32 1.0, %v5041
        %v5043 = vmul.f32 %v5040, %v5042
        %v5044 = vadd.f32 %v5040, %v5043
        %vm5045 = vweird.f32 %v5024
        %vm5046 = vweird.f32 %v5040
        %vm5047 = vmor %vm5045, %vm5046
        %v5048 = vsel %vm5047, %v5040, %v5044
        %v5049 = vand.u32 2147483647, %v5024
        %vm5050 = vcmp.eq.f32.partialorder %v5049, 8.507059e+37
        %v5051 = vand.u32 %v5024, 2147483648
        %v5052 = vor.u32 1.1754944e-38, %v5051
        %v5053 = vsel %vm5050, %v5052, %v5048
        %v5054 = vmul.f32 %v5018, %v5053
        %v5055 = vsel %vm5011, 0.7853982, 0.0
        %v5056 = vsel %vm5012, 0.7853982, 0.0
        %v5057 = vsel %vm5009, 1.5707964, %v5055
        %v5058 = vsel %vm5010, 1.5707964, %v5056
        %v5059 = vmul.f32 %v5039, %v5039
        %v5060 = vmul.f32 %v5054, %v5054
        %v5061 = vmul.f32 %v5059, 0.080537446
        %v5062 = vmul.f32 %v5060, 0.080537446
        %v5063 = vsub.f32 %v5061, 0.13877685
        %v5064 = vsub.f32 %v5062, 0.13877685
        %v5065 = vmul.f32 %v5063, %v5059
        %v5066 = vmul.f32 %v5064, %v5060
        %v5067 = vadd.f32 %v5065, 0.19977711
        %v5068 = vadd.f32 %v5066, 0.19977711
        %v5069 = vmul.f32 %v5067, %v5059
        %v5070 = vmul.f32 %v5068, %v5060
        %v5071 = vsub.f32 %v5069, 0.3333295
        %v5072 = vsub.f32 %v5070, 0.3333295
        %v5073 = vadd.f32 %v5057, %v5039
        %v5074 = vadd.f32 %v5058, %v5054
        %v5075 = vmul.f32 %v5039, %v5059
        %v5076 = vmul.f32 %v5054, %v5060
        %v5077 = vmul.f32 %v5075, %v5071
        %v5078 = vmul.f32 %v5076, %v5072
        %v5079 = vadd.f32 %v5073, %v5077
        %v5080 = vadd.f32 %v5074, %v5078
        %v5081 = vmul.f32 %v5005, %v5079
        %v5082 = vmul.f32 %v5006, %v5080
        %v5083 = vmul.f32 %v5081, 1.272
        %v5084 = vmul.f32 %v5082, 1.272
        %v5085 = vrot.slane %v5083, 4
        %v5086 = vadd.f32 %v5083, %v5085
        %v5087 = vrot.slane %v5086, 2
        %v5088 = vadd.f32 %v5086, %v5087
        %v5089 = vrot.slane %v5088, 1
        %v5090 = vadd.f32 %v5088, %v5089
        %v5091 = vrot.slane %v5084, 4
        %v5092 = vadd.f32 %v5084, %v5091
        %v5093 = vrot.slane %v5092, 2
        %v5094 = vadd.f32 %v5092, %v5093
        %v5095 = vrot.slane %v5094, 1
        %v5096 = vadd.f32 %v5094, %v5095
        %v5097 = vmul.f32 %v5090, 0.2
        %v5098 = vmul.f32 %v5096, 0.2
        %v5099 = vsub.f32 %v5083, %v5097
        %v5100 = vsub.f32 %v5084, %v5098
        %v5101 = vmul.f32 %v5099, 1.442695
        %v5102 = vpow.pop %v5101
        %v5103 = vmul.f32 %v5100, 1.442695
        %v5104 = vpow.pop %v5103
        %v5105 = vmul.f32 %v5102, %v4448
        %v5106 = vmul.f32 %v5104, %v4471
        %v5107 = vadd.f32 %v5105, %v4978
        %v5108 = vadd.f32 %v5106, %v5001
        %s5109 = scalar_lea.vmem %s7, 96
        %v5110 = vld [vmem:[%s5109] sm:$0xff]
        %v5111 = vld [vmem:[%s5109 + $0x8] sm:$0xff]
        %v5113 = vsel %vm427, %v5110, 0
        %v5116 = vsel %vm427, %v5111, 0
        %5118 = vmatpush.msra.mxu0 0.0
        %5119 = vmatpush.msra.mxu0 0.0
        %5120 = vmatpush.msra.mxu0 0.0
        %5121 = vmatpush.msra.mxu0 0.0
        %5122 = vmatpush.msra.mxu0 0.0
        %5123 = vmatpush.msra.mxu0 0.0
        %5124 = vmatpush.msra.mxu0 0.0
        %5125 = vmatpush.msra.mxu0 0.0
        %5126 = vmatpush.msra.mxu0 0.0
        %5127 = vmatpush.msra.mxu0 0.0
        %5128 = vmatpush.msra.mxu0 0.0
        %5129 = vmatpush.msra.mxu0 0.0
        %5130 = vmatpush.msra.mxu0 0.0
        %5131 = vmatpush.msra.mxu0 0.0
        %5132 = vmatpush.msra.mxu0 %v5107
        %5133 = vmatpush.msra.mxu0 %v4789
        %5134 = vmatmul.f32.gmra.mxu0 %v5113
        %v5135 = vpop.f32.mrf.mxu0
        %v5136 = vadd.f32 0.0, %v5135
        %5137 = vmatmul.f32.gmra.mxu0 %v5116
        %v5138 = vpop.f32.mrf.mxu0
        %v5139 = vadd.f32 0.0, %v5138
        %5140 = vdwg.mxu0
        %5141 = vmatpush.msra.mxu0 0.0
        %5142 = vmatpush.msra.mxu0 0.0
        %5143 = vmatpush.msra.mxu0 0.0
        %5144 = vmatpush.msra.mxu0 0.0
        %5145 = vmatpush.msra.mxu0 0.0
        %5146 = vmatpush.msra.mxu0 0.0
        %5147 = vmatpush.msra.mxu0 0.0
        %5148 = vmatpush.msra.mxu0 0.0
        %5149 = vmatpush.msra.mxu0 0.0
        %5150 = vmatpush.msra.mxu0 0.0
        %5151 = vmatpush.msra.mxu0 0.0
        %5152 = vmatpush.msra.mxu0 0.0
        %5153 = vmatpush.msra.mxu0 0.0
        %5154 = vmatpush.msra.mxu0 0.0
        %5155 = vmatpush.msra.mxu0 %v5108
        %5156 = vmatpush.msra.mxu0 %v4790
        %5157 = vmatmul.f32.gmra.mxu0 %v5113
        %v5158 = vpop.f32.mrf.mxu0
        %v5159 = vadd.f32 0.0, %v5158
        %5160 = vmatmul.f32.gmra.mxu0 %v5116
        %v5161 = vpop.f32.mrf.mxu0
        %v5162 = vadd.f32 0.0, %v5161
        %5163 = vdwg.mxu0
        %s5164 = scalar_lea.vmem %s1, 240
        %v5165 = vld [vmem:[%s5164] sm:$0xff]
        %v5166 = vld [vmem:[%s5164 + $0x8] sm:$0xff]
        %s5167 = scalar_lea.vmem %s2, 240
        %v5168 = vld [vmem:[%s5167] sm:$0xff]
        %v5169 = vld [vmem:[%s5167 + $0x8] sm:$0xff]
        %s5170 = scalar_lea.vmem %s3, 240
        %v5171 = vld [vmem:[%s5170] sm:$0xff]
        %v5172 = vld [vmem:[%s5170 + $0x8] sm:$0xff]
        %s5173 = scalar_lea.vmem %s4, 240
        %v5174 = vld [vmem:[%s5173] sm:$0xff]
        %v5175 = vld [vmem:[%s5173 + $0x8] sm:$0xff]
        %s5176 = scalar_lea.vmem %s5, 240
        %v5177 = vld [vmem:[%s5176] sm:$0xff]
        %v5178 = vld [vmem:[%s5176 + $0x8] sm:$0xff]
        %s5179 = scalar_lea.vmem %s6, 240
        %v5180 = vld [vmem:[%s5179] sm:$0xff]
        %v5181 = vld [vmem:[%s5179 + $0x8] sm:$0xff]
        %5183 = vset.pattern.permute.xlu0 0
        %5184 = vperm.xlu0 %5183, %v5168
        %v5185 = vpop.permute.xlu0 %5184
        %5188 = vset.pattern.permute.xlu0 0
        %5189 = vperm.xlu0 %5188, %v5169
        %v5190 = vpop.permute.xlu0 %5189
        %v5193 = vsel %vm360, %v5165, 0
        %v5196 = vsel %vm360, %v5166, 0
        %5198 = vmatpush.msra.mxu0 0.0
        %5199 = vmatpush.msra.mxu0 0.0
        %5200 = vmatpush.msra.mxu0 0.0
        %5201 = vmatpush.msra.mxu0 0.0
        %5202 = vmatpush.msra.mxu0 0.0
        %5203 = vmatpush.msra.mxu0 0.0
        %5204 = vmatpush.msra.mxu0 0.0
        %5205 = vmatpush.msra.mxu0 0.0
        %5206 = vmatpush.msra.mxu0 0.0
        %5207 = vmatpush.msra.mxu0 0.0
        %5208 = vmatpush.msra.mxu0 0.0
        %5209 = vmatpush.msra.mxu0 0.0
        %5210 = vmatpush.msra.mxu0 0.0
        %5211 = vmatpush.msra.mxu0 0.0
        %5212 = vmatpush.msra.mxu0 0.0
        %5213 = vmatpush.msra.mxu0 %v5139
        %5214 = vmatmul.f32.gmra.mxu0 %v5193
        %v5215 = vpop.f32.mrf.mxu0
        %v5216 = vadd.f32 %v5185, %v5215
        %5217 = vmatmul.f32.gmra.mxu0 %v5196
        %v5218 = vpop.f32.mrf.mxu0
        %v5219 = vadd.f32 %v5190, %v5218
        %5220 = vdwg.mxu0
        %5221 = vmatpush.msra.mxu0 0.0
        %5222 = vmatpush.msra.mxu0 0.0
        %5223 = vmatpush.msra.mxu0 0.0
        %5224 = vmatpush.msra.mxu0 0.0
        %5225 = vmatpush.msra.mxu0 0.0
        %5226 = vmatpush.msra.mxu0 0.0
        %5227 = vmatpush.msra.mxu0 0.0
        %5228 = vmatpush.msra.mxu0 0.0
        %5229 = vmatpush.msra.mxu0 0.0
        %5230 = vmatpush.msra.mxu0 0.0
        %5231 = vmatpush.msra.mxu0 0.0
        %5232 = vmatpush.msra.mxu0 0.0
        %5233 = vmatpush.msra.mxu0 0.0
        %5234 = vmatpush.msra.mxu0 0.0
        %5235 = vmatpush.msra.mxu0 0.0
        %5236 = vmatpush.msra.mxu0 %v5162
        %5237 = vmatmul.f32.gmra.mxu0 %v5193
        %v5238 = vpop.f32.mrf.mxu0
        %v5239 = vadd.f32 %v5185, %v5238
        %5240 = vmatmul.f32.gmra.mxu0 %v5196
        %v5241 = vpop.f32.mrf.mxu0
        %v5242 = vadd.f32 %v5190, %v5241
        %5243 = vdwg.mxu0
        %v5244 = vmax.f32 %v5216, 0.0
        %v5245 = vmax.f32 %v5239, 0.0
        %v5246 = vmax.f32 %v5219, 0.0
        %v5247 = vmax.f32 %v5242, 0.0
        %5249 = vset.pattern.permute.xlu0 0
        %5250 = vperm.xlu0 %5249, %v5174
        %v5251 = vpop.permute.xlu0 %5250
        %5254 = vset.pattern.permute.xlu0 0
        %5255 = vperm.xlu0 %5254, %v5175
        %v5256 = vpop.permute.xlu0 %5255
        %v5259 = vsel %vm427, %v5171, 0
        %v5262 = vsel %vm427, %v5172, 0
        %5264 = vmatpush.msra.mxu0 0.0
        %5265 = vmatpush.msra.mxu0 0.0
        %5266 = vmatpush.msra.mxu0 0.0
        %5267 = vmatpush.msra.mxu0 0.0
        %5268 = vmatpush.msra.mxu0 0.0
        %5269 = vmatpush.msra.mxu0 0.0
        %5270 = vmatpush.msra.mxu0 0.0
        %5271 = vmatpush.msra.mxu0 0.0
        %5272 = vmatpush.msra.mxu0 0.0
        %5273 = vmatpush.msra.mxu0 0.0
        %5274 = vmatpush.msra.mxu0 0.0
        %5275 = vmatpush.msra.mxu0 0.0
        %5276 = vmatpush.msra.mxu0 0.0
        %5277 = vmatpush.msra.mxu0 0.0
        %5278 = vmatpush.msra.mxu0 %v5246
        %5279 = vmatpush.msra.mxu0 %v5244
        %5280 = vmatmul.f32.gmra.mxu0 %v5259
        %v5281 = vpop.f32.mrf.mxu0
        %v5282 = vadd.f32 %v5251, %v5281
        %5283 = vmatmul.f32.gmra.mxu0 %v5262
        %v5284 = vpop.f32.mrf.mxu0
        %v5285 = vadd.f32 %v5256, %v5284
        %5286 = vdwg.mxu0
        %5287 = vmatpush.msra.mxu0 0.0
        %5288 = vmatpush.msra.mxu0 0.0
        %5289 = vmatpush.msra.mxu0 0.0
        %5290 = vmatpush.msra.mxu0 0.0
        %5291 = vmatpush.msra.mxu0 0.0
        %5292 = vmatpush.msra.mxu0 0.0
        %5293 = vmatpush.msra.mxu0 0.0
        %5294 = vmatpush.msra.mxu0 0.0
        %5295 = vmatpush.msra.mxu0 0.0
        %5296 = vmatpush.msra.mxu0 0.0
        %5297 = vmatpush.msra.mxu0 0.0
        %5298 = vmatpush.msra.mxu0 0.0
        %5299 = vmatpush.msra.mxu0 0.0
        %5300 = vmatpush.msra.mxu0 0.0
        %5301 = vmatpush.msra.mxu0 %v5247
        %5302 = vmatpush.msra.mxu0 %v5245
        %5303 = vmatmul.f32.gmra.mxu0 %v5259
        %v5304 = vpop.f32.mrf.mxu0
        %v5305 = vadd.f32 %v5251, %v5304
        %5306 = vmatmul.f32.gmra.mxu0 %v5262
        %v5307 = vpop.f32.mrf.mxu0
        %v5308 = vadd.f32 %v5256, %v5307
        %5309 = vdwg.mxu0
        %v5310 = vmax.f32 %v5282, 0.0
        %v5311 = vmax.f32 %v5305, 0.0
        %v5312 = vmax.f32 %v5285, 0.0
        %v5313 = vmax.f32 %v5308, 0.0
        %5315 = vset.pattern.permute.xlu0 0
        %5316 = vperm.xlu0 %5315, %v5180
        %v5317 = vpop.permute.xlu0 %5316
        %5320 = vset.pattern.permute.xlu0 0
        %5321 = vperm.xlu0 %5320, %v5181
        %v5322 = vpop.permute.xlu0 %5321
        %v5325 = vsel %vm427, %v5177, 0
        %v5328 = vsel %vm427, %v5178, 0
        %5330 = vmatpush.msra.mxu0 0.0
        %5331 = vmatpush.msra.mxu0 0.0
        %5332 = vmatpush.msra.mxu0 0.0
        %5333 = vmatpush.msra.mxu0 0.0
        %5334 = vmatpush.msra.mxu0 0.0
        %5335 = vmatpush.msra.mxu0 0.0
        %5336 = vmatpush.msra.mxu0 0.0
        %5337 = vmatpush.msra.mxu0 0.0
        %5338 = vmatpush.msra.mxu0 0.0
        %5339 = vmatpush.msra.mxu0 0.0
        %5340 = vmatpush.msra.mxu0 0.0
        %5341 = vmatpush.msra.mxu0 0.0
        %5342 = vmatpush.msra.mxu0 0.0
        %5343 = vmatpush.msra.mxu0 0.0
        %5344 = vmatpush.msra.mxu0 %v5312
        %5345 = vmatpush.msra.mxu0 %v5310
        %5346 = vmatmul.f32.gmra.mxu0 %v5325
        %v5347 = vpop.f32.mrf.mxu0
        %v5348 = vadd.f32 %v5317, %v5347
        %5349 = vmatmul.f32.gmra.mxu0 %v5328
        %v5350 = vpop.f32.mrf.mxu0
        %v5351 = vadd.f32 %v5322, %v5350
        %5352 = vdwg.mxu0
        %5353 = vmatpush.msra.mxu0 0.0
        %5354 = vmatpush.msra.mxu0 0.0
        %5355 = vmatpush.msra.mxu0 0.0
        %5356 = vmatpush.msra.mxu0 0.0
        %5357 = vmatpush.msra.mxu0 0.0
        %5358 = vmatpush.msra.mxu0 0.0
        %5359 = vmatpush.msra.mxu0 0.0
        %5360 = vmatpush.msra.mxu0 0.0
        %5361 = vmatpush.msra.mxu0 0.0
        %5362 = vmatpush.msra.mxu0 0.0
        %5363 = vmatpush.msra.mxu0 0.0
        %5364 = vmatpush.msra.mxu0 0.0
        %5365 = vmatpush.msra.mxu0 0.0
        %5366 = vmatpush.msra.mxu0 0.0
        %5367 = vmatpush.msra.mxu0 %v5313
        %5368 = vmatpush.msra.mxu0 %v5311
        %5369 = vmatmul.f32.gmra.mxu0 %v5325
        %v5370 = vpop.f32.mrf.mxu0
        %v5371 = vadd.f32 %v5317, %v5370
        %5372 = vmatmul.f32.gmra.mxu0 %v5328
        %v5373 = vpop.f32.mrf.mxu0
        %v5374 = vadd.f32 %v5322, %v5373
        %5375 = vdwg.mxu0
        %vm5376 = vcmp.lt.f32.partialorder %v5348, 0.0
        %vm5377 = vcmp.lt.f32.partialorder %v5371, 0.0
        %v5378 = vsel %vm5376, -1.0, 1.0
        %v5379 = vsel %vm5377, -1.0, 1.0
        %v5380 = vand.u32 2147483647, %v5348
        %v5381 = vand.u32 2147483647, %v5371
        %vm5382 = vcmp.gt.f32.partialorder %v5380, 2.4142137
        %vm5383 = vcmp.gt.f32.partialorder %v5381, 2.4142137
        %vm5384 = vcmp.gt.f32.partialorder %v5380, 0.41421357
        %vm5385 = vcmp.gt.f32.partialorder %v5381, 0.41421357
        %v5386 = vsub.f32 %v5380, 1.0
        %v5387 = vsub.f32 %v5381, 1.0
        %v5388 = vsel %vm5384, %v5386, %v5380
        %v5389 = vsel %vm5385, %v5387, %v5381
        %v5390 = vsel %vm5382, -1.0, %v5388
        %v5391 = vsel %vm5383, -1.0, %v5389
        %v5392 = vadd.f32 %v5380, 1.0
        %v5393 = vadd.f32 %v5381, 1.0
        %v5394 = vsel %vm5384, %v5392, 1.0
        %v5395 = vsel %vm5385, %v5393, 1.0
        %v5396 = vsel %vm5382, %v5380, %v5394
        %v5397 = vsel %vm5383, %v5381, %v5395
        %v5398 = vrcp.pop %v5396
        %v5399 = vmul.f32 %v5396, %v5398
        %v5400 = vsub.f32 1.0, %v5399
        %v5401 = vmul.f32 %v5398, %v5400
        %v5402 = vadd.f32 %v5398, %v5401
        %vm5403 = vweird.f32 %v5396
        %vm5404 = vweird.f32 %v5398
        %vm5405 = vmor %vm5403, %vm5404
        %v5406 = vsel %vm5405, %v5398, %v5402
        %v5407 = vand.u32 2147483647, %v5396
        %vm5408 = vcmp.eq.f32.partialorder %v5407, 8.507059e+37
        %v5409 = vand.u32 %v5396, 2147483648
        %v5410 = vor.u32 1.1754944e-38, %v5409
        %v5411 = vsel %vm5408, %v5410, %v5406
        %v5412 = vmul.f32 %v5390, %v5411
        %v5413 = vrcp.pop %v5397
        %v5414 = vmul.f32 %v5397, %v5413
        %v5415 = vsub.f32 1.0, %v5414
        %v5416 = vmul.f32 %v5413, %v5415
        %v5417 = vadd.f32 %v5413, %v5416
        %vm5418 = vweird.f32 %v5397
        %vm5419 = vweird.f32 %v5413
        %vm5420 = vmor %vm5418, %vm5419
        %v5421 = vsel %vm5420, %v5413, %v5417
        %v5422 = vand.u32 2147483647, %v5397
        %vm5423 = vcmp.eq.f32.partialorder %v5422, 8.507059e+37
        %v5424 = vand.u32 %v5397, 2147483648
        %v5425 = vor.u32 1.1754944e-38, %v5424
        %v5426 = vsel %vm5423, %v5425, %v5421
        %v5427 = vmul.f32 %v5391, %v5426
        %v5428 = vsel %vm5384, 0.7853982, 0.0
        %v5429 = vsel %vm5385, 0.7853982, 0.0
        %v5430 = vsel %vm5382, 1.5707964, %v5428
        %v5431 = vsel %vm5383, 1.5707964, %v5429
        %v5432 = vmul.f32 %v5412, %v5412
        %v5433 = vmul.f32 %v5427, %v5427
        %v5434 = vmul.f32 %v5432, 0.080537446
        %v5435 = vmul.f32 %v5433, 0.080537446
        %v5436 = vsub.f32 %v5434, 0.13877685
        %v5437 = vsub.f32 %v5435, 0.13877685
        %v5438 = vmul.f32 %v5436, %v5432
        %v5439 = vmul.f32 %v5437, %v5433
        %v5440 = vadd.f32 %v5438, 0.19977711
        %v5441 = vadd.f32 %v5439, 0.19977711
        %v5442 = vmul.f32 %v5440, %v5432
        %v5443 = vmul.f32 %v5441, %v5433
        %v5444 = vsub.f32 %v5442, 0.3333295
        %v5445 = vsub.f32 %v5443, 0.3333295
        %v5446 = vadd.f32 %v5430, %v5412
        %v5447 = vadd.f32 %v5431, %v5427
        %v5448 = vmul.f32 %v5412, %v5432
        %v5449 = vmul.f32 %v5427, %v5433
        %v5450 = vmul.f32 %v5448, %v5444
        %v5451 = vmul.f32 %v5449, %v5445
        %v5452 = vadd.f32 %v5446, %v5450
        %v5453 = vadd.f32 %v5447, %v5451
        %v5454 = vmul.f32 %v5378, %v5452
        %v5455 = vmul.f32 %v5379, %v5453
        %v5456 = vmul.f32 %v5454, 1.272
        %v5457 = vmul.f32 %v5455, 1.272
        %v5458 = vrot.slane %v5456, 4
        %v5459 = vadd.f32 %v5456, %v5458
        %v5460 = vrot.slane %v5459, 2
        %v5461 = vadd.f32 %v5459, %v5460
        %v5462 = vrot.slane %v5461, 1
        %v5463 = vadd.f32 %v5461, %v5462
        %v5464 = vrot.slane %v5457, 4
        %v5465 = vadd.f32 %v5457, %v5464
        %v5466 = vrot.slane %v5465, 2
        %v5467 = vadd.f32 %v5465, %v5466
        %v5468 = vrot.slane %v5467, 1
        %v5469 = vadd.f32 %v5467, %v5468
        %v5470 = vmul.f32 %v5463, 0.2
        %v5471 = vmul.f32 %v5469, 0.2
        %v5472 = vsub.f32 %v5456, %v5470
        %v5473 = vsub.f32 %v5457, %v5471
        %v5474 = vmul.f32 %v5472, 1.442695
        %v5475 = vpow.pop %v5474
        %v5476 = vmul.f32 %v5473, 1.442695
        %v5477 = vpow.pop %v5476
        %v5478 = vmul.f32 %v5475, %v5136
        %v5479 = vmul.f32 %v5477, %v5159
        %v5480 = vadd.f32 %v5478, %v5351
        %v5481 = vadd.f32 %v5479, %v5374
        %s5482 = scalar_lea.vmem %s1, 224
        %v5483 = vld [vmem:[%s5482] sm:$0xff]
        %v5484 = vld [vmem:[%s5482 + $0x8] sm:$0xff]
        %s5485 = scalar_lea.vmem %s2, 224
        %v5486 = vld [vmem:[%s5485] sm:$0xff]
        %v5487 = vld [vmem:[%s5485 + $0x8] sm:$0xff]
        %s5488 = scalar_lea.vmem %s3, 224
        %v5489 = vld [vmem:[%s5488] sm:$0xff]
        %v5490 = vld [vmem:[%s5488 + $0x8] sm:$0xff]
        %s5491 = scalar_lea.vmem %s4, 224
        %v5492 = vld [vmem:[%s5491] sm:$0xff]
        %v5493 = vld [vmem:[%s5491 + $0x8] sm:$0xff]
        %s5494 = scalar_lea.vmem %s5, 224
        %v5495 = vld [vmem:[%s5494] sm:$0xff]
        %v5496 = vld [vmem:[%s5494 + $0x8] sm:$0xff]
        %s5497 = scalar_lea.vmem %s6, 224
        %v5498 = vld [vmem:[%s5497] sm:$0xff]
        %v5499 = vld [vmem:[%s5497 + $0x8] sm:$0xff]
        %5501 = vset.pattern.permute.xlu0 0
        %5502 = vperm.xlu0 %5501, %v5486
        %v5503 = vpop.permute.xlu0 %5502
        %5506 = vset.pattern.permute.xlu0 0
        %5507 = vperm.xlu0 %5506, %v5487
        %v5508 = vpop.permute.xlu0 %5507
        %v5511 = vsel %vm360, %v5483, 0
        %v5514 = vsel %vm360, %v5484, 0
        %5516 = vmatpush.msra.mxu0 0.0
        %5517 = vmatpush.msra.mxu0 0.0
        %5518 = vmatpush.msra.mxu0 0.0
        %5519 = vmatpush.msra.mxu0 0.0
        %5520 = vmatpush.msra.mxu0 0.0
        %5521 = vmatpush.msra.mxu0 0.0
        %5522 = vmatpush.msra.mxu0 0.0
        %5523 = vmatpush.msra.mxu0 0.0
        %5524 = vmatpush.msra.mxu0 0.0
        %5525 = vmatpush.msra.mxu0 0.0
        %5526 = vmatpush.msra.mxu0 0.0
        %5527 = vmatpush.msra.mxu0 0.0
        %5528 = vmatpush.msra.mxu0 0.0
        %5529 = vmatpush.msra.mxu0 0.0
        %5530 = vmatpush.msra.mxu0 0.0
        %5531 = vmatpush.msra.mxu0 %v5480
        %5532 = vmatmul.f32.gmra.mxu0 %v5511
        %v5533 = vpop.f32.mrf.mxu0
        %v5534 = vadd.f32 %v5503, %v5533
        %5535 = vmatmul.f32.gmra.mxu0 %v5514
        %v5536 = vpop.f32.mrf.mxu0
        %v5537 = vadd.f32 %v5508, %v5536
        %5538 = vdwg.mxu0
        %5539 = vmatpush.msra.mxu0 0.0
        %5540 = vmatpush.msra.mxu0 0.0
        %5541 = vmatpush.msra.mxu0 0.0
        %5542 = vmatpush.msra.mxu0 0.0
        %5543 = vmatpush.msra.mxu0 0.0
        %5544 = vmatpush.msra.mxu0 0.0
        %5545 = vmatpush.msra.mxu0 0.0
        %5546 = vmatpush.msra.mxu0 0.0
        %5547 = vmatpush.msra.mxu0 0.0
        %5548 = vmatpush.msra.mxu0 0.0
        %5549 = vmatpush.msra.mxu0 0.0
        %5550 = vmatpush.msra.mxu0 0.0
        %5551 = vmatpush.msra.mxu0 0.0
        %5552 = vmatpush.msra.mxu0 0.0
        %5553 = vmatpush.msra.mxu0 0.0
        %5554 = vmatpush.msra.mxu0 %v5481
        %5555 = vmatmul.f32.gmra.mxu0 %v5511
        %v5556 = vpop.f32.mrf.mxu0
        %v5557 = vadd.f32 %v5503, %v5556
        %5558 = vmatmul.f32.gmra.mxu0 %v5514
        %v5559 = vpop.f32.mrf.mxu0
        %v5560 = vadd.f32 %v5508, %v5559
        %5561 = vdwg.mxu0
        %v5562 = vmax.f32 %v5534, 0.0
        %v5563 = vmax.f32 %v5557, 0.0
        %v5564 = vmax.f32 %v5537, 0.0
        %v5565 = vmax.f32 %v5560, 0.0
        %5567 = vset.pattern.permute.xlu0 0
        %5568 = vperm.xlu0 %5567, %v5492
        %v5569 = vpop.permute.xlu0 %5568
        %5572 = vset.pattern.permute.xlu0 0
        %5573 = vperm.xlu0 %5572, %v5493
        %v5574 = vpop.permute.xlu0 %5573
        %v5577 = vsel %vm427, %v5489, 0
        %v5580 = vsel %vm427, %v5490, 0
        %5582 = vmatpush.msra.mxu0 0.0
        %5583 = vmatpush.msra.mxu0 0.0
        %5584 = vmatpush.msra.mxu0 0.0
        %5585 = vmatpush.msra.mxu0 0.0
        %5586 = vmatpush.msra.mxu0 0.0
        %5587 = vmatpush.msra.mxu0 0.0
        %5588 = vmatpush.msra.mxu0 0.0
        %5589 = vmatpush.msra.mxu0 0.0
        %5590 = vmatpush.msra.mxu0 0.0
        %5591 = vmatpush.msra.mxu0 0.0
        %5592 = vmatpush.msra.mxu0 0.0
        %5593 = vmatpush.msra.mxu0 0.0
        %5594 = vmatpush.msra.mxu0 0.0
        %5595 = vmatpush.msra.mxu0 0.0
        %5596 = vmatpush.msra.mxu0 %v5564
        %5597 = vmatpush.msra.mxu0 %v5562
        %5598 = vmatmul.f32.gmra.mxu0 %v5577
        %v5599 = vpop.f32.mrf.mxu0
        %v5600 = vadd.f32 %v5569, %v5599
        %5601 = vmatmul.f32.gmra.mxu0 %v5580
        %v5602 = vpop.f32.mrf.mxu0
        %v5603 = vadd.f32 %v5574, %v5602
        %5604 = vdwg.mxu0
        %5605 = vmatpush.msra.mxu0 0.0
        %5606 = vmatpush.msra.mxu0 0.0
        %5607 = vmatpush.msra.mxu0 0.0
        %5608 = vmatpush.msra.mxu0 0.0
        %5609 = vmatpush.msra.mxu0 0.0
        %5610 = vmatpush.msra.mxu0 0.0
        %5611 = vmatpush.msra.mxu0 0.0
        %5612 = vmatpush.msra.mxu0 0.0
        %5613 = vmatpush.msra.mxu0 0.0
        %5614 = vmatpush.msra.mxu0 0.0
        %5615 = vmatpush.msra.mxu0 0.0
        %5616 = vmatpush.msra.mxu0 0.0
        %5617 = vmatpush.msra.mxu0 0.0
        %5618 = vmatpush.msra.mxu0 0.0
        %5619 = vmatpush.msra.mxu0 %v5565
        %5620 = vmatpush.msra.mxu0 %v5563
        %5621 = vmatmul.f32.gmra.mxu0 %v5577
        %v5622 = vpop.f32.mrf.mxu0
        %v5623 = vadd.f32 %v5569, %v5622
        %5624 = vmatmul.f32.gmra.mxu0 %v5580
        %v5625 = vpop.f32.mrf.mxu0
        %v5626 = vadd.f32 %v5574, %v5625
        %5627 = vdwg.mxu0
        %v5628 = vmax.f32 %v5600, 0.0
        %v5629 = vmax.f32 %v5623, 0.0
        %v5630 = vmax.f32 %v5603, 0.0
        %v5631 = vmax.f32 %v5626, 0.0
        %5633 = vset.pattern.permute.xlu0 0
        %5634 = vperm.xlu0 %5633, %v5498
        %v5635 = vpop.permute.xlu0 %5634
        %5638 = vset.pattern.permute.xlu0 0
        %5639 = vperm.xlu0 %5638, %v5499
        %v5640 = vpop.permute.xlu0 %5639
        %v5643 = vsel %vm427, %v5495, 0
        %v5646 = vsel %vm427, %v5496, 0
        %5648 = vmatpush.msra.mxu0 0.0
        %5649 = vmatpush.msra.mxu0 0.0
        %5650 = vmatpush.msra.mxu0 0.0
        %5651 = vmatpush.msra.mxu0 0.0
        %5652 = vmatpush.msra.mxu0 0.0
        %5653 = vmatpush.msra.mxu0 0.0
        %5654 = vmatpush.msra.mxu0 0.0
        %5655 = vmatpush.msra.mxu0 0.0
        %5656 = vmatpush.msra.mxu0 0.0
        %5657 = vmatpush.msra.mxu0 0.0
        %5658 = vmatpush.msra.mxu0 0.0
        %5659 = vmatpush.msra.mxu0 0.0
        %5660 = vmatpush.msra.mxu0 0.0
        %5661 = vmatpush.msra.mxu0 0.0
        %5662 = vmatpush.msra.mxu0 %v5630
        %5663 = vmatpush.msra.mxu0 %v5628
        %5664 = vmatmul.f32.gmra.mxu0 %v5643
        %v5665 = vpop.f32.mrf.mxu0
        %v5666 = vadd.f32 %v5635, %v5665
        %5667 = vmatmul.f32.gmra.mxu0 %v5646
        %v5668 = vpop.f32.mrf.mxu0
        %v5669 = vadd.f32 %v5640, %v5668
        %5670 = vdwg.mxu0
        %5671 = vmatpush.msra.mxu0 0.0
        %5672 = vmatpush.msra.mxu0 0.0
        %5673 = vmatpush.msra.mxu0 0.0
        %5674 = vmatpush.msra.mxu0 0.0
        %5675 = vmatpush.msra.mxu0 0.0
        %5676 = vmatpush.msra.mxu0 0.0
        %5677 = vmatpush.msra.mxu0 0.0
        %5678 = vmatpush.msra.mxu0 0.0
        %5679 = vmatpush.msra.mxu0 0.0
        %5680 = vmatpush.msra.mxu0 0.0
        %5681 = vmatpush.msra.mxu0 0.0
        %5682 = vmatpush.msra.mxu0 0.0
        %5683 = vmatpush.msra.mxu0 0.0
        %5684 = vmatpush.msra.mxu0 0.0
        %5685 = vmatpush.msra.mxu0 %v5631
        %5686 = vmatpush.msra.mxu0 %v5629
        %5687 = vmatmul.f32.gmra.mxu0 %v5643
        %v5688 = vpop.f32.mrf.mxu0
        %v5689 = vadd.f32 %v5635, %v5688
        %5690 = vmatmul.f32.gmra.mxu0 %v5646
        %v5691 = vpop.f32.mrf.mxu0
        %v5692 = vadd.f32 %v5640, %v5691
        %5693 = vdwg.mxu0
        %vm5694 = vcmp.lt.f32.partialorder %v5666, 0.0
        %vm5695 = vcmp.lt.f32.partialorder %v5689, 0.0
        %v5696 = vsel %vm5694, -1.0, 1.0
        %v5697 = vsel %vm5695, -1.0, 1.0
        %v5698 = vand.u32 2147483647, %v5666
        %v5699 = vand.u32 2147483647, %v5689
        %vm5700 = vcmp.gt.f32.partialorder %v5698, 2.4142137
        %vm5701 = vcmp.gt.f32.partialorder %v5699, 2.4142137
        %vm5702 = vcmp.gt.f32.partialorder %v5698, 0.41421357
        %vm5703 = vcmp.gt.f32.partialorder %v5699, 0.41421357
        %v5704 = vsub.f32 %v5698, 1.0
        %v5705 = vsub.f32 %v5699, 1.0
        %v5706 = vsel %vm5702, %v5704, %v5698
        %v5707 = vsel %vm5703, %v5705, %v5699
        %v5708 = vsel %vm5700, -1.0, %v5706
        %v5709 = vsel %vm5701, -1.0, %v5707
        %v5710 = vadd.f32 %v5698, 1.0
        %v5711 = vadd.f32 %v5699, 1.0
        %v5712 = vsel %vm5702, %v5710, 1.0
        %v5713 = vsel %vm5703, %v5711, 1.0
        %v5714 = vsel %vm5700, %v5698, %v5712
        %v5715 = vsel %vm5701, %v5699, %v5713
        %v5716 = vrcp.pop %v5714
        %v5717 = vmul.f32 %v5714, %v5716
        %v5718 = vsub.f32 1.0, %v5717
        %v5719 = vmul.f32 %v5716, %v5718
        %v5720 = vadd.f32 %v5716, %v5719
        %vm5721 = vweird.f32 %v5714
        %vm5722 = vweird.f32 %v5716
        %vm5723 = vmor %vm5721, %vm5722
        %v5724 = vsel %vm5723, %v5716, %v5720
        %v5725 = vand.u32 2147483647, %v5714
        %vm5726 = vcmp.eq.f32.partialorder %v5725, 8.507059e+37
        %v5727 = vand.u32 %v5714, 2147483648
        %v5728 = vor.u32 1.1754944e-38, %v5727
        %v5729 = vsel %vm5726, %v5728, %v5724
        %v5730 = vmul.f32 %v5708, %v5729
        %v5731 = vrcp.pop %v5715
        %v5732 = vmul.f32 %v5715, %v5731
        %v5733 = vsub.f32 1.0, %v5732
        %v5734 = vmul.f32 %v5731, %v5733
        %v5735 = vadd.f32 %v5731, %v5734
        %vm5736 = vweird.f32 %v5715
        %vm5737 = vweird.f32 %v5731
        %vm5738 = vmor %vm5736, %vm5737
        %v5739 = vsel %vm5738, %v5731, %v5735
        %v5740 = vand.u32 2147483647, %v5715
        %vm5741 = vcmp.eq.f32.partialorder %v5740, 8.507059e+37
        %v5742 = vand.u32 %v5715, 2147483648
        %v5743 = vor.u32 1.1754944e-38, %v5742
        %v5744 = vsel %vm5741, %v5743, %v5739
        %v5745 = vmul.f32 %v5709, %v5744
        %v5746 = vsel %vm5702, 0.7853982, 0.0
        %v5747 = vsel %vm5703, 0.7853982, 0.0
        %v5748 = vsel %vm5700, 1.5707964, %v5746
        %v5749 = vsel %vm5701, 1.5707964, %v5747
        %v5750 = vmul.f32 %v5730, %v5730
        %v5751 = vmul.f32 %v5745, %v5745
        %v5752 = vmul.f32 %v5750, 0.080537446
        %v5753 = vmul.f32 %v5751, 0.080537446
        %v5754 = vsub.f32 %v5752, 0.13877685
        %v5755 = vsub.f32 %v5753, 0.13877685
        %v5756 = vmul.f32 %v5754, %v5750
        %v5757 = vmul.f32 %v5755, %v5751
        %v5758 = vadd.f32 %v5756, 0.19977711
        %v5759 = vadd.f32 %v5757, 0.19977711
        %v5760 = vmul.f32 %v5758, %v5750
        %v5761 = vmul.f32 %v5759, %v5751
        %v5762 = vsub.f32 %v5760, 0.3333295
        %v5763 = vsub.f32 %v5761, 0.3333295
        %v5764 = vadd.f32 %v5748, %v5730
        %v5765 = vadd.f32 %v5749, %v5745
        %v5766 = vmul.f32 %v5730, %v5750
        %v5767 = vmul.f32 %v5745, %v5751
        %v5768 = vmul.f32 %v5766, %v5762
        %v5769 = vmul.f32 %v5767, %v5763
        %v5770 = vadd.f32 %v5764, %v5768
        %v5771 = vadd.f32 %v5765, %v5769
        %v5772 = vmul.f32 %v5696, %v5770
        %v5773 = vmul.f32 %v5697, %v5771
        %v5774 = vmul.f32 %v5772, 1.272
        %v5775 = vmul.f32 %v5773, 1.272
        %v5776 = vrot.slane %v5774, 4
        %v5777 = vadd.f32 %v5774, %v5776
        %v5778 = vrot.slane %v5777, 2
        %v5779 = vadd.f32 %v5777, %v5778
        %v5780 = vrot.slane %v5779, 1
        %v5781 = vadd.f32 %v5779, %v5780
        %v5782 = vrot.slane %v5775, 4
        %v5783 = vadd.f32 %v5775, %v5782
        %v5784 = vrot.slane %v5783, 2
        %v5785 = vadd.f32 %v5783, %v5784
        %v5786 = vrot.slane %v5785, 1
        %v5787 = vadd.f32 %v5785, %v5786
        %v5788 = vmul.f32 %v5781, 0.2
        %v5789 = vmul.f32 %v5787, 0.2
        %v5790 = vsub.f32 %v5774, %v5788
        %v5791 = vsub.f32 %v5775, %v5789
        %v5792 = vmul.f32 %v5790, 1.442695
        %v5793 = vpow.pop %v5792
        %v5794 = vmul.f32 %v5791, 1.442695
        %v5795 = vpow.pop %v5794
        %v5796 = vmul.f32 %v5793, %v5139
        %v5797 = vmul.f32 %v5795, %v5162
        %v5798 = vadd.f32 %v5796, %v5669
        %v5799 = vadd.f32 %v5797, %v5692
        %s5800 = scalar_lea.vmem %s7, 112
        %v5801 = vld [vmem:[%s5800] sm:$0xff]
        %v5802 = vld [vmem:[%s5800 + $0x8] sm:$0xff]
        %v5804 = vsel %vm427, %v5801, 0
        %v5807 = vsel %vm427, %v5802, 0
        %5809 = vmatpush.msra.mxu0 0.0
        %5810 = vmatpush.msra.mxu0 0.0
        %5811 = vmatpush.msra.mxu0 0.0
        %5812 = vmatpush.msra.mxu0 0.0
        %5813 = vmatpush.msra.mxu0 0.0
        %5814 = vmatpush.msra.mxu0 0.0
        %5815 = vmatpush.msra.mxu0 0.0
        %5816 = vmatpush.msra.mxu0 0.0
        %5817 = vmatpush.msra.mxu0 0.0
        %5818 = vmatpush.msra.mxu0 0.0
        %5819 = vmatpush.msra.mxu0 0.0
        %5820 = vmatpush.msra.mxu0 0.0
        %5821 = vmatpush.msra.mxu0 0.0
        %5822 = vmatpush.msra.mxu0 0.0
        %5823 = vmatpush.msra.mxu0 %v5798
        %5824 = vmatpush.msra.mxu0 %v5480
        %5825 = vmatmul.f32.gmra.mxu0 %v5804
        %v5826 = vpop.f32.mrf.mxu0
        %v5827 = vadd.f32 0.0, %v5826
        %5828 = vmatmul.f32.gmra.mxu0 %v5807
        %v5829 = vpop.f32.mrf.mxu0
        %v5830 = vadd.f32 0.0, %v5829
        %5831 = vdwg.mxu0
        %5832 = vmatpush.msra.mxu0 0.0
        %5833 = vmatpush.msra.mxu0 0.0
        %5834 = vmatpush.msra.mxu0 0.0
        %5835 = vmatpush.msra.mxu0 0.0
        %5836 = vmatpush.msra.mxu0 0.0
        %5837 = vmatpush.msra.mxu0 0.0
        %5838 = vmatpush.msra.mxu0 0.0
        %5839 = vmatpush.msra.mxu0 0.0
        %5840 = vmatpush.msra.mxu0 0.0
        %5841 = vmatpush.msra.mxu0 0.0
        %5842 = vmatpush.msra.mxu0 0.0
        %5843 = vmatpush.msra.mxu0 0.0
        %5844 = vmatpush.msra.mxu0 0.0
        %5845 = vmatpush.msra.mxu0 0.0
        %5846 = vmatpush.msra.mxu0 %v5799
        %5847 = vmatpush.msra.mxu0 %v5481
        %5848 = vmatmul.f32.gmra.mxu0 %v5804
        %v5849 = vpop.f32.mrf.mxu0
        %v5850 = vadd.f32 0.0, %v5849
        %5851 = vmatmul.f32.gmra.mxu0 %v5807
        %v5852 = vpop.f32.mrf.mxu0
        %v5853 = vadd.f32 0.0, %v5852
        %5854 = vdwg.mxu0
        %5855 = vst [vmem:[%s325] sm:$0xff] %v5827
        %5856 = vst [vmem:[%s325 + $0x8] sm:$0xff] %v5850
        %5857 = vst [vmem:[%s325 + $0x10] sm:$0xff] %v5830
        %5858 = vst [vmem:[%s325 + $0x18] sm:$0xff] %v5853
        %s5859 = sand.u32 %s200, 1
        %s5860 = sand.u32 %s200, 1
        %s5861 = smul.addr %s5860, 32
        %s5862 = scalar_lea.vmem [#allocation3], %s5861
        // Predicated region
        $region76: #{gin_forward.1} parent=70 // pred_check
          %p5863 = pneg %p210
        $region77: #{gin_forward.1} parent=70 // pred_check_branch
          %5865 = sbr.rel (%p5863) target = $region79
        $region78: #{gin_forward.1} parent=70 // pred_region
          %s5866 = smul.u32 2, %s19
          %s5867 = smul.addr %s5866, 8
          %s5868 = scalar_lea.vmem %s8, %s5867
          // Predicated region
          $region80: #{gin_forward.1} parent=78 // pred_check
            _
          $region81: #{gin_forward.1} parent=78 // pred_check_branch
            %5870 = sbr.rel (0) target = $region83
          $region82: #{gin_forward.1} parent=78 // pred_region
            // Predicated region
            $region84: #{gin_forward.1} parent=82 // pred_check
              _
            $region85: #{gin_forward.1} parent=82 // pred_check_branch
              %5872 = sbr.rel (0) target = $region87
            $region86: #{gin_forward.1} parent=82 // pred_region
              loop: start=0, step=1, limit=1
              $region88: #{gin_forward.1} parent=86 // loop_pre_header
                _
              $region89: #{gin_forward.1} parent=86 // loop_header
                %s5874 = sphi 0, %s5878
                %p5875 = scmp.ge.s32.totalorder %s5874, 1
                %s5879 = sphi %s5862, %s5862
                %s5880 = sphi %s5868, %s5868
              $region90: #{gin_forward.1} parent=86 // loop_header_branch
                %5877 = sbr.rel (%p5875) target = $region94
              $region91: #{gin_forward.1} parent=86 // loop_body
                %v5881 = vld [vmem:[%s5879] sm:$0xff]
                %5882 = vst [vmem:[%s5880] sm:$0xff] %v5881
                %v5883 = vld [vmem:[%s5879 + $0x8] sm:$0xff]
                %5884 = vst [vmem:[%s5880 + $0x8] sm:$0xff] %v5883
                %v5885 = vld [vmem:[%s5879 + $0x10] sm:$0xff]
                %5886 = vst [vmem:[%s5880 + $0x20] sm:$0xff] %v5885
                %v5887 = vld [vmem:[%s5879 + $0x18] sm:$0xff]
                %5888 = vst [vmem:[%s5880 + $0x28] sm:$0xff] %v5887
              $region92: #{gin_forward.1} parent=86 // loop_footer
                %s5878 = sadd.s32 1, %s5874
              $region93: #{gin_forward.1} parent=86 // loop_footer_branch
                %5873 = sbr.rel target = $region89
              $region94: #{gin_forward.1} parent=86 // loop_exit
                _
            $region87: #{gin_forward.1} parent=82 // pred_fallthru
              _
            // Predicated region
            $region95: #{gin_forward.1} parent=82 // pred_check
              _
            $region96: #{gin_forward.1} parent=82 // pred_check_branch
              %5890 = sbr.rel target = $region98
            $region97: #{gin_forward.1} parent=82 // pred_region
              _
            $region98: #{gin_forward.1} parent=82 // pred_fallthru
              _
          $region83: #{gin_forward.1} parent=78 // pred_fallthru
            _
          %5891 = vnop
        $region79: #{gin_forward.1} parent=70 // pred_fallthru
          _
      $region71: #{gin_forward.1} parent=5 // pred_fallthru
        _
      %p5892 = scmp.le.s32.totalorder 2, %s14
      // Predicated region
      $region99: #{gin_forward.1} parent=5 // pred_check
        %p5893 = pneg %p5892
      $region100: #{gin_forward.1} parent=5 // pred_check_branch
        %5895 = sbr.rel (%p5893) target = $region102
      $region101: #{gin_forward.1} parent=5 // pred_region
        %s5896 = ssub.s32 %s14, 2
        // Predicated region
        $region103: #{gin_forward.1} parent=101 // pred_check
          %p5897 = pneg %p216
        $region104: #{gin_forward.1} parent=101 // pred_check_branch
          %5899 = sbr.rel (%p5897) target = $region106
        $region105: #{gin_forward.1} parent=101 // pred_region
          %s5900 = sand.u32 %s201, 1
          %s5901 = sand.u32 %s201, 1
          %s5902 = smul.addr %s5901, 32
          %s5903 = scalar_lea.vmem [#allocation3], %s5902
        $region106: #{gin_forward.1} parent=101 // pred_fallthru
          _
      $region102: #{gin_forward.1} parent=5 // pred_fallthru
        _
    $region6: #{gin_forward.1} parent=1 // loop_footer
      %s18 = sadd.s32 1, %s14
    $region7: #{gin_forward.1} parent=1 // loop_footer_branch
      %13 = sbr.rel target = $region3
    $region8: #{gin_forward.1} parent=1 // loop_exit
      _

</llo_original>
